<compile_context>
chip_gen: v5e
topology: v5e:2x2
jax: 0.10.0
libtpu: 0.0.40
codegen_flags: <defaults>
</compile_context>

<pallas_src>
import functools

import jax
import jax.numpy as jnp
from jax import lax
from jax.experimental import pallas as pl
from jax.experimental.pallas import tpu as pltpu

EPS = 1e-5
ROW_TILE_TARGET = 1024                 # rows per tile for the 1x1 / elementwise stages
VMEM_LIMIT_1X1 = 32 * 1024 * 1024      # per-step footprint of the 1x1 stages is a few MiB


# --------------------------------------------------------------------------- kernels

def _partial_stats(h_f32):
    """Per-channel (sum, sum_sq) partials stacked into a (2, C) block.

    TODO(synk): E[x^2]-E[x]^2 folding can cancel badly for |mean| >> std; switch to
                mean-centered / Welford partials if activations can have large means."""
    return jnp.concatenate([jnp.sum(h_f32, axis=0, keepdims=True),
                            jnp.sum(h_f32 * h_f32, axis=0, keepdims=True)], axis=0)


def conv1x1_stats_kernel(x_ref, w_ref, h_ref, pstats_ref):
    # conv1 (1x1): bf16 operands (x pre-cast in the wrapper), f32 MXU accumulation.
    # Conv bias dropped: training-mode BN's batch-mean subtraction cancels it exactly.
    acc = jnp.dot(x_ref[...], w_ref[...], preferred_element_type=jnp.float32)
    h_ref[...] = acc.astype(h_ref.dtype)
    pstats_ref[0] = _partial_stats(acc)


def bn_relu_conv1x1_stats_kernel(valid_rows, h_in_ref, ss_ref, w_ref, h_out_ref, pstats_ref):
    # Previous BN folded to one per-channel scale+shift (f32), ReLU, then 1x1 conv.
    a = jnp.maximum(h_in_ref[...].astype(jnp.float32) * ss_ref[0:1, :] + ss_ref[1:2, :], 0.0)
    if valid_rows is not None:
        # Zero wrapper-padded rows (unwritten by K2) so they cannot pollute BN partial stats.
        row = (pl.program_id(0) * a.shape[0]
               + lax.broadcasted_iota(jnp.int32, (a.shape[0], 1), 0))
        a = jnp.where(row < valid_rows, a, 0.0)
    acc = jnp.dot(a.astype(jnp.bfloat16), w_ref[...], preferred_element_type=jnp.float32)
    h_out_ref[...] = acc.astype(h_out_ref.dtype)
    pstats_ref[0] = _partial_stats(acc)


def bn_relu_conv3x3_stats_kernel(H, W, h_in_ref, ss_ref, w2_ref,
                                 h_out_ref, pstats_ref, pad1_ref, pad3_ref):
    """bn1+relu then 3x3 conv (stride=1, pad=1) on ONE image.

    pad3 holds [dx=-1 | dx=0 | dx=+1] lane-column blocks for every image row, plus W zero rows
    above/below.  The conv is three accumulating MXU matmuls over the dy=-1/0/+1 row-shifted
    (HW, 3*Cmid) windows of pad3 against the matching (3*Cmid, Cmid) slices of w2 -- no
    (HW, 9*Cmid) slab is ever materialized.
    """
    HW = H * W
    cmid = h_in_ref.shape[-1]
    r1 = (pad1_ref.shape[0] - HW) // 2
    r3 = (pad3_ref.shape[0] - HW) // 2

    # BN1 (pre-folded per-channel scale/shift) + ReLU in f32, then bf16 for MXU/scratch.
    a = jnp.maximum(h_in_ref[...].astype(jnp.float32) * ss_ref[0:1, :] + ss_ref[1:2, :], 0.0)
    a = a.astype(jnp.bfloat16)                                     # (HW, Cmid)

    # dx = +-1 shifted copies.  pad1's border rows are never zeroed: every read of them is
    # discarded by the (HW, 1) left/right edge masks (select never does arithmetic on them).
    pad1_ref[r1:r1 + HW, :] = a
    w_idx = lax.broadcasted_iota(jnp.int32, (HW, 1), 0) % W
    s_l = jnp.where(w_idx >= 1, pad1_ref[r1 - 1:r1 - 1 + HW, :], 0.0)
    s_r = jnp.where(w_idx <= W - 2, pad1_ref[r1 + 1:r1 + 1 + HW, :], 0.0)

    # Zero exactly the W border rows that the dy = +-1 windows read (interior rows are fully
    # overwritten each step).
    pad3_ref[r3 - W:r3, :] = jnp.zeros((W, 3 * cmid), pad3_ref.dtype)
    pad3_ref[r3 + HW:r3 + HW + W, :] = jnp.zeros((W, 3 * cmid), pad3_ref.dtype)
    # Interior taps written directly into three lane-column slices (no lane-concat temporary).
    pad3_ref[r3:r3 + HW, 0:cmid] = s_l
    pad3_ref[r3:r3 + HW, cmid:2 * cmid] = a
    pad3_ref[r3:r3 + HW, 2 * cmid:3 * cmid] = s_r

    # Three accumulating matmuls over the dy = -1 / 0 / +1 windows.
    # Tap order matches w2 rows: k = (dy+1)*3 + (dx+1), row index k*Cmid + c_in.
    acc = jnp.dot(pad3_ref[r3 - W:r3 - W + HW, :], w2_ref[0:3 * cmid, :],
                  preferred_element_type=jnp.float32)
    acc = acc + jnp.dot(pad3_ref[r3:r3 + HW, :], w2_ref[3 * cmid:6 * cmid, :],
                        preferred_element_type=jnp.float32)
    acc = acc + jnp.dot(pad3_ref[r3 + W:r3 + W + HW, :], w2_ref[6 * cmid:9 * cmid, :],
                        preferred_element_type=jnp.float32)

    h_out_ref[...] = acc.astype(h_out_ref.dtype)
    pstats_ref[0] = _partial_stats(acc)


def bn_residual_relu_kernel(h_ref, x_ref, ss_ref, out_ref):
    h = h_ref[...].astype(jnp.float32)
    x = x_ref[...].astype(jnp.float32)
    out_ref[...] = jnp.maximum(h * ss_ref[0:1, :] + ss_ref[1:2, :] + x, 0.0)


# --------------------------------------------------------------------------- wrapper

def _round_up(x, m):
    return -(-x // m) * m


def _pick_row_tile(M, target=ROW_TILE_TARGET):
    """Row tile, multiple of 16 (bf16 sublane packing): an exact divisor of M if one exists
    up to `target`, otherwise `target` (the wrapper then zero-pads M up)."""
    if M <= target:
        return _round_up(M, 16)
    best = 0
    for t in range(16, target + 1, 16):
        if M % t == 0:
            best = t
    return best if best else target


def _fold_bn(pstats, count, gamma, beta):
    """Per-tile (sum, sum_sq) partials -> fused per-channel BN (scale, shift) as a (2, C) array.

    O(C) glue outside the kernels; the heavy per-element work stays in Pallas."""
    totals = jnp.sum(pstats, axis=0)                              # (2, C)
    mean = totals[0] / count
    var = jnp.maximum(totals[1] / count - mean * mean, 0.0)       # biased variance
    scale = gamma.reshape(-1) * lax.rsqrt(var + EPS)
    shift = beta.reshape(-1) - mean * scale
    return jnp.stack([scale, shift], axis=0)                      # (2, C) f32


def bottleneck_forward(x_nchw, params):
    N, Cin, H, W = x_nchw.shape
    cmid = params["w1"].shape[1]
    cout = params["w3"].shape[1]
    assert cout == Cin, "identity residual (downsample=None) requires Cin == 4*out_channels"
    HW = H * W
    M = N * HW
    assert HW % 8 == 0, "H*W must be a multiple of 8 for the per-image conv2 blocks"

    # glue: NCHW -> flattened NHWC (M, C); ONE bf16 copy feeds conv1 and the K4 residual.
    x2d = jnp.transpose(x_nchw, (0, 2, 3, 1)).reshape(M, Cin).astype(jnp.bfloat16)

    tm = _pick_row_tile(M)
    M_pad = _round_up(M, tm)
    if M_pad != M:
        x2d = jnp.pad(x2d, ((0, M_pad - M), (0, 0)))   # zero pad rows -> h1 pad rows are zero
    T = M_pad // tm
    valid_rows = M if M_pad != M else None             # K3 masks h2's unwritten pad rows

    # bf16 matmul operands (f32 accumulation happens inside the kernels)
    w1 = params["w1"].astype(jnp.bfloat16)                            # (Cin, Cmid)
    w2 = params["w2"].reshape(9 * cmid, cmid).astype(jnp.bfloat16)    # tap-major (9*Cmid, Cmid)
    w3 = params["w3"].astype(jnp.bfloat16)                            # (Cmid, Cout)

    r1 = 16                                  # pad1 border (>=1 row; 16 keeps interior write aligned)
    r3 = max(16, _round_up(W, 16))           # pad3 border: >= W rows, 16-aligned

    params_1x1 = pltpu.CompilerParams(dimension_semantics=("parallel",),
                                      vmem_limit_bytes=VMEM_LIMIT_1X1)
    stage2_bytes = (2 * 2 * HW * cmid * 2           # in/out (HW, Cmid) bf16 blocks, double-buffered
                    + 2 * 9 * cmid * cmid * 2       # w2, double-buffered
                    + (HW + 2 * r1) * cmid * 2      # pad1 scratch
                    + (HW + 2 * r3) * 3 * cmid * 2  # pad3 scratch
                    + 4 * HW * cmid * 4)            # f32 accumulator / prologue temporaries
    params_k2 = pltpu.CompilerParams(
        dimension_semantics=("parallel",),
        vmem_limit_bytes=min(100 << 20, max(32 << 20, 2 * stage2_bytes)))

    # ---- stage 1: conv1 (1x1) + BN1 partial stats, tiled over rows ----
    h1, p1 = pl.pallas_call(
        conv1x1_stats_kernel,
        out_shape=(jax.ShapeDtypeStruct((M_pad, cmid), jnp.bfloat16),
                   jax.ShapeDtypeStruct((T, 2, cmid), jnp.float32)),
        grid=(T,),
        in_specs=[pl.BlockSpec((tm, Cin), lambda i: (i, 0)),
                  pl.BlockSpec((Cin, cmid), lambda i: (0, 0))],
        out_specs=(pl.BlockSpec((tm, cmid), lambda i: (i, 0)),
                   pl.BlockSpec((1, 2, cmid), lambda i: (i, 0, 0))),
        compiler_params=params_1x1,
    )(x2d, w1)
    ss1 = _fold_bn(p1, M, params["g1"], params["be1"])

    # ---- stage 2: bn1+relu + conv2 (3x3) + BN2 partial stats, one image per grid step ----
    h2, p2 = pl.pallas_call(
        functools.partial(bn_relu_conv3x3_stats_kernel, H, W),
        out_shape=(jax.ShapeDtypeStruct((M_pad, cmid), jnp.bfloat16),
                   jax.ShapeDtypeStruct((N, 2, cmid), jnp.float32)),
        grid=(N,),
        in_specs=[pl.BlockSpec((HW, cmid), lambda n: (n, 0)),
                  pl.BlockSpec((2, cmid), lambda n: (0, 0)),
                  pl.BlockSpec((9 * cmid, cmid), lambda n: (0, 0))],
        out_specs=(pl.BlockSpec((HW, cmid), lambda n: (n, 0)),
                   pl.BlockSpec((1, 2, cmid), lambda n: (n, 0, 0))),
        scratch_shapes=[pltpu.VMEM((HW + 2 * r1, cmid), jnp.bfloat16),
                        pltpu.VMEM((HW + 2 * r3, 3 * cmid), jnp.bfloat16)],
        compiler_params=params_k2,
    )(h1, ss1, w2)
    ss2 = _fold_bn(p2, M, params["g2"], params["be2"])

    # ---- stage 3: bn2+relu + conv3 (1x1) + BN3 partial stats, tiled over rows ----
    h3, p3 = pl.pallas_call(
        functools.partial(bn_relu_conv1x1_stats_kernel, valid_rows),
        out_shape=(jax.ShapeDtypeStruct((M_pad, cout), jnp.bfloat16),
                   jax.ShapeDtypeStruct((T, 2, cout), jnp.float32)),
        grid=(T,),
        in_specs=[pl.BlockSpec((tm, cmid), lambda i: (i, 0)),
                  pl.BlockSpec((2, cmid), lambda i: (0, 0)),
                  pl.BlockSpec((cmid, cout), lambda i: (0, 0))],
        out_specs=(pl.BlockSpec((tm, cout), lambda i: (i, 0)),
                   pl.BlockSpec((1, 2, cout), lambda i: (i, 0, 0))),
        compiler_params=params_1x1,
    )(h2, ss2, w3)
    ss3 = _fold_bn(p3, M, params["g3"], params["be3"])

    # ---- stage 4: bn3 + residual add (bf16 residual) + relu, tiled over rows ----
    out2d = pl.pallas_call(
        bn_residual_relu_kernel,
        out_shape=jax.ShapeDtypeStruct((M_pad, cout), jnp.float32),  # module output dtype is f32
        grid=(T,),
        in_specs=[pl.BlockSpec((tm, cout), lambda i: (i, 0)),
                  pl.BlockSpec((tm, cout), lambda i: (i, 0)),
                  pl.BlockSpec((2, cout), lambda i: (0, 0))],
        out_specs=pl.BlockSpec((tm, cout), lambda i: (i, 0)),
        compiler_params=params_1x1,
    )(h3, x2d, ss3)

    if M_pad != M:
        out2d = out2d[:M]
    # glue: flattened NHWC -> NCHW
    return jnp.transpose(out2d.reshape(N, H, W, cout), (0, 3, 1, 2))


# --------------------------------------------------------------------------- params / reference

def init_params(key, in_channels, out_channels):
    expansion = 4
    cout = out_channels * expansion
    ks = jax.random.split(key, 6)
    f32 = jnp.float32

    def chan_row(lo, hi, c):
        return jnp.linspace(lo, hi, c, dtype=f32).reshape(1, c)

    return {
        # conv1: 1x1, (Cin -> Cmid); stored as (Cin, Cmid) [= torch (Cmid,Cin,1,1)^T]
        "w1": 0.1 * jax.random.normal(ks[0], (in_channels, out_channels), f32),
        "b1": 0.1 * jax.random.normal(ks[1], (1, out_channels), f32),
        "g1": chan_row(0.9, 1.1, out_channels),
        "be1": chan_row(-0.05, 0.05, out_channels),
        # conv2: 3x3, (Cmid -> Cmid); stored as (9, Cmid_in, Cmid_out), tap k = kh*3+kw
        "w2": 0.1 * jax.random.normal(ks[2], (9, out_channels, out_channels), f32),
        "b2": 0.1 * jax.random.normal(ks[3], (1, out_channels), f32),
        "g2": chan_row(0.8, 1.2, out_channels),
        "be2": chan_row(-0.1, 0.1, out_channels),
        # conv3: 1x1, (Cmid -> Cout)
        "w3": 0.1 * jax.random.normal(ks[4], (out_channels, cout), f32),
        "b3": 0.1 * jax.random.normal(ks[5], (1, cout), f32),
        "g3": chan_row(0.95, 1.05, cout),
        "be3": chan_row(-0.02, 0.02, cout),
    }


def ref_forward(x_nchw, params):
    """Plain-JAX f32 reference of the same forward pass (includes the conv biases, which
    training-mode BN cancels exactly — validating the in-kernel bias drop)."""
    x = jnp.transpose(x_nchw, (0, 2, 3, 1))  # NHWC
    N, H, W, _ = x.shape

    def bn(h, g, b):
        m = jnp.mean(h, axis=(0, 1, 2), keepdims=True)
        v = jnp.mean((h - m) ** 2, axis=(0, 1, 2), keepdims=True)
        return g.reshape(1, 1, 1, -1) * (h - m) * lax.rsqrt(v + EPS) + b.reshape(1, 1, 1, -1)

    h1 = jnp.einsum("nhwc,cd->nhwd", x, params["w1"]) + params["b1"].reshape(1, 1, 1, -1)
    h1 = jnp.maximum(bn(h1, params["g1"], params["be1"]), 0.0)

    h1p = jnp.pad(h1, ((0, 0), (1, 1), (1, 1), (0, 0)))
    acc = jnp.zeros_like(h1)
    for kh in range(3):
        for kw in range(3):
            acc = acc + jnp.einsum("nhwc,cd->nhwd",
                                   h1p[:, kh:kh + H, kw:kw + W, :],
                                   params["w2"][kh * 3 + kw])
    h2 = acc + params["b2"].reshape(1, 1, 1, -1)
    h2 = jnp.maximum(bn(h2, params["g2"], params["be2"]), 0.0)

    h3 = jnp.einsum("nhwc,cd->nhwd", h2, params["w3"]) + params["b3"].reshape(1, 1, 1, -1)
    h3 = bn(h3, params["g3"], params["be3"])
    out = jnp.maximum(h3 + x, 0.0)
    return jnp.transpose(out, (0, 3, 1, 2))


if __name__ == "__main__":
    key = jax.random.PRNGKey(0)
    kx, kp = jax.random.split(key)

    # in_channels must equal out_channels * expansion for the identity residual.
    N, Cin, H, W = 2, 32, 16, 16
    out_channels = Cin // 4

    x = jax.random.normal(kx, (N, Cin, H, W), jnp.float32)
    params = init_params(kp, Cin, out_channels)

    fwd = jax.jit(bottleneck_forward)
    out = jax.block_until_ready(fwd(x, params))
    assert out.shape == (N, Cin, H, W)

    ref = ref_forward(x, params)
    max_err = float(jnp.max(jnp.abs(out - ref)))
    # Loose tolerance: bf16 matmul operands, bf16 intermediates and a bf16 residual vs f32 ref.
    if not max_err < 1.5e-1:
        raise AssertionError(f"kernel/reference mismatch: max abs err = {max_err}")

    print("KERNEL_OK")
</pallas_src>

<mosaic_0001>
module attributes {stable_mosaic.version = 11 : i64} {
  func.func @bn_relu_conv3x3_stats_kernel(%arg0: i32, %arg1: memref<256x8xbf16, #tpu.memory_space<vmem>>, %arg2: memref<2x8xf32, #tpu.memory_space<vmem>>, %arg3: memref<72x8xbf16, #tpu.memory_space<vmem>>, %arg4: memref<256x8xbf16, #tpu.memory_space<vmem>>, %arg5: memref<1x2x8xf32, #tpu.memory_space<vmem>>, %arg6: memref<288x8xbf16, #tpu.memory_space<vmem>>, %arg7: memref<288x24xbf16, #tpu.memory_space<vmem>>) attributes {dimension_semantics = [#tpu.dimension_semantics<parallel>], iteration_bounds = array<i64: 2>, scalar_prefetch = 0 : i64, scratch_operands = 2 : i64, tpu.core_type = #tpu.core_type<tc>, window_params = [{transform_indices = @transform_0, window_bounds = array<i64: 256, 8>}, {pipeline_mode = #tpu.pipeline_mode<synchronous>, transform_indices = @transform_1, window_bounds = array<i64: 2, 8>}, {pipeline_mode = #tpu.pipeline_mode<synchronous>, transform_indices = @transform_2, window_bounds = array<i64: 72, 8>}, {transform_indices = @transform_3, window_bounds = array<i64: 256, 8>}, {transform_indices = @transform_4, window_bounds = array<i64: 1, 2, 8>}]} {
    %c0 = arith.constant 0 : index
    %c0_0 = arith.constant 0 : index
    %0 = vector.load %arg1[%c0, %c0_0] : memref<256x8xbf16, #tpu.memory_space<vmem>>, vector<256x8xbf16>
    %1 = arith.extf %0 : vector<256x8xbf16> to vector<256x8xf32>
    %c0_1 = arith.constant 0 : index
    %c0_2 = arith.constant 0 : index
    %2 = vector.load %arg2[%c0_1, %c0_2] : memref<2x8xf32, #tpu.memory_space<vmem>>, vector<1x8xf32>
    %3 = vector.broadcast %2 : vector<1x8xf32> to vector<256x8xf32>
    %4 = arith.mulf %1, %3 : vector<256x8xf32>
    %c1 = arith.constant 1 : index
    %c0_3 = arith.constant 0 : index
    %5 = vector.load %arg2[%c1, %c0_3] : memref<2x8xf32, #tpu.memory_space<vmem>>, vector<1x8xf32>
    %6 = vector.broadcast %5 : vector<1x8xf32> to vector<256x8xf32>
    %7 = arith.addf %4, %6 : vector<256x8xf32>
    %cst = arith.constant 0.000000e+00 : f32
    %8 = vector.broadcast %cst : f32 to vector<256x8xf32>
    %9 = arith.maximumf %7, %8 : vector<256x8xf32>
    %10 = arith.truncf %9 : vector<256x8xf32> to vector<256x8xbf16>
    %c16 = arith.constant 16 : index
    %c0_4 = arith.constant 0 : index
    %11 = vector.load %arg6[%c16, %c0_4] : memref<288x8xbf16, #tpu.memory_space<vmem>>, vector<256x8xbf16>
    tpu.vector_store %arg6[%c16, %c0_4], %10 {strides = array<i32>} : memref<288x8xbf16, #tpu.memory_space<vmem>>, vector<256x8xbf16>,
    %12 = tpu.iota {dimensions = array<i32: 0>} : vector<256x1xi32>
    %c16_i32 = arith.constant 16 : i32
    %c0_i32 = arith.constant 0 : i32
    %13 = arith.cmpi eq, %c16_i32, %c0_i32 : i32
    %c1_i32 = arith.constant 1 : i32
    %14 = arith.select %13, %c1_i32, %c16_i32 : i32
    %15 = vector.broadcast %14 : i32 to vector<256x1xi32>
    %16 = arith.remsi %12, %15 : vector<256x1xi32>
    %c0_i32_5 = arith.constant 0 : i32
    %17 = vector.broadcast %c0_i32_5 : i32 to vector<256x1xi32>
    %18 = arith.cmpi ne, %16, %17 : vector<256x1xi32>
    %c0_i32_6 = arith.constant 0 : i32
    %19 = vector.broadcast %c0_i32_6 : i32 to vector<256x1xi32>
    %20 = arith.cmpi slt, %16, %19 : vector<256x1xi32>
    %c0_i32_7 = arith.constant 0 : i32
    %21 = arith.cmpi slt, %14, %c0_i32_7 : i32
    %22 = vector.broadcast %21 : i1 to vector<256x1xi1>
    %23 = vector.broadcast %22 : vector<256x1xi1> to vector<256x1xi1>
    %24 = arith.xori %20, %23 : vector<256x1xi1>
    %25 = arith.andi %24, %18 : vector<256x1xi1>
    %26 = vector.broadcast %14 : i32 to vector<256x1xi32>
    %27 = arith.addi %16, %26 : vector<256x1xi32>
    %28 = arith.select %25, %27, %16 : vector<256x1xi1>, vector<256x1xi32>
    %c1_i32_8 = arith.constant 1 : i32
    %29 = vector.broadcast %c1_i32_8 : i32 to vector<256x1xi32>
    %30 = arith.cmpi sge, %28, %29 : vector<256x1xi32>
    %c15 = arith.constant 15 : index
    %c0_9 = arith.constant 0 : index
    %31 = vector.load %arg6[%c15, %c0_9] : memref<288x8xbf16, #tpu.memory_space<vmem>>, vector<256x8xbf16>
    %cst_10 = arith.constant 0.000000e+00 : f32
    %32 = arith.truncf %cst_10 : f32 to bf16
    %33 = vector.shape_cast %30 : vector<256x1xi1> to vector<256x1xi1>
    %34 = vector.broadcast %33 : vector<256x1xi1> to vector<256x8xi1>
    %35 = vector.broadcast %32 : bf16 to vector<256x8xbf16>
    %36 = arith.select %34, %31, %35 : vector<256x8xi1>, vector<256x8xbf16>
    %c14_i32 = arith.constant 14 : i32
    %37 = vector.broadcast %c14_i32 : i32 to vector<256x1xi32>
    %38 = arith.cmpi sle, %28, %37 : vector<256x1xi32>
    %c17 = arith.constant 17 : index
    %c0_11 = arith.constant 0 : index
    %39 = vector.load %arg6[%c17, %c0_11] : memref<288x8xbf16, #tpu.memory_space<vmem>>, vector<256x8xbf16>
    %cst_12 = arith.constant 0.000000e+00 : f32
    %40 = arith.truncf %cst_12 : f32 to bf16
    %41 = vector.shape_cast %38 : vector<256x1xi1> to vector<256x1xi1>
    %42 = vector.broadcast %41 : vector<256x1xi1> to vector<256x8xi1>
    %43 = vector.broadcast %40 : bf16 to vector<256x8xbf16>
    %44 = arith.select %42, %39, %43 : vector<256x8xi1>, vector<256x8xbf16>
    %cst_13 = arith.constant 0.000000e+00 : bf16
    %45 = vector.broadcast %cst_13 : bf16 to vector<16x24xbf16>
    %c0_14 = arith.constant 0 : index
    %c0_15 = arith.constant 0 : index
    %46 = vector.load %arg7[%c0_14, %c0_15] : memref<288x24xbf16, #tpu.memory_space<vmem>>, vector<16x24xbf16>
    tpu.vector_store %arg7[%c0_14, %c0_15], %45 {strides = array<i32>} : memref<288x24xbf16, #tpu.memory_space<vmem>>, vector<16x24xbf16>,
    %cst_16 = arith.constant 0.000000e+00 : bf16
    %47 = vector.broadcast %cst_16 : bf16 to vector<16x24xbf16>
    %c272 = arith.constant 272 : index
    %c0_17 = arith.constant 0 : index
    %48 = vector.load %arg7[%c272, %c0_17] : memref<288x24xbf16, #tpu.memory_space<vmem>>, vector<16x24xbf16>
    tpu.vector_store %arg7[%c272, %c0_17], %47 {strides = array<i32>} : memref<288x24xbf16, #tpu.memory_space<vmem>>, vector<16x24xbf16>,
    %c16_18 = arith.constant 16 : index
    %c0_19 = arith.constant 0 : index
    %49 = vector.load %arg7[%c16_18, %c0_19] : memref<288x24xbf16, #tpu.memory_space<vmem>>, vector<256x8xbf16>
    tpu.vector_store %arg7[%c16_18, %c0_19], %36 {strides = array<i32>} : memref<288x24xbf16, #tpu.memory_space<vmem>>, vector<256x8xbf16>,
    %c16_20 = arith.constant 16 : index
    %c8 = arith.constant 8 : index
    %50 = vector.load %arg7[%c16_20, %c8] : memref<288x24xbf16, #tpu.memory_space<vmem>>, vector<256x8xbf16>
    tpu.vector_store %arg7[%c16_20, %c8], %10 {strides = array<i32>} : memref<288x24xbf16, #tpu.memory_space<vmem>>, vector<256x8xbf16>,
    %c16_21 = arith.constant 16 : index
    %c16_22 = arith.constant 16 : index
    %51 = vector.load %arg7[%c16_21, %c16_22] : memref<288x24xbf16, #tpu.memory_space<vmem>>, vector<256x8xbf16>
    tpu.vector_store %arg7[%c16_21, %c16_22], %44 {strides = array<i32>} : memref<288x24xbf16, #tpu.memory_space<vmem>>, vector<256x8xbf16>,
    %c0_23 = arith.constant 0 : index
    %c0_24 = arith.constant 0 : index
    %52 = vector.load %arg7[%c0_23, %c0_24] : memref<288x24xbf16, #tpu.memory_space<vmem>>, vector<256x24xbf16>
    %c0_25 = arith.constant 0 : index
    %c0_26 = arith.constant 0 : index
    %53 = vector.load %arg3[%c0_25, %c0_26] : memref<72x8xbf16, #tpu.memory_space<vmem>>, vector<24x8xbf16>
    %cst_27 = arith.constant dense<0.000000e+00> : vector<256x8xf32>
    %54 = tpu.matmul %52, %53, %cst_27 {dimension_numbers = #tpu.dot_dimension_numbers<[1], [0], [0], [1], [0, 0, 1, 1], [], []>} : vector<256x24xbf16>, vector<24x8xbf16>, vector<256x8xf32> -> vector<256x8xf32>
    %c16_28 = arith.constant 16 : index
    %c0_29 = arith.constant 0 : index
    %55 = vector.load %arg7[%c16_28, %c0_29] : memref<288x24xbf16, #tpu.memory_space<vmem>>, vector<256x24xbf16>
    %c24 = arith.constant 24 : index
    %c0_30 = arith.constant 0 : index
    %56 = vector.load %arg3[%c24, %c0_30] : memref<72x8xbf16, #tpu.memory_space<vmem>>, vector<24x8xbf16>
    %cst_31 = arith.constant dense<0.000000e+00> : vector<256x8xf32>
    %57 = tpu.matmul %55, %56, %cst_31 {dimension_numbers = #tpu.dot_dimension_numbers<[1], [0], [0], [1], [0, 0, 1, 1], [], []>} : vector<256x24xbf16>, vector<24x8xbf16>, vector<256x8xf32> -> vector<256x8xf32>
    %58 = arith.addf %54, %57 : vector<256x8xf32>
    %c32 = arith.constant 32 : index
    %c0_32 = arith.constant 0 : index
    %59 = vector.load %arg7[%c32, %c0_32] : memref<288x24xbf16, #tpu.memory_space<vmem>>, vector<256x24xbf16>
    %c48 = arith.constant 48 : index
    %c0_33 = arith.constant 0 : index
    %60 = vector.load %arg3[%c48, %c0_33] : memref<72x8xbf16, #tpu.memory_space<vmem>>, vector<24x8xbf16>
    %cst_34 = arith.constant dense<0.000000e+00> : vector<256x8xf32>
    %61 = tpu.matmul %59, %60, %cst_34 {dimension_numbers = #tpu.dot_dimension_numbers<[1], [0], [0], [1], [0, 0, 1, 1], [], []>} : vector<256x24xbf16>, vector<24x8xbf16>, vector<256x8xf32> -> vector<256x8xf32>
    %62 = arith.addf %58, %61 : vector<256x8xf32>
    %63 = arith.truncf %62 : vector<256x8xf32> to vector<256x8xbf16>
    %c0_35 = arith.constant 0 : index
    %c0_36 = arith.constant 0 : index
    %64 = vector.load %arg4[%c0_35, %c0_36] : memref<256x8xbf16, #tpu.memory_space<vmem>>, vector<256x8xbf16>
    tpu.vector_store %arg4[%c0_35, %c0_36], %63 {strides = array<i32>} : memref<256x8xbf16, #tpu.memory_space<vmem>>, vector<256x8xbf16>,
    %cst_37 = arith.constant dense<0.000000e+00> : vector<8xf32>
    %65 = vector.multi_reduction <add>, %62, %cst_37 [0] : vector<256x8xf32> to vector<8xf32>
    %66 = vector.shape_cast %65 : vector<8xf32> to vector<1x8xf32>
    %67 = arith.mulf %62, %62 : vector<256x8xf32>
    %cst_38 = arith.constant dense<0.000000e+00> : vector<8xf32>
    %68 = vector.multi_reduction <add>, %67, %cst_38 [0] : vector<256x8xf32> to vector<8xf32>
    %69 = vector.shape_cast %68 : vector<8xf32> to vector<1x8xf32>
    %70 = tpu.concatenate %66, %69 in 0 : vector<1x8xf32>, vector<1x8xf32> -> vector<2x8xf32>
    %c0_39 = arith.constant 0 : index
    %c0_40 = arith.constant 0 : index
    %c0_41 = arith.constant 0 : index
    %71 = vector.load %arg5[%c0_39, %c0_40, %c0_41] : memref<1x2x8xf32, #tpu.memory_space<vmem>>, vector<1x2x8xf32>
    %72 = vector.shape_cast %71 : vector<1x2x8xf32> to vector<2x8xf32>
    %73 = vector.shape_cast %70 : vector<2x8xf32> to vector<1x2x8xf32>
    tpu.vector_store %arg5[%c0_39, %c0_40, %c0_41], %73 {strides = array<i32>} : memref<1x2x8xf32, #tpu.memory_space<vmem>>, vector<1x2x8xf32>,
    return
  }
  func.func @transform_0(%arg0: i32) -> (i32, i32) {
    %c0_i32 = arith.constant 0 : i32
    %c0_i32_0 = arith.constant 0 : i32
    return %arg0, %c0_i32 : i32, i32
  }
  func.func @transform_1(%arg0: i32) -> (i32, i32) {
    %c0_i32 = arith.constant 0 : i32
    %c0_i32_0 = arith.constant 0 : i32
    %c0_i32_1 = arith.constant 0 : i32
    return %c0_i32, %c0_i32_0 : i32, i32
  }
  func.func @transform_2(%arg0: i32) -> (i32, i32) {
    %c0_i32 = arith.constant 0 : i32
    %c0_i32_0 = arith.constant 0 : i32
    %c0_i32_1 = arith.constant 0 : i32
    return %c0_i32, %c0_i32_0 : i32, i32
  }
  func.func @transform_3(%arg0: i32) -> (i32, i32) {
    %c0_i32 = arith.constant 0 : i32
    %c0_i32_0 = arith.constant 0 : i32
    return %arg0, %c0_i32 : i32, i32
  }
  func.func @transform_4(%arg0: i32) -> (i32, i32, i32) {
    %c0_i32 = arith.constant 0 : i32
    %c0_i32_0 = arith.constant 0 : i32
    %c0_i32_1 = arith.constant 0 : i32
    return %arg0, %c0_i32, %c0_i32_0 : i32, i32, i32
  }
}

module attributes {stable_mosaic.version = 11 : i64} {
  func.func @conv1x1_stats_kernel(%arg0: i32, %arg1: memref<512x32xbf16, #tpu.memory_space<vmem>>, %arg2: memref<32x8xbf16, #tpu.memory_space<vmem>>, %arg3: memref<512x8xbf16, #tpu.memory_space<vmem>>, %arg4: memref<1x2x8xf32, #tpu.memory_space<vmem>>) attributes {dimension_semantics = [#tpu.dimension_semantics<parallel>], iteration_bounds = array<i64: 1>, scalar_prefetch = 0 : i64, scratch_operands = 0 : i64, tpu.core_type = #tpu.core_type<tc>, window_params = [{transform_indices = @transform_0, window_bounds = array<i64: 512, 32>}, {pipeline_mode = #tpu.pipeline_mode<synchronous>, transform_indices = @transform_1, window_bounds = array<i64: 32, 8>}, {transform_indices = @transform_2, window_bounds = array<i64: 512, 8>}, {transform_indices = @transform_3, window_bounds = array<i64: 1, 2, 8>}]} {
    %c0 = arith.constant 0 : index
    %c0_0 = arith.constant 0 : index
    %0 = vector.load %arg1[%c0, %c0_0] : memref<512x32xbf16, #tpu.memory_space<vmem>>, vector<512x32xbf16>
    %c0_1 = arith.constant 0 : index
    %c0_2 = arith.constant 0 : index
    %1 = vector.load %arg2[%c0_1, %c0_2] : memref<32x8xbf16, #tpu.memory_space<vmem>>, vector<32x8xbf16>
    %cst = arith.constant dense<0.000000e+00> : vector<512x8xf32>
    %2 = tpu.matmul %0, %1, %cst {dimension_numbers = #tpu.dot_dimension_numbers<[1], [0], [0], [1], [0, 0, 1, 1], [], []>} : vector<512x32xbf16>, vector<32x8xbf16>, vector<512x8xf32> -> vector<512x8xf32>
    %3 = arith.truncf %2 : vector<512x8xf32> to vector<512x8xbf16>
    %c0_3 = arith.constant 0 : index
    %c0_4 = arith.constant 0 : index
    %4 = vector.load %arg3[%c0_3, %c0_4] : memref<512x8xbf16, #tpu.memory_space<vmem>>, vector<512x8xbf16>
    tpu.vector_store %arg3[%c0_3, %c0_4], %3 {strides = array<i32>} : memref<512x8xbf16, #tpu.memory_space<vmem>>, vector<512x8xbf16>,
    %cst_5 = arith.constant dense<0.000000e+00> : vector<8xf32>
    %5 = vector.multi_reduction <add>, %2, %cst_5 [0] : vector<512x8xf32> to vector<8xf32>
    %6 = vector.shape_cast %5 : vector<8xf32> to vector<1x8xf32>
    %7 = arith.mulf %2, %2 : vector<512x8xf32>
    %cst_6 = arith.constant dense<0.000000e+00> : vector<8xf32>
    %8 = vector.multi_reduction <add>, %7, %cst_6 [0] : vector<512x8xf32> to vector<8xf32>
    %9 = vector.shape_cast %8 : vector<8xf32> to vector<1x8xf32>
    %10 = tpu.concatenate %6, %9 in 0 : vector<1x8xf32>, vector<1x8xf32> -> vector<2x8xf32>
    %c0_7 = arith.constant 0 : index
    %c0_8 = arith.constant 0 : index
    %c0_9 = arith.constant 0 : index
    %11 = vector.load %arg4[%c0_7, %c0_8, %c0_9] : memref<1x2x8xf32, #tpu.memory_space<vmem>>, vector<1x2x8xf32>
    %12 = vector.shape_cast %11 : vector<1x2x8xf32> to vector<2x8xf32>
    %13 = vector.shape_cast %10 : vector<2x8xf32> to vector<1x2x8xf32>
    tpu.vector_store %arg4[%c0_7, %c0_8, %c0_9], %13 {strides = array<i32>} : memref<1x2x8xf32, #tpu.memory_space<vmem>>, vector<1x2x8xf32>,
    return
  }
  func.func @transform_0(%arg0: i32) -> (i32, i32) {
    %c0_i32 = arith.constant 0 : i32
    %c0_i32_0 = arith.constant 0 : i32
    return %arg0, %c0_i32 : i32, i32
  }
  func.func @transform_1(%arg0: i32) -> (i32, i32) {
    %c0_i32 = arith.constant 0 : i32
    %c0_i32_0 = arith.constant 0 : i32
    %c0_i32_1 = arith.constant 0 : i32
    return %c0_i32, %c0_i32_0 : i32, i32
  }
  func.func @transform_2(%arg0: i32) -> (i32, i32) {
    %c0_i32 = arith.constant 0 : i32
    %c0_i32_0 = arith.constant 0 : i32
    return %arg0, %c0_i32 : i32, i32
  }
  func.func @transform_3(%arg0: i32) -> (i32, i32, i32) {
    %c0_i32 = arith.constant 0 : i32
    %c0_i32_0 = arith.constant 0 : i32
    %c0_i32_1 = arith.constant 0 : i32
    return %arg0, %c0_i32, %c0_i32_0 : i32, i32, i32
  }
}

module attributes {stable_mosaic.version = 11 : i64} {
  func.func @bn_residual_relu_kernel(%arg0: i32, %arg1: memref<512x32xbf16, #tpu.memory_space<vmem>>, %arg2: memref<512x32xbf16, #tpu.memory_space<vmem>>, %arg3: memref<2x32xf32, #tpu.memory_space<vmem>>, %arg4: memref<512x32xf32, #tpu.memory_space<vmem>>) attributes {dimension_semantics = [#tpu.dimension_semantics<parallel>], iteration_bounds = array<i64: 1>, scalar_prefetch = 0 : i64, scratch_operands = 0 : i64, tpu.core_type = #tpu.core_type<tc>, window_params = [{transform_indices = @transform_0, window_bounds = array<i64: 512, 32>}, {transform_indices = @transform_1, window_bounds = array<i64: 512, 32>}, {pipeline_mode = #tpu.pipeline_mode<synchronous>, transform_indices = @transform_2, window_bounds = array<i64: 2, 32>}, {transform_indices = @transform_3, window_bounds = array<i64: 512, 32>}]} {
    %c0 = arith.constant 0 : index
    %c0_0 = arith.constant 0 : index
    %0 = vector.load %arg1[%c0, %c0_0] : memref<512x32xbf16, #tpu.memory_space<vmem>>, vector<512x32xbf16>
    %1 = arith.extf %0 : vector<512x32xbf16> to vector<512x32xf32>
    %c0_1 = arith.constant 0 : index
    %c0_2 = arith.constant 0 : index
    %2 = vector.load %arg2[%c0_1, %c0_2] : memref<512x32xbf16, #tpu.memory_space<vmem>>, vector<512x32xbf16>
    %3 = arith.extf %2 : vector<512x32xbf16> to vector<512x32xf32>
    %c0_3 = arith.constant 0 : index
    %c0_4 = arith.constant 0 : index
    %4 = vector.load %arg3[%c0_3, %c0_4] : memref<2x32xf32, #tpu.memory_space<vmem>>, vector<1x32xf32>
    %5 = vector.broadcast %4 : vector<1x32xf32> to vector<512x32xf32>
    %6 = arith.mulf %1, %5 : vector<512x32xf32>
    %c1 = arith.constant 1 : index
    %c0_5 = arith.constant 0 : index
    %7 = vector.load %arg3[%c1, %c0_5] : memref<2x32xf32, #tpu.memory_space<vmem>>, vector<1x32xf32>
    %8 = vector.broadcast %7 : vector<1x32xf32> to vector<512x32xf32>
    %9 = arith.addf %6, %8 : vector<512x32xf32>
    %10 = arith.addf %9, %3 : vector<512x32xf32>
    %cst = arith.constant 0.000000e+00 : f32
    %11 = vector.broadcast %cst : f32 to vector<512x32xf32>
    %12 = arith.maximumf %10, %11 : vector<512x32xf32>
    %c0_6 = arith.constant 0 : index
    %c0_7 = arith.constant 0 : index
    %13 = vector.load %arg4[%c0_6, %c0_7] : memref<512x32xf32, #tpu.memory_space<vmem>>, vector<512x32xf32>
    tpu.vector_store %arg4[%c0_6, %c0_7], %12 {strides = array<i32>} : memref<512x32xf32, #tpu.memory_space<vmem>>, vector<512x32xf32>,
    return
  }
  func.func @transform_0(%arg0: i32) -> (i32, i32) {
    %c0_i32 = arith.constant 0 : i32
    %c0_i32_0 = arith.constant 0 : i32
    return %arg0, %c0_i32 : i32, i32
  }
  func.func @transform_1(%arg0: i32) -> (i32, i32) {
    %c0_i32 = arith.constant 0 : i32
    %c0_i32_0 = arith.constant 0 : i32
    return %arg0, %c0_i32 : i32, i32
  }
  func.func @transform_2(%arg0: i32) -> (i32, i32) {
    %c0_i32 = arith.constant 0 : i32
    %c0_i32_0 = arith.constant 0 : i32
    %c0_i32_1 = arith.constant 0 : i32
    return %c0_i32, %c0_i32_0 : i32, i32
  }
  func.func @transform_3(%arg0: i32) -> (i32, i32) {
    %c0_i32 = arith.constant 0 : i32
    %c0_i32_0 = arith.constant 0 : i32
    return %arg0, %c0_i32 : i32, i32
  }
}

module attributes {stable_mosaic.version = 11 : i64} {
  func.func @bn_relu_conv1x1_stats_kernel(%arg0: i32, %arg1: memref<512x8xbf16, #tpu.memory_space<vmem>>, %arg2: memref<2x8xf32, #tpu.memory_space<vmem>>, %arg3: memref<8x32xbf16, #tpu.memory_space<vmem>>, %arg4: memref<512x32xbf16, #tpu.memory_space<vmem>>, %arg5: memref<1x2x32xf32, #tpu.memory_space<vmem>>) attributes {dimension_semantics = [#tpu.dimension_semantics<parallel>], iteration_bounds = array<i64: 1>, scalar_prefetch = 0 : i64, scratch_operands = 0 : i64, tpu.core_type = #tpu.core_type<tc>, window_params = [{transform_indices = @transform_0, window_bounds = array<i64: 512, 8>}, {pipeline_mode = #tpu.pipeline_mode<synchronous>, transform_indices = @transform_1, window_bounds = array<i64: 2, 8>}, {pipeline_mode = #tpu.pipeline_mode<synchronous>, transform_indices = @transform_2, window_bounds = array<i64: 8, 32>}, {transform_indices = @transform_3, window_bounds = array<i64: 512, 32>}, {transform_indices = @transform_4, window_bounds = array<i64: 1, 2, 32>}]} {
    %c0 = arith.constant 0 : index
    %c0_0 = arith.constant 0 : index
    %0 = vector.load %arg1[%c0, %c0_0] : memref<512x8xbf16, #tpu.memory_space<vmem>>, vector<512x8xbf16>
    %1 = arith.extf %0 : vector<512x8xbf16> to vector<512x8xf32>
    %c0_1 = arith.constant 0 : index
    %c0_2 = arith.constant 0 : index
    %2 = vector.load %arg2[%c0_1, %c0_2] : memref<2x8xf32, #tpu.memory_space<vmem>>, vector<1x8xf32>
    %3 = vector.broadcast %2 : vector<1x8xf32> to vector<512x8xf32>
    %4 = arith.mulf %1, %3 : vector<512x8xf32>
    %c1 = arith.constant 1 : index
    %c0_3 = arith.constant 0 : index
    %5 = vector.load %arg2[%c1, %c0_3] : memref<2x8xf32, #tpu.memory_space<vmem>>, vector<1x8xf32>
    %6 = vector.broadcast %5 : vector<1x8xf32> to vector<512x8xf32>
    %7 = arith.addf %4, %6 : vector<512x8xf32>
    %cst = arith.constant 0.000000e+00 : f32
    %8 = vector.broadcast %cst : f32 to vector<512x8xf32>
    %9 = arith.maximumf %7, %8 : vector<512x8xf32>
    %10 = arith.truncf %9 : vector<512x8xf32> to vector<512x8xbf16>
    %c0_4 = arith.constant 0 : index
    %c0_5 = arith.constant 0 : index
    %11 = vector.load %arg3[%c0_4, %c0_5] : memref<8x32xbf16, #tpu.memory_space<vmem>>, vector<8x32xbf16>
    %cst_6 = arith.constant dense<0.000000e+00> : vector<512x32xf32>
    %12 = tpu.matmul %10, %11, %cst_6 {dimension_numbers = #tpu.dot_dimension_numbers<[1], [0], [0], [1], [0, 0, 1, 1], [], []>} : vector<512x8xbf16>, vector<8x32xbf16>, vector<512x32xf32> -> vector<512x32xf32>
    %13 = arith.truncf %12 : vector<512x32xf32> to vector<512x32xbf16>
    %c0_7 = arith.constant 0 : index
    %c0_8 = arith.constant 0 : index
    %14 = vector.load %arg4[%c0_7, %c0_8] : memref<512x32xbf16, #tpu.memory_space<vmem>>, vector<512x32xbf16>
    tpu.vector_store %arg4[%c0_7, %c0_8], %13 {strides = array<i32>} : memref<512x32xbf16, #tpu.memory_space<vmem>>, vector<512x32xbf16>,
    %cst_9 = arith.constant dense<0.000000e+00> : vector<32xf32>
    %15 = vector.multi_reduction <add>, %12, %cst_9 [0] : vector<512x32xf32> to vector<32xf32>
    %16 = vector.shape_cast %15 : vector<32xf32> to vector<1x32xf32>
    %17 = arith.mulf %12, %12 : vector<512x32xf32>
    %cst_10 = arith.constant dense<0.000000e+00> : vector<32xf32>
    %18 = vector.multi_reduction <add>, %17, %cst_10 [0] : vector<512x32xf32> to vector<32xf32>
    %19 = vector.shape_cast %18 : vector<32xf32> to vector<1x32xf32>
    %20 = tpu.concatenate %16, %19 in 0 : vector<1x32xf32>, vector<1x32xf32> -> vector<2x32xf32>
    %c0_11 = arith.constant 0 : index
    %c0_12 = arith.constant 0 : index
    %c0_13 = arith.constant 0 : index
    %21 = vector.load %arg5[%c0_11, %c0_12, %c0_13] : memref<1x2x32xf32, #tpu.memory_space<vmem>>, vector<1x2x32xf32>
    %22 = vector.shape_cast %21 : vector<1x2x32xf32> to vector<2x32xf32>
    %23 = vector.shape_cast %20 : vector<2x32xf32> to vector<1x2x32xf32>
    tpu.vector_store %arg5[%c0_11, %c0_12, %c0_13], %23 {strides = array<i32>} : memref<1x2x32xf32, #tpu.memory_space<vmem>>, vector<1x2x32xf32>,
    return
  }
  func.func @transform_0(%arg0: i32) -> (i32, i32) {
    %c0_i32 = arith.constant 0 : i32
    %c0_i32_0 = arith.constant 0 : i32
    return %arg0, %c0_i32 : i32, i32
  }
  func.func @transform_1(%arg0: i32) -> (i32, i32) {
    %c0_i32 = arith.constant 0 : i32
    %c0_i32_0 = arith.constant 0 : i32
    %c0_i32_1 = arith.constant 0 : i32
    return %c0_i32, %c0_i32_0 : i32, i32
  }
  func.func @transform_2(%arg0: i32) -> (i32, i32) {
    %c0_i32 = arith.constant 0 : i32
    %c0_i32_0 = arith.constant 0 : i32
    %c0_i32_1 = arith.constant 0 : i32
    return %c0_i32, %c0_i32_0 : i32, i32
  }
  func.func @transform_3(%arg0: i32) -> (i32, i32) {
    %c0_i32 = arith.constant 0 : i32
    %c0_i32_0 = arith.constant 0 : i32
    return %arg0, %c0_i32 : i32, i32
  }
  func.func @transform_4(%arg0: i32) -> (i32, i32, i32) {
    %c0_i32 = arith.constant 0 : i32
    %c0_i32_0 = arith.constant 0 : i32
    %c0_i32_1 = arith.constant 0 : i32
    return %arg0, %c0_i32, %c0_i32_0 : i32, i32, i32
  }
}

</mosaic_0001>

<llo_original>
// kernel: bottleneck_forward.7
$region0: #{bottleneck_forward.7}
  #allocation0 [shape = 'u32[]', space=smem, size = 0x4, offset = 0x4, fixed_abs, tag = 'smem constant byte address 0x4 - core index']
  #allocation1 [shape = 'u32[72,128]{1,0:T(1,128)}', space=vmem, size = 0x9000, scoped, tag = 'internal scratch']
  %s0 = inlined_call_operand.vmem [shape: bf16[512,32], index: 0, kind: input, shape index: {}]
  %s1 = inlined_call_operand.vmem [shape: bf16[512,32], index: 1, kind: input, shape index: {}]
  %s2 = inlined_call_operand.vmem [shape: f32[2,32], index: 2, kind: input, shape index: {}]
  %s3 = inlined_call_operand.hbm [shape: f32[512,32], index: 3, kind: output, shape index: {}]
  %s4 = sld [smem:[#allocation0]]
  $region22: #{bottleneck_forward.7} parent=0
    _
  %s6 = ssub.s32 1, %s4
  %s7 = scalar_select 0, %s6, %s4
  $region1: #{bottleneck_forward.7} parent=0
    #allocation2 [shape = 'u8[262144]{0}', space=vmem, size = 0x40000, scoped, tag = 'output window, operand 0, single buffered']
    #allocation3 [shape = 's32[1]{0}', space=sflag, size = 0x4, scoped, tag = 'scoped memory for bottleneck_forward.7']
    %8 = vsyncpa [#allocation3], 0
    // Predicated region
    $region2: #{bottleneck_forward.7} parent=1 // pred_check
      _
    $region3: #{bottleneck_forward.7} parent=1 // pred_check_branch
      %10 = sbr.rel (0) target = $region5
    $region4: #{bottleneck_forward.7} parent=1 // pred_region
      _
    $region5: #{bottleneck_forward.7} parent=1 // pred_fallthru
      _
    // Predicated region
    $region6: #{bottleneck_forward.7} parent=1 // pred_check
      _
    $region7: #{bottleneck_forward.7} parent=1 // pred_check_branch
      %12 = sbr.rel (0) target = $region9
    $region8: #{bottleneck_forward.7} parent=1 // pred_region
      _
    $region9: #{bottleneck_forward.7} parent=1 // pred_fallthru
      _
    // Predicated region
    $region10: #{bottleneck_forward.7} parent=1 // pred_check
      _
    $region11: #{bottleneck_forward.7} parent=1 // pred_check_branch
      %14 = sbr.rel (0) target = $region13
    $region12: #{bottleneck_forward.7} parent=1 // pred_region
      _
    $region13: #{bottleneck_forward.7} parent=1 // pred_fallthru
      _
    %v15 = vld [vmem:[%s0] sm:$0xf]
    %v16 = vld [vmem:[%s0 + $0x4] sm:$0xf]
    %v17 = vld [vmem:[%s0 + $0x8] sm:$0xf]
    %v18 = vld [vmem:[%s0 + $0xc] sm:$0xf]
    %v19 = vld [vmem:[%s0 + $0x10] sm:$0xf]
    %v20 = vld [vmem:[%s0 + $0x14] sm:$0xf]
    %v21 = vld [vmem:[%s0 + $0x18] sm:$0xf]
    %v22 = vld [vmem:[%s0 + $0x1c] sm:$0xf]
    %v23 = vld [vmem:[%s0 + $0x20] sm:$0xf]
    %v24 = vld [vmem:[%s0 + $0x24] sm:$0xf]
    %v25 = vld [vmem:[%s0 + $0x28] sm:$0xf]
    %v26 = vld [vmem:[%s0 + $0x2c] sm:$0xf]
    %v27 = vld [vmem:[%s0 + $0x30] sm:$0xf]
    %v28 = vld [vmem:[%s0 + $0x34] sm:$0xf]
    %v29 = vld [vmem:[%s0 + $0x38] sm:$0xf]
    %v30 = vld [vmem:[%s0 + $0x3c] sm:$0xf]
    %v31 = vld [vmem:[%s0 + $0x40] sm:$0xf]
    %v32 = vld [vmem:[%s0 + $0x44] sm:$0xf]
    %v33 = vld [vmem:[%s0 + $0x48] sm:$0xf]
    %v34 = vld [vmem:[%s0 + $0x4c] sm:$0xf]
    %v35 = vld [vmem:[%s0 + $0x50] sm:$0xf]
    %v36 = vld [vmem:[%s0 + $0x54] sm:$0xf]
    %v37 = vld [vmem:[%s0 + $0x58] sm:$0xf]
    %v38 = vld [vmem:[%s0 + $0x5c] sm:$0xf]
    %v39 = vld [vmem:[%s0 + $0x60] sm:$0xf]
    %v40 = vld [vmem:[%s0 + $0x64] sm:$0xf]
    %v41 = vld [vmem:[%s0 + $0x68] sm:$0xf]
    %v42 = vld [vmem:[%s0 + $0x6c] sm:$0xf]
    %v43 = vld [vmem:[%s0 + $0x70] sm:$0xf]
    %v44 = vld [vmem:[%s0 + $0x74] sm:$0xf]
    %v45 = vld [vmem:[%s0 + $0x78] sm:$0xf]
    %v46 = vld [vmem:[%s0 + $0x7c] sm:$0xf]
    %v47 = vld [vmem:[%s0 + $0x80] sm:$0xf]
    %v48 = vld [vmem:[%s0 + $0x84] sm:$0xf]
    %v49 = vld [vmem:[%s0 + $0x88] sm:$0xf]
    %v50 = vld [vmem:[%s0 + $0x8c] sm:$0xf]
    %v51 = vld [vmem:[%s0 + $0x90] sm:$0xf]
    %v52 = vld [vmem:[%s0 + $0x94] sm:$0xf]
    %v53 = vld [vmem:[%s0 + $0x98] sm:$0xf]
    %v54 = vld [vmem:[%s0 + $0x9c] sm:$0xf]
    %v55 = vld [vmem:[%s0 + $0xa0] sm:$0xf]
    %v56 = vld [vmem:[%s0 + $0xa4] sm:$0xf]
    %v57 = vld [vmem:[%s0 + $0xa8] sm:$0xf]
    %v58 = vld [vmem:[%s0 + $0xac] sm:$0xf]
    %v59 = vld [vmem:[%s0 + $0xb0] sm:$0xf]
    %v60 = vld [vmem:[%s0 + $0xb4] sm:$0xf]
    %v61 = vld [vmem:[%s0 + $0xb8] sm:$0xf]
    %v62 = vld [vmem:[%s0 + $0xbc] sm:$0xf]
    %v63 = vld [vmem:[%s0 + $0xc0] sm:$0xf]
    %v64 = vld [vmem:[%s0 + $0xc4] sm:$0xf]
    %v65 = vld [vmem:[%s0 + $0xc8] sm:$0xf]
    %v66 = vld [vmem:[%s0 + $0xcc] sm:$0xf]
    %v67 = vld [vmem:[%s0 + $0xd0] sm:$0xf]
    %v68 = vld [vmem:[%s0 + $0xd4] sm:$0xf]
    %v69 = vld [vmem:[%s0 + $0xd8] sm:$0xf]
    %v70 = vld [vmem:[%s0 + $0xdc] sm:$0xf]
    %v71 = vld [vmem:[%s0 + $0xe0] sm:$0xf]
    %v72 = vld [vmem:[%s0 + $0xe4] sm:$0xf]
    %v73 = vld [vmem:[%s0 + $0xe8] sm:$0xf]
    %v74 = vld [vmem:[%s0 + $0xec] sm:$0xf]
    %v75 = vld [vmem:[%s0 + $0xf0] sm:$0xf]
    %v76 = vld [vmem:[%s0 + $0xf4] sm:$0xf]
    %v77 = vld [vmem:[%s0 + $0xf8] sm:$0xf]
    %v78 = vld [vmem:[%s0 + $0xfc] sm:$0xf]
    %v79 = vunpack.c.l.bf16 %v15
    %v80 = vunpack.c.l.bf16 %v16
    %v81 = vunpack.c.l.bf16 %v17
    %v82 = vunpack.c.l.bf16 %v18
    %v83 = vunpack.c.l.bf16 %v19
    %v84 = vunpack.c.l.bf16 %v20
    %v85 = vunpack.c.l.bf16 %v21
    %v86 = vunpack.c.l.bf16 %v22
    %v87 = vunpack.c.l.bf16 %v23
    %v88 = vunpack.c.l.bf16 %v24
    %v89 = vunpack.c.l.bf16 %v25
    %v90 = vunpack.c.l.bf16 %v26
    %v91 = vunpack.c.l.bf16 %v27
    %v92 = vunpack.c.l.bf16 %v28
    %v93 = vunpack.c.l.bf16 %v29
    %v94 = vunpack.c.l.bf16 %v30
    %v95 = vunpack.c.l.bf16 %v31
    %v96 = vunpack.c.l.bf16 %v32
    %v97 = vunpack.c.l.bf16 %v33
    %v98 = vunpack.c.l.bf16 %v34
    %v99 = vunpack.c.l.bf16 %v35
    %v100 = vunpack.c.l.bf16 %v36
    %v101 = vunpack.c.l.bf16 %v37
    %v102 = vunpack.c.l.bf16 %v38
    %v103 = vunpack.c.l.bf16 %v39
    %v104 = vunpack.c.l.bf16 %v40
    %v105 = vunpack.c.l.bf16 %v41
    %v106 = vunpack.c.l.bf16 %v42
    %v107 = vunpack.c.l.bf16 %v43
    %v108 = vunpack.c.l.bf16 %v44
    %v109 = vunpack.c.l.bf16 %v45
    %v110 = vunpack.c.l.bf16 %v46
    %v111 = vunpack.c.l.bf16 %v47
    %v112 = vunpack.c.l.bf16 %v48
    %v113 = vunpack.c.l.bf16 %v49
    %v114 = vunpack.c.l.bf16 %v50
    %v115 = vunpack.c.l.bf16 %v51
    %v116 = vunpack.c.l.bf16 %v52
    %v117 = vunpack.c.l.bf16 %v53
    %v118 = vunpack.c.l.bf16 %v54
    %v119 = vunpack.c.l.bf16 %v55
    %v120 = vunpack.c.l.bf16 %v56
    %v121 = vunpack.c.l.bf16 %v57
    %v122 = vunpack.c.l.bf16 %v58
    %v123 = vunpack.c.l.bf16 %v59
    %v124 = vunpack.c.l.bf16 %v60
    %v125 = vunpack.c.l.bf16 %v61
    %v126 = vunpack.c.l.bf16 %v62
    %v127 = vunpack.c.l.bf16 %v63
    %v128 = vunpack.c.l.bf16 %v64
    %v129 = vunpack.c.l.bf16 %v65
    %v130 = vunpack.c.l.bf16 %v66
    %v131 = vunpack.c.l.bf16 %v67
    %v132 = vunpack.c.l.bf16 %v68
    %v133 = vunpack.c.l.bf16 %v69
    %v134 = vunpack.c.l.bf16 %v70
    %v135 = vunpack.c.l.bf16 %v71
    %v136 = vunpack.c.l.bf16 %v72
    %v137 = vunpack.c.l.bf16 %v73
    %v138 = vunpack.c.l.bf16 %v74
    %v139 = vunpack.c.l.bf16 %v75
    %v140 = vunpack.c.l.bf16 %v76
    %v141 = vunpack.c.l.bf16 %v77
    %v142 = vunpack.c.l.bf16 %v78
    %v143 = vld [vmem:[%s1] sm:$0xf]
    %v144 = vld [vmem:[%s1 + $0x4] sm:$0xf]
    %v145 = vld [vmem:[%s1 + $0x8] sm:$0xf]
    %v146 = vld [vmem:[%s1 + $0xc] sm:$0xf]
    %v147 = vld [vmem:[%s1 + $0x10] sm:$0xf]
    %v148 = vld [vmem:[%s1 + $0x14] sm:$0xf]
    %v149 = vld [vmem:[%s1 + $0x18] sm:$0xf]
    %v150 = vld [vmem:[%s1 + $0x1c] sm:$0xf]
    %v151 = vld [vmem:[%s1 + $0x20] sm:$0xf]
    %v152 = vld [vmem:[%s1 + $0x24] sm:$0xf]
    %v153 = vld [vmem:[%s1 + $0x28] sm:$0xf]
    %v154 = vld [vmem:[%s1 + $0x2c] sm:$0xf]
    %v155 = vld [vmem:[%s1 + $0x30] sm:$0xf]
    %v156 = vld [vmem:[%s1 + $0x34] sm:$0xf]
    %v157 = vld [vmem:[%s1 + $0x38] sm:$0xf]
    %v158 = vld [vmem:[%s1 + $0x3c] sm:$0xf]
    %v159 = vld [vmem:[%s1 + $0x40] sm:$0xf]
    %v160 = vld [vmem:[%s1 + $0x44] sm:$0xf]
    %v161 = vld [vmem:[%s1 + $0x48] sm:$0xf]
    %v162 = vld [vmem:[%s1 + $0x4c] sm:$0xf]
    %v163 = vld [vmem:[%s1 + $0x50] sm:$0xf]
    %v164 = vld [vmem:[%s1 + $0x54] sm:$0xf]
    %v165 = vld [vmem:[%s1 + $0x58] sm:$0xf]
    %v166 = vld [vmem:[%s1 + $0x5c] sm:$0xf]
    %v167 = vld [vmem:[%s1 + $0x60] sm:$0xf]
    %v168 = vld [vmem:[%s1 + $0x64] sm:$0xf]
    %v169 = vld [vmem:[%s1 + $0x68] sm:$0xf]
    %v170 = vld [vmem:[%s1 + $0x6c] sm:$0xf]
    %v171 = vld [vmem:[%s1 + $0x70] sm:$0xf]
    %v172 = vld [vmem:[%s1 + $0x74] sm:$0xf]
    %v173 = vld [vmem:[%s1 + $0x78] sm:$0xf]
    %v174 = vld [vmem:[%s1 + $0x7c] sm:$0xf]
    %v175 = vld [vmem:[%s1 + $0x80] sm:$0xf]
    %v176 = vld [vmem:[%s1 + $0x84] sm:$0xf]
    %v177 = vld [vmem:[%s1 + $0x88] sm:$0xf]
    %v178 = vld [vmem:[%s1 + $0x8c] sm:$0xf]
    %v179 = vld [vmem:[%s1 + $0x90] sm:$0xf]
    %v180 = vld [vmem:[%s1 + $0x94] sm:$0xf]
    %v181 = vld [vmem:[%s1 + $0x98] sm:$0xf]
    %v182 = vld [vmem:[%s1 + $0x9c] sm:$0xf]
    %v183 = vld [vmem:[%s1 + $0xa0] sm:$0xf]
    %v184 = vld [vmem:[%s1 + $0xa4] sm:$0xf]
    %v185 = vld [vmem:[%s1 + $0xa8] sm:$0xf]
    %v186 = vld [vmem:[%s1 + $0xac] sm:$0xf]
    %v187 = vld [vmem:[%s1 + $0xb0] sm:$0xf]
    %v188 = vld [vmem:[%s1 + $0xb4] sm:$0xf]
    %v189 = vld [vmem:[%s1 + $0xb8] sm:$0xf]
    %v190 = vld [vmem:[%s1 + $0xbc] sm:$0xf]
    %v191 = vld [vmem:[%s1 + $0xc0] sm:$0xf]
    %v192 = vld [vmem:[%s1 + $0xc4] sm:$0xf]
    %v193 = vld [vmem:[%s1 + $0xc8] sm:$0xf]
    %v194 = vld [vmem:[%s1 + $0xcc] sm:$0xf]
    %v195 = vld [vmem:[%s1 + $0xd0] sm:$0xf]
    %v196 = vld [vmem:[%s1 + $0xd4] sm:$0xf]
    %v197 = vld [vmem:[%s1 + $0xd8] sm:$0xf]
    %v198 = vld [vmem:[%s1 + $0xdc] sm:$0xf]
    %v199 = vld [vmem:[%s1 + $0xe0] sm:$0xf]
    %v200 = vld [vmem:[%s1 + $0xe4] sm:$0xf]
    %v201 = vld [vmem:[%s1 + $0xe8] sm:$0xf]
    %v202 = vld [vmem:[%s1 + $0xec] sm:$0xf]
    %v203 = vld [vmem:[%s1 + $0xf0] sm:$0xf]
    %v204 = vld [vmem:[%s1 + $0xf4] sm:$0xf]
    %v205 = vld [vmem:[%s1 + $0xf8] sm:$0xf]
    %v206 = vld [vmem:[%s1 + $0xfc] sm:$0xf]
    %v207 = vunpack.c.l.bf16 %v143
    %v208 = vunpack.c.l.bf16 %v144
    %v209 = vunpack.c.l.bf16 %v145
    %v210 = vunpack.c.l.bf16 %v146
    %v211 = vunpack.c.l.bf16 %v147
    %v212 = vunpack.c.l.bf16 %v148
    %v213 = vunpack.c.l.bf16 %v149
    %v214 = vunpack.c.l.bf16 %v150
    %v215 = vunpack.c.l.bf16 %v151
    %v216 = vunpack.c.l.bf16 %v152
    %v217 = vunpack.c.l.bf16 %v153
    %v218 = vunpack.c.l.bf16 %v154
    %v219 = vunpack.c.l.bf16 %v155
    %v220 = vunpack.c.l.bf16 %v156
    %v221 = vunpack.c.l.bf16 %v157
    %v222 = vunpack.c.l.bf16 %v158
    %v223 = vunpack.c.l.bf16 %v159
    %v224 = vunpack.c.l.bf16 %v160
    %v225 = vunpack.c.l.bf16 %v161
    %v226 = vunpack.c.l.bf16 %v162
    %v227 = vunpack.c.l.bf16 %v163
    %v228 = vunpack.c.l.bf16 %v164
    %v229 = vunpack.c.l.bf16 %v165
    %v230 = vunpack.c.l.bf16 %v166
    %v231 = vunpack.c.l.bf16 %v167
    %v232 = vunpack.c.l.bf16 %v168
    %v233 = vunpack.c.l.bf16 %v169
    %v234 = vunpack.c.l.bf16 %v170
    %v235 = vunpack.c.l.bf16 %v171
    %v236 = vunpack.c.l.bf16 %v172
    %v237 = vunpack.c.l.bf16 %v173
    %v238 = vunpack.c.l.bf16 %v174
    %v239 = vunpack.c.l.bf16 %v175
    %v240 = vunpack.c.l.bf16 %v176
    %v241 = vunpack.c.l.bf16 %v177
    %v242 = vunpack.c.l.bf16 %v178
    %v243 = vunpack.c.l.bf16 %v179
    %v244 = vunpack.c.l.bf16 %v180
    %v245 = vunpack.c.l.bf16 %v181
    %v246 = vunpack.c.l.bf16 %v182
    %v247 = vunpack.c.l.bf16 %v183
    %v248 = vunpack.c.l.bf16 %v184
    %v249 = vunpack.c.l.bf16 %v185
    %v250 = vunpack.c.l.bf16 %v186
    %v251 = vunpack.c.l.bf16 %v187
    %v252 = vunpack.c.l.bf16 %v188
    %v253 = vunpack.c.l.bf16 %v189
    %v254 = vunpack.c.l.bf16 %v190
    %v255 = vunpack.c.l.bf16 %v191
    %v256 = vunpack.c.l.bf16 %v192
    %v257 = vunpack.c.l.bf16 %v193
    %v258 = vunpack.c.l.bf16 %v194
    %v259 = vunpack.c.l.bf16 %v195
    %v260 = vunpack.c.l.bf16 %v196
    %v261 = vunpack.c.l.bf16 %v197
    %v262 = vunpack.c.l.bf16 %v198
    %v263 = vunpack.c.l.bf16 %v199
    %v264 = vunpack.c.l.bf16 %v200
    %v265 = vunpack.c.l.bf16 %v201
    %v266 = vunpack.c.l.bf16 %v202
    %v267 = vunpack.c.l.bf16 %v203
    %v268 = vunpack.c.l.bf16 %v204
    %v269 = vunpack.c.l.bf16 %v205
    %v270 = vunpack.c.l.bf16 %v206
    %v271 = vld [vmem:[%s2] sm:$0x1]
    %v272 = vperm.slane %v271, 0
    %v273 = vmul.f32 %v79, %v272
    %v274 = vmul.f32 %v80, %v272
    %v275 = vmul.f32 %v81, %v272
    %v276 = vmul.f32 %v82, %v272
    %v277 = vmul.f32 %v83, %v272
    %v278 = vmul.f32 %v84, %v272
    %v279 = vmul.f32 %v85, %v272
    %v280 = vmul.f32 %v86, %v272
    %v281 = vmul.f32 %v87, %v272
    %v282 = vmul.f32 %v88, %v272
    %v283 = vmul.f32 %v89, %v272
    %v284 = vmul.f32 %v90, %v272
    %v285 = vmul.f32 %v91, %v272
    %v286 = vmul.f32 %v92, %v272
    %v287 = vmul.f32 %v93, %v272
    %v288 = vmul.f32 %v94, %v272
    %v289 = vmul.f32 %v95, %v272
    %v290 = vmul.f32 %v96, %v272
    %v291 = vmul.f32 %v97, %v272
    %v292 = vmul.f32 %v98, %v272
    %v293 = vmul.f32 %v99, %v272
    %v294 = vmul.f32 %v100, %v272
    %v295 = vmul.f32 %v101, %v272
    %v296 = vmul.f32 %v102, %v272
    %v297 = vmul.f32 %v103, %v272
    %v298 = vmul.f32 %v104, %v272
    %v299 = vmul.f32 %v105, %v272
    %v300 = vmul.f32 %v106, %v272
    %v301 = vmul.f32 %v107, %v272
    %v302 = vmul.f32 %v108, %v272
    %v303 = vmul.f32 %v109, %v272
    %v304 = vmul.f32 %v110, %v272
    %v305 = vmul.f32 %v111, %v272
    %v306 = vmul.f32 %v112, %v272
    %v307 = vmul.f32 %v113, %v272
    %v308 = vmul.f32 %v114, %v272
    %v309 = vmul.f32 %v115, %v272
    %v310 = vmul.f32 %v116, %v272
    %v311 = vmul.f32 %v117, %v272
    %v312 = vmul.f32 %v118, %v272
    %v313 = vmul.f32 %v119, %v272
    %v314 = vmul.f32 %v120, %v272
    %v315 = vmul.f32 %v121, %v272
    %v316 = vmul.f32 %v122, %v272
    %v317 = vmul.f32 %v123, %v272
    %v318 = vmul.f32 %v124, %v272
    %v319 = vmul.f32 %v125, %v272
    %v320 = vmul.f32 %v126, %v272
    %v321 = vmul.f32 %v127, %v272
    %v322 = vmul.f32 %v128, %v272
    %v323 = vmul.f32 %v129, %v272
    %v324 = vmul.f32 %v130, %v272
    %v325 = vmul.f32 %v131, %v272
    %v326 = vmul.f32 %v132, %v272
    %v327 = vmul.f32 %v133, %v272
    %v328 = vmul.f32 %v134, %v272
    %v329 = vmul.f32 %v135, %v272
    %v330 = vmul.f32 %v136, %v272
    %v331 = vmul.f32 %v137, %v272
    %v332 = vmul.f32 %v138, %v272
    %v333 = vmul.f32 %v139, %v272
    %v334 = vmul.f32 %v140, %v272
    %v335 = vmul.f32 %v141, %v272
    %v336 = vmul.f32 %v142, %v272
    %v337 = vld [vmem:[%s2 + $0x1] sm:$0x1]
    %v338 = vperm.slane %v337, 0
    %v339 = vadd.f32 %v273, %v338
    %v340 = vadd.f32 %v274, %v338
    %v341 = vadd.f32 %v275, %v338
    %v342 = vadd.f32 %v276, %v338
    %v343 = vadd.f32 %v277, %v338
    %v344 = vadd.f32 %v278, %v338
    %v345 = vadd.f32 %v279, %v338
    %v346 = vadd.f32 %v280, %v338
    %v347 = vadd.f32 %v281, %v338
    %v348 = vadd.f32 %v282, %v338
    %v349 = vadd.f32 %v283, %v338
    %v350 = vadd.f32 %v284, %v338
    %v351 = vadd.f32 %v285, %v338
    %v352 = vadd.f32 %v286, %v338
    %v353 = vadd.f32 %v287, %v338
    %v354 = vadd.f32 %v288, %v338
    %v355 = vadd.f32 %v289, %v338
    %v356 = vadd.f32 %v290, %v338
    %v357 = vadd.f32 %v291, %v338
    %v358 = vadd.f32 %v292, %v338
    %v359 = vadd.f32 %v293, %v338
    %v360 = vadd.f32 %v294, %v338
    %v361 = vadd.f32 %v295, %v338
    %v362 = vadd.f32 %v296, %v338
    %v363 = vadd.f32 %v297, %v338
    %v364 = vadd.f32 %v298, %v338
    %v365 = vadd.f32 %v299, %v338
    %v366 = vadd.f32 %v300, %v338
    %v367 = vadd.f32 %v301, %v338
    %v368 = vadd.f32 %v302, %v338
    %v369 = vadd.f32 %v303, %v338
    %v370 = vadd.f32 %v304, %v338
    %v371 = vadd.f32 %v305, %v338
    %v372 = vadd.f32 %v306, %v338
    %v373 = vadd.f32 %v307, %v338
    %v374 = vadd.f32 %v308, %v338
    %v375 = vadd.f32 %v309, %v338
    %v376 = vadd.f32 %v310, %v338
    %v377 = vadd.f32 %v311, %v338
    %v378 = vadd.f32 %v312, %v338
    %v379 = vadd.f32 %v313, %v338
    %v380 = vadd.f32 %v314, %v338
    %v381 = vadd.f32 %v315, %v338
    %v382 = vadd.f32 %v316, %v338
    %v383 = vadd.f32 %v317, %v338
    %v384 = vadd.f32 %v318, %v338
    %v385 = vadd.f32 %v319, %v338
    %v386 = vadd.f32 %v320, %v338
    %v387 = vadd.f32 %v321, %v338
    %v388 = vadd.f32 %v322, %v338
    %v389 = vadd.f32 %v323, %v338
    %v390 = vadd.f32 %v324, %v338
    %v391 = vadd.f32 %v325, %v338
    %v392 = vadd.f32 %v326, %v338
    %v393 = vadd.f32 %v327, %v338
    %v394 = vadd.f32 %v328, %v338
    %v395 = vadd.f32 %v329, %v338
    %v396 = vadd.f32 %v330, %v338
    %v397 = vadd.f32 %v331, %v338
    %v398 = vadd.f32 %v332, %v338
    %v399 = vadd.f32 %v333, %v338
    %v400 = vadd.f32 %v334, %v338
    %v401 = vadd.f32 %v335, %v338
    %v402 = vadd.f32 %v336, %v338
    %v403 = vadd.f32 %v339, %v207
    %v404 = vadd.f32 %v340, %v208
    %v405 = vadd.f32 %v341, %v209
    %v406 = vadd.f32 %v342, %v210
    %v407 = vadd.f32 %v343, %v211
    %v408 = vadd.f32 %v344, %v212
    %v409 = vadd.f32 %v345, %v213
    %v410 = vadd.f32 %v346, %v214
    %v411 = vadd.f32 %v347, %v215
    %v412 = vadd.f32 %v348, %v216
    %v413 = vadd.f32 %v349, %v217
    %v414 = vadd.f32 %v350, %v218
    %v415 = vadd.f32 %v351, %v219
    %v416 = vadd.f32 %v352, %v220
    %v417 = vadd.f32 %v353, %v221
    %v418 = vadd.f32 %v354, %v222
    %v419 = vadd.f32 %v355, %v223
    %v420 = vadd.f32 %v356, %v224
    %v421 = vadd.f32 %v357, %v225
    %v422 = vadd.f32 %v358, %v226
    %v423 = vadd.f32 %v359, %v227
    %v424 = vadd.f32 %v360, %v228
    %v425 = vadd.f32 %v361, %v229
    %v426 = vadd.f32 %v362, %v230
    %v427 = vadd.f32 %v363, %v231
    %v428 = vadd.f32 %v364, %v232
    %v429 = vadd.f32 %v365, %v233
    %v430 = vadd.f32 %v366, %v234
    %v431 = vadd.f32 %v367, %v235
    %v432 = vadd.f32 %v368, %v236
    %v433 = vadd.f32 %v369, %v237
    %v434 = vadd.f32 %v370, %v238
    %v435 = vadd.f32 %v371, %v239
    %v436 = vadd.f32 %v372, %v240
    %v437 = vadd.f32 %v373, %v241
    %v438 = vadd.f32 %v374, %v242
    %v439 = vadd.f32 %v375, %v243
    %v440 = vadd.f32 %v376, %v244
    %v441 = vadd.f32 %v377, %v245
    %v442 = vadd.f32 %v378, %v246
    %v443 = vadd.f32 %v379, %v247
    %v444 = vadd.f32 %v380, %v248
    %v445 = vadd.f32 %v381, %v249
    %v446 = vadd.f32 %v382, %v250
    %v447 = vadd.f32 %v383, %v251
    %v448 = vadd.f32 %v384, %v252
    %v449 = vadd.f32 %v385, %v253
    %v450 = vadd.f32 %v386, %v254
    %v451 = vadd.f32 %v387, %v255
    %v452 = vadd.f32 %v388, %v256
    %v453 = vadd.f32 %v389, %v257
    %v454 = vadd.f32 %v390, %v258
    %v455 = vadd.f32 %v391, %v259
    %v456 = vadd.f32 %v392, %v260
    %v457 = vadd.f32 %v393, %v261
    %v458 = vadd.f32 %v394, %v262
    %v459 = vadd.f32 %v395, %v263
    %v460 = vadd.f32 %v396, %v264
    %v461 = vadd.f32 %v397, %v265
    %v462 = vadd.f32 %v398, %v266
    %v463 = vadd.f32 %v399, %v267
    %v464 = vadd.f32 %v400, %v268
    %v465 = vadd.f32 %v401, %v269
    %v466 = vadd.f32 %v402, %v270
    %v467 = vmax.f32 %v403, 0.0
    %v468 = vmax.f32 %v404, 0.0
    %v469 = vmax.f32 %v405, 0.0
    %v470 = vmax.f32 %v406, 0.0
    %v471 = vmax.f32 %v407, 0.0
    %v472 = vmax.f32 %v408, 0.0
    %v473 = vmax.f32 %v409, 0.0
    %v474 = vmax.f32 %v410, 0.0
    %v475 = vmax.f32 %v411, 0.0
    %v476 = vmax.f32 %v412, 0.0
    %v477 = vmax.f32 %v413, 0.0
    %v478 = vmax.f32 %v414, 0.0
    %v479 = vmax.f32 %v415, 0.0
    %v480 = vmax.f32 %v416, 0.0
    %v481 = vmax.f32 %v417, 0.0
    %v482 = vmax.f32 %v418, 0.0
    %v483 = vmax.f32 %v419, 0.0
    %v484 = vmax.f32 %v420, 0.0
    %v485 = vmax.f32 %v421, 0.0
    %v486 = vmax.f32 %v422, 0.0
    %v487 = vmax.f32 %v423, 0.0
    %v488 = vmax.f32 %v424, 0.0
    %v489 = vmax.f32 %v425, 0.0
    %v490 = vmax.f32 %v426, 0.0
    %v491 = vmax.f32 %v427, 0.0
    %v492 = vmax.f32 %v428, 0.0
    %v493 = vmax.f32 %v429, 0.0
    %v494 = vmax.f32 %v430, 0.0
    %v495 = vmax.f32 %v431, 0.0
    %v496 = vmax.f32 %v432, 0.0
    %v497 = vmax.f32 %v433, 0.0
    %v498 = vmax.f32 %v434, 0.0
    %v499 = vmax.f32 %v435, 0.0
    %v500 = vmax.f32 %v436, 0.0
    %v501 = vmax.f32 %v437, 0.0
    %v502 = vmax.f32 %v438, 0.0
    %v503 = vmax.f32 %v439, 0.0
    %v504 = vmax.f32 %v440, 0.0
    %v505 = vmax.f32 %v441, 0.0
    %v506 = vmax.f32 %v442, 0.0
    %v507 = vmax.f32 %v443, 0.0
    %v508 = vmax.f32 %v444, 0.0
    %v509 = vmax.f32 %v445, 0.0
    %v510 = vmax.f32 %v446, 0.0
    %v511 = vmax.f32 %v447, 0.0
    %v512 = vmax.f32 %v448, 0.0
    %v513 = vmax.f32 %v449, 0.0
    %v514 = vmax.f32 %v450, 0.0
    %v515 = vmax.f32 %v451, 0.0
    %v516 = vmax.f32 %v452, 0.0
    %v517 = vmax.f32 %v453, 0.0
    %v518 = vmax.f32 %v454, 0.0
    %v519 = vmax.f32 %v455, 0.0
    %v520 = vmax.f32 %v456, 0.0
    %v521 = vmax.f32 %v457, 0.0
    %v522 = vmax.f32 %v458, 0.0
    %v523 = vmax.f32 %v459, 0.0
    %v524 = vmax.f32 %v460, 0.0
    %v525 = vmax.f32 %v461, 0.0
    %v526 = vmax.f32 %v462, 0.0
    %v527 = vmax.f32 %v463, 0.0
    %v528 = vmax.f32 %v464, 0.0
    %v529 = vmax.f32 %v465, 0.0
    %v530 = vmax.f32 %v466, 0.0
    %vm531 = vcmask 261120
    %532 = vst.msk [vmem:[#allocation2] sm:$0xff] %vm531, %v467
    %533 = vst.msk [vmem:[#allocation2 + $0x8] sm:$0xff] %vm531, %v468
    %534 = vst.msk [vmem:[#allocation2 + $0x10] sm:$0xff] %vm531, %v469
    %535 = vst.msk [vmem:[#allocation2 + $0x18] sm:$0xff] %vm531, %v470
    %536 = vst.msk [vmem:[#allocation2 + $0x20] sm:$0xff] %vm531, %v471
    %537 = vst.msk [vmem:[#allocation2 + $0x28] sm:$0xff] %vm531, %v472
    %538 = vst.msk [vmem:[#allocation2 + $0x30] sm:$0xff] %vm531, %v473
    %539 = vst.msk [vmem:[#allocation2 + $0x38] sm:$0xff] %vm531, %v474
    %540 = vst.msk [vmem:[#allocation2 + $0x40] sm:$0xff] %vm531, %v475
    %541 = vst.msk [vmem:[#allocation2 + $0x48] sm:$0xff] %vm531, %v476
    %542 = vst.msk [vmem:[#allocation2 + $0x50] sm:$0xff] %vm531, %v477
    %543 = vst.msk [vmem:[#allocation2 + $0x58] sm:$0xff] %vm531, %v478
    %544 = vst.msk [vmem:[#allocation2 + $0x60] sm:$0xff] %vm531, %v479
    %545 = vst.msk [vmem:[#allocation2 + $0x68] sm:$0xff] %vm531, %v480
    %546 = vst.msk [vmem:[#allocation2 + $0x70] sm:$0xff] %vm531, %v481
    %547 = vst.msk [vmem:[#allocation2 + $0x78] sm:$0xff] %vm531, %v482
    %548 = vst.msk [vmem:[#allocation2 + $0x80] sm:$0xff] %vm531, %v483
    %549 = vst.msk [vmem:[#allocation2 + $0x88] sm:$0xff] %vm531, %v484
    %550 = vst.msk [vmem:[#allocation2 + $0x90] sm:$0xff] %vm531, %v485
    %551 = vst.msk [vmem:[#allocation2 + $0x98] sm:$0xff] %vm531, %v486
    %552 = vst.msk [vmem:[#allocation2 + $0xa0] sm:$0xff] %vm531, %v487
    %553 = vst.msk [vmem:[#allocation2 + $0xa8] sm:$0xff] %vm531, %v488
    %554 = vst.msk [vmem:[#allocation2 + $0xb0] sm:$0xff] %vm531, %v489
    %555 = vst.msk [vmem:[#allocation2 + $0xb8] sm:$0xff] %vm531, %v490
    %556 = vst.msk [vmem:[#allocation2 + $0xc0] sm:$0xff] %vm531, %v491
    %557 = vst.msk [vmem:[#allocation2 + $0xc8] sm:$0xff] %vm531, %v492
    %558 = vst.msk [vmem:[#allocation2 + $0xd0] sm:$0xff] %vm531, %v493
    %559 = vst.msk [vmem:[#allocation2 + $0xd8] sm:$0xff] %vm531, %v494
    %560 = vst.msk [vmem:[#allocation2 + $0xe0] sm:$0xff] %vm531, %v495
    %561 = vst.msk [vmem:[#allocation2 + $0xe8] sm:$0xff] %vm531, %v496
    %562 = vst.msk [vmem:[#allocation2 + $0xf0] sm:$0xff] %vm531, %v497
    %563 = vst.msk [vmem:[#allocation2 + $0xf8] sm:$0xff] %vm531, %v498
    %564 = vst.msk [vmem:[#allocation2 + $0x100] sm:$0xff] %vm531, %v499
    %565 = vst.msk [vmem:[#allocation2 + $0x108] sm:$0xff] %vm531, %v500
    %566 = vst.msk [vmem:[#allocation2 + $0x110] sm:$0xff] %vm531, %v501
    %567 = vst.msk [vmem:[#allocation2 + $0x118] sm:$0xff] %vm531, %v502
    %568 = vst.msk [vmem:[#allocation2 + $0x120] sm:$0xff] %vm531, %v503
    %569 = vst.msk [vmem:[#allocation2 + $0x128] sm:$0xff] %vm531, %v504
    %570 = vst.msk [vmem:[#allocation2 + $0x130] sm:$0xff] %vm531, %v505
    %571 = vst.msk [vmem:[#allocation2 + $0x138] sm:$0xff] %vm531, %v506
    %572 = vst.msk [vmem:[#allocation2 + $0x140] sm:$0xff] %vm531, %v507
    %573 = vst.msk [vmem:[#allocation2 + $0x148] sm:$0xff] %vm531, %v508
    %574 = vst.msk [vmem:[#allocation2 + $0x150] sm:$0xff] %vm531, %v509
    %575 = vst.msk [vmem:[#allocation2 + $0x158] sm:$0xff] %vm531, %v510
    %576 = vst.msk [vmem:[#allocation2 + $0x160] sm:$0xff] %vm531, %v511
    %577 = vst.msk [vmem:[#allocation2 + $0x168] sm:$0xff] %vm531, %v512
    %578 = vst.msk [vmem:[#allocation2 + $0x170] sm:$0xff] %vm531, %v513
    %579 = vst.msk [vmem:[#allocation2 + $0x178] sm:$0xff] %vm531, %v514
    %580 = vst.msk [vmem:[#allocation2 + $0x180] sm:$0xff] %vm531, %v515
    %581 = vst.msk [vmem:[#allocation2 + $0x188] sm:$0xff] %vm531, %v516
    %582 = vst.msk [vmem:[#allocation2 + $0x190] sm:$0xff] %vm531, %v517
    %583 = vst.msk [vmem:[#allocation2 + $0x198] sm:$0xff] %vm531, %v518
    %584 = vst.msk [vmem:[#allocation2 + $0x1a0] sm:$0xff] %vm531, %v519
    %585 = vst.msk [vmem:[#allocation2 + $0x1a8] sm:$0xff] %vm531, %v520
    %586 = vst.msk [vmem:[#allocation2 + $0x1b0] sm:$0xff] %vm531, %v521
    %587 = vst.msk [vmem:[#allocation2 + $0x1b8] sm:$0xff] %vm531, %v522
    %588 = vst.msk [vmem:[#allocation2 + $0x1c0] sm:$0xff] %vm531, %v523
    %589 = vst.msk [vmem:[#allocation2 + $0x1c8] sm:$0xff] %vm531, %v524
    %590 = vst.msk [vmem:[#allocation2 + $0x1d0] sm:$0xff] %vm531, %v525
    %591 = vst.msk [vmem:[#allocation2 + $0x1d8] sm:$0xff] %vm531, %v526
    %592 = vst.msk [vmem:[#allocation2 + $0x1e0] sm:$0xff] %vm531, %v527
    %593 = vst.msk [vmem:[#allocation2 + $0x1e8] sm:$0xff] %vm531, %v528
    %594 = vst.msk [vmem:[#allocation2 + $0x1f0] sm:$0xff] %vm531, %v529
    %595 = vst.msk [vmem:[#allocation2 + $0x1f8] sm:$0xff] %vm531, %v530
    // Predicated region
    $region14: #{bottleneck_forward.7} parent=1 // pred_check
      _
    $region15: #{bottleneck_forward.7} parent=1 // pred_check_branch
      %597 = sbr.rel (0) target = $region17
    $region16: #{bottleneck_forward.7} parent=1 // pred_region
      %599 = vsyncadd [#allocation3], 0
      %s600 = sshll.u32 [#allocation2], 4
      %s601 = int_to_ptr.vmem [resolvable:$true] %s600
      %s602 = sshll.u32 %s3, 4
      %s603 = int_to_ptr.hbm [resolvable:$true] %s602
      %608 = dma.vmem_to_hbm [thread:$0]  %s601, 8192, %s603, [#allocation3], 128, 128, 8
    $region17: #{bottleneck_forward.7} parent=1 // pred_fallthru
      _
    // Predicated region
    $region18: #{bottleneck_forward.7} parent=1 // pred_check
      _
    $region19: #{bottleneck_forward.7} parent=1 // pred_check_branch
      %610 = sbr.rel (0) target = $region21
    $region20: #{bottleneck_forward.7} parent=1 // pred_region
      %612 = dma.done [#allocation3], 8192
    $region21: #{bottleneck_forward.7} parent=1 // pred_fallthru
      _
    %613 = vsyncpa [#allocation3], 1

// kernel: bottleneck_forward.4
$region0: #{bottleneck_forward.4}
  #allocation0 [shape = 'u32[]', space=smem, size = 0x4, offset = 0x4, fixed_abs, tag = 'smem constant byte address 0x4 - core index']
  #allocation1 [shape = 'u32[72,128]{1,0:T(1,128)}', space=vmem, size = 0x9000, scoped, tag = 'internal scratch']
  %s0 = inlined_call_operand.vmem [shape: bf16[512,32], index: 0, kind: input, shape index: {}]
  %s1 = inlined_call_operand.vmem [shape: bf16[32,8], index: 1, kind: input, shape index: {}]
  %s2 = inlined_call_operand.vmem [shape: bf16[512,8], index: 2, kind: output, shape index: {0}]
  %s3 = inlined_call_operand.vmem [shape: f32[1,2,8], index: 3, kind: output, shape index: {1}]
  %4 = xla_tuple %s2, %s3
  %s5 = sld [smem:[#allocation0]]
  $region26: #{bottleneck_forward.4} parent=0
    _
  %s7 = ssub.s32 1, %s5
  %s8 = scalar_select 0, %s7, %s5
  // Predicated region
  $region2: #{bottleneck_forward.4} parent=0 // pred_check
    _
  $region3: #{bottleneck_forward.4} parent=0 // pred_check_branch
    %10 = sbr.rel (0) target = $region5
  $region4: #{bottleneck_forward.4} parent=0 // pred_region
    _
  $region5: #{bottleneck_forward.4} parent=0 // pred_fallthru
    _
  // Predicated region
  $region6: #{bottleneck_forward.4} parent=0 // pred_check
    _
  $region7: #{bottleneck_forward.4} parent=0 // pred_check_branch
    %12 = sbr.rel (0) target = $region9
  $region8: #{bottleneck_forward.4} parent=0 // pred_region
    _
  $region9: #{bottleneck_forward.4} parent=0 // pred_fallthru
    _
  %v14 = vld [vmem:[%s0] sm:$0xf]
  %v15 = vld [vmem:[%s0 + $0x4] sm:$0xf]
  %v16 = vld [vmem:[%s0 + $0x8] sm:$0xf]
  %v17 = vld [vmem:[%s0 + $0xc] sm:$0xf]
  %v18 = vld [vmem:[%s0 + $0x10] sm:$0xf]
  %v19 = vld [vmem:[%s0 + $0x14] sm:$0xf]
  %v20 = vld [vmem:[%s0 + $0x18] sm:$0xf]
  %v21 = vld [vmem:[%s0 + $0x1c] sm:$0xf]
  %v22 = vld [vmem:[%s0 + $0x20] sm:$0xf]
  %v23 = vld [vmem:[%s0 + $0x24] sm:$0xf]
  %v24 = vld [vmem:[%s0 + $0x28] sm:$0xf]
  %v25 = vld [vmem:[%s0 + $0x2c] sm:$0xf]
  %v26 = vld [vmem:[%s0 + $0x30] sm:$0xf]
  %v27 = vld [vmem:[%s0 + $0x34] sm:$0xf]
  %v28 = vld [vmem:[%s0 + $0x38] sm:$0xf]
  %v29 = vld [vmem:[%s0 + $0x3c] sm:$0xf]
  %v30 = vld [vmem:[%s0 + $0x40] sm:$0xf]
  %v31 = vld [vmem:[%s0 + $0x44] sm:$0xf]
  %v32 = vld [vmem:[%s0 + $0x48] sm:$0xf]
  %v33 = vld [vmem:[%s0 + $0x4c] sm:$0xf]
  %v34 = vld [vmem:[%s0 + $0x50] sm:$0xf]
  %v35 = vld [vmem:[%s0 + $0x54] sm:$0xf]
  %v36 = vld [vmem:[%s0 + $0x58] sm:$0xf]
  %v37 = vld [vmem:[%s0 + $0x5c] sm:$0xf]
  %v38 = vld [vmem:[%s0 + $0x60] sm:$0xf]
  %v39 = vld [vmem:[%s0 + $0x64] sm:$0xf]
  %v40 = vld [vmem:[%s0 + $0x68] sm:$0xf]
  %v41 = vld [vmem:[%s0 + $0x6c] sm:$0xf]
  %v42 = vld [vmem:[%s0 + $0x70] sm:$0xf]
  %v43 = vld [vmem:[%s0 + $0x74] sm:$0xf]
  %v44 = vld [vmem:[%s0 + $0x78] sm:$0xf]
  %v45 = vld [vmem:[%s0 + $0x7c] sm:$0xf]
  %v46 = vld [vmem:[%s0 + $0x80] sm:$0xf]
  %v47 = vld [vmem:[%s0 + $0x84] sm:$0xf]
  %v48 = vld [vmem:[%s0 + $0x88] sm:$0xf]
  %v49 = vld [vmem:[%s0 + $0x8c] sm:$0xf]
  %v50 = vld [vmem:[%s0 + $0x90] sm:$0xf]
  %v51 = vld [vmem:[%s0 + $0x94] sm:$0xf]
  %v52 = vld [vmem:[%s0 + $0x98] sm:$0xf]
  %v53 = vld [vmem:[%s0 + $0x9c] sm:$0xf]
  %v54 = vld [vmem:[%s0 + $0xa0] sm:$0xf]
  %v55 = vld [vmem:[%s0 + $0xa4] sm:$0xf]
  %v56 = vld [vmem:[%s0 + $0xa8] sm:$0xf]
  %v57 = vld [vmem:[%s0 + $0xac] sm:$0xf]
  %v58 = vld [vmem:[%s0 + $0xb0] sm:$0xf]
  %v59 = vld [vmem:[%s0 + $0xb4] sm:$0xf]
  %v60 = vld [vmem:[%s0 + $0xb8] sm:$0xf]
  %v61 = vld [vmem:[%s0 + $0xbc] sm:$0xf]
  %v62 = vld [vmem:[%s0 + $0xc0] sm:$0xf]
  %v63 = vld [vmem:[%s0 + $0xc4] sm:$0xf]
  %v64 = vld [vmem:[%s0 + $0xc8] sm:$0xf]
  %v65 = vld [vmem:[%s0 + $0xcc] sm:$0xf]
  %v66 = vld [vmem:[%s0 + $0xd0] sm:$0xf]
  %v67 = vld [vmem:[%s0 + $0xd4] sm:$0xf]
  %v68 = vld [vmem:[%s0 + $0xd8] sm:$0xf]
  %v69 = vld [vmem:[%s0 + $0xdc] sm:$0xf]
  %v70 = vld [vmem:[%s0 + $0xe0] sm:$0xf]
  %v71 = vld [vmem:[%s0 + $0xe4] sm:$0xf]
  %v72 = vld [vmem:[%s0 + $0xe8] sm:$0xf]
  %v73 = vld [vmem:[%s0 + $0xec] sm:$0xf]
  %v74 = vld [vmem:[%s0 + $0xf0] sm:$0xf]
  %v75 = vld [vmem:[%s0 + $0xf4] sm:$0xf]
  %v76 = vld [vmem:[%s0 + $0xf8] sm:$0xf]
  %v77 = vld [vmem:[%s0 + $0xfc] sm:$0xf]
  %v78 = vld [vmem:[%s1] sm:$0xf]
  %v79 = vld [vmem:[%s1 + $0x4] sm:$0xf]
  %v80 = vld [vmem:[%s1 + $0x8] sm:$0xf]
  %v81 = vld [vmem:[%s1 + $0xc] sm:$0xf]
  %v146 = vunpack.c.l.b16 %v14
  %v147 = vunpack.c.l.b16 %v15
  %v148 = vunpack.c.l.b16 %v16
  %v149 = vunpack.c.l.b16 %v17
  %v150 = vunpack.c.l.b16 %v18
  %v151 = vunpack.c.l.b16 %v19
  %v152 = vunpack.c.l.b16 %v20
  %v153 = vunpack.c.l.b16 %v21
  %v154 = vunpack.c.l.b16 %v22
  %v155 = vunpack.c.l.b16 %v23
  %v156 = vunpack.c.l.b16 %v24
  %v157 = vunpack.c.l.b16 %v25
  %v158 = vunpack.c.l.b16 %v26
  %v159 = vunpack.c.l.b16 %v27
  %v160 = vunpack.c.l.b16 %v28
  %v161 = vunpack.c.l.b16 %v29
  %v162 = vunpack.c.l.b16 %v30
  %v163 = vunpack.c.l.b16 %v31
  %v164 = vunpack.c.l.b16 %v32
  %v165 = vunpack.c.l.b16 %v33
  %v166 = vunpack.c.l.b16 %v34
  %v167 = vunpack.c.l.b16 %v35
  %v168 = vunpack.c.l.b16 %v36
  %v169 = vunpack.c.l.b16 %v37
  %v170 = vunpack.c.l.b16 %v38
  %v171 = vunpack.c.l.b16 %v39
  %v172 = vunpack.c.l.b16 %v40
  %v173 = vunpack.c.l.b16 %v41
  %v174 = vunpack.c.l.b16 %v42
  %v175 = vunpack.c.l.b16 %v43
  %v176 = vunpack.c.l.b16 %v44
  %v177 = vunpack.c.l.b16 %v45
  %v178 = vunpack.c.l.b16 %v46
  %v179 = vunpack.c.l.b16 %v47
  %v180 = vunpack.c.l.b16 %v48
  %v181 = vunpack.c.l.b16 %v49
  %v182 = vunpack.c.l.b16 %v50
  %v183 = vunpack.c.l.b16 %v51
  %v184 = vunpack.c.l.b16 %v52
  %v185 = vunpack.c.l.b16 %v53
  %v186 = vunpack.c.l.b16 %v54
  %v187 = vunpack.c.l.b16 %v55
  %v188 = vunpack.c.l.b16 %v56
  %v189 = vunpack.c.l.b16 %v57
  %v190 = vunpack.c.l.b16 %v58
  %v191 = vunpack.c.l.b16 %v59
  %v192 = vunpack.c.l.b16 %v60
  %v193 = vunpack.c.l.b16 %v61
  %v194 = vunpack.c.l.b16 %v62
  %v195 = vunpack.c.l.b16 %v63
  %v196 = vunpack.c.l.b16 %v64
  %v197 = vunpack.c.l.b16 %v65
  %v198 = vunpack.c.l.b16 %v66
  %v199 = vunpack.c.l.b16 %v67
  %v200 = vunpack.c.l.b16 %v68
  %v201 = vunpack.c.l.b16 %v69
  %v202 = vunpack.c.l.b16 %v70
  %v203 = vunpack.c.l.b16 %v71
  %v204 = vunpack.c.l.b16 %v72
  %v205 = vunpack.c.l.b16 %v73
  %v206 = vunpack.c.l.b16 %v74
  %v207 = vunpack.c.l.b16 %v75
  %v208 = vunpack.c.l.b16 %v76
  %v209 = vunpack.c.l.b16 %v77
  %v210 = vpack.c.b16 %v147, %v146
  %v211 = vpack.c.b16 %v149, %v148
  %v212 = vpack.c.b16 %v151, %v150
  %v213 = vpack.c.b16 %v153, %v152
  %v214 = vpack.c.b16 %v155, %v154
  %v215 = vpack.c.b16 %v157, %v156
  %v216 = vpack.c.b16 %v159, %v158
  %v217 = vpack.c.b16 %v161, %v160
  %v218 = vpack.c.b16 %v163, %v162
  %v219 = vpack.c.b16 %v165, %v164
  %v220 = vpack.c.b16 %v167, %v166
  %v221 = vpack.c.b16 %v169, %v168
  %v222 = vpack.c.b16 %v171, %v170
  %v223 = vpack.c.b16 %v173, %v172
  %v224 = vpack.c.b16 %v175, %v174
  %v225 = vpack.c.b16 %v177, %v176
  %v226 = vpack.c.b16 %v179, %v178
  %v227 = vpack.c.b16 %v181, %v180
  %v228 = vpack.c.b16 %v183, %v182
  %v229 = vpack.c.b16 %v185, %v184
  %v230 = vpack.c.b16 %v187, %v186
  %v231 = vpack.c.b16 %v189, %v188
  %v232 = vpack.c.b16 %v191, %v190
  %v233 = vpack.c.b16 %v193, %v192
  %v234 = vpack.c.b16 %v195, %v194
  %v235 = vpack.c.b16 %v197, %v196
  %v236 = vpack.c.b16 %v199, %v198
  %v237 = vpack.c.b16 %v201, %v200
  %v238 = vpack.c.b16 %v203, %v202
  %v239 = vpack.c.b16 %v205, %v204
  %v240 = vpack.c.b16 %v207, %v206
  %v241 = vpack.c.b16 %v209, %v208
  %v246 = vunpack.c.l.b16 %v78
  %v247 = vunpack.c.l.b16 %v79
  %v248 = vunpack.c.l.b16 %v80
  %v249 = vunpack.c.l.b16 %v81
  %v250 = vpack.c.b16 %v247, %v246
  %v251 = vpack.c.b16 %v249, %v248
  %vm254 = vcmask 261120
  %v256 = vsel %vm254, %v210, 0
  %v259 = vsel %vm254, %v211, 0
  %v262 = vsel %vm254, %v212, 0
  %v265 = vsel %vm254, %v213, 0
  %v268 = vsel %vm254, %v214, 0
  %v271 = vsel %vm254, %v215, 0
  %v274 = vsel %vm254, %v216, 0
  %v277 = vsel %vm254, %v217, 0
  %v280 = vsel %vm254, %v218, 0
  %v283 = vsel %vm254, %v219, 0
  %v286 = vsel %vm254, %v220, 0
  %v289 = vsel %vm254, %v221, 0
  %v292 = vsel %vm254, %v222, 0
  %v295 = vsel %vm254, %v223, 0
  %v298 = vsel %vm254, %v224, 0
  %v301 = vsel %vm254, %v225, 0
  %v304 = vsel %vm254, %v226, 0
  %v307 = vsel %vm254, %v227, 0
  %v310 = vsel %vm254, %v228, 0
  %v313 = vsel %vm254, %v229, 0
  %v316 = vsel %vm254, %v230, 0
  %v319 = vsel %vm254, %v231, 0
  %v322 = vsel %vm254, %v232, 0
  %v325 = vsel %vm254, %v233, 0
  %v328 = vsel %vm254, %v234, 0
  %v331 = vsel %vm254, %v235, 0
  %v334 = vsel %vm254, %v236, 0
  %v337 = vsel %vm254, %v237, 0
  %v340 = vsel %vm254, %v238, 0
  %v343 = vsel %vm254, %v239, 0
  %v346 = vsel %vm254, %v240, 0
  %v349 = vsel %vm254, %v241, 0
  %351 = vmatpush.bf16.msra.mxu0 0
  %352 = vmatpush.bf16.msra.mxu0 0
  %353 = vmatpush.bf16.msra.mxu0 0
  %354 = vmatpush.bf16.msra.mxu0 0
  %355 = vmatpush.bf16.msra.mxu0 0
  %356 = vmatpush.bf16.msra.mxu0 0
  %357 = vmatpush.bf16.msra.mxu0 %v251
  %358 = vmatpush.bf16.msra.mxu0 %v250
  %359 = vmatmul.bf16.gmra.mxu0 %v256
  %v360 = vpop.f32.mrf.mxu0
  %v361 = vadd.f32 0.0, %v360
  %v362 = vpop.f32.mrf.mxu0
  %v363 = vadd.f32 0.0, %v362
  %364 = vmatmul.bf16.gmra.mxu0 %v259
  %v365 = vpop.f32.mrf.mxu0
  %v366 = vadd.f32 0.0, %v365
  %v367 = vpop.f32.mrf.mxu0
  %v368 = vadd.f32 0.0, %v367
  %369 = vmatmul.bf16.gmra.mxu0 %v262
  %v370 = vpop.f32.mrf.mxu0
  %v371 = vadd.f32 0.0, %v370
  %v372 = vpop.f32.mrf.mxu0
  %v373 = vadd.f32 0.0, %v372
  %374 = vmatmul.bf16.gmra.mxu0 %v265
  %v375 = vpop.f32.mrf.mxu0
  %v376 = vadd.f32 0.0, %v375
  %v377 = vpop.f32.mrf.mxu0
  %v378 = vadd.f32 0.0, %v377
  %379 = vmatmul.bf16.gmra.mxu0 %v268
  %v380 = vpop.f32.mrf.mxu0
  %v381 = vadd.f32 0.0, %v380
  %v382 = vpop.f32.mrf.mxu0
  %v383 = vadd.f32 0.0, %v382
  %384 = vmatmul.bf16.gmra.mxu0 %v271
  %v385 = vpop.f32.mrf.mxu0
  %v386 = vadd.f32 0.0, %v385
  %v387 = vpop.f32.mrf.mxu0
  %v388 = vadd.f32 0.0, %v387
  %389 = vmatmul.bf16.gmra.mxu0 %v274
  %v390 = vpop.f32.mrf.mxu0
  %v391 = vadd.f32 0.0, %v390
  %v392 = vpop.f32.mrf.mxu0
  %v393 = vadd.f32 0.0, %v392
  %394 = vmatmul.bf16.gmra.mxu0 %v277
  %v395 = vpop.f32.mrf.mxu0
  %v396 = vadd.f32 0.0, %v395
  %v397 = vpop.f32.mrf.mxu0
  %v398 = vadd.f32 0.0, %v397
  %399 = vmatmul.bf16.gmra.mxu0 %v280
  %v400 = vpop.f32.mrf.mxu0
  %v401 = vadd.f32 0.0, %v400
  %v402 = vpop.f32.mrf.mxu0
  %v403 = vadd.f32 0.0, %v402
  %404 = vmatmul.bf16.gmra.mxu0 %v283
  %v405 = vpop.f32.mrf.mxu0
  %v406 = vadd.f32 0.0, %v405
  %v407 = vpop.f32.mrf.mxu0
  %v408 = vadd.f32 0.0, %v407
  %409 = vmatmul.bf16.gmra.mxu0 %v286
  %v410 = vpop.f32.mrf.mxu0
  %v411 = vadd.f32 0.0, %v410
  %v412 = vpop.f32.mrf.mxu0
  %v413 = vadd.f32 0.0, %v412
  %414 = vmatmul.bf16.gmra.mxu0 %v289
  %v415 = vpop.f32.mrf.mxu0
  %v416 = vadd.f32 0.0, %v415
  %v417 = vpop.f32.mrf.mxu0
  %v418 = vadd.f32 0.0, %v417
  %419 = vmatmul.bf16.gmra.mxu0 %v292
  %v420 = vpop.f32.mrf.mxu0
  %v421 = vadd.f32 0.0, %v420
  %v422 = vpop.f32.mrf.mxu0
  %v423 = vadd.f32 0.0, %v422
  %424 = vmatmul.bf16.gmra.mxu0 %v295
  %v425 = vpop.f32.mrf.mxu0
  %v426 = vadd.f32 0.0, %v425
  %v427 = vpop.f32.mrf.mxu0
  %v428 = vadd.f32 0.0, %v427
  %429 = vmatmul.bf16.gmra.mxu0 %v298
  %v430 = vpop.f32.mrf.mxu0
  %v431 = vadd.f32 0.0, %v430
  %v432 = vpop.f32.mrf.mxu0
  %v433 = vadd.f32 0.0, %v432
  %434 = vmatmul.bf16.gmra.mxu0 %v301
  %v435 = vpop.f32.mrf.mxu0
  %v436 = vadd.f32 0.0, %v435
  %v437 = vpop.f32.mrf.mxu0
  %v438 = vadd.f32 0.0, %v437
  %439 = vmatmul.bf16.gmra.mxu0 %v304
  %v440 = vpop.f32.mrf.mxu0
  %v441 = vadd.f32 0.0, %v440
  %v442 = vpop.f32.mrf.mxu0
  %v443 = vadd.f32 0.0, %v442
  %444 = vmatmul.bf16.gmra.mxu0 %v307
  %v445 = vpop.f32.mrf.mxu0
  %v446 = vadd.f32 0.0, %v445
  %v447 = vpop.f32.mrf.mxu0
  %v448 = vadd.f32 0.0, %v447
  %449 = vmatmul.bf16.gmra.mxu0 %v310
  %v450 = vpop.f32.mrf.mxu0
  %v451 = vadd.f32 0.0, %v450
  %v452 = vpop.f32.mrf.mxu0
  %v453 = vadd.f32 0.0, %v452
  %454 = vmatmul.bf16.gmra.mxu0 %v313
  %v455 = vpop.f32.mrf.mxu0
  %v456 = vadd.f32 0.0, %v455
  %v457 = vpop.f32.mrf.mxu0
  %v458 = vadd.f32 0.0, %v457
  %459 = vmatmul.bf16.gmra.mxu0 %v316
  %v460 = vpop.f32.mrf.mxu0
  %v461 = vadd.f32 0.0, %v460
  %v462 = vpop.f32.mrf.mxu0
  %v463 = vadd.f32 0.0, %v462
  %464 = vmatmul.bf16.gmra.mxu0 %v319
  %v465 = vpop.f32.mrf.mxu0
  %v466 = vadd.f32 0.0, %v465
  %v467 = vpop.f32.mrf.mxu0
  %v468 = vadd.f32 0.0, %v467
  %469 = vmatmul.bf16.gmra.mxu0 %v322
  %v470 = vpop.f32.mrf.mxu0
  %v471 = vadd.f32 0.0, %v470
  %v472 = vpop.f32.mrf.mxu0
  %v473 = vadd.f32 0.0, %v472
  %474 = vmatmul.bf16.gmra.mxu0 %v325
  %v475 = vpop.f32.mrf.mxu0
  %v476 = vadd.f32 0.0, %v475
  %v477 = vpop.f32.mrf.mxu0
  %v478 = vadd.f32 0.0, %v477
  %479 = vmatmul.bf16.gmra.mxu0 %v328
  %v480 = vpop.f32.mrf.mxu0
  %v481 = vadd.f32 0.0, %v480
  %v482 = vpop.f32.mrf.mxu0
  %v483 = vadd.f32 0.0, %v482
  %484 = vmatmul.bf16.gmra.mxu0 %v331
  %v485 = vpop.f32.mrf.mxu0
  %v486 = vadd.f32 0.0, %v485
  %v487 = vpop.f32.mrf.mxu0
  %v488 = vadd.f32 0.0, %v487
  %489 = vmatmul.bf16.gmra.mxu0 %v334
  %v490 = vpop.f32.mrf.mxu0
  %v491 = vadd.f32 0.0, %v490
  %v492 = vpop.f32.mrf.mxu0
  %v493 = vadd.f32 0.0, %v492
  %494 = vmatmul.bf16.gmra.mxu0 %v337
  %v495 = vpop.f32.mrf.mxu0
  %v496 = vadd.f32 0.0, %v495
  %v497 = vpop.f32.mrf.mxu0
  %v498 = vadd.f32 0.0, %v497
  %499 = vmatmul.bf16.gmra.mxu0 %v340
  %v500 = vpop.f32.mrf.mxu0
  %v501 = vadd.f32 0.0, %v500
  %v502 = vpop.f32.mrf.mxu0
  %v503 = vadd.f32 0.0, %v502
  %504 = vmatmul.bf16.gmra.mxu0 %v343
  %v505 = vpop.f32.mrf.mxu0
  %v506 = vadd.f32 0.0, %v505
  %v507 = vpop.f32.mrf.mxu0
  %v508 = vadd.f32 0.0, %v507
  %509 = vmatmul.bf16.gmra.mxu0 %v346
  %v510 = vpop.f32.mrf.mxu0
  %v511 = vadd.f32 0.0, %v510
  %v512 = vpop.f32.mrf.mxu0
  %v513 = vadd.f32 0.0, %v512
  %514 = vmatmul.bf16.gmra.mxu0 %v349
  %v515 = vpop.f32.mrf.mxu0
  %v516 = vadd.f32 0.0, %v515
  %v517 = vpop.f32.mrf.mxu0
  %v518 = vadd.f32 0.0, %v517
  %519 = vdwg.mxu0
  %v520 = vpack.c.bf16 %v361, %v361
  %v521 = vpack.c.bf16 %v363, %v363
  %v522 = vpack.c.bf16 %v366, %v366
  %v523 = vpack.c.bf16 %v368, %v368
  %v524 = vpack.c.bf16 %v371, %v371
  %v525 = vpack.c.bf16 %v373, %v373
  %v526 = vpack.c.bf16 %v376, %v376
  %v527 = vpack.c.bf16 %v378, %v378
  %v528 = vpack.c.bf16 %v381, %v381
  %v529 = vpack.c.bf16 %v383, %v383
  %v530 = vpack.c.bf16 %v386, %v386
  %v531 = vpack.c.bf16 %v388, %v388
  %v532 = vpack.c.bf16 %v391, %v391
  %v533 = vpack.c.bf16 %v393, %v393
  %v534 = vpack.c.bf16 %v396, %v396
  %v535 = vpack.c.bf16 %v398, %v398
  %v536 = vpack.c.bf16 %v401, %v401
  %v537 = vpack.c.bf16 %v403, %v403
  %v538 = vpack.c.bf16 %v406, %v406
  %v539 = vpack.c.bf16 %v408, %v408
  %v540 = vpack.c.bf16 %v411, %v411
  %v541 = vpack.c.bf16 %v413, %v413
  %v542 = vpack.c.bf16 %v416, %v416
  %v543 = vpack.c.bf16 %v418, %v418
  %v544 = vpack.c.bf16 %v421, %v421
  %v545 = vpack.c.bf16 %v423, %v423
  %v546 = vpack.c.bf16 %v426, %v426
  %v547 = vpack.c.bf16 %v428, %v428
  %v548 = vpack.c.bf16 %v431, %v431
  %v549 = vpack.c.bf16 %v433, %v433
  %v550 = vpack.c.bf16 %v436, %v436
  %v551 = vpack.c.bf16 %v438, %v438
  %v552 = vpack.c.bf16 %v441, %v441
  %v553 = vpack.c.bf16 %v443, %v443
  %v554 = vpack.c.bf16 %v446, %v446
  %v555 = vpack.c.bf16 %v448, %v448
  %v556 = vpack.c.bf16 %v451, %v451
  %v557 = vpack.c.bf16 %v453, %v453
  %v558 = vpack.c.bf16 %v456, %v456
  %v559 = vpack.c.bf16 %v458, %v458
  %v560 = vpack.c.bf16 %v461, %v461
  %v561 = vpack.c.bf16 %v463, %v463
  %v562 = vpack.c.bf16 %v466, %v466
  %v563 = vpack.c.bf16 %v468, %v468
  %v564 = vpack.c.bf16 %v471, %v471
  %v565 = vpack.c.bf16 %v473, %v473
  %v566 = vpack.c.bf16 %v476, %v476
  %v567 = vpack.c.bf16 %v478, %v478
  %v568 = vpack.c.bf16 %v481, %v481
  %v569 = vpack.c.bf16 %v483, %v483
  %v570 = vpack.c.bf16 %v486, %v486
  %v571 = vpack.c.bf16 %v488, %v488
  %v572 = vpack.c.bf16 %v491, %v491
  %v573 = vpack.c.bf16 %v493, %v493
  %v574 = vpack.c.bf16 %v496, %v496
  %v575 = vpack.c.bf16 %v498, %v498
  %v576 = vpack.c.bf16 %v501, %v501
  %v577 = vpack.c.bf16 %v503, %v503
  %v578 = vpack.c.bf16 %v506, %v506
  %v579 = vpack.c.bf16 %v508, %v508
  %v580 = vpack.c.bf16 %v511, %v511
  %v581 = vpack.c.bf16 %v513, %v513
  %v582 = vpack.c.bf16 %v516, %v516
  %v583 = vpack.c.bf16 %v518, %v518
  %vm584 = vcmask 60416
  %585 = vst.msk [vmem:[%s2] sm:$0xf] %vm584, %v520
  %586 = vst.msk [vmem:[%s2 + $0x4] sm:$0xf] %vm584, %v521
  %587 = vst.msk [vmem:[%s2 + $0x8] sm:$0xf] %vm584, %v522
  %588 = vst.msk [vmem:[%s2 + $0xc] sm:$0xf] %vm584, %v523
  %589 = vst.msk [vmem:[%s2 + $0x10] sm:$0xf] %vm584, %v524
  %590 = vst.msk [vmem:[%s2 + $0x14] sm:$0xf] %vm584, %v525
  %591 = vst.msk [vmem:[%s2 + $0x18] sm:$0xf] %vm584, %v526
  %592 = vst.msk [vmem:[%s2 + $0x1c] sm:$0xf] %vm584, %v527
  %593 = vst.msk [vmem:[%s2 + $0x20] sm:$0xf] %vm584, %v528
  %594 = vst.msk [vmem:[%s2 + $0x24] sm:$0xf] %vm584, %v529
  %595 = vst.msk [vmem:[%s2 + $0x28] sm:$0xf] %vm584, %v530
  %596 = vst.msk [vmem:[%s2 + $0x2c] sm:$0xf] %vm584, %v531
  %597 = vst.msk [vmem:[%s2 + $0x30] sm:$0xf] %vm584, %v532
  %598 = vst.msk [vmem:[%s2 + $0x34] sm:$0xf] %vm584, %v533
  %599 = vst.msk [vmem:[%s2 + $0x38] sm:$0xf] %vm584, %v534
  %600 = vst.msk [vmem:[%s2 + $0x3c] sm:$0xf] %vm584, %v535
  %601 = vst.msk [vmem:[%s2 + $0x40] sm:$0xf] %vm584, %v536
  %602 = vst.msk [vmem:[%s2 + $0x44] sm:$0xf] %vm584, %v537
  %603 = vst.msk [vmem:[%s2 + $0x48] sm:$0xf] %vm584, %v538
  %604 = vst.msk [vmem:[%s2 + $0x4c] sm:$0xf] %vm584, %v539
  %605 = vst.msk [vmem:[%s2 + $0x50] sm:$0xf] %vm584, %v540
  %606 = vst.msk [vmem:[%s2 + $0x54] sm:$0xf] %vm584, %v541
  %607 = vst.msk [vmem:[%s2 + $0x58] sm:$0xf] %vm584, %v542
  %608 = vst.msk [vmem:[%s2 + $0x5c] sm:$0xf] %vm584, %v543
  %609 = vst.msk [vmem:[%s2 + $0x60] sm:$0xf] %vm584, %v544
  %610 = vst.msk [vmem:[%s2 + $0x64] sm:$0xf] %vm584, %v545
  %611 = vst.msk [vmem:[%s2 + $0x68] sm:$0xf] %vm584, %v546
  %612 = vst.msk [vmem:[%s2 + $0x6c] sm:$0xf] %vm584, %v547
  %613 = vst.msk [vmem:[%s2 + $0x70] sm:$0xf] %vm584, %v548
  %614 = vst.msk [vmem:[%s2 + $0x74] sm:$0xf] %vm584, %v549
  %615 = vst.msk [vmem:[%s2 + $0x78] sm:$0xf] %vm584, %v550
  %616 = vst.msk [vmem:[%s2 + $0x7c] sm:$0xf] %vm584, %v551
  %617 = vst.msk [vmem:[%s2 + $0x80] sm:$0xf] %vm584, %v552
  %618 = vst.msk [vmem:[%s2 + $0x84] sm:$0xf] %vm584, %v553
  %619 = vst.msk [vmem:[%s2 + $0x88] sm:$0xf] %vm584, %v554
  %620 = vst.msk [vmem:[%s2 + $0x8c] sm:$0xf] %vm584, %v555
  %621 = vst.msk [vmem:[%s2 + $0x90] sm:$0xf] %vm584, %v556
  %622 = vst.msk [vmem:[%s2 + $0x94] sm:$0xf] %vm584, %v557
  %623 = vst.msk [vmem:[%s2 + $0x98] sm:$0xf] %vm584, %v558
  %624 = vst.msk [vmem:[%s2 + $0x9c] sm:$0xf] %vm584, %v559
  %625 = vst.msk [vmem:[%s2 + $0xa0] sm:$0xf] %vm584, %v560
  %626 = vst.msk [vmem:[%s2 + $0xa4] sm:$0xf] %vm584, %v561
  %627 = vst.msk [vmem:[%s2 + $0xa8] sm:$0xf] %vm584, %v562
  %628 = vst.msk [vmem:[%s2 + $0xac] sm:$0xf] %vm584, %v563
  %629 = vst.msk [vmem:[%s2 + $0xb0] sm:$0xf] %vm584, %v564
  %630 = vst.msk [vmem:[%s2 + $0xb4] sm:$0xf] %vm584, %v565
  %631 = vst.msk [vmem:[%s2 + $0xb8] sm:$0xf] %vm584, %v566
  %632 = vst.msk [vmem:[%s2 + $0xbc] sm:$0xf] %vm584, %v567
  %633 = vst.msk [vmem:[%s2 + $0xc0] sm:$0xf] %vm584, %v568
  %634 = vst.msk [vmem:[%s2 + $0xc4] sm:$0xf] %vm584, %v569
  %635 = vst.msk [vmem:[%s2 + $0xc8] sm:$0xf] %vm584, %v570
  %636 = vst.msk [vmem:[%s2 + $0xcc] sm:$0xf] %vm584, %v571
  %637 = vst.msk [vmem:[%s2 + $0xd0] sm:$0xf] %vm584, %v572
  %638 = vst.msk [vmem:[%s2 + $0xd4] sm:$0xf] %vm584, %v573
  %639 = vst.msk [vmem:[%s2 + $0xd8] sm:$0xf] %vm584, %v574
  %640 = vst.msk [vmem:[%s2 + $0xdc] sm:$0xf] %vm584, %v575
  %641 = vst.msk [vmem:[%s2 + $0xe0] sm:$0xf] %vm584, %v576
  %642 = vst.msk [vmem:[%s2 + $0xe4] sm:$0xf] %vm584, %v577
  %643 = vst.msk [vmem:[%s2 + $0xe8] sm:$0xf] %vm584, %v578
  %644 = vst.msk [vmem:[%s2 + $0xec] sm:$0xf] %vm584, %v579
  %645 = vst.msk [vmem:[%s2 + $0xf0] sm:$0xf] %vm584, %v580
  %646 = vst.msk [vmem:[%s2 + $0xf4] sm:$0xf] %vm584, %v581
  %647 = vst.msk [vmem:[%s2 + $0xf8] sm:$0xf] %vm584, %v582
  %648 = vst.msk [vmem:[%s2 + $0xfc] sm:$0xf] %vm584, %v583
  %vm649 = vcmask 64512
  %v650 = vsel %vm649, %v361, 0.0
  %v651 = vsel %vm649, %v363, 0.0
  %v652 = vadd.f32 %v650, %v651
  %v653 = vsel %vm649, %v366, 0.0
  %v654 = vadd.f32 %v652, %v653
  %v655 = vsel %vm649, %v368, 0.0
  %v656 = vadd.f32 %v654, %v655
  %v657 = vsel %vm649, %v371, 0.0
  %v658 = vadd.f32 %v656, %v657
  %v659 = vsel %vm649, %v373, 0.0
  %v660 = vadd.f32 %v658, %v659
  %v661 = vsel %vm649, %v376, 0.0
  %v662 = vadd.f32 %v660, %v661
  %v663 = vsel %vm649, %v378, 0.0
  %v664 = vadd.f32 %v662, %v663
  %v665 = vsel %vm649, %v381, 0.0
  %v666 = vadd.f32 %v664, %v665
  %v667 = vsel %vm649, %v383, 0.0
  %v668 = vadd.f32 %v666, %v667
  %v669 = vsel %vm649, %v386, 0.0
  %v670 = vadd.f32 %v668, %v669
  %v671 = vsel %vm649, %v388, 0.0
  %v672 = vadd.f32 %v670, %v671
  %v673 = vsel %vm649, %v391, 0.0
  %v674 = vadd.f32 %v672, %v673
  %v675 = vsel %vm649, %v393, 0.0
  %v676 = vadd.f32 %v674, %v675
  %v677 = vsel %vm649, %v396, 0.0
  %v678 = vadd.f32 %v676, %v677
  %v679 = vsel %vm649, %v398, 0.0
  %v680 = vadd.f32 %v678, %v679
  %v681 = vsel %vm649, %v401, 0.0
  %v682 = vadd.f32 %v680, %v681
  %v683 = vsel %vm649, %v403, 0.0
  %v684 = vadd.f32 %v682, %v683
  %v685 = vsel %vm649, %v406, 0.0
  %v686 = vadd.f32 %v684, %v685
  %v687 = vsel %vm649, %v408, 0.0
  %v688 = vadd.f32 %v686, %v687
  %v689 = vsel %vm649, %v411, 0.0
  %v690 = vadd.f32 %v688, %v689
  %v691 = vsel %vm649, %v413, 0.0
  %v692 = vadd.f32 %v690, %v691
  %v693 = vsel %vm649, %v416, 0.0
  %v694 = vadd.f32 %v692, %v693
  %v695 = vsel %vm649, %v418, 0.0
  %v696 = vadd.f32 %v694, %v695
  %v697 = vsel %vm649, %v421, 0.0
  %v698 = vadd.f32 %v696, %v697
  %v699 = vsel %vm649, %v423, 0.0
  %v700 = vadd.f32 %v698, %v699
  %v701 = vsel %vm649, %v426, 0.0
  %v702 = vadd.f32 %v700, %v701
  %v703 = vsel %vm649, %v428, 0.0
  %v704 = vadd.f32 %v702, %v703
  %v705 = vsel %vm649, %v431, 0.0
  %v706 = vadd.f32 %v704, %v705
  %v707 = vsel %vm649, %v433, 0.0
  %v708 = vadd.f32 %v706, %v707
  %v709 = vsel %vm649, %v436, 0.0
  %v710 = vadd.f32 %v708, %v709
  %v711 = vsel %vm649, %v438, 0.0
  %v712 = vadd.f32 %v710, %v711
  %v713 = vsel %vm649, %v441, 0.0
  %v714 = vadd.f32 %v712, %v713
  %v715 = vsel %vm649, %v443, 0.0
  %v716 = vadd.f32 %v714, %v715
  %v717 = vsel %vm649, %v446, 0.0
  %v718 = vadd.f32 %v716, %v717
  %v719 = vsel %vm649, %v448, 0.0
  %v720 = vadd.f32 %v718, %v719
  %v721 = vsel %vm649, %v451, 0.0
  %v722 = vadd.f32 %v720, %v721
  %v723 = vsel %vm649, %v453, 0.0
  %v724 = vadd.f32 %v722, %v723
  %v725 = vsel %vm649, %v456, 0.0
  %v726 = vadd.f32 %v724, %v725
  %v727 = vsel %vm649, %v458, 0.0
  %v728 = vadd.f32 %v726, %v727
  %v729 = vsel %vm649, %v461, 0.0
  %v730 = vadd.f32 %v728, %v729
  %v731 = vsel %vm649, %v463, 0.0
  %v732 = vadd.f32 %v730, %v731
  %v733 = vsel %vm649, %v466, 0.0
  %v734 = vadd.f32 %v732, %v733
  %v735 = vsel %vm649, %v468, 0.0
  %v736 = vadd.f32 %v734, %v735
  %v737 = vsel %vm649, %v471, 0.0
  %v738 = vadd.f32 %v736, %v737
  %v739 = vsel %vm649, %v473, 0.0
  %v740 = vadd.f32 %v738, %v739
  %v741 = vsel %vm649, %v476, 0.0
  %v742 = vadd.f32 %v740, %v741
  %v743 = vsel %vm649, %v478, 0.0
  %v744 = vadd.f32 %v742, %v743
  %v745 = vsel %vm649, %v481, 0.0
  %v746 = vadd.f32 %v744, %v745
  %v747 = vsel %vm649, %v483, 0.0
  %v748 = vadd.f32 %v746, %v747
  %v749 = vsel %vm649, %v486, 0.0
  %v750 = vadd.f32 %v748, %v749
  %v751 = vsel %vm649, %v488, 0.0
  %v752 = vadd.f32 %v750, %v751
  %v753 = vsel %vm649, %v491, 0.0
  %v754 = vadd.f32 %v752, %v753
  %v755 = vsel %vm649, %v493, 0.0
  %v756 = vadd.f32 %v754, %v755
  %v757 = vsel %vm649, %v496, 0.0
  %v758 = vadd.f32 %v756, %v757
  %v759 = vsel %vm649, %v498, 0.0
  %v760 = vadd.f32 %v758, %v759
  %v761 = vsel %vm649, %v501, 0.0
  %v762 = vadd.f32 %v760, %v761
  %v763 = vsel %vm649, %v503, 0.0
  %v764 = vadd.f32 %v762, %v763
  %v765 = vsel %vm649, %v506, 0.0
  %v766 = vadd.f32 %v764, %v765
  %v767 = vsel %vm649, %v508, 0.0
  %v768 = vadd.f32 %v766, %v767
  %v769 = vsel %vm649, %v511, 0.0
  %v770 = vadd.f32 %v768, %v769
  %v771 = vsel %vm649, %v513, 0.0
  %v772 = vadd.f32 %v770, %v771
  %v773 = vsel %vm649, %v516, 0.0
  %v774 = vadd.f32 %v772, %v773
  %v775 = vsel %vm649, %v518, 0.0
  %v776 = vadd.f32 %v774, %v775
  %v777 = vrot.slane %v776, 4
  %v778 = vadd.f32 %v776, %v777
  %v779 = vrot.slane %v778, 2
  %v780 = vadd.f32 %v778, %v779
  %v781 = vrot.slane %v780, 1
  %v782 = vadd.f32 %v780, %v781
  %v783 = vmul.f32 %v361, %v361
  %v784 = vmul.f32 %v363, %v363
  %v785 = vmul.f32 %v366, %v366
  %v786 = vmul.f32 %v368, %v368
  %v787 = vmul.f32 %v371, %v371
  %v788 = vmul.f32 %v373, %v373
  %v789 = vmul.f32 %v376, %v376
  %v790 = vmul.f32 %v378, %v378
  %v791 = vmul.f32 %v381, %v381
  %v792 = vmul.f32 %v383, %v383
  %v793 = vmul.f32 %v386, %v386
  %v794 = vmul.f32 %v388, %v388
  %v795 = vmul.f32 %v391, %v391
  %v796 = vmul.f32 %v393, %v393
  %v797 = vmul.f32 %v396, %v396
  %v798 = vmul.f32 %v398, %v398
  %v799 = vmul.f32 %v401, %v401
  %v800 = vmul.f32 %v403, %v403
  %v801 = vmul.f32 %v406, %v406
  %v802 = vmul.f32 %v408, %v408
  %v803 = vmul.f32 %v411, %v411
  %v804 = vmul.f32 %v413, %v413
  %v805 = vmul.f32 %v416, %v416
  %v806 = vmul.f32 %v418, %v418
  %v807 = vmul.f32 %v421, %v421
  %v808 = vmul.f32 %v423, %v423
  %v809 = vmul.f32 %v426, %v426
  %v810 = vmul.f32 %v428, %v428
  %v811 = vmul.f32 %v431, %v431
  %v812 = vmul.f32 %v433, %v433
  %v813 = vmul.f32 %v436, %v436
  %v814 = vmul.f32 %v438, %v438
  %v815 = vmul.f32 %v441, %v441
  %v816 = vmul.f32 %v443, %v443
  %v817 = vmul.f32 %v446, %v446
  %v818 = vmul.f32 %v448, %v448
  %v819 = vmul.f32 %v451, %v451
  %v820 = vmul.f32 %v453, %v453
  %v821 = vmul.f32 %v456, %v456
  %v822 = vmul.f32 %v458, %v458
  %v823 = vmul.f32 %v461, %v461
  %v824 = vmul.f32 %v463, %v463
  %v825 = vmul.f32 %v466, %v466
  %v826 = vmul.f32 %v468, %v468
  %v827 = vmul.f32 %v471, %v471
  %v828 = vmul.f32 %v473, %v473
  %v829 = vmul.f32 %v476, %v476
  %v830 = vmul.f32 %v478, %v478
  %v831 = vmul.f32 %v481, %v481
  %v832 = vmul.f32 %v483, %v483
  %v833 = vmul.f32 %v486, %v486
  %v834 = vmul.f32 %v488, %v488
  %v835 = vmul.f32 %v491, %v491
  %v836 = vmul.f32 %v493, %v493
  %v837 = vmul.f32 %v496, %v496
  %v838 = vmul.f32 %v498, %v498
  %v839 = vmul.f32 %v501, %v501
  %v840 = vmul.f32 %v503, %v503
  %v841 = vmul.f32 %v506, %v506
  %v842 = vmul.f32 %v508, %v508
  %v843 = vmul.f32 %v511, %v511
  %v844 = vmul.f32 %v513, %v513
  %v845 = vmul.f32 %v516, %v516
  %v846 = vmul.f32 %v518, %v518
  %v847 = vsel %vm649, %v783, 0.0
  %v848 = vsel %vm649, %v784, 0.0
  %v849 = vadd.f32 %v847, %v848
  %v850 = vsel %vm649, %v785, 0.0
  %v851 = vadd.f32 %v849, %v850
  %v852 = vsel %vm649, %v786, 0.0
  %v853 = vadd.f32 %v851, %v852
  %v854 = vsel %vm649, %v787, 0.0
  %v855 = vadd.f32 %v853, %v854
  %v856 = vsel %vm649, %v788, 0.0
  %v857 = vadd.f32 %v855, %v856
  %v858 = vsel %vm649, %v789, 0.0
  %v859 = vadd.f32 %v857, %v858
  %v860 = vsel %vm649, %v790, 0.0
  %v861 = vadd.f32 %v859, %v860
  %v862 = vsel %vm649, %v791, 0.0
  %v863 = vadd.f32 %v861, %v862
  %v864 = vsel %vm649, %v792, 0.0
  %v865 = vadd.f32 %v863, %v864
  %v866 = vsel %vm649, %v793, 0.0
  %v867 = vadd.f32 %v865, %v866
  %v868 = vsel %vm649, %v794, 0.0
  %v869 = vadd.f32 %v867, %v868
  %v870 = vsel %vm649, %v795, 0.0
  %v871 = vadd.f32 %v869, %v870
  %v872 = vsel %vm649, %v796, 0.0
  %v873 = vadd.f32 %v871, %v872
  %v874 = vsel %vm649, %v797, 0.0
  %v875 = vadd.f32 %v873, %v874
  %v876 = vsel %vm649, %v798, 0.0
  %v877 = vadd.f32 %v875, %v876
  %v878 = vsel %vm649, %v799, 0.0
  %v879 = vadd.f32 %v877, %v878
  %v880 = vsel %vm649, %v800, 0.0
  %v881 = vadd.f32 %v879, %v880
  %v882 = vsel %vm649, %v801, 0.0
  %v883 = vadd.f32 %v881, %v882
  %v884 = vsel %vm649, %v802, 0.0
  %v885 = vadd.f32 %v883, %v884
  %v886 = vsel %vm649, %v803, 0.0
  %v887 = vadd.f32 %v885, %v886
  %v888 = vsel %vm649, %v804, 0.0
  %v889 = vadd.f32 %v887, %v888
  %v890 = vsel %vm649, %v805, 0.0
  %v891 = vadd.f32 %v889, %v890
  %v892 = vsel %vm649, %v806, 0.0
  %v893 = vadd.f32 %v891, %v892
  %v894 = vsel %vm649, %v807, 0.0
  %v895 = vadd.f32 %v893, %v894
  %v896 = vsel %vm649, %v808, 0.0
  %v897 = vadd.f32 %v895, %v896
  %v898 = vsel %vm649, %v809, 0.0
  %v899 = vadd.f32 %v897, %v898
  %v900 = vsel %vm649, %v810, 0.0
  %v901 = vadd.f32 %v899, %v900
  %v902 = vsel %vm649, %v811, 0.0
  %v903 = vadd.f32 %v901, %v902
  %v904 = vsel %vm649, %v812, 0.0
  %v905 = vadd.f32 %v903, %v904
  %v906 = vsel %vm649, %v813, 0.0
  %v907 = vadd.f32 %v905, %v906
  %v908 = vsel %vm649, %v814, 0.0
  %v909 = vadd.f32 %v907, %v908
  %v910 = vsel %vm649, %v815, 0.0
  %v911 = vadd.f32 %v909, %v910
  %v912 = vsel %vm649, %v816, 0.0
  %v913 = vadd.f32 %v911, %v912
  %v914 = vsel %vm649, %v817, 0.0
  %v915 = vadd.f32 %v913, %v914
  %v916 = vsel %vm649, %v818, 0.0
  %v917 = vadd.f32 %v915, %v916
  %v918 = vsel %vm649, %v819, 0.0
  %v919 = vadd.f32 %v917, %v918
  %v920 = vsel %vm649, %v820, 0.0
  %v921 = vadd.f32 %v919, %v920
  %v922 = vsel %vm649, %v821, 0.0
  %v923 = vadd.f32 %v921, %v922
  %v924 = vsel %vm649, %v822, 0.0
  %v925 = vadd.f32 %v923, %v924
  %v926 = vsel %vm649, %v823, 0.0
  %v927 = vadd.f32 %v925, %v926
  %v928 = vsel %vm649, %v824, 0.0
  %v929 = vadd.f32 %v927, %v928
  %v930 = vsel %vm649, %v825, 0.0
  %v931 = vadd.f32 %v929, %v930
  %v932 = vsel %vm649, %v826, 0.0
  %v933 = vadd.f32 %v931, %v932
  %v934 = vsel %vm649, %v827, 0.0
  %v935 = vadd.f32 %v933, %v934
  %v936 = vsel %vm649, %v828, 0.0
  %v937 = vadd.f32 %v935, %v936
  %v938 = vsel %vm649, %v829, 0.0
  %v939 = vadd.f32 %v937, %v938
  %v940 = vsel %vm649, %v830, 0.0
  %v941 = vadd.f32 %v939, %v940
  %v942 = vsel %vm649, %v831, 0.0
  %v943 = vadd.f32 %v941, %v942
  %v944 = vsel %vm649, %v832, 0.0
  %v945 = vadd.f32 %v943, %v944
  %v946 = vsel %vm649, %v833, 0.0
  %v947 = vadd.f32 %v945, %v946
  %v948 = vsel %vm649, %v834, 0.0
  %v949 = vadd.f32 %v947, %v948
  %v950 = vsel %vm649, %v835, 0.0
  %v951 = vadd.f32 %v949, %v950
  %v952 = vsel %vm649, %v836, 0.0
  %v953 = vadd.f32 %v951, %v952
  %v954 = vsel %vm649, %v837, 0.0
  %v955 = vadd.f32 %v953, %v954
  %v956 = vsel %vm649, %v838, 0.0
  %v957 = vadd.f32 %v955, %v956
  %v958 = vsel %vm649, %v839, 0.0
  %v959 = vadd.f32 %v957, %v958
  %v960 = vsel %vm649, %v840, 0.0
  %v961 = vadd.f32 %v959, %v960
  %v962 = vsel %vm649, %v841, 0.0
  %v963 = vadd.f32 %v961, %v962
  %v964 = vsel %vm649, %v842, 0.0
  %v965 = vadd.f32 %v963, %v964
  %v966 = vsel %vm649, %v843, 0.0
  %v967 = vadd.f32 %v965, %v966
  %v968 = vsel %vm649, %v844, 0.0
  %v969 = vadd.f32 %v967, %v968
  %v970 = vsel %vm649, %v845, 0.0
  %v971 = vadd.f32 %v969, %v970
  %v972 = vsel %vm649, %v846, 0.0
  %v973 = vadd.f32 %v971, %v972
  %v974 = vrot.slane %v973, 4
  %v975 = vadd.f32 %v973, %v974
  %v976 = vrot.slane %v975, 2
  %v977 = vadd.f32 %v975, %v976
  %v978 = vrot.slane %v977, 1
  %v979 = vadd.f32 %v977, %v978
  %vm980 = vcmask 1040384
  %v981 = vsel %vm980, %v782, %v979
  %vm982 = vcmask 58368
  %983 = vst.msk [vmem:[%s3] sm:$0x3] %vm982, %v981
  // Predicated region
  $region10: #{bottleneck_forward.4} parent=0 // pred_check
    _
  $region11: #{bottleneck_forward.4} parent=0 // pred_check_branch
    %985 = sbr.rel (0) target = $region13
  $region12: #{bottleneck_forward.4} parent=0 // pred_region
    _
  $region13: #{bottleneck_forward.4} parent=0 // pred_fallthru
    _
  // Predicated region
  $region14: #{bottleneck_forward.4} parent=0 // pred_check
    _
  $region15: #{bottleneck_forward.4} parent=0 // pred_check_branch
    %987 = sbr.rel (0) target = $region17
  $region16: #{bottleneck_forward.4} parent=0 // pred_region
    _
  $region17: #{bottleneck_forward.4} parent=0 // pred_fallthru
    _
  // Predicated region
  $region18: #{bottleneck_forward.4} parent=0 // pred_check
    _
  $region19: #{bottleneck_forward.4} parent=0 // pred_check_branch
    %989 = sbr.rel (0) target = $region21
  $region20: #{bottleneck_forward.4} parent=0 // pred_region
    _
  $region21: #{bottleneck_forward.4} parent=0 // pred_fallthru
    _
  // Predicated region
  $region22: #{bottleneck_forward.4} parent=0 // pred_check
    _
  $region23: #{bottleneck_forward.4} parent=0 // pred_check_branch
    %991 = sbr.rel (0) target = $region25
  $region24: #{bottleneck_forward.4} parent=0 // pred_region
    _
  $region25: #{bottleneck_forward.4} parent=0 // pred_fallthru
    _

// kernel: bottleneck_forward.6
$region0: #{bottleneck_forward.6}
  #allocation0 [shape = 'u32[]', space=smem, size = 0x4, offset = 0x4, fixed_abs, tag = 'smem constant byte address 0x4 - core index']
  #allocation1 [shape = 'u32[72,128]{1,0:T(1,128)}', space=vmem, size = 0x9000, scoped, tag = 'internal scratch']
  %s0 = inlined_call_operand.vmem [shape: bf16[512,8], index: 0, kind: input, shape index: {}]
  %s1 = inlined_call_operand.vmem [shape: f32[2,8], index: 1, kind: input, shape index: {}]
  %s2 = inlined_call_operand.vmem [shape: bf16[8,32], index: 2, kind: input, shape index: {}]
  %s3 = inlined_call_operand.vmem [shape: bf16[512,32], index: 3, kind: output, shape index: {0}]
  %s4 = inlined_call_operand.vmem [shape: f32[1,2,32], index: 4, kind: output, shape index: {1}]
  %5 = xla_tuple %s3, %s4
  %s6 = sld [smem:[#allocation0]]
  $region30: #{bottleneck_forward.6} parent=0
    _
  %s8 = ssub.s32 1, %s6
  %s9 = scalar_select 0, %s8, %s6
  // Predicated region
  $region2: #{bottleneck_forward.6} parent=0 // pred_check
    _
  $region3: #{bottleneck_forward.6} parent=0 // pred_check_branch
    %11 = sbr.rel (0) target = $region5
  $region4: #{bottleneck_forward.6} parent=0 // pred_region
    _
  $region5: #{bottleneck_forward.6} parent=0 // pred_fallthru
    _
  // Predicated region
  $region6: #{bottleneck_forward.6} parent=0 // pred_check
    _
  $region7: #{bottleneck_forward.6} parent=0 // pred_check_branch
    %13 = sbr.rel (0) target = $region9
  $region8: #{bottleneck_forward.6} parent=0 // pred_region
    _
  $region9: #{bottleneck_forward.6} parent=0 // pred_fallthru
    _
  // Predicated region
  $region10: #{bottleneck_forward.6} parent=0 // pred_check
    _
  $region11: #{bottleneck_forward.6} parent=0 // pred_check_branch
    %15 = sbr.rel (0) target = $region13
  $region12: #{bottleneck_forward.6} parent=0 // pred_region
    _
  $region13: #{bottleneck_forward.6} parent=0 // pred_fallthru
    _
  %v17 = vld [vmem:[%s0] sm:$0xf]
  %v18 = vld [vmem:[%s0 + $0x4] sm:$0xf]
  %v19 = vld [vmem:[%s0 + $0x8] sm:$0xf]
  %v20 = vld [vmem:[%s0 + $0xc] sm:$0xf]
  %v21 = vld [vmem:[%s0 + $0x10] sm:$0xf]
  %v22 = vld [vmem:[%s0 + $0x14] sm:$0xf]
  %v23 = vld [vmem:[%s0 + $0x18] sm:$0xf]
  %v24 = vld [vmem:[%s0 + $0x1c] sm:$0xf]
  %v25 = vld [vmem:[%s0 + $0x20] sm:$0xf]
  %v26 = vld [vmem:[%s0 + $0x24] sm:$0xf]
  %v27 = vld [vmem:[%s0 + $0x28] sm:$0xf]
  %v28 = vld [vmem:[%s0 + $0x2c] sm:$0xf]
  %v29 = vld [vmem:[%s0 + $0x30] sm:$0xf]
  %v30 = vld [vmem:[%s0 + $0x34] sm:$0xf]
  %v31 = vld [vmem:[%s0 + $0x38] sm:$0xf]
  %v32 = vld [vmem:[%s0 + $0x3c] sm:$0xf]
  %v33 = vld [vmem:[%s0 + $0x40] sm:$0xf]
  %v34 = vld [vmem:[%s0 + $0x44] sm:$0xf]
  %v35 = vld [vmem:[%s0 + $0x48] sm:$0xf]
  %v36 = vld [vmem:[%s0 + $0x4c] sm:$0xf]
  %v37 = vld [vmem:[%s0 + $0x50] sm:$0xf]
  %v38 = vld [vmem:[%s0 + $0x54] sm:$0xf]
  %v39 = vld [vmem:[%s0 + $0x58] sm:$0xf]
  %v40 = vld [vmem:[%s0 + $0x5c] sm:$0xf]
  %v41 = vld [vmem:[%s0 + $0x60] sm:$0xf]
  %v42 = vld [vmem:[%s0 + $0x64] sm:$0xf]
  %v43 = vld [vmem:[%s0 + $0x68] sm:$0xf]
  %v44 = vld [vmem:[%s0 + $0x6c] sm:$0xf]
  %v45 = vld [vmem:[%s0 + $0x70] sm:$0xf]
  %v46 = vld [vmem:[%s0 + $0x74] sm:$0xf]
  %v47 = vld [vmem:[%s0 + $0x78] sm:$0xf]
  %v48 = vld [vmem:[%s0 + $0x7c] sm:$0xf]
  %v49 = vld [vmem:[%s0 + $0x80] sm:$0xf]
  %v50 = vld [vmem:[%s0 + $0x84] sm:$0xf]
  %v51 = vld [vmem:[%s0 + $0x88] sm:$0xf]
  %v52 = vld [vmem:[%s0 + $0x8c] sm:$0xf]
  %v53 = vld [vmem:[%s0 + $0x90] sm:$0xf]
  %v54 = vld [vmem:[%s0 + $0x94] sm:$0xf]
  %v55 = vld [vmem:[%s0 + $0x98] sm:$0xf]
  %v56 = vld [vmem:[%s0 + $0x9c] sm:$0xf]
  %v57 = vld [vmem:[%s0 + $0xa0] sm:$0xf]
  %v58 = vld [vmem:[%s0 + $0xa4] sm:$0xf]
  %v59 = vld [vmem:[%s0 + $0xa8] sm:$0xf]
  %v60 = vld [vmem:[%s0 + $0xac] sm:$0xf]
  %v61 = vld [vmem:[%s0 + $0xb0] sm:$0xf]
  %v62 = vld [vmem:[%s0 + $0xb4] sm:$0xf]
  %v63 = vld [vmem:[%s0 + $0xb8] sm:$0xf]
  %v64 = vld [vmem:[%s0 + $0xbc] sm:$0xf]
  %v65 = vld [vmem:[%s0 + $0xc0] sm:$0xf]
  %v66 = vld [vmem:[%s0 + $0xc4] sm:$0xf]
  %v67 = vld [vmem:[%s0 + $0xc8] sm:$0xf]
  %v68 = vld [vmem:[%s0 + $0xcc] sm:$0xf]
  %v69 = vld [vmem:[%s0 + $0xd0] sm:$0xf]
  %v70 = vld [vmem:[%s0 + $0xd4] sm:$0xf]
  %v71 = vld [vmem:[%s0 + $0xd8] sm:$0xf]
  %v72 = vld [vmem:[%s0 + $0xdc] sm:$0xf]
  %v73 = vld [vmem:[%s0 + $0xe0] sm:$0xf]
  %v74 = vld [vmem:[%s0 + $0xe4] sm:$0xf]
  %v75 = vld [vmem:[%s0 + $0xe8] sm:$0xf]
  %v76 = vld [vmem:[%s0 + $0xec] sm:$0xf]
  %v77 = vld [vmem:[%s0 + $0xf0] sm:$0xf]
  %v78 = vld [vmem:[%s0 + $0xf4] sm:$0xf]
  %v79 = vld [vmem:[%s0 + $0xf8] sm:$0xf]
  %v80 = vld [vmem:[%s0 + $0xfc] sm:$0xf]
  %v81 = vunpack.c.l.bf16 %v17
  %v82 = vunpack.c.l.bf16 %v18
  %v83 = vunpack.c.l.bf16 %v19
  %v84 = vunpack.c.l.bf16 %v20
  %v85 = vunpack.c.l.bf16 %v21
  %v86 = vunpack.c.l.bf16 %v22
  %v87 = vunpack.c.l.bf16 %v23
  %v88 = vunpack.c.l.bf16 %v24
  %v89 = vunpack.c.l.bf16 %v25
  %v90 = vunpack.c.l.bf16 %v26
  %v91 = vunpack.c.l.bf16 %v27
  %v92 = vunpack.c.l.bf16 %v28
  %v93 = vunpack.c.l.bf16 %v29
  %v94 = vunpack.c.l.bf16 %v30
  %v95 = vunpack.c.l.bf16 %v31
  %v96 = vunpack.c.l.bf16 %v32
  %v97 = vunpack.c.l.bf16 %v33
  %v98 = vunpack.c.l.bf16 %v34
  %v99 = vunpack.c.l.bf16 %v35
  %v100 = vunpack.c.l.bf16 %v36
  %v101 = vunpack.c.l.bf16 %v37
  %v102 = vunpack.c.l.bf16 %v38
  %v103 = vunpack.c.l.bf16 %v39
  %v104 = vunpack.c.l.bf16 %v40
  %v105 = vunpack.c.l.bf16 %v41
  %v106 = vunpack.c.l.bf16 %v42
  %v107 = vunpack.c.l.bf16 %v43
  %v108 = vunpack.c.l.bf16 %v44
  %v109 = vunpack.c.l.bf16 %v45
  %v110 = vunpack.c.l.bf16 %v46
  %v111 = vunpack.c.l.bf16 %v47
  %v112 = vunpack.c.l.bf16 %v48
  %v113 = vunpack.c.l.bf16 %v49
  %v114 = vunpack.c.l.bf16 %v50
  %v115 = vunpack.c.l.bf16 %v51
  %v116 = vunpack.c.l.bf16 %v52
  %v117 = vunpack.c.l.bf16 %v53
  %v118 = vunpack.c.l.bf16 %v54
  %v119 = vunpack.c.l.bf16 %v55
  %v120 = vunpack.c.l.bf16 %v56
  %v121 = vunpack.c.l.bf16 %v57
  %v122 = vunpack.c.l.bf16 %v58
  %v123 = vunpack.c.l.bf16 %v59
  %v124 = vunpack.c.l.bf16 %v60
  %v125 = vunpack.c.l.bf16 %v61
  %v126 = vunpack.c.l.bf16 %v62
  %v127 = vunpack.c.l.bf16 %v63
  %v128 = vunpack.c.l.bf16 %v64
  %v129 = vunpack.c.l.bf16 %v65
  %v130 = vunpack.c.l.bf16 %v66
  %v131 = vunpack.c.l.bf16 %v67
  %v132 = vunpack.c.l.bf16 %v68
  %v133 = vunpack.c.l.bf16 %v69
  %v134 = vunpack.c.l.bf16 %v70
  %v135 = vunpack.c.l.bf16 %v71
  %v136 = vunpack.c.l.bf16 %v72
  %v137 = vunpack.c.l.bf16 %v73
  %v138 = vunpack.c.l.bf16 %v74
  %v139 = vunpack.c.l.bf16 %v75
  %v140 = vunpack.c.l.bf16 %v76
  %v141 = vunpack.c.l.bf16 %v77
  %v142 = vunpack.c.l.bf16 %v78
  %v143 = vunpack.c.l.bf16 %v79
  %v144 = vunpack.c.l.bf16 %v80
  %v145 = vld [vmem:[%s1] sm:$0x1]
  %v146 = vperm.slane %v145, 0
  %v147 = vmul.f32 %v81, %v146
  %v148 = vmul.f32 %v82, %v146
  %v149 = vmul.f32 %v83, %v146
  %v150 = vmul.f32 %v84, %v146
  %v151 = vmul.f32 %v85, %v146
  %v152 = vmul.f32 %v86, %v146
  %v153 = vmul.f32 %v87, %v146
  %v154 = vmul.f32 %v88, %v146
  %v155 = vmul.f32 %v89, %v146
  %v156 = vmul.f32 %v90, %v146
  %v157 = vmul.f32 %v91, %v146
  %v158 = vmul.f32 %v92, %v146
  %v159 = vmul.f32 %v93, %v146
  %v160 = vmul.f32 %v94, %v146
  %v161 = vmul.f32 %v95, %v146
  %v162 = vmul.f32 %v96, %v146
  %v163 = vmul.f32 %v97, %v146
  %v164 = vmul.f32 %v98, %v146
  %v165 = vmul.f32 %v99, %v146
  %v166 = vmul.f32 %v100, %v146
  %v167 = vmul.f32 %v101, %v146
  %v168 = vmul.f32 %v102, %v146
  %v169 = vmul.f32 %v103, %v146
  %v170 = vmul.f32 %v104, %v146
  %v171 = vmul.f32 %v105, %v146
  %v172 = vmul.f32 %v106, %v146
  %v173 = vmul.f32 %v107, %v146
  %v174 = vmul.f32 %v108, %v146
  %v175 = vmul.f32 %v109, %v146
  %v176 = vmul.f32 %v110, %v146
  %v177 = vmul.f32 %v111, %v146
  %v178 = vmul.f32 %v112, %v146
  %v179 = vmul.f32 %v113, %v146
  %v180 = vmul.f32 %v114, %v146
  %v181 = vmul.f32 %v115, %v146
  %v182 = vmul.f32 %v116, %v146
  %v183 = vmul.f32 %v117, %v146
  %v184 = vmul.f32 %v118, %v146
  %v185 = vmul.f32 %v119, %v146
  %v186 = vmul.f32 %v120, %v146
  %v187 = vmul.f32 %v121, %v146
  %v188 = vmul.f32 %v122, %v146
  %v189 = vmul.f32 %v123, %v146
  %v190 = vmul.f32 %v124, %v146
  %v191 = vmul.f32 %v125, %v146
  %v192 = vmul.f32 %v126, %v146
  %v193 = vmul.f32 %v127, %v146
  %v194 = vmul.f32 %v128, %v146
  %v195 = vmul.f32 %v129, %v146
  %v196 = vmul.f32 %v130, %v146
  %v197 = vmul.f32 %v131, %v146
  %v198 = vmul.f32 %v132, %v146
  %v199 = vmul.f32 %v133, %v146
  %v200 = vmul.f32 %v134, %v146
  %v201 = vmul.f32 %v135, %v146
  %v202 = vmul.f32 %v136, %v146
  %v203 = vmul.f32 %v137, %v146
  %v204 = vmul.f32 %v138, %v146
  %v205 = vmul.f32 %v139, %v146
  %v206 = vmul.f32 %v140, %v146
  %v207 = vmul.f32 %v141, %v146
  %v208 = vmul.f32 %v142, %v146
  %v209 = vmul.f32 %v143, %v146
  %v210 = vmul.f32 %v144, %v146
  %v211 = vld [vmem:[%s1 + $0x1] sm:$0x1]
  %v212 = vperm.slane %v211, 0
  %v213 = vadd.f32 %v147, %v212
  %v214 = vadd.f32 %v148, %v212
  %v215 = vadd.f32 %v149, %v212
  %v216 = vadd.f32 %v150, %v212
  %v217 = vadd.f32 %v151, %v212
  %v218 = vadd.f32 %v152, %v212
  %v219 = vadd.f32 %v153, %v212
  %v220 = vadd.f32 %v154, %v212
  %v221 = vadd.f32 %v155, %v212
  %v222 = vadd.f32 %v156, %v212
  %v223 = vadd.f32 %v157, %v212
  %v224 = vadd.f32 %v158, %v212
  %v225 = vadd.f32 %v159, %v212
  %v226 = vadd.f32 %v160, %v212
  %v227 = vadd.f32 %v161, %v212
  %v228 = vadd.f32 %v162, %v212
  %v229 = vadd.f32 %v163, %v212
  %v230 = vadd.f32 %v164, %v212
  %v231 = vadd.f32 %v165, %v212
  %v232 = vadd.f32 %v166, %v212
  %v233 = vadd.f32 %v167, %v212
  %v234 = vadd.f32 %v168, %v212
  %v235 = vadd.f32 %v169, %v212
  %v236 = vadd.f32 %v170, %v212
  %v237 = vadd.f32 %v171, %v212
  %v238 = vadd.f32 %v172, %v212
  %v239 = vadd.f32 %v173, %v212
  %v240 = vadd.f32 %v174, %v212
  %v241 = vadd.f32 %v175, %v212
  %v242 = vadd.f32 %v176, %v212
  %v243 = vadd.f32 %v177, %v212
  %v244 = vadd.f32 %v178, %v212
  %v245 = vadd.f32 %v179, %v212
  %v246 = vadd.f32 %v180, %v212
  %v247 = vadd.f32 %v181, %v212
  %v248 = vadd.f32 %v182, %v212
  %v249 = vadd.f32 %v183, %v212
  %v250 = vadd.f32 %v184, %v212
  %v251 = vadd.f32 %v185, %v212
  %v252 = vadd.f32 %v186, %v212
  %v253 = vadd.f32 %v187, %v212
  %v254 = vadd.f32 %v188, %v212
  %v255 = vadd.f32 %v189, %v212
  %v256 = vadd.f32 %v190, %v212
  %v257 = vadd.f32 %v191, %v212
  %v258 = vadd.f32 %v192, %v212
  %v259 = vadd.f32 %v193, %v212
  %v260 = vadd.f32 %v194, %v212
  %v261 = vadd.f32 %v195, %v212
  %v262 = vadd.f32 %v196, %v212
  %v263 = vadd.f32 %v197, %v212
  %v264 = vadd.f32 %v198, %v212
  %v265 = vadd.f32 %v199, %v212
  %v266 = vadd.f32 %v200, %v212
  %v267 = vadd.f32 %v201, %v212
  %v268 = vadd.f32 %v202, %v212
  %v269 = vadd.f32 %v203, %v212
  %v270 = vadd.f32 %v204, %v212
  %v271 = vadd.f32 %v205, %v212
  %v272 = vadd.f32 %v206, %v212
  %v273 = vadd.f32 %v207, %v212
  %v274 = vadd.f32 %v208, %v212
  %v275 = vadd.f32 %v209, %v212
  %v276 = vadd.f32 %v210, %v212
  %v277 = vmax.f32 %v213, 0.0
  %v278 = vmax.f32 %v214, 0.0
  %v279 = vmax.f32 %v215, 0.0
  %v280 = vmax.f32 %v216, 0.0
  %v281 = vmax.f32 %v217, 0.0
  %v282 = vmax.f32 %v218, 0.0
  %v283 = vmax.f32 %v219, 0.0
  %v284 = vmax.f32 %v220, 0.0
  %v285 = vmax.f32 %v221, 0.0
  %v286 = vmax.f32 %v222, 0.0
  %v287 = vmax.f32 %v223, 0.0
  %v288 = vmax.f32 %v224, 0.0
  %v289 = vmax.f32 %v225, 0.0
  %v290 = vmax.f32 %v226, 0.0
  %v291 = vmax.f32 %v227, 0.0
  %v292 = vmax.f32 %v228, 0.0
  %v293 = vmax.f32 %v229, 0.0
  %v294 = vmax.f32 %v230, 0.0
  %v295 = vmax.f32 %v231, 0.0
  %v296 = vmax.f32 %v232, 0.0
  %v297 = vmax.f32 %v233, 0.0
  %v298 = vmax.f32 %v234, 0.0
  %v299 = vmax.f32 %v235, 0.0
  %v300 = vmax.f32 %v236, 0.0
  %v301 = vmax.f32 %v237, 0.0
  %v302 = vmax.f32 %v238, 0.0
  %v303 = vmax.f32 %v239, 0.0
  %v304 = vmax.f32 %v240, 0.0
  %v305 = vmax.f32 %v241, 0.0
  %v306 = vmax.f32 %v242, 0.0
  %v307 = vmax.f32 %v243, 0.0
  %v308 = vmax.f32 %v244, 0.0
  %v309 = vmax.f32 %v245, 0.0
  %v310 = vmax.f32 %v246, 0.0
  %v311 = vmax.f32 %v247, 0.0
  %v312 = vmax.f32 %v248, 0.0
  %v313 = vmax.f32 %v249, 0.0
  %v314 = vmax.f32 %v250, 0.0
  %v315 = vmax.f32 %v251, 0.0
  %v316 = vmax.f32 %v252, 0.0
  %v317 = vmax.f32 %v253, 0.0
  %v318 = vmax.f32 %v254, 0.0
  %v319 = vmax.f32 %v255, 0.0
  %v320 = vmax.f32 %v256, 0.0
  %v321 = vmax.f32 %v257, 0.0
  %v322 = vmax.f32 %v258, 0.0
  %v323 = vmax.f32 %v259, 0.0
  %v324 = vmax.f32 %v260, 0.0
  %v325 = vmax.f32 %v261, 0.0
  %v326 = vmax.f32 %v262, 0.0
  %v327 = vmax.f32 %v263, 0.0
  %v328 = vmax.f32 %v264, 0.0
  %v329 = vmax.f32 %v265, 0.0
  %v330 = vmax.f32 %v266, 0.0
  %v331 = vmax.f32 %v267, 0.0
  %v332 = vmax.f32 %v268, 0.0
  %v333 = vmax.f32 %v269, 0.0
  %v334 = vmax.f32 %v270, 0.0
  %v335 = vmax.f32 %v271, 0.0
  %v336 = vmax.f32 %v272, 0.0
  %v337 = vmax.f32 %v273, 0.0
  %v338 = vmax.f32 %v274, 0.0
  %v339 = vmax.f32 %v275, 0.0
  %v340 = vmax.f32 %v276, 0.0
  %v341 = vpack.c.bf16 %v278, %v277
  %v342 = vpack.c.bf16 %v280, %v279
  %v343 = vpack.c.bf16 %v282, %v281
  %v344 = vpack.c.bf16 %v284, %v283
  %v345 = vpack.c.bf16 %v286, %v285
  %v346 = vpack.c.bf16 %v288, %v287
  %v347 = vpack.c.bf16 %v290, %v289
  %v348 = vpack.c.bf16 %v292, %v291
  %v349 = vpack.c.bf16 %v294, %v293
  %v350 = vpack.c.bf16 %v296, %v295
  %v351 = vpack.c.bf16 %v298, %v297
  %v352 = vpack.c.bf16 %v300, %v299
  %v353 = vpack.c.bf16 %v302, %v301
  %v354 = vpack.c.bf16 %v304, %v303
  %v355 = vpack.c.bf16 %v306, %v305
  %v356 = vpack.c.bf16 %v308, %v307
  %v357 = vpack.c.bf16 %v310, %v309
  %v358 = vpack.c.bf16 %v312, %v311
  %v359 = vpack.c.bf16 %v314, %v313
  %v360 = vpack.c.bf16 %v316, %v315
  %v361 = vpack.c.bf16 %v318, %v317
  %v362 = vpack.c.bf16 %v320, %v319
  %v363 = vpack.c.bf16 %v322, %v321
  %v364 = vpack.c.bf16 %v324, %v323
  %v365 = vpack.c.bf16 %v326, %v325
  %v366 = vpack.c.bf16 %v328, %v327
  %v367 = vpack.c.bf16 %v330, %v329
  %v368 = vpack.c.bf16 %v332, %v331
  %v369 = vpack.c.bf16 %v334, %v333
  %v370 = vpack.c.bf16 %v336, %v335
  %v371 = vpack.c.bf16 %v338, %v337
  %v372 = vpack.c.bf16 %v340, %v339
  %v373 = vld [vmem:[%s2] sm:$0xf]
  %vm374 = vcmask 64512
  %v376 = vsel %vm374, %v341, 0
  %v379 = vsel %vm374, %v342, 0
  %v382 = vsel %vm374, %v343, 0
  %v385 = vsel %vm374, %v344, 0
  %v388 = vsel %vm374, %v345, 0
  %v391 = vsel %vm374, %v346, 0
  %v394 = vsel %vm374, %v347, 0
  %v397 = vsel %vm374, %v348, 0
  %v400 = vsel %vm374, %v349, 0
  %v403 = vsel %vm374, %v350, 0
  %v406 = vsel %vm374, %v351, 0
  %v409 = vsel %vm374, %v352, 0
  %v412 = vsel %vm374, %v353, 0
  %v415 = vsel %vm374, %v354, 0
  %v418 = vsel %vm374, %v355, 0
  %v421 = vsel %vm374, %v356, 0
  %v424 = vsel %vm374, %v357, 0
  %v427 = vsel %vm374, %v358, 0
  %v430 = vsel %vm374, %v359, 0
  %v433 = vsel %vm374, %v360, 0
  %v436 = vsel %vm374, %v361, 0
  %v439 = vsel %vm374, %v362, 0
  %v442 = vsel %vm374, %v363, 0
  %v445 = vsel %vm374, %v364, 0
  %v448 = vsel %vm374, %v365, 0
  %v451 = vsel %vm374, %v366, 0
  %v454 = vsel %vm374, %v367, 0
  %v457 = vsel %vm374, %v368, 0
  %v460 = vsel %vm374, %v369, 0
  %v463 = vsel %vm374, %v370, 0
  %v466 = vsel %vm374, %v371, 0
  %v469 = vsel %vm374, %v372, 0
  %vm471 = vcmask 1043456
  %v473 = vsel %vm471, %v373, 0
  %475 = vmatpush.bf16.msra.mxu0 0
  %476 = vmatpush.bf16.msra.mxu0 0
  %477 = vmatpush.bf16.msra.mxu0 0
  %478 = vmatpush.bf16.msra.mxu0 0
  %479 = vmatpush.bf16.msra.mxu0 0
  %480 = vmatpush.bf16.msra.mxu0 0
  %481 = vmatpush.bf16.msra.mxu0 0
  %482 = vmatpush.bf16.msra.mxu0 %v473
  %483 = vmatmul.bf16.gmra.mxu0 %v376
  %v484 = vpop.f32.mrf.mxu0
  %v485 = vadd.f32 0.0, %v484
  %v486 = vpop.f32.mrf.mxu0
  %v487 = vadd.f32 0.0, %v486
  %488 = vmatmul.bf16.gmra.mxu0 %v379
  %v489 = vpop.f32.mrf.mxu0
  %v490 = vadd.f32 0.0, %v489
  %v491 = vpop.f32.mrf.mxu0
  %v492 = vadd.f32 0.0, %v491
  %493 = vmatmul.bf16.gmra.mxu0 %v382
  %v494 = vpop.f32.mrf.mxu0
  %v495 = vadd.f32 0.0, %v494
  %v496 = vpop.f32.mrf.mxu0
  %v497 = vadd.f32 0.0, %v496
  %498 = vmatmul.bf16.gmra.mxu0 %v385
  %v499 = vpop.f32.mrf.mxu0
  %v500 = vadd.f32 0.0, %v499
  %v501 = vpop.f32.mrf.mxu0
  %v502 = vadd.f32 0.0, %v501
  %503 = vmatmul.bf16.gmra.mxu0 %v388
  %v504 = vpop.f32.mrf.mxu0
  %v505 = vadd.f32 0.0, %v504
  %v506 = vpop.f32.mrf.mxu0
  %v507 = vadd.f32 0.0, %v506
  %508 = vmatmul.bf16.gmra.mxu0 %v391
  %v509 = vpop.f32.mrf.mxu0
  %v510 = vadd.f32 0.0, %v509
  %v511 = vpop.f32.mrf.mxu0
  %v512 = vadd.f32 0.0, %v511
  %513 = vmatmul.bf16.gmra.mxu0 %v394
  %v514 = vpop.f32.mrf.mxu0
  %v515 = vadd.f32 0.0, %v514
  %v516 = vpop.f32.mrf.mxu0
  %v517 = vadd.f32 0.0, %v516
  %518 = vmatmul.bf16.gmra.mxu0 %v397
  %v519 = vpop.f32.mrf.mxu0
  %v520 = vadd.f32 0.0, %v519
  %v521 = vpop.f32.mrf.mxu0
  %v522 = vadd.f32 0.0, %v521
  %523 = vmatmul.bf16.gmra.mxu0 %v400
  %v524 = vpop.f32.mrf.mxu0
  %v525 = vadd.f32 0.0, %v524
  %v526 = vpop.f32.mrf.mxu0
  %v527 = vadd.f32 0.0, %v526
  %528 = vmatmul.bf16.gmra.mxu0 %v403
  %v529 = vpop.f32.mrf.mxu0
  %v530 = vadd.f32 0.0, %v529
  %v531 = vpop.f32.mrf.mxu0
  %v532 = vadd.f32 0.0, %v531
  %533 = vmatmul.bf16.gmra.mxu0 %v406
  %v534 = vpop.f32.mrf.mxu0
  %v535 = vadd.f32 0.0, %v534
  %v536 = vpop.f32.mrf.mxu0
  %v537 = vadd.f32 0.0, %v536
  %538 = vmatmul.bf16.gmra.mxu0 %v409
  %v539 = vpop.f32.mrf.mxu0
  %v540 = vadd.f32 0.0, %v539
  %v541 = vpop.f32.mrf.mxu0
  %v542 = vadd.f32 0.0, %v541
  %543 = vmatmul.bf16.gmra.mxu0 %v412
  %v544 = vpop.f32.mrf.mxu0
  %v545 = vadd.f32 0.0, %v544
  %v546 = vpop.f32.mrf.mxu0
  %v547 = vadd.f32 0.0, %v546
  %548 = vmatmul.bf16.gmra.mxu0 %v415
  %v549 = vpop.f32.mrf.mxu0
  %v550 = vadd.f32 0.0, %v549
  %v551 = vpop.f32.mrf.mxu0
  %v552 = vadd.f32 0.0, %v551
  %553 = vmatmul.bf16.gmra.mxu0 %v418
  %v554 = vpop.f32.mrf.mxu0
  %v555 = vadd.f32 0.0, %v554
  %v556 = vpop.f32.mrf.mxu0
  %v557 = vadd.f32 0.0, %v556
  %558 = vmatmul.bf16.gmra.mxu0 %v421
  %v559 = vpop.f32.mrf.mxu0
  %v560 = vadd.f32 0.0, %v559
  %v561 = vpop.f32.mrf.mxu0
  %v562 = vadd.f32 0.0, %v561
  %563 = vmatmul.bf16.gmra.mxu0 %v424
  %v564 = vpop.f32.mrf.mxu0
  %v565 = vadd.f32 0.0, %v564
  %v566 = vpop.f32.mrf.mxu0
  %v567 = vadd.f32 0.0, %v566
  %568 = vmatmul.bf16.gmra.mxu0 %v427
  %v569 = vpop.f32.mrf.mxu0
  %v570 = vadd.f32 0.0, %v569
  %v571 = vpop.f32.mrf.mxu0
  %v572 = vadd.f32 0.0, %v571
  %573 = vmatmul.bf16.gmra.mxu0 %v430
  %v574 = vpop.f32.mrf.mxu0
  %v575 = vadd.f32 0.0, %v574
  %v576 = vpop.f32.mrf.mxu0
  %v577 = vadd.f32 0.0, %v576
  %578 = vmatmul.bf16.gmra.mxu0 %v433
  %v579 = vpop.f32.mrf.mxu0
  %v580 = vadd.f32 0.0, %v579
  %v581 = vpop.f32.mrf.mxu0
  %v582 = vadd.f32 0.0, %v581
  %583 = vmatmul.bf16.gmra.mxu0 %v436
  %v584 = vpop.f32.mrf.mxu0
  %v585 = vadd.f32 0.0, %v584
  %v586 = vpop.f32.mrf.mxu0
  %v587 = vadd.f32 0.0, %v586
  %588 = vmatmul.bf16.gmra.mxu0 %v439
  %v589 = vpop.f32.mrf.mxu0
  %v590 = vadd.f32 0.0, %v589
  %v591 = vpop.f32.mrf.mxu0
  %v592 = vadd.f32 0.0, %v591
  %593 = vmatmul.bf16.gmra.mxu0 %v442
  %v594 = vpop.f32.mrf.mxu0
  %v595 = vadd.f32 0.0, %v594
  %v596 = vpop.f32.mrf.mxu0
  %v597 = vadd.f32 0.0, %v596
  %598 = vmatmul.bf16.gmra.mxu0 %v445
  %v599 = vpop.f32.mrf.mxu0
  %v600 = vadd.f32 0.0, %v599
  %v601 = vpop.f32.mrf.mxu0
  %v602 = vadd.f32 0.0, %v601
  %603 = vmatmul.bf16.gmra.mxu0 %v448
  %v604 = vpop.f32.mrf.mxu0
  %v605 = vadd.f32 0.0, %v604
  %v606 = vpop.f32.mrf.mxu0
  %v607 = vadd.f32 0.0, %v606
  %608 = vmatmul.bf16.gmra.mxu0 %v451
  %v609 = vpop.f32.mrf.mxu0
  %v610 = vadd.f32 0.0, %v609
  %v611 = vpop.f32.mrf.mxu0
  %v612 = vadd.f32 0.0, %v611
  %613 = vmatmul.bf16.gmra.mxu0 %v454
  %v614 = vpop.f32.mrf.mxu0
  %v615 = vadd.f32 0.0, %v614
  %v616 = vpop.f32.mrf.mxu0
  %v617 = vadd.f32 0.0, %v616
  %618 = vmatmul.bf16.gmra.mxu0 %v457
  %v619 = vpop.f32.mrf.mxu0
  %v620 = vadd.f32 0.0, %v619
  %v621 = vpop.f32.mrf.mxu0
  %v622 = vadd.f32 0.0, %v621
  %623 = vmatmul.bf16.gmra.mxu0 %v460
  %v624 = vpop.f32.mrf.mxu0
  %v625 = vadd.f32 0.0, %v624
  %v626 = vpop.f32.mrf.mxu0
  %v627 = vadd.f32 0.0, %v626
  %628 = vmatmul.bf16.gmra.mxu0 %v463
  %v629 = vpop.f32.mrf.mxu0
  %v630 = vadd.f32 0.0, %v629
  %v631 = vpop.f32.mrf.mxu0
  %v632 = vadd.f32 0.0, %v631
  %633 = vmatmul.bf16.gmra.mxu0 %v466
  %v634 = vpop.f32.mrf.mxu0
  %v635 = vadd.f32 0.0, %v634
  %v636 = vpop.f32.mrf.mxu0
  %v637 = vadd.f32 0.0, %v636
  %638 = vmatmul.bf16.gmra.mxu0 %v469
  %v639 = vpop.f32.mrf.mxu0
  %v640 = vadd.f32 0.0, %v639
  %v641 = vpop.f32.mrf.mxu0
  %v642 = vadd.f32 0.0, %v641
  %643 = vdwg.mxu0
  %v644 = vpack.c.bf16 %v485, %v485
  %v645 = vpack.c.bf16 %v487, %v487
  %v646 = vpack.c.bf16 %v490, %v490
  %v647 = vpack.c.bf16 %v492, %v492
  %v648 = vpack.c.bf16 %v495, %v495
  %v649 = vpack.c.bf16 %v497, %v497
  %v650 = vpack.c.bf16 %v500, %v500
  %v651 = vpack.c.bf16 %v502, %v502
  %v652 = vpack.c.bf16 %v505, %v505
  %v653 = vpack.c.bf16 %v507, %v507
  %v654 = vpack.c.bf16 %v510, %v510
  %v655 = vpack.c.bf16 %v512, %v512
  %v656 = vpack.c.bf16 %v515, %v515
  %v657 = vpack.c.bf16 %v517, %v517
  %v658 = vpack.c.bf16 %v520, %v520
  %v659 = vpack.c.bf16 %v522, %v522
  %v660 = vpack.c.bf16 %v525, %v525
  %v661 = vpack.c.bf16 %v527, %v527
  %v662 = vpack.c.bf16 %v530, %v530
  %v663 = vpack.c.bf16 %v532, %v532
  %v664 = vpack.c.bf16 %v535, %v535
  %v665 = vpack.c.bf16 %v537, %v537
  %v666 = vpack.c.bf16 %v540, %v540
  %v667 = vpack.c.bf16 %v542, %v542
  %v668 = vpack.c.bf16 %v545, %v545
  %v669 = vpack.c.bf16 %v547, %v547
  %v670 = vpack.c.bf16 %v550, %v550
  %v671 = vpack.c.bf16 %v552, %v552
  %v672 = vpack.c.bf16 %v555, %v555
  %v673 = vpack.c.bf16 %v557, %v557
  %v674 = vpack.c.bf16 %v560, %v560
  %v675 = vpack.c.bf16 %v562, %v562
  %v676 = vpack.c.bf16 %v565, %v565
  %v677 = vpack.c.bf16 %v567, %v567
  %v678 = vpack.c.bf16 %v570, %v570
  %v679 = vpack.c.bf16 %v572, %v572
  %v680 = vpack.c.bf16 %v575, %v575
  %v681 = vpack.c.bf16 %v577, %v577
  %v682 = vpack.c.bf16 %v580, %v580
  %v683 = vpack.c.bf16 %v582, %v582
  %v684 = vpack.c.bf16 %v585, %v585
  %v685 = vpack.c.bf16 %v587, %v587
  %v686 = vpack.c.bf16 %v590, %v590
  %v687 = vpack.c.bf16 %v592, %v592
  %v688 = vpack.c.bf16 %v595, %v595
  %v689 = vpack.c.bf16 %v597, %v597
  %v690 = vpack.c.bf16 %v600, %v600
  %v691 = vpack.c.bf16 %v602, %v602
  %v692 = vpack.c.bf16 %v605, %v605
  %v693 = vpack.c.bf16 %v607, %v607
  %v694 = vpack.c.bf16 %v610, %v610
  %v695 = vpack.c.bf16 %v612, %v612
  %v696 = vpack.c.bf16 %v615, %v615
  %v697 = vpack.c.bf16 %v617, %v617
  %v698 = vpack.c.bf16 %v620, %v620
  %v699 = vpack.c.bf16 %v622, %v622
  %v700 = vpack.c.bf16 %v625, %v625
  %v701 = vpack.c.bf16 %v627, %v627
  %v702 = vpack.c.bf16 %v630, %v630
  %v703 = vpack.c.bf16 %v632, %v632
  %v704 = vpack.c.bf16 %v635, %v635
  %v705 = vpack.c.bf16 %v637, %v637
  %v706 = vpack.c.bf16 %v640, %v640
  %v707 = vpack.c.bf16 %v642, %v642
  %vm708 = vcmask 257024
  %709 = vst.msk [vmem:[%s3] sm:$0xf] %vm708, %v644
  %710 = vst.msk [vmem:[%s3 + $0x4] sm:$0xf] %vm708, %v645
  %711 = vst.msk [vmem:[%s3 + $0x8] sm:$0xf] %vm708, %v646
  %712 = vst.msk [vmem:[%s3 + $0xc] sm:$0xf] %vm708, %v647
  %713 = vst.msk [vmem:[%s3 + $0x10] sm:$0xf] %vm708, %v648
  %714 = vst.msk [vmem:[%s3 + $0x14] sm:$0xf] %vm708, %v649
  %715 = vst.msk [vmem:[%s3 + $0x18] sm:$0xf] %vm708, %v650
  %716 = vst.msk [vmem:[%s3 + $0x1c] sm:$0xf] %vm708, %v651
  %717 = vst.msk [vmem:[%s3 + $0x20] sm:$0xf] %vm708, %v652
  %718 = vst.msk [vmem:[%s3 + $0x24] sm:$0xf] %vm708, %v653
  %719 = vst.msk [vmem:[%s3 + $0x28] sm:$0xf] %vm708, %v654
  %720 = vst.msk [vmem:[%s3 + $0x2c] sm:$0xf] %vm708, %v655
  %721 = vst.msk [vmem:[%s3 + $0x30] sm:$0xf] %vm708, %v656
  %722 = vst.msk [vmem:[%s3 + $0x34] sm:$0xf] %vm708, %v657
  %723 = vst.msk [vmem:[%s3 + $0x38] sm:$0xf] %vm708, %v658
  %724 = vst.msk [vmem:[%s3 + $0x3c] sm:$0xf] %vm708, %v659
  %725 = vst.msk [vmem:[%s3 + $0x40] sm:$0xf] %vm708, %v660
  %726 = vst.msk [vmem:[%s3 + $0x44] sm:$0xf] %vm708, %v661
  %727 = vst.msk [vmem:[%s3 + $0x48] sm:$0xf] %vm708, %v662
  %728 = vst.msk [vmem:[%s3 + $0x4c] sm:$0xf] %vm708, %v663
  %729 = vst.msk [vmem:[%s3 + $0x50] sm:$0xf] %vm708, %v664
  %730 = vst.msk [vmem:[%s3 + $0x54] sm:$0xf] %vm708, %v665
  %731 = vst.msk [vmem:[%s3 + $0x58] sm:$0xf] %vm708, %v666
  %732 = vst.msk [vmem:[%s3 + $0x5c] sm:$0xf] %vm708, %v667
  %733 = vst.msk [vmem:[%s3 + $0x60] sm:$0xf] %vm708, %v668
  %734 = vst.msk [vmem:[%s3 + $0x64] sm:$0xf] %vm708, %v669
  %735 = vst.msk [vmem:[%s3 + $0x68] sm:$0xf] %vm708, %v670
  %736 = vst.msk [vmem:[%s3 + $0x6c] sm:$0xf] %vm708, %v671
  %737 = vst.msk [vmem:[%s3 + $0x70] sm:$0xf] %vm708, %v672
  %738 = vst.msk [vmem:[%s3 + $0x74] sm:$0xf] %vm708, %v673
  %739 = vst.msk [vmem:[%s3 + $0x78] sm:$0xf] %vm708, %v674
  %740 = vst.msk [vmem:[%s3 + $0x7c] sm:$0xf] %vm708, %v675
  %741 = vst.msk [vmem:[%s3 + $0x80] sm:$0xf] %vm708, %v676
  %742 = vst.msk [vmem:[%s3 + $0x84] sm:$0xf] %vm708, %v677
  %743 = vst.msk [vmem:[%s3 + $0x88] sm:$0xf] %vm708, %v678
  %744 = vst.msk [vmem:[%s3 + $0x8c] sm:$0xf] %vm708, %v679
  %745 = vst.msk [vmem:[%s3 + $0x90] sm:$0xf] %vm708, %v680
  %746 = vst.msk [vmem:[%s3 + $0x94] sm:$0xf] %vm708, %v681
  %747 = vst.msk [vmem:[%s3 + $0x98] sm:$0xf] %vm708, %v682
  %748 = vst.msk [vmem:[%s3 + $0x9c] sm:$0xf] %vm708, %v683
  %749 = vst.msk [vmem:[%s3 + $0xa0] sm:$0xf] %vm708, %v684
  %750 = vst.msk [vmem:[%s3 + $0xa4] sm:$0xf] %vm708, %v685
  %751 = vst.msk [vmem:[%s3 + $0xa8] sm:$0xf] %vm708, %v686
  %752 = vst.msk [vmem:[%s3 + $0xac] sm:$0xf] %vm708, %v687
  %753 = vst.msk [vmem:[%s3 + $0xb0] sm:$0xf] %vm708, %v688
  %754 = vst.msk [vmem:[%s3 + $0xb4] sm:$0xf] %vm708, %v689
  %755 = vst.msk [vmem:[%s3 + $0xb8] sm:$0xf] %vm708, %v690
  %756 = vst.msk [vmem:[%s3 + $0xbc] sm:$0xf] %vm708, %v691
  %757 = vst.msk [vmem:[%s3 + $0xc0] sm:$0xf] %vm708, %v692
  %758 = vst.msk [vmem:[%s3 + $0xc4] sm:$0xf] %vm708, %v693
  %759 = vst.msk [vmem:[%s3 + $0xc8] sm:$0xf] %vm708, %v694
  %760 = vst.msk [vmem:[%s3 + $0xcc] sm:$0xf] %vm708, %v695
  %761 = vst.msk [vmem:[%s3 + $0xd0] sm:$0xf] %vm708, %v696
  %762 = vst.msk [vmem:[%s3 + $0xd4] sm:$0xf] %vm708, %v697
  %763 = vst.msk [vmem:[%s3 + $0xd8] sm:$0xf] %vm708, %v698
  %764 = vst.msk [vmem:[%s3 + $0xdc] sm:$0xf] %vm708, %v699
  %765 = vst.msk [vmem:[%s3 + $0xe0] sm:$0xf] %vm708, %v700
  %766 = vst.msk [vmem:[%s3 + $0xe4] sm:$0xf] %vm708, %v701
  %767 = vst.msk [vmem:[%s3 + $0xe8] sm:$0xf] %vm708, %v702
  %768 = vst.msk [vmem:[%s3 + $0xec] sm:$0xf] %vm708, %v703
  %769 = vst.msk [vmem:[%s3 + $0xf0] sm:$0xf] %vm708, %v704
  %770 = vst.msk [vmem:[%s3 + $0xf4] sm:$0xf] %vm708, %v705
  %771 = vst.msk [vmem:[%s3 + $0xf8] sm:$0xf] %vm708, %v706
  %772 = vst.msk [vmem:[%s3 + $0xfc] sm:$0xf] %vm708, %v707
  %vm773 = vcmask 261120
  %v774 = vsel %vm773, %v485, 0.0
  %v775 = vsel %vm773, %v487, 0.0
  %v776 = vadd.f32 %v774, %v775
  %v777 = vsel %vm773, %v490, 0.0
  %v778 = vadd.f32 %v776, %v777
  %v779 = vsel %vm773, %v492, 0.0
  %v780 = vadd.f32 %v778, %v779
  %v781 = vsel %vm773, %v495, 0.0
  %v782 = vadd.f32 %v780, %v781
  %v783 = vsel %vm773, %v497, 0.0
  %v784 = vadd.f32 %v782, %v783
  %v785 = vsel %vm773, %v500, 0.0
  %v786 = vadd.f32 %v784, %v785
  %v787 = vsel %vm773, %v502, 0.0
  %v788 = vadd.f32 %v786, %v787
  %v789 = vsel %vm773, %v505, 0.0
  %v790 = vadd.f32 %v788, %v789
  %v791 = vsel %vm773, %v507, 0.0
  %v792 = vadd.f32 %v790, %v791
  %v793 = vsel %vm773, %v510, 0.0
  %v794 = vadd.f32 %v792, %v793
  %v795 = vsel %vm773, %v512, 0.0
  %v796 = vadd.f32 %v794, %v795
  %v797 = vsel %vm773, %v515, 0.0
  %v798 = vadd.f32 %v796, %v797
  %v799 = vsel %vm773, %v517, 0.0
  %v800 = vadd.f32 %v798, %v799
  %v801 = vsel %vm773, %v520, 0.0
  %v802 = vadd.f32 %v800, %v801
  %v803 = vsel %vm773, %v522, 0.0
  %v804 = vadd.f32 %v802, %v803
  %v805 = vsel %vm773, %v525, 0.0
  %v806 = vadd.f32 %v804, %v805
  %v807 = vsel %vm773, %v527, 0.0
  %v808 = vadd.f32 %v806, %v807
  %v809 = vsel %vm773, %v530, 0.0
  %v810 = vadd.f32 %v808, %v809
  %v811 = vsel %vm773, %v532, 0.0
  %v812 = vadd.f32 %v810, %v811
  %v813 = vsel %vm773, %v535, 0.0
  %v814 = vadd.f32 %v812, %v813
  %v815 = vsel %vm773, %v537, 0.0
  %v816 = vadd.f32 %v814, %v815
  %v817 = vsel %vm773, %v540, 0.0
  %v818 = vadd.f32 %v816, %v817
  %v819 = vsel %vm773, %v542, 0.0
  %v820 = vadd.f32 %v818, %v819
  %v821 = vsel %vm773, %v545, 0.0
  %v822 = vadd.f32 %v820, %v821
  %v823 = vsel %vm773, %v547, 0.0
  %v824 = vadd.f32 %v822, %v823
  %v825 = vsel %vm773, %v550, 0.0
  %v826 = vadd.f32 %v824, %v825
  %v827 = vsel %vm773, %v552, 0.0
  %v828 = vadd.f32 %v826, %v827
  %v829 = vsel %vm773, %v555, 0.0
  %v830 = vadd.f32 %v828, %v829
  %v831 = vsel %vm773, %v557, 0.0
  %v832 = vadd.f32 %v830, %v831
  %v833 = vsel %vm773, %v560, 0.0
  %v834 = vadd.f32 %v832, %v833
  %v835 = vsel %vm773, %v562, 0.0
  %v836 = vadd.f32 %v834, %v835
  %v837 = vsel %vm773, %v565, 0.0
  %v838 = vadd.f32 %v836, %v837
  %v839 = vsel %vm773, %v567, 0.0
  %v840 = vadd.f32 %v838, %v839
  %v841 = vsel %vm773, %v570, 0.0
  %v842 = vadd.f32 %v840, %v841
  %v843 = vsel %vm773, %v572, 0.0
  %v844 = vadd.f32 %v842, %v843
  %v845 = vsel %vm773, %v575, 0.0
  %v846 = vadd.f32 %v844, %v845
  %v847 = vsel %vm773, %v577, 0.0
  %v848 = vadd.f32 %v846, %v847
  %v849 = vsel %vm773, %v580, 0.0
  %v850 = vadd.f32 %v848, %v849
  %v851 = vsel %vm773, %v582, 0.0
  %v852 = vadd.f32 %v850, %v851
  %v853 = vsel %vm773, %v585, 0.0
  %v854 = vadd.f32 %v852, %v853
  %v855 = vsel %vm773, %v587, 0.0
  %v856 = vadd.f32 %v854, %v855
  %v857 = vsel %vm773, %v590, 0.0
  %v858 = vadd.f32 %v856, %v857
  %v859 = vsel %vm773, %v592, 0.0
  %v860 = vadd.f32 %v858, %v859
  %v861 = vsel %vm773, %v595, 0.0
  %v862 = vadd.f32 %v860, %v861
  %v863 = vsel %vm773, %v597, 0.0
  %v864 = vadd.f32 %v862, %v863
  %v865 = vsel %vm773, %v600, 0.0
  %v866 = vadd.f32 %v864, %v865
  %v867 = vsel %vm773, %v602, 0.0
  %v868 = vadd.f32 %v866, %v867
  %v869 = vsel %vm773, %v605, 0.0
  %v870 = vadd.f32 %v868, %v869
  %v871 = vsel %vm773, %v607, 0.0
  %v872 = vadd.f32 %v870, %v871
  %v873 = vsel %vm773, %v610, 0.0
  %v874 = vadd.f32 %v872, %v873
  %v875 = vsel %vm773, %v612, 0.0
  %v876 = vadd.f32 %v874, %v875
  %v877 = vsel %vm773, %v615, 0.0
  %v878 = vadd.f32 %v876, %v877
  %v879 = vsel %vm773, %v617, 0.0
  %v880 = vadd.f32 %v878, %v879
  %v881 = vsel %vm773, %v620, 0.0
  %v882 = vadd.f32 %v880, %v881
  %v883 = vsel %vm773, %v622, 0.0
  %v884 = vadd.f32 %v882, %v883
  %v885 = vsel %vm773, %v625, 0.0
  %v886 = vadd.f32 %v884, %v885
  %v887 = vsel %vm773, %v627, 0.0
  %v888 = vadd.f32 %v886, %v887
  %v889 = vsel %vm773, %v630, 0.0
  %v890 = vadd.f32 %v888, %v889
  %v891 = vsel %vm773, %v632, 0.0
  %v892 = vadd.f32 %v890, %v891
  %v893 = vsel %vm773, %v635, 0.0
  %v894 = vadd.f32 %v892, %v893
  %v895 = vsel %vm773, %v637, 0.0
  %v896 = vadd.f32 %v894, %v895
  %v897 = vsel %vm773, %v640, 0.0
  %v898 = vadd.f32 %v896, %v897
  %v899 = vsel %vm773, %v642, 0.0
  %v900 = vadd.f32 %v898, %v899
  %v901 = vrot.slane %v900, 4
  %v902 = vadd.f32 %v900, %v901
  %v903 = vrot.slane %v902, 2
  %v904 = vadd.f32 %v902, %v903
  %v905 = vrot.slane %v904, 1
  %v906 = vadd.f32 %v904, %v905
  %v907 = vmul.f32 %v485, %v485
  %v908 = vmul.f32 %v487, %v487
  %v909 = vmul.f32 %v490, %v490
  %v910 = vmul.f32 %v492, %v492
  %v911 = vmul.f32 %v495, %v495
  %v912 = vmul.f32 %v497, %v497
  %v913 = vmul.f32 %v500, %v500
  %v914 = vmul.f32 %v502, %v502
  %v915 = vmul.f32 %v505, %v505
  %v916 = vmul.f32 %v507, %v507
  %v917 = vmul.f32 %v510, %v510
  %v918 = vmul.f32 %v512, %v512
  %v919 = vmul.f32 %v515, %v515
  %v920 = vmul.f32 %v517, %v517
  %v921 = vmul.f32 %v520, %v520
  %v922 = vmul.f32 %v522, %v522
  %v923 = vmul.f32 %v525, %v525
  %v924 = vmul.f32 %v527, %v527
  %v925 = vmul.f32 %v530, %v530
  %v926 = vmul.f32 %v532, %v532
  %v927 = vmul.f32 %v535, %v535
  %v928 = vmul.f32 %v537, %v537
  %v929 = vmul.f32 %v540, %v540
  %v930 = vmul.f32 %v542, %v542
  %v931 = vmul.f32 %v545, %v545
  %v932 = vmul.f32 %v547, %v547
  %v933 = vmul.f32 %v550, %v550
  %v934 = vmul.f32 %v552, %v552
  %v935 = vmul.f32 %v555, %v555
  %v936 = vmul.f32 %v557, %v557
  %v937 = vmul.f32 %v560, %v560
  %v938 = vmul.f32 %v562, %v562
  %v939 = vmul.f32 %v565, %v565
  %v940 = vmul.f32 %v567, %v567
  %v941 = vmul.f32 %v570, %v570
  %v942 = vmul.f32 %v572, %v572
  %v943 = vmul.f32 %v575, %v575
  %v944 = vmul.f32 %v577, %v577
  %v945 = vmul.f32 %v580, %v580
  %v946 = vmul.f32 %v582, %v582
  %v947 = vmul.f32 %v585, %v585
  %v948 = vmul.f32 %v587, %v587
  %v949 = vmul.f32 %v590, %v590
  %v950 = vmul.f32 %v592, %v592
  %v951 = vmul.f32 %v595, %v595
  %v952 = vmul.f32 %v597, %v597
  %v953 = vmul.f32 %v600, %v600
  %v954 = vmul.f32 %v602, %v602
  %v955 = vmul.f32 %v605, %v605
  %v956 = vmul.f32 %v607, %v607
  %v957 = vmul.f32 %v610, %v610
  %v958 = vmul.f32 %v612, %v612
  %v959 = vmul.f32 %v615, %v615
  %v960 = vmul.f32 %v617, %v617
  %v961 = vmul.f32 %v620, %v620
  %v962 = vmul.f32 %v622, %v622
  %v963 = vmul.f32 %v625, %v625
  %v964 = vmul.f32 %v627, %v627
  %v965 = vmul.f32 %v630, %v630
  %v966 = vmul.f32 %v632, %v632
  %v967 = vmul.f32 %v635, %v635
  %v968 = vmul.f32 %v637, %v637
  %v969 = vmul.f32 %v640, %v640
  %v970 = vmul.f32 %v642, %v642
  %v971 = vsel %vm773, %v907, 0.0
  %v972 = vsel %vm773, %v908, 0.0
  %v973 = vadd.f32 %v971, %v972
  %v974 = vsel %vm773, %v909, 0.0
  %v975 = vadd.f32 %v973, %v974
  %v976 = vsel %vm773, %v910, 0.0
  %v977 = vadd.f32 %v975, %v976
  %v978 = vsel %vm773, %v911, 0.0
  %v979 = vadd.f32 %v977, %v978
  %v980 = vsel %vm773, %v912, 0.0
  %v981 = vadd.f32 %v979, %v980
  %v982 = vsel %vm773, %v913, 0.0
  %v983 = vadd.f32 %v981, %v982
  %v984 = vsel %vm773, %v914, 0.0
  %v985 = vadd.f32 %v983, %v984
  %v986 = vsel %vm773, %v915, 0.0
  %v987 = vadd.f32 %v985, %v986
  %v988 = vsel %vm773, %v916, 0.0
  %v989 = vadd.f32 %v987, %v988
  %v990 = vsel %vm773, %v917, 0.0
  %v991 = vadd.f32 %v989, %v990
  %v992 = vsel %vm773, %v918, 0.0
  %v993 = vadd.f32 %v991, %v992
  %v994 = vsel %vm773, %v919, 0.0
  %v995 = vadd.f32 %v993, %v994
  %v996 = vsel %vm773, %v920, 0.0
  %v997 = vadd.f32 %v995, %v996
  %v998 = vsel %vm773, %v921, 0.0
  %v999 = vadd.f32 %v997, %v998
  %v1000 = vsel %vm773, %v922, 0.0
  %v1001 = vadd.f32 %v999, %v1000
  %v1002 = vsel %vm773, %v923, 0.0
  %v1003 = vadd.f32 %v1001, %v1002
  %v1004 = vsel %vm773, %v924, 0.0
  %v1005 = vadd.f32 %v1003, %v1004
  %v1006 = vsel %vm773, %v925, 0.0
  %v1007 = vadd.f32 %v1005, %v1006
  %v1008 = vsel %vm773, %v926, 0.0
  %v1009 = vadd.f32 %v1007, %v1008
  %v1010 = vsel %vm773, %v927, 0.0
  %v1011 = vadd.f32 %v1009, %v1010
  %v1012 = vsel %vm773, %v928, 0.0
  %v1013 = vadd.f32 %v1011, %v1012
  %v1014 = vsel %vm773, %v929, 0.0
  %v1015 = vadd.f32 %v1013, %v1014
  %v1016 = vsel %vm773, %v930, 0.0
  %v1017 = vadd.f32 %v1015, %v1016
  %v1018 = vsel %vm773, %v931, 0.0
  %v1019 = vadd.f32 %v1017, %v1018
  %v1020 = vsel %vm773, %v932, 0.0
  %v1021 = vadd.f32 %v1019, %v1020
  %v1022 = vsel %vm773, %v933, 0.0
  %v1023 = vadd.f32 %v1021, %v1022
  %v1024 = vsel %vm773, %v934, 0.0
  %v1025 = vadd.f32 %v1023, %v1024
  %v1026 = vsel %vm773, %v935, 0.0
  %v1027 = vadd.f32 %v1025, %v1026
  %v1028 = vsel %vm773, %v936, 0.0
  %v1029 = vadd.f32 %v1027, %v1028
  %v1030 = vsel %vm773, %v937, 0.0
  %v1031 = vadd.f32 %v1029, %v1030
  %v1032 = vsel %vm773, %v938, 0.0
  %v1033 = vadd.f32 %v1031, %v1032
  %v1034 = vsel %vm773, %v939, 0.0
  %v1035 = vadd.f32 %v1033, %v1034
  %v1036 = vsel %vm773, %v940, 0.0
  %v1037 = vadd.f32 %v1035, %v1036
  %v1038 = vsel %vm773, %v941, 0.0
  %v1039 = vadd.f32 %v1037, %v1038
  %v1040 = vsel %vm773, %v942, 0.0
  %v1041 = vadd.f32 %v1039, %v1040
  %v1042 = vsel %vm773, %v943, 0.0
  %v1043 = vadd.f32 %v1041, %v1042
  %v1044 = vsel %vm773, %v944, 0.0
  %v1045 = vadd.f32 %v1043, %v1044
  %v1046 = vsel %vm773, %v945, 0.0
  %v1047 = vadd.f32 %v1045, %v1046
  %v1048 = vsel %vm773, %v946, 0.0
  %v1049 = vadd.f32 %v1047, %v1048
  %v1050 = vsel %vm773, %v947, 0.0
  %v1051 = vadd.f32 %v1049, %v1050
  %v1052 = vsel %vm773, %v948, 0.0
  %v1053 = vadd.f32 %v1051, %v1052
  %v1054 = vsel %vm773, %v949, 0.0
  %v1055 = vadd.f32 %v1053, %v1054
  %v1056 = vsel %vm773, %v950, 0.0
  %v1057 = vadd.f32 %v1055, %v1056
  %v1058 = vsel %vm773, %v951, 0.0
  %v1059 = vadd.f32 %v1057, %v1058
  %v1060 = vsel %vm773, %v952, 0.0
  %v1061 = vadd.f32 %v1059, %v1060
  %v1062 = vsel %vm773, %v953, 0.0
  %v1063 = vadd.f32 %v1061, %v1062
  %v1064 = vsel %vm773, %v954, 0.0
  %v1065 = vadd.f32 %v1063, %v1064
  %v1066 = vsel %vm773, %v955, 0.0
  %v1067 = vadd.f32 %v1065, %v1066
  %v1068 = vsel %vm773, %v956, 0.0
  %v1069 = vadd.f32 %v1067, %v1068
  %v1070 = vsel %vm773, %v957, 0.0
  %v1071 = vadd.f32 %v1069, %v1070
  %v1072 = vsel %vm773, %v958, 0.0
  %v1073 = vadd.f32 %v1071, %v1072
  %v1074 = vsel %vm773, %v959, 0.0
  %v1075 = vadd.f32 %v1073, %v1074
  %v1076 = vsel %vm773, %v960, 0.0
  %v1077 = vadd.f32 %v1075, %v1076
  %v1078 = vsel %vm773, %v961, 0.0
  %v1079 = vadd.f32 %v1077, %v1078
  %v1080 = vsel %vm773, %v962, 0.0
  %v1081 = vadd.f32 %v1079, %v1080
  %v1082 = vsel %vm773, %v963, 0.0
  %v1083 = vadd.f32 %v1081, %v1082
  %v1084 = vsel %vm773, %v964, 0.0
  %v1085 = vadd.f32 %v1083, %v1084
  %v1086 = vsel %vm773, %v965, 0.0
  %v1087 = vadd.f32 %v1085, %v1086
  %v1088 = vsel %vm773, %v966, 0.0
  %v1089 = vadd.f32 %v1087, %v1088
  %v1090 = vsel %vm773, %v967, 0.0
  %v1091 = vadd.f32 %v1089, %v1090
  %v1092 = vsel %vm773, %v968, 0.0
  %v1093 = vadd.f32 %v1091, %v1092
  %v1094 = vsel %vm773, %v969, 0.0
  %v1095 = vadd.f32 %v1093, %v1094
  %v1096 = vsel %vm773, %v970, 0.0
  %v1097 = vadd.f32 %v1095, %v1096
  %v1098 = vrot.slane %v1097, 4
  %v1099 = vadd.f32 %v1097, %v1098
  %v1100 = vrot.slane %v1099, 2
  %v1101 = vadd.f32 %v1099, %v1100
  %v1102 = vrot.slane %v1101, 1
  %v1103 = vadd.f32 %v1101, %v1102
  %vm1104 = vcmask 1040384
  %v1105 = vsel %vm1104, %v906, %v1103
  %vm1106 = vcmask 254976
  %1107 = vst.msk [vmem:[%s4] sm:$0x3] %vm1106, %v1105
  // Predicated region
  $region14: #{bottleneck_forward.6} parent=0 // pred_check
    _
  $region15: #{bottleneck_forward.6} parent=0 // pred_check_branch
    %1109 = sbr.rel (0) target = $region17
  $region16: #{bottleneck_forward.6} parent=0 // pred_region
    _
  $region17: #{bottleneck_forward.6} parent=0 // pred_fallthru
    _
  // Predicated region
  $region18: #{bottleneck_forward.6} parent=0 // pred_check
    _
  $region19: #{bottleneck_forward.6} parent=0 // pred_check_branch
    %1111 = sbr.rel (0) target = $region21
  $region20: #{bottleneck_forward.6} parent=0 // pred_region
    _
  $region21: #{bottleneck_forward.6} parent=0 // pred_fallthru
    _
  // Predicated region
  $region22: #{bottleneck_forward.6} parent=0 // pred_check
    _
  $region23: #{bottleneck_forward.6} parent=0 // pred_check_branch
    %1113 = sbr.rel (0) target = $region25
  $region24: #{bottleneck_forward.6} parent=0 // pred_region
    _
  $region25: #{bottleneck_forward.6} parent=0 // pred_fallthru
    _
  // Predicated region
  $region26: #{bottleneck_forward.6} parent=0 // pred_check
    _
  $region27: #{bottleneck_forward.6} parent=0 // pred_check_branch
    %1115 = sbr.rel (0) target = $region29
  $region28: #{bottleneck_forward.6} parent=0 // pred_region
    _
  $region29: #{bottleneck_forward.6} parent=0 // pred_fallthru
    _

// kernel: bottleneck_forward.5
$region0: #{bottleneck_forward.5}
  #allocation0 [shape = 'u32[]', space=smem, size = 0x4, offset = 0x4, fixed_abs, tag = 'smem constant byte address 0x4 - core index']
  #allocation1 [shape = 'u32[72,128]{1,0:T(1,128)}', space=vmem, size = 0x9000, scoped, tag = 'internal scratch']
  #allocation2 [shape = 'bf16[288,8]{1,0:T(8,128)(2,1)}', space=vmem, size = 0x12000, scoped, tag = 'scratch operand']
  #allocation3 [shape = 'bf16[288,24]{1,0:T(8,128)(2,1)}', space=vmem, size = 0x12000, scoped, tag = 'scratch operand']
  %s0 = inlined_call_operand.vmem [shape: bf16[512,8], index: 0, kind: input, shape index: {}]
  %s1 = inlined_call_operand.vmem [shape: f32[2,8], index: 1, kind: input, shape index: {}]
  %s2 = inlined_call_operand.vmem [shape: bf16[72,8], index: 2, kind: input, shape index: {}]
  %s3 = inlined_call_operand.vmem [shape: bf16[512,8], index: 3, kind: output, shape index: {0}]
  %s4 = inlined_call_operand.vmem [shape: f32[2,2,8], index: 4, kind: output, shape index: {1}]
  %5 = xla_tuple %s3, %s4
  %s6 = sld [smem:[#allocation0]]
  $region53: #{bottleneck_forward.5} parent=0
    _
  %s8 = ssub.s32 1, %s6
  %s9 = scalar_select 0, %s8, %s6
  loop: start=0, step=1, limit=4
  $region2: #{bottleneck_forward.5} parent=0 // loop_pre_header
    _
  $region3: #{bottleneck_forward.5} parent=0 // loop_header
    %s11 = sphi 0, %s15
    %p12 = scmp.ge.s32.totalorder %s11, 4
    %s21 = sphi 0, %s23
    %s24 = sphi 0, %s21
    %s25 = sphi 0, %s24
    %s41 = sphi 0, %s25
    %s45 = sphi 0, %s45
    %s47 = sphi 0, %s45
    %s48 = sphi 0, %s47
    %s62 = sphi 0, %s48
    %s66 = sphi 0, %s66
    %s68 = sphi 0, %s66
    %s69 = sphi 0, %s68
    %s83 = sphi 0, %s69
    %s89 = sphi 0, %s91
    %s92 = sphi 0, %s89
    %s93 = sphi 0, %s92
    %s109 = sphi 0, %s93
    %s115 = sphi 0, %s117
    %s118 = sphi 0, %s115
    %s119 = sphi 0, %s118
    %s135 = sphi 0, %s119
  $region4: #{bottleneck_forward.5} parent=0 // loop_header_branch
    %14 = sbr.rel (%p12) target = $region8
  $region5: #{bottleneck_forward.5} parent=0 // loop_body
    %s16 = ssub.s32 %s11, 1
    %s17 = ssub.s32 %s11, 2
    %s18 = sadd.s32 %s11, 1
    %s19 = ssub.s32 %s11, %s18
    %p20 = scmp.eq.s32.totalorder %s19, 0
    %s22 = sadd.s32 %s21, 1
    %s23 = scalar_select %p20, %s21, %s22
    %p26 = pneg %p20
    %p27 = scmp.eq.s32.totalorder %s11, 1
    %p28 = por %p26, %p27
    %p29 = scmp.ne.s32.totalorder %s21, %s24
    %p30 = scmp.eq.s32.totalorder %s11, 0
    %p31 = por %p29, %p30
    %p32 = scmp.ne.s32.totalorder %s21, %s24
    %p33 = scmp.eq.s32.totalorder %s16, 1
    %p34 = por %p32, %p33
    %p35 = scmp.ne.s32.totalorder %s24, %s25
    %p36 = scmp.eq.s32.totalorder %s16, 0
    %p37 = por %p35, %p36
    %p38 = scmp.ne.s32.totalorder %s24, %s25
    %p39 = scmp.eq.s32.totalorder %s17, 1
    %p40 = por %p38, %p39
    %p42 = scmp.ne.s32.totalorder %s25, %s41
    %p43 = scmp.eq.s32.totalorder %s17, 0
    %p44 = por %p42, %p43
    %s46 = sadd.s32 %s45, 1
    %p49 = scmp.eq.s32.totalorder %s11, 1
    %p50 = scmp.ne.s32.totalorder %s45, %s47
    %p51 = scmp.eq.s32.totalorder %s11, 0
    %p52 = por %p50, %p51
    %p53 = scmp.ne.s32.totalorder %s45, %s47
    %p54 = scmp.eq.s32.totalorder %s16, 1
    %p55 = por %p53, %p54
    %p56 = scmp.ne.s32.totalorder %s47, %s48
    %p57 = scmp.eq.s32.totalorder %s16, 0
    %p58 = por %p56, %p57
    %p59 = scmp.ne.s32.totalorder %s47, %s48
    %p60 = scmp.eq.s32.totalorder %s17, 1
    %p61 = por %p59, %p60
    %p63 = scmp.ne.s32.totalorder %s48, %s62
    %p64 = scmp.eq.s32.totalorder %s17, 0
    %p65 = por %p63, %p64
    %s67 = sadd.s32 %s66, 1
    %p70 = scmp.eq.s32.totalorder %s11, 1
    %p71 = scmp.ne.s32.totalorder %s66, %s68
    %p72 = scmp.eq.s32.totalorder %s11, 0
    %p73 = por %p71, %p72
    %p74 = scmp.ne.s32.totalorder %s66, %s68
    %p75 = scmp.eq.s32.totalorder %s16, 1
    %p76 = por %p74, %p75
    %p77 = scmp.ne.s32.totalorder %s68, %s69
    %p78 = scmp.eq.s32.totalorder %s16, 0
    %p79 = por %p77, %p78
    %p80 = scmp.ne.s32.totalorder %s68, %s69
    %p81 = scmp.eq.s32.totalorder %s17, 1
    %p82 = por %p80, %p81
    %p84 = scmp.ne.s32.totalorder %s69, %s83
    %p85 = scmp.eq.s32.totalorder %s17, 0
    %p86 = por %p84, %p85
    %s87 = ssub.s32 %s11, %s18
    %p88 = scmp.eq.s32.totalorder %s87, 0
    %s90 = sadd.s32 %s89, 1
    %s91 = scalar_select %p88, %s89, %s90
    %p94 = pneg %p88
    %p95 = scmp.eq.s32.totalorder %s11, 1
    %p96 = por %p94, %p95
    %p97 = scmp.ne.s32.totalorder %s89, %s92
    %p98 = scmp.eq.s32.totalorder %s11, 0
    %p99 = por %p97, %p98
    %p100 = scmp.ne.s32.totalorder %s89, %s92
    %p101 = scmp.eq.s32.totalorder %s16, 1
    %p102 = por %p100, %p101
    %p103 = scmp.ne.s32.totalorder %s92, %s93
    %p104 = scmp.eq.s32.totalorder %s16, 0
    %p105 = por %p103, %p104
    %p106 = scmp.ne.s32.totalorder %s92, %s93
    %p107 = scmp.eq.s32.totalorder %s17, 1
    %p108 = por %p106, %p107
    %p110 = scmp.ne.s32.totalorder %s93, %s109
    %p111 = scmp.eq.s32.totalorder %s17, 0
    %p112 = por %p110, %p111
    %s113 = ssub.s32 %s11, %s18
    %p114 = scmp.eq.s32.totalorder %s113, 0
    %s116 = sadd.s32 %s115, 1
    %s117 = scalar_select %p114, %s115, %s116
    %p120 = pneg %p114
    %p121 = scmp.eq.s32.totalorder %s11, 1
    %p122 = por %p120, %p121
    %p123 = scmp.ne.s32.totalorder %s115, %s118
    %p124 = scmp.eq.s32.totalorder %s11, 0
    %p125 = por %p123, %p124
    %p126 = scmp.ne.s32.totalorder %s115, %s118
    %p127 = scmp.eq.s32.totalorder %s16, 1
    %p128 = por %p126, %p127
    %p129 = scmp.ne.s32.totalorder %s118, %s119
    %p130 = scmp.eq.s32.totalorder %s16, 0
    %p131 = por %p129, %p130
    %p132 = scmp.ne.s32.totalorder %s118, %s119
    %p133 = scmp.eq.s32.totalorder %s17, 1
    %p134 = por %p132, %p133
    %p136 = scmp.ne.s32.totalorder %s119, %s135
    %p137 = scmp.eq.s32.totalorder %s17, 0
    %p138 = por %p136, %p137
    %p139 = scmp.le.s32.totalorder 1, %s11
    %p140 = scmp.lt.s32.totalorder %s11, 3
    %p141 = pnand %p139, %p140
    %p142 = pneg %p141
    // Predicated region
    $region9: #{bottleneck_forward.5} parent=5 // pred_check
      _
    $region10: #{bottleneck_forward.5} parent=5 // pred_check_branch
      %144 = sbr.rel (%p141) target = $region12
    $region11: #{bottleneck_forward.5} parent=5 // pred_region
      %s145 = ssub.s32 %s11, 1
      // Predicated region
      $region13: #{bottleneck_forward.5} parent=11 // pred_check
        %p146 = pneg %p58
      $region14: #{bottleneck_forward.5} parent=11 // pred_check_branch
        %148 = sbr.rel (%p146) target = $region16
      $region15: #{bottleneck_forward.5} parent=11 // pred_region
        _
      $region16: #{bottleneck_forward.5} parent=11 // pred_fallthru
        _
      // Predicated region
      $region17: #{bottleneck_forward.5} parent=11 // pred_check
        %p149 = pneg %p79
      $region18: #{bottleneck_forward.5} parent=11 // pred_check_branch
        %151 = sbr.rel (%p149) target = $region20
      $region19: #{bottleneck_forward.5} parent=11 // pred_region
        _
      $region20: #{bottleneck_forward.5} parent=11 // pred_fallthru
        _
    $region12: #{bottleneck_forward.5} parent=5 // pred_fallthru
      _
    %p152 = scmp.lt.s32.totalorder %s11, 2
    // Predicated region
    $region21: #{bottleneck_forward.5} parent=5 // pred_check
      %p153 = pneg %p152
    $region22: #{bottleneck_forward.5} parent=5 // pred_check_branch
      %155 = sbr.rel (%p153) target = $region24
    $region23: #{bottleneck_forward.5} parent=5 // pred_region
      // Predicated region
      $region25: #{bottleneck_forward.5} parent=23 // pred_check
        %p156 = pneg %p31
      $region26: #{bottleneck_forward.5} parent=23 // pred_check_branch
        %158 = sbr.rel (%p156) target = $region28
      $region27: #{bottleneck_forward.5} parent=23 // pred_region
        %s159 = smul.u32 32, %s11
        %p160 = scmp.lt.s32.totalorder %s159, 63
        %s161 = scalar_select %p160, %s159, 63
        %s162 = smul.addr %s161, 4
        %s163 = scalar_lea.vmem %s0, %s162
        %s164 = smul.u32 32, %s11
      $region28: #{bottleneck_forward.5} parent=23 // pred_fallthru
        _
    $region24: #{bottleneck_forward.5} parent=5 // pred_fallthru
      _
    %p165 = scmp.le.s32.totalorder 1, %s11
    %p166 = scmp.lt.s32.totalorder %s11, 3
    %p167 = pnand %p165, %p166
    %p168 = pneg %p167
    // Predicated region
    $region29: #{bottleneck_forward.5} parent=5 // pred_check
      _
    $region30: #{bottleneck_forward.5} parent=5 // pred_check_branch
      %170 = sbr.rel (%p167) target = $region32
    $region31: #{bottleneck_forward.5} parent=5 // pred_region
      %s171 = ssub.s32 %s11, 1
      %s172 = smul.u32 32, %s16
      %p173 = scmp.lt.s32.totalorder %s172, 63
      %s174 = scalar_select %p173, %s172, 63
      %s175 = smul.addr %s174, 4
      %s176 = scalar_lea.vmem %s0, %s175
      %p177 = pneg %p37
      %p178 = pneg %p34
      %p179 = pneg %p58
      %p180 = pneg %p55
      %p181 = pneg %p79
      %p182 = pneg %p76
      %p183 = pneg %p105
      %p184 = pneg %p102
      %s185 = smul.u32 32, %s16
      %p186 = scmp.lt.s32.totalorder %s185, 63
      %s187 = scalar_select %p186, %s185, 63
      %s188 = smul.addr %s187, 4
      %s189 = scalar_lea.vmem %s3, %s188
      %p190 = pneg %p131
      %p191 = pneg %p128
      %p192 = scmp.lt.s32.totalorder %s16, 1
      %s193 = scalar_select %p192, %s16, 1
      %s194 = smul.addr %s193, 2
      %s195 = scalar_lea.vmem %s4, %s194
      %s196 = smul.u32 32, %s16
      %p197 = scmp.lt.s32.totalorder %s196, 63
      %s198 = scalar_select %p197, %s196, 63
      %s199 = smul.addr %s198, 4
      %s200 = scalar_lea.vmem %s0, %s199
      %s201 = smul.u32 32, %s16
      %s202 = smul.u32 32, %s16
      %p203 = scmp.lt.s32.totalorder %s202, 63
      %s204 = scalar_select %p203, %s202, 63
      %s205 = smul.addr %s204, 4
      %s206 = scalar_lea.vmem %s3, %s205
      %s207 = smul.u32 32, %s16
      %p208 = scmp.lt.s32.totalorder %s16, 1
      %s209 = scalar_select %p208, %s16, 1
      %s210 = smul.addr %s209, 2
      %s211 = scalar_lea.vmem %s4, %s210
      %v215 = vld [vmem:[%s200] sm:$0xf]
      %v216 = vld [vmem:[%s200 + $0x4] sm:$0xf]
      %v217 = vld [vmem:[%s200 + $0x8] sm:$0xf]
      %v218 = vld [vmem:[%s200 + $0xc] sm:$0xf]
      %v219 = vld [vmem:[%s200 + $0x10] sm:$0xf]
      %v220 = vld [vmem:[%s200 + $0x14] sm:$0xf]
      %v221 = vld [vmem:[%s200 + $0x18] sm:$0xf]
      %v222 = vld [vmem:[%s200 + $0x1c] sm:$0xf]
      %v223 = vld [vmem:[%s200 + $0x20] sm:$0xf]
      %v224 = vld [vmem:[%s200 + $0x24] sm:$0xf]
      %v225 = vld [vmem:[%s200 + $0x28] sm:$0xf]
      %v226 = vld [vmem:[%s200 + $0x2c] sm:$0xf]
      %v227 = vld [vmem:[%s200 + $0x30] sm:$0xf]
      %v228 = vld [vmem:[%s200 + $0x34] sm:$0xf]
      %v229 = vld [vmem:[%s200 + $0x38] sm:$0xf]
      %v230 = vld [vmem:[%s200 + $0x3c] sm:$0xf]
      %v231 = vld [vmem:[%s200 + $0x40] sm:$0xf]
      %v232 = vld [vmem:[%s200 + $0x44] sm:$0xf]
      %v233 = vld [vmem:[%s200 + $0x48] sm:$0xf]
      %v234 = vld [vmem:[%s200 + $0x4c] sm:$0xf]
      %v235 = vld [vmem:[%s200 + $0x50] sm:$0xf]
      %v236 = vld [vmem:[%s200 + $0x54] sm:$0xf]
      %v237 = vld [vmem:[%s200 + $0x58] sm:$0xf]
      %v238 = vld [vmem:[%s200 + $0x5c] sm:$0xf]
      %v239 = vld [vmem:[%s200 + $0x60] sm:$0xf]
      %v240 = vld [vmem:[%s200 + $0x64] sm:$0xf]
      %v241 = vld [vmem:[%s200 + $0x68] sm:$0xf]
      %v242 = vld [vmem:[%s200 + $0x6c] sm:$0xf]
      %v243 = vld [vmem:[%s200 + $0x70] sm:$0xf]
      %v244 = vld [vmem:[%s200 + $0x74] sm:$0xf]
      %v245 = vld [vmem:[%s200 + $0x78] sm:$0xf]
      %v246 = vld [vmem:[%s200 + $0x7c] sm:$0xf]
      %v247 = vunpack.c.l.bf16 %v215
      %v248 = vunpack.c.l.bf16 %v216
      %v249 = vunpack.c.l.bf16 %v217
      %v250 = vunpack.c.l.bf16 %v218
      %v251 = vunpack.c.l.bf16 %v219
      %v252 = vunpack.c.l.bf16 %v220
      %v253 = vunpack.c.l.bf16 %v221
      %v254 = vunpack.c.l.bf16 %v222
      %v255 = vunpack.c.l.bf16 %v223
      %v256 = vunpack.c.l.bf16 %v224
      %v257 = vunpack.c.l.bf16 %v225
      %v258 = vunpack.c.l.bf16 %v226
      %v259 = vunpack.c.l.bf16 %v227
      %v260 = vunpack.c.l.bf16 %v228
      %v261 = vunpack.c.l.bf16 %v229
      %v262 = vunpack.c.l.bf16 %v230
      %v263 = vunpack.c.l.bf16 %v231
      %v264 = vunpack.c.l.bf16 %v232
      %v265 = vunpack.c.l.bf16 %v233
      %v266 = vunpack.c.l.bf16 %v234
      %v267 = vunpack.c.l.bf16 %v235
      %v268 = vunpack.c.l.bf16 %v236
      %v269 = vunpack.c.l.bf16 %v237
      %v270 = vunpack.c.l.bf16 %v238
      %v271 = vunpack.c.l.bf16 %v239
      %v272 = vunpack.c.l.bf16 %v240
      %v273 = vunpack.c.l.bf16 %v241
      %v274 = vunpack.c.l.bf16 %v242
      %v275 = vunpack.c.l.bf16 %v243
      %v276 = vunpack.c.l.bf16 %v244
      %v277 = vunpack.c.l.bf16 %v245
      %v278 = vunpack.c.l.bf16 %v246
      %v279 = vld [vmem:[%s1] sm:$0x1]
      %v280 = vperm.slane %v279, 0
      %v281 = vmul.f32 %v247, %v280
      %v282 = vmul.f32 %v248, %v280
      %v283 = vmul.f32 %v249, %v280
      %v284 = vmul.f32 %v250, %v280
      %v285 = vmul.f32 %v251, %v280
      %v286 = vmul.f32 %v252, %v280
      %v287 = vmul.f32 %v253, %v280
      %v288 = vmul.f32 %v254, %v280
      %v289 = vmul.f32 %v255, %v280
      %v290 = vmul.f32 %v256, %v280
      %v291 = vmul.f32 %v257, %v280
      %v292 = vmul.f32 %v258, %v280
      %v293 = vmul.f32 %v259, %v280
      %v294 = vmul.f32 %v260, %v280
      %v295 = vmul.f32 %v261, %v280
      %v296 = vmul.f32 %v262, %v280
      %v297 = vmul.f32 %v263, %v280
      %v298 = vmul.f32 %v264, %v280
      %v299 = vmul.f32 %v265, %v280
      %v300 = vmul.f32 %v266, %v280
      %v301 = vmul.f32 %v267, %v280
      %v302 = vmul.f32 %v268, %v280
      %v303 = vmul.f32 %v269, %v280
      %v304 = vmul.f32 %v270, %v280
      %v305 = vmul.f32 %v271, %v280
      %v306 = vmul.f32 %v272, %v280
      %v307 = vmul.f32 %v273, %v280
      %v308 = vmul.f32 %v274, %v280
      %v309 = vmul.f32 %v275, %v280
      %v310 = vmul.f32 %v276, %v280
      %v311 = vmul.f32 %v277, %v280
      %v312 = vmul.f32 %v278, %v280
      %v313 = vld [vmem:[%s1 + $0x1] sm:$0x1]
      %v314 = vperm.slane %v313, 0
      %v315 = vadd.f32 %v281, %v314
      %v316 = vadd.f32 %v282, %v314
      %v317 = vadd.f32 %v283, %v314
      %v318 = vadd.f32 %v284, %v314
      %v319 = vadd.f32 %v285, %v314
      %v320 = vadd.f32 %v286, %v314
      %v321 = vadd.f32 %v287, %v314
      %v322 = vadd.f32 %v288, %v314
      %v323 = vadd.f32 %v289, %v314
      %v324 = vadd.f32 %v290, %v314
      %v325 = vadd.f32 %v291, %v314
      %v326 = vadd.f32 %v292, %v314
      %v327 = vadd.f32 %v293, %v314
      %v328 = vadd.f32 %v294, %v314
      %v329 = vadd.f32 %v295, %v314
      %v330 = vadd.f32 %v296, %v314
      %v331 = vadd.f32 %v297, %v314
      %v332 = vadd.f32 %v298, %v314
      %v333 = vadd.f32 %v299, %v314
      %v334 = vadd.f32 %v300, %v314
      %v335 = vadd.f32 %v301, %v314
      %v336 = vadd.f32 %v302, %v314
      %v337 = vadd.f32 %v303, %v314
      %v338 = vadd.f32 %v304, %v314
      %v339 = vadd.f32 %v305, %v314
      %v340 = vadd.f32 %v306, %v314
      %v341 = vadd.f32 %v307, %v314
      %v342 = vadd.f32 %v308, %v314
      %v343 = vadd.f32 %v309, %v314
      %v344 = vadd.f32 %v310, %v314
      %v345 = vadd.f32 %v311, %v314
      %v346 = vadd.f32 %v312, %v314
      %v347 = vmax.f32 %v315, 0.0
      %v348 = vmax.f32 %v316, 0.0
      %v349 = vmax.f32 %v317, 0.0
      %v350 = vmax.f32 %v318, 0.0
      %v351 = vmax.f32 %v319, 0.0
      %v352 = vmax.f32 %v320, 0.0
      %v353 = vmax.f32 %v321, 0.0
      %v354 = vmax.f32 %v322, 0.0
      %v355 = vmax.f32 %v323, 0.0
      %v356 = vmax.f32 %v324, 0.0
      %v357 = vmax.f32 %v325, 0.0
      %v358 = vmax.f32 %v326, 0.0
      %v359 = vmax.f32 %v327, 0.0
      %v360 = vmax.f32 %v328, 0.0
      %v361 = vmax.f32 %v329, 0.0
      %v362 = vmax.f32 %v330, 0.0
      %v363 = vmax.f32 %v331, 0.0
      %v364 = vmax.f32 %v332, 0.0
      %v365 = vmax.f32 %v333, 0.0
      %v366 = vmax.f32 %v334, 0.0
      %v367 = vmax.f32 %v335, 0.0
      %v368 = vmax.f32 %v336, 0.0
      %v369 = vmax.f32 %v337, 0.0
      %v370 = vmax.f32 %v338, 0.0
      %v371 = vmax.f32 %v339, 0.0
      %v372 = vmax.f32 %v340, 0.0
      %v373 = vmax.f32 %v341, 0.0
      %v374 = vmax.f32 %v342, 0.0
      %v375 = vmax.f32 %v343, 0.0
      %v376 = vmax.f32 %v344, 0.0
      %v377 = vmax.f32 %v345, 0.0
      %v378 = vmax.f32 %v346, 0.0
      %v379 = vpack.c.bf16 %v347, %v347
      %v380 = vpack.c.bf16 %v348, %v348
      %v381 = vpack.c.bf16 %v349, %v349
      %v382 = vpack.c.bf16 %v350, %v350
      %v383 = vpack.c.bf16 %v351, %v351
      %v384 = vpack.c.bf16 %v352, %v352
      %v385 = vpack.c.bf16 %v353, %v353
      %v386 = vpack.c.bf16 %v354, %v354
      %v387 = vpack.c.bf16 %v355, %v355
      %v388 = vpack.c.bf16 %v356, %v356
      %v389 = vpack.c.bf16 %v357, %v357
      %v390 = vpack.c.bf16 %v358, %v358
      %v391 = vpack.c.bf16 %v359, %v359
      %v392 = vpack.c.bf16 %v360, %v360
      %v393 = vpack.c.bf16 %v361, %v361
      %v394 = vpack.c.bf16 %v362, %v362
      %v395 = vpack.c.bf16 %v363, %v363
      %v396 = vpack.c.bf16 %v364, %v364
      %v397 = vpack.c.bf16 %v365, %v365
      %v398 = vpack.c.bf16 %v366, %v366
      %v399 = vpack.c.bf16 %v367, %v367
      %v400 = vpack.c.bf16 %v368, %v368
      %v401 = vpack.c.bf16 %v369, %v369
      %v402 = vpack.c.bf16 %v370, %v370
      %v403 = vpack.c.bf16 %v371, %v371
      %v404 = vpack.c.bf16 %v372, %v372
      %v405 = vpack.c.bf16 %v373, %v373
      %v406 = vpack.c.bf16 %v374, %v374
      %v407 = vpack.c.bf16 %v375, %v375
      %v408 = vpack.c.bf16 %v376, %v376
      %v409 = vpack.c.bf16 %v377, %v377
      %v410 = vpack.c.bf16 %v378, %v378
      %vm411 = vcmask 60416
      %412 = vst.msk [vmem:[#allocation2 + $0x8] sm:$0xf] %vm411, %v379
      %413 = vst.msk [vmem:[#allocation2 + $0xc] sm:$0xf] %vm411, %v380
      %414 = vst.msk [vmem:[#allocation2 + $0x10] sm:$0xf] %vm411, %v381
      %415 = vst.msk [vmem:[#allocation2 + $0x14] sm:$0xf] %vm411, %v382
      %416 = vst.msk [vmem:[#allocation2 + $0x18] sm:$0xf] %vm411, %v383
      %417 = vst.msk [vmem:[#allocation2 + $0x1c] sm:$0xf] %vm411, %v384
      %418 = vst.msk [vmem:[#allocation2 + $0x20] sm:$0xf] %vm411, %v385
      %419 = vst.msk [vmem:[#allocation2 + $0x24] sm:$0xf] %vm411, %v386
      %420 = vst.msk [vmem:[#allocation2 + $0x28] sm:$0xf] %vm411, %v387
      %421 = vst.msk [vmem:[#allocation2 + $0x2c] sm:$0xf] %vm411, %v388
      %422 = vst.msk [vmem:[#allocation2 + $0x30] sm:$0xf] %vm411, %v389
      %423 = vst.msk [vmem:[#allocation2 + $0x34] sm:$0xf] %vm411, %v390
      %424 = vst.msk [vmem:[#allocation2 + $0x38] sm:$0xf] %vm411, %v391
      %425 = vst.msk [vmem:[#allocation2 + $0x3c] sm:$0xf] %vm411, %v392
      %426 = vst.msk [vmem:[#allocation2 + $0x40] sm:$0xf] %vm411, %v393
      %427 = vst.msk [vmem:[#allocation2 + $0x44] sm:$0xf] %vm411, %v394
      %428 = vst.msk [vmem:[#allocation2 + $0x48] sm:$0xf] %vm411, %v395
      %429 = vst.msk [vmem:[#allocation2 + $0x4c] sm:$0xf] %vm411, %v396
      %430 = vst.msk [vmem:[#allocation2 + $0x50] sm:$0xf] %vm411, %v397
      %431 = vst.msk [vmem:[#allocation2 + $0x54] sm:$0xf] %vm411, %v398
      %432 = vst.msk [vmem:[#allocation2 + $0x58] sm:$0xf] %vm411, %v399
      %433 = vst.msk [vmem:[#allocation2 + $0x5c] sm:$0xf] %vm411, %v400
      %434 = vst.msk [vmem:[#allocation2 + $0x60] sm:$0xf] %vm411, %v401
      %435 = vst.msk [vmem:[#allocation2 + $0x64] sm:$0xf] %vm411, %v402
      %436 = vst.msk [vmem:[#allocation2 + $0x68] sm:$0xf] %vm411, %v403
      %437 = vst.msk [vmem:[#allocation2 + $0x6c] sm:$0xf] %vm411, %v404
      %438 = vst.msk [vmem:[#allocation2 + $0x70] sm:$0xf] %vm411, %v405
      %439 = vst.msk [vmem:[#allocation2 + $0x74] sm:$0xf] %vm411, %v406
      %440 = vst.msk [vmem:[#allocation2 + $0x78] sm:$0xf] %vm411, %v407
      %441 = vst.msk [vmem:[#allocation2 + $0x7c] sm:$0xf] %vm411, %v408
      %442 = vst.msk [vmem:[#allocation2 + $0x80] sm:$0xf] %vm411, %v409
      %443 = vst.msk [vmem:[#allocation2 + $0x84] sm:$0xf] %vm411, %v410
      %v444 = vlaneseq
      %v445 = vshrl.u32 %v444, 7
      %v446 = vadd.s32 %v445, 8
      %v447 = vadd.s32 %v445, 16
      %v448 = vadd.s32 %v445, 24
      %v449 = vadd.s32 %v445, 32
      %v450 = vadd.s32 %v445, 40
      %v451 = vadd.s32 %v445, 48
      %v452 = vadd.s32 %v445, 56
      %v453 = vadd.s32 %v445, 64
      %v454 = vadd.s32 %v445, 72
      %v455 = vadd.s32 %v445, 80
      %v456 = vadd.s32 %v445, 88
      %v457 = vadd.s32 %v445, 96
      %v458 = vadd.s32 %v445, 104
      %v459 = vadd.s32 %v445, 112
      %v460 = vadd.s32 %v445, 120
      %v461 = vadd.s32 %v445, 128
      %v462 = vadd.s32 %v445, 136
      %v463 = vadd.s32 %v445, 144
      %v464 = vadd.s32 %v445, 152
      %v465 = vadd.s32 %v445, 160
      %v466 = vadd.s32 %v445, 168
      %v467 = vadd.s32 %v445, 176
      %v468 = vadd.s32 %v445, 184
      %v469 = vadd.s32 %v445, 192
      %v470 = vadd.s32 %v445, 200
      %v471 = vadd.s32 %v445, 208
      %v472 = vadd.s32 %v445, 216
      %v473 = vadd.s32 %v445, 224
      %v474 = vadd.s32 %v445, 232
      %v475 = vadd.s32 %v445, 240
      %v476 = vadd.s32 %v445, 248
      %vm477 = vcmp.lt.s32.totalorder %v445, 0
      %v478 = vsub.s32 0, %v445
      %v479 = vsel %vm477, %v478, %v445
      %v480 = vshrl.u32 %v479, 4
      %v481 = vand.u32 %v479, 15
      %v482 = vsub.s32 0, %v481
      %v483 = vsel %vm477, %v482, %v481
      %vm484 = vcmp.lt.s32.totalorder %v446, 0
      %v485 = vsub.s32 0, %v446
      %v486 = vsel %vm484, %v485, %v446
      %v487 = vshrl.u32 %v486, 4
      %v488 = vand.u32 %v486, 15
      %v489 = vsub.s32 0, %v488
      %v490 = vsel %vm484, %v489, %v488
      %vm491 = vcmp.lt.s32.totalorder %v447, 0
      %v492 = vsub.s32 0, %v447
      %v493 = vsel %vm491, %v492, %v447
      %v494 = vshrl.u32 %v493, 4
      %v495 = vand.u32 %v493, 15
      %v496 = vsub.s32 0, %v495
      %v497 = vsel %vm491, %v496, %v495
      %vm498 = vcmp.lt.s32.totalorder %v448, 0
      %v499 = vsub.s32 0, %v448
      %v500 = vsel %vm498, %v499, %v448
      %v501 = vshrl.u32 %v500, 4
      %v502 = vand.u32 %v500, 15
      %v503 = vsub.s32 0, %v502
      %v504 = vsel %vm498, %v503, %v502
      %vm505 = vcmp.lt.s32.totalorder %v449, 0
      %v506 = vsub.s32 0, %v449
      %v507 = vsel %vm505, %v506, %v449
      %v508 = vshrl.u32 %v507, 4
      %v509 = vand.u32 %v507, 15
      %v510 = vsub.s32 0, %v509
      %v511 = vsel %vm505, %v510, %v509
      %vm512 = vcmp.lt.s32.totalorder %v450, 0
      %v513 = vsub.s32 0, %v450
      %v514 = vsel %vm512, %v513, %v450
      %v515 = vshrl.u32 %v514, 4
      %v516 = vand.u32 %v514, 15
      %v517 = vsub.s32 0, %v516
      %v518 = vsel %vm512, %v517, %v516
      %vm519 = vcmp.lt.s32.totalorder %v451, 0
      %v520 = vsub.s32 0, %v451
      %v521 = vsel %vm519, %v520, %v451
      %v522 = vshrl.u32 %v521, 4
      %v523 = vand.u32 %v521, 15
      %v524 = vsub.s32 0, %v523
      %v525 = vsel %vm519, %v524, %v523
      %vm526 = vcmp.lt.s32.totalorder %v452, 0
      %v527 = vsub.s32 0, %v452
      %v528 = vsel %vm526, %v527, %v452
      %v529 = vshrl.u32 %v528, 4
      %v530 = vand.u32 %v528, 15
      %v531 = vsub.s32 0, %v530
      %v532 = vsel %vm526, %v531, %v530
      %vm533 = vcmp.lt.s32.totalorder %v453, 0
      %v534 = vsub.s32 0, %v453
      %v535 = vsel %vm533, %v534, %v453
      %v536 = vshrl.u32 %v535, 4
      %v537 = vand.u32 %v535, 15
      %v538 = vsub.s32 0, %v537
      %v539 = vsel %vm533, %v538, %v537
      %vm540 = vcmp.lt.s32.totalorder %v454, 0
      %v541 = vsub.s32 0, %v454
      %v542 = vsel %vm540, %v541, %v454
      %v543 = vshrl.u32 %v542, 4
      %v544 = vand.u32 %v542, 15
      %v545 = vsub.s32 0, %v544
      %v546 = vsel %vm540, %v545, %v544
      %vm547 = vcmp.lt.s32.totalorder %v455, 0
      %v548 = vsub.s32 0, %v455
      %v549 = vsel %vm547, %v548, %v455
      %v550 = vshrl.u32 %v549, 4
      %v551 = vand.u32 %v549, 15
      %v552 = vsub.s32 0, %v551
      %v553 = vsel %vm547, %v552, %v551
      %vm554 = vcmp.lt.s32.totalorder %v456, 0
      %v555 = vsub.s32 0, %v456
      %v556 = vsel %vm554, %v555, %v456
      %v557 = vshrl.u32 %v556, 4
      %v558 = vand.u32 %v556, 15
      %v559 = vsub.s32 0, %v558
      %v560 = vsel %vm554, %v559, %v558
      %vm561 = vcmp.lt.s32.totalorder %v457, 0
      %v562 = vsub.s32 0, %v457
      %v563 = vsel %vm561, %v562, %v457
      %v564 = vshrl.u32 %v563, 4
      %v565 = vand.u32 %v563, 15
      %v566 = vsub.s32 0, %v565
      %v567 = vsel %vm561, %v566, %v565
      %vm568 = vcmp.lt.s32.totalorder %v458, 0
      %v569 = vsub.s32 0, %v458
      %v570 = vsel %vm568, %v569, %v458
      %v571 = vshrl.u32 %v570, 4
      %v572 = vand.u32 %v570, 15
      %v573 = vsub.s32 0, %v572
      %v574 = vsel %vm568, %v573, %v572
      %vm575 = vcmp.lt.s32.totalorder %v459, 0
      %v576 = vsub.s32 0, %v459
      %v577 = vsel %vm575, %v576, %v459
      %v578 = vshrl.u32 %v577, 4
      %v579 = vand.u32 %v577, 15
      %v580 = vsub.s32 0, %v579
      %v581 = vsel %vm575, %v580, %v579
      %vm582 = vcmp.lt.s32.totalorder %v460, 0
      %v583 = vsub.s32 0, %v460
      %v584 = vsel %vm582, %v583, %v460
      %v585 = vshrl.u32 %v584, 4
      %v586 = vand.u32 %v584, 15
      %v587 = vsub.s32 0, %v586
      %v588 = vsel %vm582, %v587, %v586
      %vm589 = vcmp.lt.s32.totalorder %v461, 0
      %v590 = vsub.s32 0, %v461
      %v591 = vsel %vm589, %v590, %v461
      %v592 = vshrl.u32 %v591, 4
      %v593 = vand.u32 %v591, 15
      %v594 = vsub.s32 0, %v593
      %v595 = vsel %vm589, %v594, %v593
      %vm596 = vcmp.lt.s32.totalorder %v462, 0
      %v597 = vsub.s32 0, %v462
      %v598 = vsel %vm596, %v597, %v462
      %v599 = vshrl.u32 %v598, 4
      %v600 = vand.u32 %v598, 15
      %v601 = vsub.s32 0, %v600
      %v602 = vsel %vm596, %v601, %v600
      %vm603 = vcmp.lt.s32.totalorder %v463, 0
      %v604 = vsub.s32 0, %v463
      %v605 = vsel %vm603, %v604, %v463
      %v606 = vshrl.u32 %v605, 4
      %v607 = vand.u32 %v605, 15
      %v608 = vsub.s32 0, %v607
      %v609 = vsel %vm603, %v608, %v607
      %vm610 = vcmp.lt.s32.totalorder %v464, 0
      %v611 = vsub.s32 0, %v464
      %v612 = vsel %vm610, %v611, %v464
      %v613 = vshrl.u32 %v612, 4
      %v614 = vand.u32 %v612, 15
      %v615 = vsub.s32 0, %v614
      %v616 = vsel %vm610, %v615, %v614
      %vm617 = vcmp.lt.s32.totalorder %v465, 0
      %v618 = vsub.s32 0, %v465
      %v619 = vsel %vm617, %v618, %v465
      %v620 = vshrl.u32 %v619, 4
      %v621 = vand.u32 %v619, 15
      %v622 = vsub.s32 0, %v621
      %v623 = vsel %vm617, %v622, %v621
      %vm624 = vcmp.lt.s32.totalorder %v466, 0
      %v625 = vsub.s32 0, %v466
      %v626 = vsel %vm624, %v625, %v466
      %v627 = vshrl.u32 %v626, 4
      %v628 = vand.u32 %v626, 15
      %v629 = vsub.s32 0, %v628
      %v630 = vsel %vm624, %v629, %v628
      %vm631 = vcmp.lt.s32.totalorder %v467, 0
      %v632 = vsub.s32 0, %v467
      %v633 = vsel %vm631, %v632, %v467
      %v634 = vshrl.u32 %v633, 4
      %v635 = vand.u32 %v633, 15
      %v636 = vsub.s32 0, %v635
      %v637 = vsel %vm631, %v636, %v635
      %vm638 = vcmp.lt.s32.totalorder %v468, 0
      %v639 = vsub.s32 0, %v468
      %v640 = vsel %vm638, %v639, %v468
      %v641 = vshrl.u32 %v640, 4
      %v642 = vand.u32 %v640, 15
      %v643 = vsub.s32 0, %v642
      %v644 = vsel %vm638, %v643, %v642
      %vm645 = vcmp.lt.s32.totalorder %v469, 0
      %v646 = vsub.s32 0, %v469
      %v647 = vsel %vm645, %v646, %v469
      %v648 = vshrl.u32 %v647, 4
      %v649 = vand.u32 %v647, 15
      %v650 = vsub.s32 0, %v649
      %v651 = vsel %vm645, %v650, %v649
      %vm652 = vcmp.lt.s32.totalorder %v470, 0
      %v653 = vsub.s32 0, %v470
      %v654 = vsel %vm652, %v653, %v470
      %v655 = vshrl.u32 %v654, 4
      %v656 = vand.u32 %v654, 15
      %v657 = vsub.s32 0, %v656
      %v658 = vsel %vm652, %v657, %v656
      %vm659 = vcmp.lt.s32.totalorder %v471, 0
      %v660 = vsub.s32 0, %v471
      %v661 = vsel %vm659, %v660, %v471
      %v662 = vshrl.u32 %v661, 4
      %v663 = vand.u32 %v661, 15
      %v664 = vsub.s32 0, %v663
      %v665 = vsel %vm659, %v664, %v663
      %vm666 = vcmp.lt.s32.totalorder %v472, 0
      %v667 = vsub.s32 0, %v472
      %v668 = vsel %vm666, %v667, %v472
      %v669 = vshrl.u32 %v668, 4
      %v670 = vand.u32 %v668, 15
      %v671 = vsub.s32 0, %v670
      %v672 = vsel %vm666, %v671, %v670
      %vm673 = vcmp.lt.s32.totalorder %v473, 0
      %v674 = vsub.s32 0, %v473
      %v675 = vsel %vm673, %v674, %v473
      %v676 = vshrl.u32 %v675, 4
      %v677 = vand.u32 %v675, 15
      %v678 = vsub.s32 0, %v677
      %v679 = vsel %vm673, %v678, %v677
      %vm680 = vcmp.lt.s32.totalorder %v474, 0
      %v681 = vsub.s32 0, %v474
      %v682 = vsel %vm680, %v681, %v474
      %v683 = vshrl.u32 %v682, 4
      %v684 = vand.u32 %v682, 15
      %v685 = vsub.s32 0, %v684
      %v686 = vsel %vm680, %v685, %v684
      %vm687 = vcmp.lt.s32.totalorder %v475, 0
      %v688 = vsub.s32 0, %v475
      %v689 = vsel %vm687, %v688, %v475
      %v690 = vshrl.u32 %v689, 4
      %v691 = vand.u32 %v689, 15
      %v692 = vsub.s32 0, %v691
      %v693 = vsel %vm687, %v692, %v691
      %vm694 = vcmp.lt.s32.totalorder %v476, 0
      %v695 = vsub.s32 0, %v476
      %v696 = vsel %vm694, %v695, %v476
      %v697 = vshrl.u32 %v696, 4
      %v698 = vand.u32 %v696, 15
      %v699 = vsub.s32 0, %v698
      %v700 = vsel %vm694, %v699, %v698
      %vm701 = vcmp.ne.s32.totalorder %v483, 0
      %vm702 = vcmp.ne.s32.totalorder %v490, 0
      %vm703 = vcmp.ne.s32.totalorder %v497, 0
      %vm704 = vcmp.ne.s32.totalorder %v504, 0
      %vm705 = vcmp.ne.s32.totalorder %v511, 0
      %vm706 = vcmp.ne.s32.totalorder %v518, 0
      %vm707 = vcmp.ne.s32.totalorder %v525, 0
      %vm708 = vcmp.ne.s32.totalorder %v532, 0
      %vm709 = vcmp.ne.s32.totalorder %v539, 0
      %vm710 = vcmp.ne.s32.totalorder %v546, 0
      %vm711 = vcmp.ne.s32.totalorder %v553, 0
      %vm712 = vcmp.ne.s32.totalorder %v560, 0
      %vm713 = vcmp.ne.s32.totalorder %v567, 0
      %vm714 = vcmp.ne.s32.totalorder %v574, 0
      %vm715 = vcmp.ne.s32.totalorder %v581, 0
      %vm716 = vcmp.ne.s32.totalorder %v588, 0
      %vm717 = vcmp.ne.s32.totalorder %v595, 0
      %vm718 = vcmp.ne.s32.totalorder %v602, 0
      %vm719 = vcmp.ne.s32.totalorder %v609, 0
      %vm720 = vcmp.ne.s32.totalorder %v616, 0
      %vm721 = vcmp.ne.s32.totalorder %v623, 0
      %vm722 = vcmp.ne.s32.totalorder %v630, 0
      %vm723 = vcmp.ne.s32.totalorder %v637, 0
      %vm724 = vcmp.ne.s32.totalorder %v644, 0
      %vm725 = vcmp.ne.s32.totalorder %v651, 0
      %vm726 = vcmp.ne.s32.totalorder %v658, 0
      %vm727 = vcmp.ne.s32.totalorder %v665, 0
      %vm728 = vcmp.ne.s32.totalorder %v672, 0
      %vm729 = vcmp.ne.s32.totalorder %v679, 0
      %vm730 = vcmp.ne.s32.totalorder %v686, 0
      %vm731 = vcmp.ne.s32.totalorder %v693, 0
      %vm732 = vcmp.ne.s32.totalorder %v700, 0
      %vm733 = vcmp.lt.s32.totalorder %v483, 0
      %vm734 = vcmp.lt.s32.totalorder %v490, 0
      %vm735 = vcmp.lt.s32.totalorder %v497, 0
      %vm736 = vcmp.lt.s32.totalorder %v504, 0
      %vm737 = vcmp.lt.s32.totalorder %v511, 0
      %vm738 = vcmp.lt.s32.totalorder %v518, 0
      %vm739 = vcmp.lt.s32.totalorder %v525, 0
      %vm740 = vcmp.lt.s32.totalorder %v532, 0
      %vm741 = vcmp.lt.s32.totalorder %v539, 0
      %vm742 = vcmp.lt.s32.totalorder %v546, 0
      %vm743 = vcmp.lt.s32.totalorder %v553, 0
      %vm744 = vcmp.lt.s32.totalorder %v560, 0
      %vm745 = vcmp.lt.s32.totalorder %v567, 0
      %vm746 = vcmp.lt.s32.totalorder %v574, 0
      %vm747 = vcmp.lt.s32.totalorder %v581, 0
      %vm748 = vcmp.lt.s32.totalorder %v588, 0
      %vm749 = vcmp.lt.s32.totalorder %v595, 0
      %vm750 = vcmp.lt.s32.totalorder %v602, 0
      %vm751 = vcmp.lt.s32.totalorder %v609, 0
      %vm752 = vcmp.lt.s32.totalorder %v616, 0
      %vm753 = vcmp.lt.s32.totalorder %v623, 0
      %vm754 = vcmp.lt.s32.totalorder %v630, 0
      %vm755 = vcmp.lt.s32.totalorder %v637, 0
      %vm756 = vcmp.lt.s32.totalorder %v644, 0
      %vm757 = vcmp.lt.s32.totalorder %v651, 0
      %vm758 = vcmp.lt.s32.totalorder %v658, 0
      %vm759 = vcmp.lt.s32.totalorder %v665, 0
      %vm760 = vcmp.lt.s32.totalorder %v672, 0
      %vm761 = vcmp.lt.s32.totalorder %v679, 0
      %vm762 = vcmp.lt.s32.totalorder %v686, 0
      %vm763 = vcmp.lt.s32.totalorder %v693, 0
      %vm764 = vcmp.lt.s32.totalorder %v700, 0
      %vm765 = vmand %vm733, %vm701
      %vm766 = vmand %vm734, %vm702
      %vm767 = vmand %vm735, %vm703
      %vm768 = vmand %vm736, %vm704
      %vm769 = vmand %vm737, %vm705
      %vm770 = vmand %vm738, %vm706
      %vm771 = vmand %vm739, %vm707
      %vm772 = vmand %vm740, %vm708
      %vm773 = vmand %vm741, %vm709
      %vm774 = vmand %vm742, %vm710
      %vm775 = vmand %vm743, %vm711
      %vm776 = vmand %vm744, %vm712
      %vm777 = vmand %vm745, %vm713
      %vm778 = vmand %vm746, %vm714
      %vm779 = vmand %vm747, %vm715
      %vm780 = vmand %vm748, %vm716
      %vm781 = vmand %vm749, %vm717
      %vm782 = vmand %vm750, %vm718
      %vm783 = vmand %vm751, %vm719
      %vm784 = vmand %vm752, %vm720
      %vm785 = vmand %vm753, %vm721
      %vm786 = vmand %vm754, %vm722
      %vm787 = vmand %vm755, %vm723
      %vm788 = vmand %vm756, %vm724
      %vm789 = vmand %vm757, %vm725
      %vm790 = vmand %vm758, %vm726
      %vm791 = vmand %vm759, %vm727
      %vm792 = vmand %vm760, %vm728
      %vm793 = vmand %vm761, %vm729
      %vm794 = vmand %vm762, %vm730
      %vm795 = vmand %vm763, %vm731
      %vm796 = vmand %vm764, %vm732
      %v797 = vadd.s32 %v483, 16
      %v798 = vadd.s32 %v490, 16
      %v799 = vadd.s32 %v497, 16
      %v800 = vadd.s32 %v504, 16
      %v801 = vadd.s32 %v511, 16
      %v802 = vadd.s32 %v518, 16
      %v803 = vadd.s32 %v525, 16
      %v804 = vadd.s32 %v532, 16
      %v805 = vadd.s32 %v539, 16
      %v806 = vadd.s32 %v546, 16
      %v807 = vadd.s32 %v553, 16
      %v808 = vadd.s32 %v560, 16
      %v809 = vadd.s32 %v567, 16
      %v810 = vadd.s32 %v574, 16
      %v811 = vadd.s32 %v581, 16
      %v812 = vadd.s32 %v588, 16
      %v813 = vadd.s32 %v595, 16
      %v814 = vadd.s32 %v602, 16
      %v815 = vadd.s32 %v609, 16
      %v816 = vadd.s32 %v616, 16
      %v817 = vadd.s32 %v623, 16
      %v818 = vadd.s32 %v630, 16
      %v819 = vadd.s32 %v637, 16
      %v820 = vadd.s32 %v644, 16
      %v821 = vadd.s32 %v651, 16
      %v822 = vadd.s32 %v658, 16
      %v823 = vadd.s32 %v665, 16
      %v824 = vadd.s32 %v672, 16
      %v825 = vadd.s32 %v679, 16
      %v826 = vadd.s32 %v686, 16
      %v827 = vadd.s32 %v693, 16
      %v828 = vadd.s32 %v700, 16
      %v829 = vsel %vm765, %v797, %v483
      %v830 = vsel %vm766, %v798, %v490
      %v831 = vsel %vm767, %v799, %v497
      %v832 = vsel %vm768, %v800, %v504
      %v833 = vsel %vm769, %v801, %v511
      %v834 = vsel %vm770, %v802, %v518
      %v835 = vsel %vm771, %v803, %v525
      %v836 = vsel %vm772, %v804, %v532
      %v837 = vsel %vm773, %v805, %v539
      %v838 = vsel %vm774, %v806, %v546
      %v839 = vsel %vm775, %v807, %v553
      %v840 = vsel %vm776, %v808, %v560
      %v841 = vsel %vm777, %v809, %v567
      %v842 = vsel %vm778, %v810, %v574
      %v843 = vsel %vm779, %v811, %v581
      %v844 = vsel %vm780, %v812, %v588
      %v845 = vsel %vm781, %v813, %v595
      %v846 = vsel %vm782, %v814, %v602
      %v847 = vsel %vm783, %v815, %v609
      %v848 = vsel %vm784, %v816, %v616
      %v849 = vsel %vm785, %v817, %v623
      %v850 = vsel %vm786, %v818, %v630
      %v851 = vsel %vm787, %v819, %v637
      %v852 = vsel %vm788, %v820, %v644
      %v853 = vsel %vm789, %v821, %v651
      %v854 = vsel %vm790, %v822, %v658
      %v855 = vsel %vm791, %v823, %v665
      %v856 = vsel %vm792, %v824, %v672
      %v857 = vsel %vm793, %v825, %v679
      %v858 = vsel %vm794, %v826, %v686
      %v859 = vsel %vm795, %v827, %v693
      %v860 = vsel %vm796, %v828, %v700
      %vm861 = vcmp.ge.s32.totalorder %v829, 1
      %vm862 = vcmp.ge.s32.totalorder %v830, 1
      %vm863 = vcmp.ge.s32.totalorder %v831, 1
      %vm864 = vcmp.ge.s32.totalorder %v832, 1
      %vm865 = vcmp.ge.s32.totalorder %v833, 1
      %vm866 = vcmp.ge.s32.totalorder %v834, 1
      %vm867 = vcmp.ge.s32.totalorder %v835, 1
      %vm868 = vcmp.ge.s32.totalorder %v836, 1
      %vm869 = vcmp.ge.s32.totalorder %v837, 1
      %vm870 = vcmp.ge.s32.totalorder %v838, 1
      %vm871 = vcmp.ge.s32.totalorder %v839, 1
      %vm872 = vcmp.ge.s32.totalorder %v840, 1
      %vm873 = vcmp.ge.s32.totalorder %v841, 1
      %vm874 = vcmp.ge.s32.totalorder %v842, 1
      %vm875 = vcmp.ge.s32.totalorder %v843, 1
      %vm876 = vcmp.ge.s32.totalorder %v844, 1
      %vm877 = vcmp.ge.s32.totalorder %v845, 1
      %vm878 = vcmp.ge.s32.totalorder %v846, 1
      %vm879 = vcmp.ge.s32.totalorder %v847, 1
      %vm880 = vcmp.ge.s32.totalorder %v848, 1
      %vm881 = vcmp.ge.s32.totalorder %v849, 1
      %vm882 = vcmp.ge.s32.totalorder %v850, 1
      %vm883 = vcmp.ge.s32.totalorder %v851, 1
      %vm884 = vcmp.ge.s32.totalorder %v852, 1
      %vm885 = vcmp.ge.s32.totalorder %v853, 1
      %vm886 = vcmp.ge.s32.totalorder %v854, 1
      %vm887 = vcmp.ge.s32.totalorder %v855, 1
      %vm888 = vcmp.ge.s32.totalorder %v856, 1
      %vm889 = vcmp.ge.s32.totalorder %v857, 1
      %vm890 = vcmp.ge.s32.totalorder %v858, 1
      %vm891 = vcmp.ge.s32.totalorder %v859, 1
      %vm892 = vcmp.ge.s32.totalorder %v860, 1
      %v893 = vld [vmem:[#allocation2 + $0x4] sm:$0x8]
      %v894 = vld [vmem:[#allocation2 + $0x8] sm:$0xf]
      %v895 = vld [vmem:[#allocation2 + $0xc] sm:$0xf]
      %v896 = vld [vmem:[#allocation2 + $0x10] sm:$0xf]
      %v897 = vld [vmem:[#allocation2 + $0x14] sm:$0xf]
      %v898 = vld [vmem:[#allocation2 + $0x18] sm:$0xf]
      %v899 = vld [vmem:[#allocation2 + $0x1c] sm:$0xf]
      %v900 = vld [vmem:[#allocation2 + $0x20] sm:$0xf]
      %v901 = vld [vmem:[#allocation2 + $0x24] sm:$0xf]
      %v902 = vld [vmem:[#allocation2 + $0x28] sm:$0xf]
      %v903 = vld [vmem:[#allocation2 + $0x2c] sm:$0xf]
      %v904 = vld [vmem:[#allocation2 + $0x30] sm:$0xf]
      %v905 = vld [vmem:[#allocation2 + $0x34] sm:$0xf]
      %v906 = vld [vmem:[#allocation2 + $0x38] sm:$0xf]
      %v907 = vld [vmem:[#allocation2 + $0x3c] sm:$0xf]
      %v908 = vld [vmem:[#allocation2 + $0x40] sm:$0xf]
      %v909 = vld [vmem:[#allocation2 + $0x44] sm:$0xf]
      %v910 = vld [vmem:[#allocation2 + $0x48] sm:$0xf]
      %v911 = vld [vmem:[#allocation2 + $0x4c] sm:$0xf]
      %v912 = vld [vmem:[#allocation2 + $0x50] sm:$0xf]
      %v913 = vld [vmem:[#allocation2 + $0x54] sm:$0xf]
      %v914 = vld [vmem:[#allocation2 + $0x58] sm:$0xf]
      %v915 = vld [vmem:[#allocation2 + $0x5c] sm:$0xf]
      %v916 = vld [vmem:[#allocation2 + $0x60] sm:$0xf]
      %v917 = vld [vmem:[#allocation2 + $0x64] sm:$0xf]
      %v918 = vld [vmem:[#allocation2 + $0x68] sm:$0xf]
      %v919 = vld [vmem:[#allocation2 + $0x6c] sm:$0xf]
      %v920 = vld [vmem:[#allocation2 + $0x70] sm:$0xf]
      %v921 = vld [vmem:[#allocation2 + $0x74] sm:$0xf]
      %v922 = vld [vmem:[#allocation2 + $0x78] sm:$0xf]
      %v923 = vld [vmem:[#allocation2 + $0x7c] sm:$0xf]
      %v924 = vld [vmem:[#allocation2 + $0x80] sm:$0xf]
      %v925 = vld [vmem:[#allocation2 + $0x84] sm:$0xf]
      %v926 = vsel %vm861, 1, 0
      %v927 = vsel %vm862, 1, 0
      %v928 = vsel %vm863, 1, 0
      %v929 = vsel %vm864, 1, 0
      %v930 = vsel %vm865, 1, 0
      %v931 = vsel %vm866, 1, 0
      %v932 = vsel %vm867, 1, 0
      %v933 = vsel %vm868, 1, 0
      %v934 = vsel %vm869, 1, 0
      %v935 = vsel %vm870, 1, 0
      %v936 = vsel %vm871, 1, 0
      %v937 = vsel %vm872, 1, 0
      %v938 = vsel %vm873, 1, 0
      %v939 = vsel %vm874, 1, 0
      %v940 = vsel %vm875, 1, 0
      %v941 = vsel %vm876, 1, 0
      %v942 = vsel %vm877, 1, 0
      %v943 = vsel %vm878, 1, 0
      %v944 = vsel %vm879, 1, 0
      %v945 = vsel %vm880, 1, 0
      %v946 = vsel %vm881, 1, 0
      %v947 = vsel %vm882, 1, 0
      %v948 = vsel %vm883, 1, 0
      %v949 = vsel %vm884, 1, 0
      %v950 = vsel %vm885, 1, 0
      %v951 = vsel %vm886, 1, 0
      %v952 = vsel %vm887, 1, 0
      %v953 = vsel %vm888, 1, 0
      %v954 = vsel %vm889, 1, 0
      %v955 = vsel %vm890, 1, 0
      %v956 = vsel %vm891, 1, 0
      %v957 = vsel %vm892, 1, 0
      %vm958 = vcmp.eq.s32.totalorder %v926, 1
      %vm959 = vcmp.eq.s32.totalorder %v927, 1
      %vm960 = vcmp.eq.s32.totalorder %v928, 1
      %vm961 = vcmp.eq.s32.totalorder %v929, 1
      %vm962 = vcmp.eq.s32.totalorder %v930, 1
      %vm963 = vcmp.eq.s32.totalorder %v931, 1
      %vm964 = vcmp.eq.s32.totalorder %v932, 1
      %vm965 = vcmp.eq.s32.totalorder %v933, 1
      %vm966 = vcmp.eq.s32.totalorder %v934, 1
      %vm967 = vcmp.eq.s32.totalorder %v935, 1
      %vm968 = vcmp.eq.s32.totalorder %v936, 1
      %vm969 = vcmp.eq.s32.totalorder %v937, 1
      %vm970 = vcmp.eq.s32.totalorder %v938, 1
      %vm971 = vcmp.eq.s32.totalorder %v939, 1
      %vm972 = vcmp.eq.s32.totalorder %v940, 1
      %vm973 = vcmp.eq.s32.totalorder %v941, 1
      %vm974 = vcmp.eq.s32.totalorder %v942, 1
      %vm975 = vcmp.eq.s32.totalorder %v943, 1
      %vm976 = vcmp.eq.s32.totalorder %v944, 1
      %vm977 = vcmp.eq.s32.totalorder %v945, 1
      %vm978 = vcmp.eq.s32.totalorder %v946, 1
      %vm979 = vcmp.eq.s32.totalorder %v947, 1
      %vm980 = vcmp.eq.s32.totalorder %v948, 1
      %vm981 = vcmp.eq.s32.totalorder %v949, 1
      %vm982 = vcmp.eq.s32.totalorder %v950, 1
      %vm983 = vcmp.eq.s32.totalorder %v951, 1
      %vm984 = vcmp.eq.s32.totalorder %v952, 1
      %vm985 = vcmp.eq.s32.totalorder %v953, 1
      %vm986 = vcmp.eq.s32.totalorder %v954, 1
      %vm987 = vcmp.eq.s32.totalorder %v955, 1
      %vm988 = vcmp.eq.s32.totalorder %v956, 1
      %vm989 = vcmp.eq.s32.totalorder %v957, 1
      %vm990 = vmpackc.low %vm958, %vm958
      %vm991 = vmpackc.low %vm959, %vm959
      %vm992 = vmpackc.low %vm960, %vm960
      %vm993 = vmpackc.low %vm961, %vm961
      %vm994 = vmpackc.low %vm962, %vm962
      %vm995 = vmpackc.low %vm963, %vm963
      %vm996 = vmpackc.low %vm964, %vm964
      %vm997 = vmpackc.low %vm965, %vm965
      %vm998 = vmpackc.low %vm966, %vm966
      %vm999 = vmpackc.low %vm967, %vm967
      %vm1000 = vmpackc.low %vm968, %vm968
      %vm1001 = vmpackc.low %vm969, %vm969
      %vm1002 = vmpackc.low %vm970, %vm970
      %vm1003 = vmpackc.low %vm971, %vm971
      %vm1004 = vmpackc.low %vm972, %vm972
      %vm1005 = vmpackc.low %vm973, %vm973
      %vm1006 = vmpackc.low %vm974, %vm974
      %vm1007 = vmpackc.low %vm975, %vm975
      %vm1008 = vmpackc.low %vm976, %vm976
      %vm1009 = vmpackc.low %vm977, %vm977
      %vm1010 = vmpackc.low %vm978, %vm978
      %vm1011 = vmpackc.low %vm979, %vm979
      %vm1012 = vmpackc.low %vm980, %vm980
      %vm1013 = vmpackc.low %vm981, %vm981
      %vm1014 = vmpackc.low %vm982, %vm982
      %vm1015 = vmpackc.low %vm983, %vm983
      %vm1016 = vmpackc.low %vm984, %vm984
      %vm1017 = vmpackc.low %vm985, %vm985
      %vm1018 = vmpackc.low %vm986, %vm986
      %vm1019 = vmpackc.low %vm987, %vm987
      %vm1020 = vmpackc.low %vm988, %vm988
      %vm1021 = vmpackc.low %vm989, %vm989
      %v1022 = vsel %vm990, 65537, 0
      %v1023 = vsel %vm991, 65537, 0
      %v1024 = vsel %vm992, 65537, 0
      %v1025 = vsel %vm993, 65537, 0
      %v1026 = vsel %vm994, 65537, 0
      %v1027 = vsel %vm995, 65537, 0
      %v1028 = vsel %vm996, 65537, 0
      %v1029 = vsel %vm997, 65537, 0
      %v1030 = vsel %vm998, 65537, 0
      %v1031 = vsel %vm999, 65537, 0
      %v1032 = vsel %vm1000, 65537, 0
      %v1033 = vsel %vm1001, 65537, 0
      %v1034 = vsel %vm1002, 65537, 0
      %v1035 = vsel %vm1003, 65537, 0
      %v1036 = vsel %vm1004, 65537, 0
      %v1037 = vsel %vm1005, 65537, 0
      %v1038 = vsel %vm1006, 65537, 0
      %v1039 = vsel %vm1007, 65537, 0
      %v1040 = vsel %vm1008, 65537, 0
      %v1041 = vsel %vm1009, 65537, 0
      %v1042 = vsel %vm1010, 65537, 0
      %v1043 = vsel %vm1011, 65537, 0
      %v1044 = vsel %vm1012, 65537, 0
      %v1045 = vsel %vm1013, 65537, 0
      %v1046 = vsel %vm1014, 65537, 0
      %v1047 = vsel %vm1015, 65537, 0
      %v1048 = vsel %vm1016, 65537, 0
      %v1049 = vsel %vm1017, 65537, 0
      %v1050 = vsel %vm1018, 65537, 0
      %v1051 = vsel %vm1019, 65537, 0
      %v1052 = vsel %vm1020, 65537, 0
      %v1053 = vsel %vm1021, 65537, 0
      %vm1054 = vsmask.f32 3328
      %vm1055 = vsmask.f32 7440
      %vm1056 = vmor %vm1054, %vm1055
      %v1058 = vshll.u32 %v1022, 16
      %v1060 = vrot.slane %v1058, 5
      %v1061 = vshrl.u32 %v1022, 16
      %v1063 = vrot.slane %v1061, 4
      %v1064 = vor.u32 %v1063, %v1060
      %v1065 = vrot.slane %v1064, 4
      %v1067 = vshll.u32 %v1023, 16
      %v1069 = vrot.slane %v1067, 5
      %v1070 = vsel %vm1056, %v1065, %v1069
      %v1071 = vshrl.u32 %v1023, 16
      %v1073 = vrot.slane %v1071, 4
      %v1074 = vor.u32 %v1073, %v1069
      %v1075 = vrot.slane %v1074, 4
      %v1077 = vshll.u32 %v1024, 16
      %v1079 = vrot.slane %v1077, 5
      %v1080 = vsel %vm1056, %v1075, %v1079
      %v1081 = vshrl.u32 %v1024, 16
      %v1083 = vrot.slane %v1081, 4
      %v1084 = vor.u32 %v1083, %v1079
      %v1085 = vrot.slane %v1084, 4
      %v1087 = vshll.u32 %v1025, 16
      %v1089 = vrot.slane %v1087, 5
      %v1090 = vsel %vm1056, %v1085, %v1089
      %v1091 = vshrl.u32 %v1025, 16
      %v1093 = vrot.slane %v1091, 4
      %v1094 = vor.u32 %v1093, %v1089
      %v1095 = vrot.slane %v1094, 4
      %v1097 = vshll.u32 %v1026, 16
      %v1099 = vrot.slane %v1097, 5
      %v1100 = vsel %vm1056, %v1095, %v1099
      %v1101 = vshrl.u32 %v1026, 16
      %v1103 = vrot.slane %v1101, 4
      %v1104 = vor.u32 %v1103, %v1099
      %v1105 = vrot.slane %v1104, 4
      %v1107 = vshll.u32 %v1027, 16
      %v1109 = vrot.slane %v1107, 5
      %v1110 = vsel %vm1056, %v1105, %v1109
      %v1111 = vshrl.u32 %v1027, 16
      %v1113 = vrot.slane %v1111, 4
      %v1114 = vor.u32 %v1113, %v1109
      %v1115 = vrot.slane %v1114, 4
      %v1117 = vshll.u32 %v1028, 16
      %v1119 = vrot.slane %v1117, 5
      %v1120 = vsel %vm1056, %v1115, %v1119
      %v1121 = vshrl.u32 %v1028, 16
      %v1123 = vrot.slane %v1121, 4
      %v1124 = vor.u32 %v1123, %v1119
      %v1125 = vrot.slane %v1124, 4
      %v1127 = vshll.u32 %v1029, 16
      %v1129 = vrot.slane %v1127, 5
      %v1130 = vsel %vm1056, %v1125, %v1129
      %v1131 = vshrl.u32 %v1029, 16
      %v1133 = vrot.slane %v1131, 4
      %v1134 = vor.u32 %v1133, %v1129
      %v1135 = vrot.slane %v1134, 4
      %v1137 = vshll.u32 %v1030, 16
      %v1139 = vrot.slane %v1137, 5
      %v1140 = vsel %vm1056, %v1135, %v1139
      %v1141 = vshrl.u32 %v1030, 16
      %v1143 = vrot.slane %v1141, 4
      %v1144 = vor.u32 %v1143, %v1139
      %v1145 = vrot.slane %v1144, 4
      %v1147 = vshll.u32 %v1031, 16
      %v1149 = vrot.slane %v1147, 5
      %v1150 = vsel %vm1056, %v1145, %v1149
      %v1151 = vshrl.u32 %v1031, 16
      %v1153 = vrot.slane %v1151, 4
      %v1154 = vor.u32 %v1153, %v1149
      %v1155 = vrot.slane %v1154, 4
      %v1157 = vshll.u32 %v1032, 16
      %v1159 = vrot.slane %v1157, 5
      %v1160 = vsel %vm1056, %v1155, %v1159
      %v1161 = vshrl.u32 %v1032, 16
      %v1163 = vrot.slane %v1161, 4
      %v1164 = vor.u32 %v1163, %v1159
      %v1165 = vrot.slane %v1164, 4
      %v1167 = vshll.u32 %v1033, 16
      %v1169 = vrot.slane %v1167, 5
      %v1170 = vsel %vm1056, %v1165, %v1169
      %v1171 = vshrl.u32 %v1033, 16
      %v1173 = vrot.slane %v1171, 4
      %v1174 = vor.u32 %v1173, %v1169
      %v1175 = vrot.slane %v1174, 4
      %v1177 = vshll.u32 %v1034, 16
      %v1179 = vrot.slane %v1177, 5
      %v1180 = vsel %vm1056, %v1175, %v1179
      %v1181 = vshrl.u32 %v1034, 16
      %v1183 = vrot.slane %v1181, 4
      %v1184 = vor.u32 %v1183, %v1179
      %v1185 = vrot.slane %v1184, 4
      %v1187 = vshll.u32 %v1035, 16
      %v1189 = vrot.slane %v1187, 5
      %v1190 = vsel %vm1056, %v1185, %v1189
      %v1191 = vshrl.u32 %v1035, 16
      %v1193 = vrot.slane %v1191, 4
      %v1194 = vor.u32 %v1193, %v1189
      %v1195 = vrot.slane %v1194, 4
      %v1197 = vshll.u32 %v1036, 16
      %v1199 = vrot.slane %v1197, 5
      %v1200 = vsel %vm1056, %v1195, %v1199
      %v1201 = vshrl.u32 %v1036, 16
      %v1203 = vrot.slane %v1201, 4
      %v1204 = vor.u32 %v1203, %v1199
      %v1205 = vrot.slane %v1204, 4
      %v1207 = vshll.u32 %v1037, 16
      %v1209 = vrot.slane %v1207, 5
      %v1210 = vsel %vm1056, %v1205, %v1209
      %v1211 = vshrl.u32 %v1037, 16
      %v1213 = vrot.slane %v1211, 4
      %v1214 = vor.u32 %v1213, %v1209
      %v1215 = vrot.slane %v1214, 4
      %v1217 = vshll.u32 %v1038, 16
      %v1219 = vrot.slane %v1217, 5
      %v1220 = vsel %vm1056, %v1215, %v1219
      %v1221 = vshrl.u32 %v1038, 16
      %v1223 = vrot.slane %v1221, 4
      %v1224 = vor.u32 %v1223, %v1219
      %v1225 = vrot.slane %v1224, 4
      %v1227 = vshll.u32 %v1039, 16
      %v1229 = vrot.slane %v1227, 5
      %v1230 = vsel %vm1056, %v1225, %v1229
      %v1231 = vshrl.u32 %v1039, 16
      %v1233 = vrot.slane %v1231, 4
      %v1234 = vor.u32 %v1233, %v1229
      %v1235 = vrot.slane %v1234, 4
      %v1237 = vshll.u32 %v1040, 16
      %v1239 = vrot.slane %v1237, 5
      %v1240 = vsel %vm1056, %v1235, %v1239
      %v1241 = vshrl.u32 %v1040, 16
      %v1243 = vrot.slane %v1241, 4
      %v1244 = vor.u32 %v1243, %v1239
      %v1245 = vrot.slane %v1244, 4
      %v1247 = vshll.u32 %v1041, 16
      %v1249 = vrot.slane %v1247, 5
      %v1250 = vsel %vm1056, %v1245, %v1249
      %v1251 = vshrl.u32 %v1041, 16
      %v1253 = vrot.slane %v1251, 4
      %v1254 = vor.u32 %v1253, %v1249
      %v1255 = vrot.slane %v1254, 4
      %v1257 = vshll.u32 %v1042, 16
      %v1259 = vrot.slane %v1257, 5
      %v1260 = vsel %vm1056, %v1255, %v1259
      %v1261 = vshrl.u32 %v1042, 16
      %v1263 = vrot.slane %v1261, 4
      %v1264 = vor.u32 %v1263, %v1259
      %v1265 = vrot.slane %v1264, 4
      %v1267 = vshll.u32 %v1043, 16
      %v1269 = vrot.slane %v1267, 5
      %v1270 = vsel %vm1056, %v1265, %v1269
      %v1271 = vshrl.u32 %v1043, 16
      %v1273 = vrot.slane %v1271, 4
      %v1274 = vor.u32 %v1273, %v1269
      %v1275 = vrot.slane %v1274, 4
      %v1277 = vshll.u32 %v1044, 16
      %v1279 = vrot.slane %v1277, 5
      %v1280 = vsel %vm1056, %v1275, %v1279
      %v1281 = vshrl.u32 %v1044, 16
      %v1283 = vrot.slane %v1281, 4
      %v1284 = vor.u32 %v1283, %v1279
      %v1285 = vrot.slane %v1284, 4
      %v1287 = vshll.u32 %v1045, 16
      %v1289 = vrot.slane %v1287, 5
      %v1290 = vsel %vm1056, %v1285, %v1289
      %v1291 = vshrl.u32 %v1045, 16
      %v1293 = vrot.slane %v1291, 4
      %v1294 = vor.u32 %v1293, %v1289
      %v1295 = vrot.slane %v1294, 4
      %v1297 = vshll.u32 %v1046, 16
      %v1299 = vrot.slane %v1297, 5
      %v1300 = vsel %vm1056, %v1295, %v1299
      %v1301 = vshrl.u32 %v1046, 16
      %v1303 = vrot.slane %v1301, 4
      %v1304 = vor.u32 %v1303, %v1299
      %v1305 = vrot.slane %v1304, 4
      %v1307 = vshll.u32 %v1047, 16
      %v1309 = vrot.slane %v1307, 5
      %v1310 = vsel %vm1056, %v1305, %v1309
      %v1311 = vshrl.u32 %v1047, 16
      %v1313 = vrot.slane %v1311, 4
      %v1314 = vor.u32 %v1313, %v1309
      %v1315 = vrot.slane %v1314, 4
      %v1317 = vshll.u32 %v1048, 16
      %v1319 = vrot.slane %v1317, 5
      %v1320 = vsel %vm1056, %v1315, %v1319
      %v1321 = vshrl.u32 %v1048, 16
      %v1323 = vrot.slane %v1321, 4
      %v1324 = vor.u32 %v1323, %v1319
      %v1325 = vrot.slane %v1324, 4
      %v1327 = vshll.u32 %v1049, 16
      %v1329 = vrot.slane %v1327, 5
      %v1330 = vsel %vm1056, %v1325, %v1329
      %v1331 = vshrl.u32 %v1049, 16
      %v1333 = vrot.slane %v1331, 4
      %v1334 = vor.u32 %v1333, %v1329
      %v1335 = vrot.slane %v1334, 4
      %v1337 = vshll.u32 %v1050, 16
      %v1339 = vrot.slane %v1337, 5
      %v1340 = vsel %vm1056, %v1335, %v1339
      %v1341 = vshrl.u32 %v1050, 16
      %v1343 = vrot.slane %v1341, 4
      %v1344 = vor.u32 %v1343, %v1339
      %v1345 = vrot.slane %v1344, 4
      %v1347 = vshll.u32 %v1051, 16
      %v1349 = vrot.slane %v1347, 5
      %v1350 = vsel %vm1056, %v1345, %v1349
      %v1351 = vshrl.u32 %v1051, 16
      %v1353 = vrot.slane %v1351, 4
      %v1354 = vor.u32 %v1353, %v1349
      %v1355 = vrot.slane %v1354, 4
      %v1357 = vshll.u32 %v1052, 16
      %v1359 = vrot.slane %v1357, 5
      %v1360 = vsel %vm1056, %v1355, %v1359
      %v1361 = vshrl.u32 %v1052, 16
      %v1363 = vrot.slane %v1361, 4
      %v1364 = vor.u32 %v1363, %v1359
      %v1365 = vrot.slane %v1364, 4
      %v1367 = vshll.u32 %v1053, 16
      %v1369 = vrot.slane %v1367, 5
      %v1370 = vsel %vm1056, %v1365, %v1369
      %v1371 = vshrl.u32 %v1053, 16
      %v1373 = vrot.slane %v1371, 4
      %v1374 = vor.u32 %v1373, %v1369
      %v1375 = vrot.slane %v1374, 4
      %v1376 = vunpack.c.l.b16 %v1060
      %v1377 = vunpack.c.h.b16 %v1060
      %v1378 = vunpack.c.l.b16 0
      %v1379 = vunpack.c.h.b16 0
      %vm1380 = vcmp.ne.s32.totalorder %v1376, %v1378
      %vm1381 = vcmp.ne.s32.totalorder %v1377, %v1379
      %vm1382 = vmpackc.low %vm1381, %vm1380
      %v1383 = vunpack.c.l.b16 %v1070
      %v1384 = vunpack.c.h.b16 %v1070
      %v1385 = vunpack.c.l.b16 0
      %v1386 = vunpack.c.h.b16 0
      %vm1387 = vcmp.ne.s32.totalorder %v1383, %v1385
      %vm1388 = vcmp.ne.s32.totalorder %v1384, %v1386
      %vm1389 = vmpackc.low %vm1388, %vm1387
      %v1390 = vunpack.c.l.b16 %v1080
      %v1391 = vunpack.c.h.b16 %v1080
      %v1392 = vunpack.c.l.b16 0
      %v1393 = vunpack.c.h.b16 0
      %vm1394 = vcmp.ne.s32.totalorder %v1390, %v1392
      %vm1395 = vcmp.ne.s32.totalorder %v1391, %v1393
      %vm1396 = vmpackc.low %vm1395, %vm1394
      %v1397 = vunpack.c.l.b16 %v1090
      %v1398 = vunpack.c.h.b16 %v1090
      %v1399 = vunpack.c.l.b16 0
      %v1400 = vunpack.c.h.b16 0
      %vm1401 = vcmp.ne.s32.totalorder %v1397, %v1399
      %vm1402 = vcmp.ne.s32.totalorder %v1398, %v1400
      %vm1403 = vmpackc.low %vm1402, %vm1401
      %v1404 = vunpack.c.l.b16 %v1100
      %v1405 = vunpack.c.h.b16 %v1100
      %v1406 = vunpack.c.l.b16 0
      %v1407 = vunpack.c.h.b16 0
      %vm1408 = vcmp.ne.s32.totalorder %v1404, %v1406
      %vm1409 = vcmp.ne.s32.totalorder %v1405, %v1407
      %vm1410 = vmpackc.low %vm1409, %vm1408
      %v1411 = vunpack.c.l.b16 %v1110
      %v1412 = vunpack.c.h.b16 %v1110
      %v1413 = vunpack.c.l.b16 0
      %v1414 = vunpack.c.h.b16 0
      %vm1415 = vcmp.ne.s32.totalorder %v1411, %v1413
      %vm1416 = vcmp.ne.s32.totalorder %v1412, %v1414
      %vm1417 = vmpackc.low %vm1416, %vm1415
      %v1418 = vunpack.c.l.b16 %v1120
      %v1419 = vunpack.c.h.b16 %v1120
      %v1420 = vunpack.c.l.b16 0
      %v1421 = vunpack.c.h.b16 0
      %vm1422 = vcmp.ne.s32.totalorder %v1418, %v1420
      %vm1423 = vcmp.ne.s32.totalorder %v1419, %v1421
      %vm1424 = vmpackc.low %vm1423, %vm1422
      %v1425 = vunpack.c.l.b16 %v1130
      %v1426 = vunpack.c.h.b16 %v1130
      %v1427 = vunpack.c.l.b16 0
      %v1428 = vunpack.c.h.b16 0
      %vm1429 = vcmp.ne.s32.totalorder %v1425, %v1427
      %vm1430 = vcmp.ne.s32.totalorder %v1426, %v1428
      %vm1431 = vmpackc.low %vm1430, %vm1429
      %v1432 = vunpack.c.l.b16 %v1140
      %v1433 = vunpack.c.h.b16 %v1140
      %v1434 = vunpack.c.l.b16 0
      %v1435 = vunpack.c.h.b16 0
      %vm1436 = vcmp.ne.s32.totalorder %v1432, %v1434
      %vm1437 = vcmp.ne.s32.totalorder %v1433, %v1435
      %vm1438 = vmpackc.low %vm1437, %vm1436
      %v1439 = vunpack.c.l.b16 %v1150
      %v1440 = vunpack.c.h.b16 %v1150
      %v1441 = vunpack.c.l.b16 0
      %v1442 = vunpack.c.h.b16 0
      %vm1443 = vcmp.ne.s32.totalorder %v1439, %v1441
      %vm1444 = vcmp.ne.s32.totalorder %v1440, %v1442
      %vm1445 = vmpackc.low %vm1444, %vm1443
      %v1446 = vunpack.c.l.b16 %v1160
      %v1447 = vunpack.c.h.b16 %v1160
      %v1448 = vunpack.c.l.b16 0
      %v1449 = vunpack.c.h.b16 0
      %vm1450 = vcmp.ne.s32.totalorder %v1446, %v1448
      %vm1451 = vcmp.ne.s32.totalorder %v1447, %v1449
      %vm1452 = vmpackc.low %vm1451, %vm1450
      %v1453 = vunpack.c.l.b16 %v1170
      %v1454 = vunpack.c.h.b16 %v1170
      %v1455 = vunpack.c.l.b16 0
      %v1456 = vunpack.c.h.b16 0
      %vm1457 = vcmp.ne.s32.totalorder %v1453, %v1455
      %vm1458 = vcmp.ne.s32.totalorder %v1454, %v1456
      %vm1459 = vmpackc.low %vm1458, %vm1457
      %v1460 = vunpack.c.l.b16 %v1180
      %v1461 = vunpack.c.h.b16 %v1180
      %v1462 = vunpack.c.l.b16 0
      %v1463 = vunpack.c.h.b16 0
      %vm1464 = vcmp.ne.s32.totalorder %v1460, %v1462
      %vm1465 = vcmp.ne.s32.totalorder %v1461, %v1463
      %vm1466 = vmpackc.low %vm1465, %vm1464
      %v1467 = vunpack.c.l.b16 %v1190
      %v1468 = vunpack.c.h.b16 %v1190
      %v1469 = vunpack.c.l.b16 0
      %v1470 = vunpack.c.h.b16 0
      %vm1471 = vcmp.ne.s32.totalorder %v1467, %v1469
      %vm1472 = vcmp.ne.s32.totalorder %v1468, %v1470
      %vm1473 = vmpackc.low %vm1472, %vm1471
      %v1474 = vunpack.c.l.b16 %v1200
      %v1475 = vunpack.c.h.b16 %v1200
      %v1476 = vunpack.c.l.b16 0
      %v1477 = vunpack.c.h.b16 0
      %vm1478 = vcmp.ne.s32.totalorder %v1474, %v1476
      %vm1479 = vcmp.ne.s32.totalorder %v1475, %v1477
      %vm1480 = vmpackc.low %vm1479, %vm1478
      %v1481 = vunpack.c.l.b16 %v1210
      %v1482 = vunpack.c.h.b16 %v1210
      %v1483 = vunpack.c.l.b16 0
      %v1484 = vunpack.c.h.b16 0
      %vm1485 = vcmp.ne.s32.totalorder %v1481, %v1483
      %vm1486 = vcmp.ne.s32.totalorder %v1482, %v1484
      %vm1487 = vmpackc.low %vm1486, %vm1485
      %v1488 = vunpack.c.l.b16 %v1220
      %v1489 = vunpack.c.h.b16 %v1220
      %v1490 = vunpack.c.l.b16 0
      %v1491 = vunpack.c.h.b16 0
      %vm1492 = vcmp.ne.s32.totalorder %v1488, %v1490
      %vm1493 = vcmp.ne.s32.totalorder %v1489, %v1491
      %vm1494 = vmpackc.low %vm1493, %vm1492
      %v1495 = vunpack.c.l.b16 %v1230
      %v1496 = vunpack.c.h.b16 %v1230
      %v1497 = vunpack.c.l.b16 0
      %v1498 = vunpack.c.h.b16 0
      %vm1499 = vcmp.ne.s32.totalorder %v1495, %v1497
      %vm1500 = vcmp.ne.s32.totalorder %v1496, %v1498
      %vm1501 = vmpackc.low %vm1500, %vm1499
      %v1502 = vunpack.c.l.b16 %v1240
      %v1503 = vunpack.c.h.b16 %v1240
      %v1504 = vunpack.c.l.b16 0
      %v1505 = vunpack.c.h.b16 0
      %vm1506 = vcmp.ne.s32.totalorder %v1502, %v1504
      %vm1507 = vcmp.ne.s32.totalorder %v1503, %v1505
      %vm1508 = vmpackc.low %vm1507, %vm1506
      %v1509 = vunpack.c.l.b16 %v1250
      %v1510 = vunpack.c.h.b16 %v1250
      %v1511 = vunpack.c.l.b16 0
      %v1512 = vunpack.c.h.b16 0
      %vm1513 = vcmp.ne.s32.totalorder %v1509, %v1511
      %vm1514 = vcmp.ne.s32.totalorder %v1510, %v1512
      %vm1515 = vmpackc.low %vm1514, %vm1513
      %v1516 = vunpack.c.l.b16 %v1260
      %v1517 = vunpack.c.h.b16 %v1260
      %v1518 = vunpack.c.l.b16 0
      %v1519 = vunpack.c.h.b16 0
      %vm1520 = vcmp.ne.s32.totalorder %v1516, %v1518
      %vm1521 = vcmp.ne.s32.totalorder %v1517, %v1519
      %vm1522 = vmpackc.low %vm1521, %vm1520
      %v1523 = vunpack.c.l.b16 %v1270
      %v1524 = vunpack.c.h.b16 %v1270
      %v1525 = vunpack.c.l.b16 0
      %v1526 = vunpack.c.h.b16 0
      %vm1527 = vcmp.ne.s32.totalorder %v1523, %v1525
      %vm1528 = vcmp.ne.s32.totalorder %v1524, %v1526
      %vm1529 = vmpackc.low %vm1528, %vm1527
      %v1530 = vunpack.c.l.b16 %v1280
      %v1531 = vunpack.c.h.b16 %v1280
      %v1532 = vunpack.c.l.b16 0
      %v1533 = vunpack.c.h.b16 0
      %vm1534 = vcmp.ne.s32.totalorder %v1530, %v1532
      %vm1535 = vcmp.ne.s32.totalorder %v1531, %v1533
      %vm1536 = vmpackc.low %vm1535, %vm1534
      %v1537 = vunpack.c.l.b16 %v1290
      %v1538 = vunpack.c.h.b16 %v1290
      %v1539 = vunpack.c.l.b16 0
      %v1540 = vunpack.c.h.b16 0
      %vm1541 = vcmp.ne.s32.totalorder %v1537, %v1539
      %vm1542 = vcmp.ne.s32.totalorder %v1538, %v1540
      %vm1543 = vmpackc.low %vm1542, %vm1541
      %v1544 = vunpack.c.l.b16 %v1300
      %v1545 = vunpack.c.h.b16 %v1300
      %v1546 = vunpack.c.l.b16 0
      %v1547 = vunpack.c.h.b16 0
      %vm1548 = vcmp.ne.s32.totalorder %v1544, %v1546
      %vm1549 = vcmp.ne.s32.totalorder %v1545, %v1547
      %vm1550 = vmpackc.low %vm1549, %vm1548
      %v1551 = vunpack.c.l.b16 %v1310
      %v1552 = vunpack.c.h.b16 %v1310
      %v1553 = vunpack.c.l.b16 0
      %v1554 = vunpack.c.h.b16 0
      %vm1555 = vcmp.ne.s32.totalorder %v1551, %v1553
      %vm1556 = vcmp.ne.s32.totalorder %v1552, %v1554
      %vm1557 = vmpackc.low %vm1556, %vm1555
      %v1558 = vunpack.c.l.b16 %v1320
      %v1559 = vunpack.c.h.b16 %v1320
      %v1560 = vunpack.c.l.b16 0
      %v1561 = vunpack.c.h.b16 0
      %vm1562 = vcmp.ne.s32.totalorder %v1558, %v1560
      %vm1563 = vcmp.ne.s32.totalorder %v1559, %v1561
      %vm1564 = vmpackc.low %vm1563, %vm1562
      %v1565 = vunpack.c.l.b16 %v1330
      %v1566 = vunpack.c.h.b16 %v1330
      %v1567 = vunpack.c.l.b16 0
      %v1568 = vunpack.c.h.b16 0
      %vm1569 = vcmp.ne.s32.totalorder %v1565, %v1567
      %vm1570 = vcmp.ne.s32.totalorder %v1566, %v1568
      %vm1571 = vmpackc.low %vm1570, %vm1569
      %v1572 = vunpack.c.l.b16 %v1340
      %v1573 = vunpack.c.h.b16 %v1340
      %v1574 = vunpack.c.l.b16 0
      %v1575 = vunpack.c.h.b16 0
      %vm1576 = vcmp.ne.s32.totalorder %v1572, %v1574
      %vm1577 = vcmp.ne.s32.totalorder %v1573, %v1575
      %vm1578 = vmpackc.low %vm1577, %vm1576
      %v1579 = vunpack.c.l.b16 %v1350
      %v1580 = vunpack.c.h.b16 %v1350
      %v1581 = vunpack.c.l.b16 0
      %v1582 = vunpack.c.h.b16 0
      %vm1583 = vcmp.ne.s32.totalorder %v1579, %v1581
      %vm1584 = vcmp.ne.s32.totalorder %v1580, %v1582
      %vm1585 = vmpackc.low %vm1584, %vm1583
      %v1586 = vunpack.c.l.b16 %v1360
      %v1587 = vunpack.c.h.b16 %v1360
      %v1588 = vunpack.c.l.b16 0
      %v1589 = vunpack.c.h.b16 0
      %vm1590 = vcmp.ne.s32.totalorder %v1586, %v1588
      %vm1591 = vcmp.ne.s32.totalorder %v1587, %v1589
      %vm1592 = vmpackc.low %vm1591, %vm1590
      %v1593 = vunpack.c.l.b16 %v1370
      %v1594 = vunpack.c.h.b16 %v1370
      %v1595 = vunpack.c.l.b16 0
      %v1596 = vunpack.c.h.b16 0
      %vm1597 = vcmp.ne.s32.totalorder %v1593, %v1595
      %vm1598 = vcmp.ne.s32.totalorder %v1594, %v1596
      %vm1599 = vmpackc.low %vm1598, %vm1597
      %v1600 = vunpack.c.l.b16 %v1375
      %v1601 = vunpack.c.h.b16 %v1375
      %v1602 = vunpack.c.l.b16 0
      %v1603 = vunpack.c.h.b16 0
      %vm1604 = vcmp.ne.s32.totalorder %v1600, %v1602
      %vm1605 = vcmp.ne.s32.totalorder %v1601, %v1603
      %vm1606 = vmpackc.low %vm1605, %vm1604
      %v1607 = vsel %vm1382, %v893, 0
      %v1608 = vsel %vm1389, %v894, 0
      %v1609 = vsel %vm1396, %v895, 0
      %v1610 = vsel %vm1403, %v896, 0
      %v1611 = vsel %vm1410, %v897, 0
      %v1612 = vsel %vm1417, %v898, 0
      %v1613 = vsel %vm1424, %v899, 0
      %v1614 = vsel %vm1431, %v900, 0
      %v1615 = vsel %vm1438, %v901, 0
      %v1616 = vsel %vm1445, %v902, 0
      %v1617 = vsel %vm1452, %v903, 0
      %v1618 = vsel %vm1459, %v904, 0
      %v1619 = vsel %vm1466, %v905, 0
      %v1620 = vsel %vm1473, %v906, 0
      %v1621 = vsel %vm1480, %v907, 0
      %v1622 = vsel %vm1487, %v908, 0
      %v1623 = vsel %vm1494, %v909, 0
      %v1624 = vsel %vm1501, %v910, 0
      %v1625 = vsel %vm1508, %v911, 0
      %v1626 = vsel %vm1515, %v912, 0
      %v1627 = vsel %vm1522, %v913, 0
      %v1628 = vsel %vm1529, %v914, 0
      %v1629 = vsel %vm1536, %v915, 0
      %v1630 = vsel %vm1543, %v916, 0
      %v1631 = vsel %vm1550, %v917, 0
      %v1632 = vsel %vm1557, %v918, 0
      %v1633 = vsel %vm1564, %v919, 0
      %v1634 = vsel %vm1571, %v920, 0
      %v1635 = vsel %vm1578, %v921, 0
      %v1636 = vsel %vm1585, %v922, 0
      %v1637 = vsel %vm1592, %v923, 0
      %v1638 = vsel %vm1599, %v924, 0
      %v1639 = vsel %vm1606, %v925, 0
      %vm1640 = vcmp.le.s32.totalorder %v829, 14
      %vm1641 = vcmp.le.s32.totalorder %v830, 14
      %vm1642 = vcmp.le.s32.totalorder %v831, 14
      %vm1643 = vcmp.le.s32.totalorder %v832, 14
      %vm1644 = vcmp.le.s32.totalorder %v833, 14
      %vm1645 = vcmp.le.s32.totalorder %v834, 14
      %vm1646 = vcmp.le.s32.totalorder %v835, 14
      %vm1647 = vcmp.le.s32.totalorder %v836, 14
      %vm1648 = vcmp.le.s32.totalorder %v837, 14
      %vm1649 = vcmp.le.s32.totalorder %v838, 14
      %vm1650 = vcmp.le.s32.totalorder %v839, 14
      %vm1651 = vcmp.le.s32.totalorder %v840, 14
      %vm1652 = vcmp.le.s32.totalorder %v841, 14
      %vm1653 = vcmp.le.s32.totalorder %v842, 14
      %vm1654 = vcmp.le.s32.totalorder %v843, 14
      %vm1655 = vcmp.le.s32.totalorder %v844, 14
      %vm1656 = vcmp.le.s32.totalorder %v845, 14
      %vm1657 = vcmp.le.s32.totalorder %v846, 14
      %vm1658 = vcmp.le.s32.totalorder %v847, 14
      %vm1659 = vcmp.le.s32.totalorder %v848, 14
      %vm1660 = vcmp.le.s32.totalorder %v849, 14
      %vm1661 = vcmp.le.s32.totalorder %v850, 14
      %vm1662 = vcmp.le.s32.totalorder %v851, 14
      %vm1663 = vcmp.le.s32.totalorder %v852, 14
      %vm1664 = vcmp.le.s32.totalorder %v853, 14
      %vm1665 = vcmp.le.s32.totalorder %v854, 14
      %vm1666 = vcmp.le.s32.totalorder %v855, 14
      %vm1667 = vcmp.le.s32.totalorder %v856, 14
      %vm1668 = vcmp.le.s32.totalorder %v857, 14
      %vm1669 = vcmp.le.s32.totalorder %v858, 14
      %vm1670 = vcmp.le.s32.totalorder %v859, 14
      %vm1671 = vcmp.le.s32.totalorder %v860, 14
      %v1672 = vld [vmem:[#allocation2 + $0x88] sm:$0x1]
      %v1673 = vsel %vm1640, 1, 0
      %v1674 = vsel %vm1641, 1, 0
      %v1675 = vsel %vm1642, 1, 0
      %v1676 = vsel %vm1643, 1, 0
      %v1677 = vsel %vm1644, 1, 0
      %v1678 = vsel %vm1645, 1, 0
      %v1679 = vsel %vm1646, 1, 0
      %v1680 = vsel %vm1647, 1, 0
      %v1681 = vsel %vm1648, 1, 0
      %v1682 = vsel %vm1649, 1, 0
      %v1683 = vsel %vm1650, 1, 0
      %v1684 = vsel %vm1651, 1, 0
      %v1685 = vsel %vm1652, 1, 0
      %v1686 = vsel %vm1653, 1, 0
      %v1687 = vsel %vm1654, 1, 0
      %v1688 = vsel %vm1655, 1, 0
      %v1689 = vsel %vm1656, 1, 0
      %v1690 = vsel %vm1657, 1, 0
      %v1691 = vsel %vm1658, 1, 0
      %v1692 = vsel %vm1659, 1, 0
      %v1693 = vsel %vm1660, 1, 0
      %v1694 = vsel %vm1661, 1, 0
      %v1695 = vsel %vm1662, 1, 0
      %v1696 = vsel %vm1663, 1, 0
      %v1697 = vsel %vm1664, 1, 0
      %v1698 = vsel %vm1665, 1, 0
      %v1699 = vsel %vm1666, 1, 0
      %v1700 = vsel %vm1667, 1, 0
      %v1701 = vsel %vm1668, 1, 0
      %v1702 = vsel %vm1669, 1, 0
      %v1703 = vsel %vm1670, 1, 0
      %v1704 = vsel %vm1671, 1, 0
      %vm1705 = vcmp.eq.s32.totalorder %v1673, 1
      %vm1706 = vcmp.eq.s32.totalorder %v1674, 1
      %vm1707 = vcmp.eq.s32.totalorder %v1675, 1
      %vm1708 = vcmp.eq.s32.totalorder %v1676, 1
      %vm1709 = vcmp.eq.s32.totalorder %v1677, 1
      %vm1710 = vcmp.eq.s32.totalorder %v1678, 1
      %vm1711 = vcmp.eq.s32.totalorder %v1679, 1
      %vm1712 = vcmp.eq.s32.totalorder %v1680, 1
      %vm1713 = vcmp.eq.s32.totalorder %v1681, 1
      %vm1714 = vcmp.eq.s32.totalorder %v1682, 1
      %vm1715 = vcmp.eq.s32.totalorder %v1683, 1
      %vm1716 = vcmp.eq.s32.totalorder %v1684, 1
      %vm1717 = vcmp.eq.s32.totalorder %v1685, 1
      %vm1718 = vcmp.eq.s32.totalorder %v1686, 1
      %vm1719 = vcmp.eq.s32.totalorder %v1687, 1
      %vm1720 = vcmp.eq.s32.totalorder %v1688, 1
      %vm1721 = vcmp.eq.s32.totalorder %v1689, 1
      %vm1722 = vcmp.eq.s32.totalorder %v1690, 1
      %vm1723 = vcmp.eq.s32.totalorder %v1691, 1
      %vm1724 = vcmp.eq.s32.totalorder %v1692, 1
      %vm1725 = vcmp.eq.s32.totalorder %v1693, 1
      %vm1726 = vcmp.eq.s32.totalorder %v1694, 1
      %vm1727 = vcmp.eq.s32.totalorder %v1695, 1
      %vm1728 = vcmp.eq.s32.totalorder %v1696, 1
      %vm1729 = vcmp.eq.s32.totalorder %v1697, 1
      %vm1730 = vcmp.eq.s32.totalorder %v1698, 1
      %vm1731 = vcmp.eq.s32.totalorder %v1699, 1
      %vm1732 = vcmp.eq.s32.totalorder %v1700, 1
      %vm1733 = vcmp.eq.s32.totalorder %v1701, 1
      %vm1734 = vcmp.eq.s32.totalorder %v1702, 1
      %vm1735 = vcmp.eq.s32.totalorder %v1703, 1
      %vm1736 = vcmp.eq.s32.totalorder %v1704, 1
      %vm1737 = vmpackc.low %vm1705, %vm1705
      %vm1738 = vmpackc.low %vm1706, %vm1706
      %vm1739 = vmpackc.low %vm1707, %vm1707
      %vm1740 = vmpackc.low %vm1708, %vm1708
      %vm1741 = vmpackc.low %vm1709, %vm1709
      %vm1742 = vmpackc.low %vm1710, %vm1710
      %vm1743 = vmpackc.low %vm1711, %vm1711
      %vm1744 = vmpackc.low %vm1712, %vm1712
      %vm1745 = vmpackc.low %vm1713, %vm1713
      %vm1746 = vmpackc.low %vm1714, %vm1714
      %vm1747 = vmpackc.low %vm1715, %vm1715
      %vm1748 = vmpackc.low %vm1716, %vm1716
      %vm1749 = vmpackc.low %vm1717, %vm1717
      %vm1750 = vmpackc.low %vm1718, %vm1718
      %vm1751 = vmpackc.low %vm1719, %vm1719
      %vm1752 = vmpackc.low %vm1720, %vm1720
      %vm1753 = vmpackc.low %vm1721, %vm1721
      %vm1754 = vmpackc.low %vm1722, %vm1722
      %vm1755 = vmpackc.low %vm1723, %vm1723
      %vm1756 = vmpackc.low %vm1724, %vm1724
      %vm1757 = vmpackc.low %vm1725, %vm1725
      %vm1758 = vmpackc.low %vm1726, %vm1726
      %vm1759 = vmpackc.low %vm1727, %vm1727
      %vm1760 = vmpackc.low %vm1728, %vm1728
      %vm1761 = vmpackc.low %vm1729, %vm1729
      %vm1762 = vmpackc.low %vm1730, %vm1730
      %vm1763 = vmpackc.low %vm1731, %vm1731
      %vm1764 = vmpackc.low %vm1732, %vm1732
      %vm1765 = vmpackc.low %vm1733, %vm1733
      %vm1766 = vmpackc.low %vm1734, %vm1734
      %vm1767 = vmpackc.low %vm1735, %vm1735
      %vm1768 = vmpackc.low %vm1736, %vm1736
      %v1769 = vsel %vm1737, 65537, 0
      %v1770 = vsel %vm1738, 65537, 0
      %v1771 = vsel %vm1739, 65537, 0
      %v1772 = vsel %vm1740, 65537, 0
      %v1773 = vsel %vm1741, 65537, 0
      %v1774 = vsel %vm1742, 65537, 0
      %v1775 = vsel %vm1743, 65537, 0
      %v1776 = vsel %vm1744, 65537, 0
      %v1777 = vsel %vm1745, 65537, 0
      %v1778 = vsel %vm1746, 65537, 0
      %v1779 = vsel %vm1747, 65537, 0
      %v1780 = vsel %vm1748, 65537, 0
      %v1781 = vsel %vm1749, 65537, 0
      %v1782 = vsel %vm1750, 65537, 0
      %v1783 = vsel %vm1751, 65537, 0
      %v1784 = vsel %vm1752, 65537, 0
      %v1785 = vsel %vm1753, 65537, 0
      %v1786 = vsel %vm1754, 65537, 0
      %v1787 = vsel %vm1755, 65537, 0
      %v1788 = vsel %vm1756, 65537, 0
      %v1789 = vsel %vm1757, 65537, 0
      %v1790 = vsel %vm1758, 65537, 0
      %v1791 = vsel %vm1759, 65537, 0
      %v1792 = vsel %vm1760, 65537, 0
      %v1793 = vsel %vm1761, 65537, 0
      %v1794 = vsel %vm1762, 65537, 0
      %v1795 = vsel %vm1763, 65537, 0
      %v1796 = vsel %vm1764, 65537, 0
      %v1797 = vsel %vm1765, 65537, 0
      %v1798 = vsel %vm1766, 65537, 0
      %v1799 = vsel %vm1767, 65537, 0
      %v1800 = vsel %vm1768, 65537, 0
      %vm1801 = vsmask.f32 256
      %vm1802 = vsmask.f32 4368
      %vm1803 = vmor %vm1801, %vm1802
      %v1805 = vshrl.u32 %v1769, 16
      %v1807 = vrot.slane %v1805, 7
      %v1808 = vshll.u32 %v1769, 16
      %v1810 = vor.u32 %v1807, %v1808
      %v1811 = vrot.slane %v1807, 4
      %v1813 = vshrl.u32 %v1770, 16
      %v1815 = vrot.slane %v1813, 7
      %v1816 = vshll.u32 %v1770, 16
      %v1818 = vor.u32 %v1815, %v1816
      %v1819 = vsel %vm1803, %v1811, %v1818
      %v1820 = vrot.slane %v1815, 4
      %v1822 = vshrl.u32 %v1771, 16
      %v1824 = vrot.slane %v1822, 7
      %v1825 = vshll.u32 %v1771, 16
      %v1827 = vor.u32 %v1824, %v1825
      %v1828 = vsel %vm1803, %v1820, %v1827
      %v1829 = vrot.slane %v1824, 4
      %v1831 = vshrl.u32 %v1772, 16
      %v1833 = vrot.slane %v1831, 7
      %v1834 = vshll.u32 %v1772, 16
      %v1836 = vor.u32 %v1833, %v1834
      %v1837 = vsel %vm1803, %v1829, %v1836
      %v1838 = vrot.slane %v1833, 4
      %v1840 = vshrl.u32 %v1773, 16
      %v1842 = vrot.slane %v1840, 7
      %v1843 = vshll.u32 %v1773, 16
      %v1845 = vor.u32 %v1842, %v1843
      %v1846 = vsel %vm1803, %v1838, %v1845
      %v1847 = vrot.slane %v1842, 4
      %v1849 = vshrl.u32 %v1774, 16
      %v1851 = vrot.slane %v1849, 7
      %v1852 = vshll.u32 %v1774, 16
      %v1854 = vor.u32 %v1851, %v1852
      %v1855 = vsel %vm1803, %v1847, %v1854
      %v1856 = vrot.slane %v1851, 4
      %v1858 = vshrl.u32 %v1775, 16
      %v1860 = vrot.slane %v1858, 7
      %v1861 = vshll.u32 %v1775, 16
      %v1863 = vor.u32 %v1860, %v1861
      %v1864 = vsel %vm1803, %v1856, %v1863
      %v1865 = vrot.slane %v1860, 4
      %v1867 = vshrl.u32 %v1776, 16
      %v1869 = vrot.slane %v1867, 7
      %v1870 = vshll.u32 %v1776, 16
      %v1872 = vor.u32 %v1869, %v1870
      %v1873 = vsel %vm1803, %v1865, %v1872
      %v1874 = vrot.slane %v1869, 4
      %v1876 = vshrl.u32 %v1777, 16
      %v1878 = vrot.slane %v1876, 7
      %v1879 = vshll.u32 %v1777, 16
      %v1881 = vor.u32 %v1878, %v1879
      %v1882 = vsel %vm1803, %v1874, %v1881
      %v1883 = vrot.slane %v1878, 4
      %v1885 = vshrl.u32 %v1778, 16
      %v1887 = vrot.slane %v1885, 7
      %v1888 = vshll.u32 %v1778, 16
      %v1890 = vor.u32 %v1887, %v1888
      %v1891 = vsel %vm1803, %v1883, %v1890
      %v1892 = vrot.slane %v1887, 4
      %v1894 = vshrl.u32 %v1779, 16
      %v1896 = vrot.slane %v1894, 7
      %v1897 = vshll.u32 %v1779, 16
      %v1899 = vor.u32 %v1896, %v1897
      %v1900 = vsel %vm1803, %v1892, %v1899
      %v1901 = vrot.slane %v1896, 4
      %v1903 = vshrl.u32 %v1780, 16
      %v1905 = vrot.slane %v1903, 7
      %v1906 = vshll.u32 %v1780, 16
      %v1908 = vor.u32 %v1905, %v1906
      %v1909 = vsel %vm1803, %v1901, %v1908
      %v1910 = vrot.slane %v1905, 4
      %v1912 = vshrl.u32 %v1781, 16
      %v1914 = vrot.slane %v1912, 7
      %v1915 = vshll.u32 %v1781, 16
      %v1917 = vor.u32 %v1914, %v1915
      %v1918 = vsel %vm1803, %v1910, %v1917
      %v1919 = vrot.slane %v1914, 4
      %v1921 = vshrl.u32 %v1782, 16
      %v1923 = vrot.slane %v1921, 7
      %v1924 = vshll.u32 %v1782, 16
      %v1926 = vor.u32 %v1923, %v1924
      %v1927 = vsel %vm1803, %v1919, %v1926
      %v1928 = vrot.slane %v1923, 4
      %v1930 = vshrl.u32 %v1783, 16
      %v1932 = vrot.slane %v1930, 7
      %v1933 = vshll.u32 %v1783, 16
      %v1935 = vor.u32 %v1932, %v1933
      %v1936 = vsel %vm1803, %v1928, %v1935
      %v1937 = vrot.slane %v1932, 4
      %v1939 = vshrl.u32 %v1784, 16
      %v1941 = vrot.slane %v1939, 7
      %v1942 = vshll.u32 %v1784, 16
      %v1944 = vor.u32 %v1941, %v1942
      %v1945 = vsel %vm1803, %v1937, %v1944
      %v1946 = vrot.slane %v1941, 4
      %v1948 = vshrl.u32 %v1785, 16
      %v1950 = vrot.slane %v1948, 7
      %v1951 = vshll.u32 %v1785, 16
      %v1953 = vor.u32 %v1950, %v1951
      %v1954 = vsel %vm1803, %v1946, %v1953
      %v1955 = vrot.slane %v1950, 4
      %v1957 = vshrl.u32 %v1786, 16
      %v1959 = vrot.slane %v1957, 7
      %v1960 = vshll.u32 %v1786, 16
      %v1962 = vor.u32 %v1959, %v1960
      %v1963 = vsel %vm1803, %v1955, %v1962
      %v1964 = vrot.slane %v1959, 4
      %v1966 = vshrl.u32 %v1787, 16
      %v1968 = vrot.slane %v1966, 7
      %v1969 = vshll.u32 %v1787, 16
      %v1971 = vor.u32 %v1968, %v1969
      %v1972 = vsel %vm1803, %v1964, %v1971
      %v1973 = vrot.slane %v1968, 4
      %v1975 = vshrl.u32 %v1788, 16
      %v1977 = vrot.slane %v1975, 7
      %v1978 = vshll.u32 %v1788, 16
      %v1980 = vor.u32 %v1977, %v1978
      %v1981 = vsel %vm1803, %v1973, %v1980
      %v1982 = vrot.slane %v1977, 4
      %v1984 = vshrl.u32 %v1789, 16
      %v1986 = vrot.slane %v1984, 7
      %v1987 = vshll.u32 %v1789, 16
      %v1989 = vor.u32 %v1986, %v1987
      %v1990 = vsel %vm1803, %v1982, %v1989
      %v1991 = vrot.slane %v1986, 4
      %v1993 = vshrl.u32 %v1790, 16
      %v1995 = vrot.slane %v1993, 7
      %v1996 = vshll.u32 %v1790, 16
      %v1998 = vor.u32 %v1995, %v1996
      %v1999 = vsel %vm1803, %v1991, %v1998
      %v2000 = vrot.slane %v1995, 4
      %v2002 = vshrl.u32 %v1791, 16
      %v2004 = vrot.slane %v2002, 7
      %v2005 = vshll.u32 %v1791, 16
      %v2007 = vor.u32 %v2004, %v2005
      %v2008 = vsel %vm1803, %v2000, %v2007
      %v2009 = vrot.slane %v2004, 4
      %v2011 = vshrl.u32 %v1792, 16
      %v2013 = vrot.slane %v2011, 7
      %v2014 = vshll.u32 %v1792, 16
      %v2016 = vor.u32 %v2013, %v2014
      %v2017 = vsel %vm1803, %v2009, %v2016
      %v2018 = vrot.slane %v2013, 4
      %v2020 = vshrl.u32 %v1793, 16
      %v2022 = vrot.slane %v2020, 7
      %v2023 = vshll.u32 %v1793, 16
      %v2025 = vor.u32 %v2022, %v2023
      %v2026 = vsel %vm1803, %v2018, %v2025
      %v2027 = vrot.slane %v2022, 4
      %v2029 = vshrl.u32 %v1794, 16
      %v2031 = vrot.slane %v2029, 7
      %v2032 = vshll.u32 %v1794, 16
      %v2034 = vor.u32 %v2031, %v2032
      %v2035 = vsel %vm1803, %v2027, %v2034
      %v2036 = vrot.slane %v2031, 4
      %v2038 = vshrl.u32 %v1795, 16
      %v2040 = vrot.slane %v2038, 7
      %v2041 = vshll.u32 %v1795, 16
      %v2043 = vor.u32 %v2040, %v2041
      %v2044 = vsel %vm1803, %v2036, %v2043
      %v2045 = vrot.slane %v2040, 4
      %v2047 = vshrl.u32 %v1796, 16
      %v2049 = vrot.slane %v2047, 7
      %v2050 = vshll.u32 %v1796, 16
      %v2052 = vor.u32 %v2049, %v2050
      %v2053 = vsel %vm1803, %v2045, %v2052
      %v2054 = vrot.slane %v2049, 4
      %v2056 = vshrl.u32 %v1797, 16
      %v2058 = vrot.slane %v2056, 7
      %v2059 = vshll.u32 %v1797, 16
      %v2061 = vor.u32 %v2058, %v2059
      %v2062 = vsel %vm1803, %v2054, %v2061
      %v2063 = vrot.slane %v2058, 4
      %v2065 = vshrl.u32 %v1798, 16
      %v2067 = vrot.slane %v2065, 7
      %v2068 = vshll.u32 %v1798, 16
      %v2070 = vor.u32 %v2067, %v2068
      %v2071 = vsel %vm1803, %v2063, %v2070
      %v2072 = vrot.slane %v2067, 4
      %v2074 = vshrl.u32 %v1799, 16
      %v2076 = vrot.slane %v2074, 7
      %v2077 = vshll.u32 %v1799, 16
      %v2079 = vor.u32 %v2076, %v2077
      %v2080 = vsel %vm1803, %v2072, %v2079
      %v2081 = vrot.slane %v2076, 4
      %v2083 = vshrl.u32 %v1800, 16
      %v2085 = vrot.slane %v2083, 7
      %v2086 = vshll.u32 %v1800, 16
      %v2088 = vor.u32 %v2085, %v2086
      %v2089 = vsel %vm1803, %v2081, %v2088
      %v2090 = vrot.slane %v2085, 4
      %v2091 = vunpack.c.l.b16 %v1810
      %v2092 = vunpack.c.h.b16 %v1810
      %v2093 = vunpack.c.l.b16 0
      %v2094 = vunpack.c.h.b16 0
      %vm2095 = vcmp.ne.s32.totalorder %v2091, %v2093
      %vm2096 = vcmp.ne.s32.totalorder %v2092, %v2094
      %vm2097 = vmpackc.low %vm2096, %vm2095
      %v2098 = vunpack.c.l.b16 %v1819
      %v2099 = vunpack.c.h.b16 %v1819
      %v2100 = vunpack.c.l.b16 0
      %v2101 = vunpack.c.h.b16 0
      %vm2102 = vcmp.ne.s32.totalorder %v2098, %v2100
      %vm2103 = vcmp.ne.s32.totalorder %v2099, %v2101
      %vm2104 = vmpackc.low %vm2103, %vm2102
      %v2105 = vunpack.c.l.b16 %v1828
      %v2106 = vunpack.c.h.b16 %v1828
      %v2107 = vunpack.c.l.b16 0
      %v2108 = vunpack.c.h.b16 0
      %vm2109 = vcmp.ne.s32.totalorder %v2105, %v2107
      %vm2110 = vcmp.ne.s32.totalorder %v2106, %v2108
      %vm2111 = vmpackc.low %vm2110, %vm2109
      %v2112 = vunpack.c.l.b16 %v1837
      %v2113 = vunpack.c.h.b16 %v1837
      %v2114 = vunpack.c.l.b16 0
      %v2115 = vunpack.c.h.b16 0
      %vm2116 = vcmp.ne.s32.totalorder %v2112, %v2114
      %vm2117 = vcmp.ne.s32.totalorder %v2113, %v2115
      %vm2118 = vmpackc.low %vm2117, %vm2116
      %v2119 = vunpack.c.l.b16 %v1846
      %v2120 = vunpack.c.h.b16 %v1846
      %v2121 = vunpack.c.l.b16 0
      %v2122 = vunpack.c.h.b16 0
      %vm2123 = vcmp.ne.s32.totalorder %v2119, %v2121
      %vm2124 = vcmp.ne.s32.totalorder %v2120, %v2122
      %vm2125 = vmpackc.low %vm2124, %vm2123
      %v2126 = vunpack.c.l.b16 %v1855
      %v2127 = vunpack.c.h.b16 %v1855
      %v2128 = vunpack.c.l.b16 0
      %v2129 = vunpack.c.h.b16 0
      %vm2130 = vcmp.ne.s32.totalorder %v2126, %v2128
      %vm2131 = vcmp.ne.s32.totalorder %v2127, %v2129
      %vm2132 = vmpackc.low %vm2131, %vm2130
      %v2133 = vunpack.c.l.b16 %v1864
      %v2134 = vunpack.c.h.b16 %v1864
      %v2135 = vunpack.c.l.b16 0
      %v2136 = vunpack.c.h.b16 0
      %vm2137 = vcmp.ne.s32.totalorder %v2133, %v2135
      %vm2138 = vcmp.ne.s32.totalorder %v2134, %v2136
      %vm2139 = vmpackc.low %vm2138, %vm2137
      %v2140 = vunpack.c.l.b16 %v1873
      %v2141 = vunpack.c.h.b16 %v1873
      %v2142 = vunpack.c.l.b16 0
      %v2143 = vunpack.c.h.b16 0
      %vm2144 = vcmp.ne.s32.totalorder %v2140, %v2142
      %vm2145 = vcmp.ne.s32.totalorder %v2141, %v2143
      %vm2146 = vmpackc.low %vm2145, %vm2144
      %v2147 = vunpack.c.l.b16 %v1882
      %v2148 = vunpack.c.h.b16 %v1882
      %v2149 = vunpack.c.l.b16 0
      %v2150 = vunpack.c.h.b16 0
      %vm2151 = vcmp.ne.s32.totalorder %v2147, %v2149
      %vm2152 = vcmp.ne.s32.totalorder %v2148, %v2150
      %vm2153 = vmpackc.low %vm2152, %vm2151
      %v2154 = vunpack.c.l.b16 %v1891
      %v2155 = vunpack.c.h.b16 %v1891
      %v2156 = vunpack.c.l.b16 0
      %v2157 = vunpack.c.h.b16 0
      %vm2158 = vcmp.ne.s32.totalorder %v2154, %v2156
      %vm2159 = vcmp.ne.s32.totalorder %v2155, %v2157
      %vm2160 = vmpackc.low %vm2159, %vm2158
      %v2161 = vunpack.c.l.b16 %v1900
      %v2162 = vunpack.c.h.b16 %v1900
      %v2163 = vunpack.c.l.b16 0
      %v2164 = vunpack.c.h.b16 0
      %vm2165 = vcmp.ne.s32.totalorder %v2161, %v2163
      %vm2166 = vcmp.ne.s32.totalorder %v2162, %v2164
      %vm2167 = vmpackc.low %vm2166, %vm2165
      %v2168 = vunpack.c.l.b16 %v1909
      %v2169 = vunpack.c.h.b16 %v1909
      %v2170 = vunpack.c.l.b16 0
      %v2171 = vunpack.c.h.b16 0
      %vm2172 = vcmp.ne.s32.totalorder %v2168, %v2170
      %vm2173 = vcmp.ne.s32.totalorder %v2169, %v2171
      %vm2174 = vmpackc.low %vm2173, %vm2172
      %v2175 = vunpack.c.l.b16 %v1918
      %v2176 = vunpack.c.h.b16 %v1918
      %v2177 = vunpack.c.l.b16 0
      %v2178 = vunpack.c.h.b16 0
      %vm2179 = vcmp.ne.s32.totalorder %v2175, %v2177
      %vm2180 = vcmp.ne.s32.totalorder %v2176, %v2178
      %vm2181 = vmpackc.low %vm2180, %vm2179
      %v2182 = vunpack.c.l.b16 %v1927
      %v2183 = vunpack.c.h.b16 %v1927
      %v2184 = vunpack.c.l.b16 0
      %v2185 = vunpack.c.h.b16 0
      %vm2186 = vcmp.ne.s32.totalorder %v2182, %v2184
      %vm2187 = vcmp.ne.s32.totalorder %v2183, %v2185
      %vm2188 = vmpackc.low %vm2187, %vm2186
      %v2189 = vunpack.c.l.b16 %v1936
      %v2190 = vunpack.c.h.b16 %v1936
      %v2191 = vunpack.c.l.b16 0
      %v2192 = vunpack.c.h.b16 0
      %vm2193 = vcmp.ne.s32.totalorder %v2189, %v2191
      %vm2194 = vcmp.ne.s32.totalorder %v2190, %v2192
      %vm2195 = vmpackc.low %vm2194, %vm2193
      %v2196 = vunpack.c.l.b16 %v1945
      %v2197 = vunpack.c.h.b16 %v1945
      %v2198 = vunpack.c.l.b16 0
      %v2199 = vunpack.c.h.b16 0
      %vm2200 = vcmp.ne.s32.totalorder %v2196, %v2198
      %vm2201 = vcmp.ne.s32.totalorder %v2197, %v2199
      %vm2202 = vmpackc.low %vm2201, %vm2200
      %v2203 = vunpack.c.l.b16 %v1954
      %v2204 = vunpack.c.h.b16 %v1954
      %v2205 = vunpack.c.l.b16 0
      %v2206 = vunpack.c.h.b16 0
      %vm2207 = vcmp.ne.s32.totalorder %v2203, %v2205
      %vm2208 = vcmp.ne.s32.totalorder %v2204, %v2206
      %vm2209 = vmpackc.low %vm2208, %vm2207
      %v2210 = vunpack.c.l.b16 %v1963
      %v2211 = vunpack.c.h.b16 %v1963
      %v2212 = vunpack.c.l.b16 0
      %v2213 = vunpack.c.h.b16 0
      %vm2214 = vcmp.ne.s32.totalorder %v2210, %v2212
      %vm2215 = vcmp.ne.s32.totalorder %v2211, %v2213
      %vm2216 = vmpackc.low %vm2215, %vm2214
      %v2217 = vunpack.c.l.b16 %v1972
      %v2218 = vunpack.c.h.b16 %v1972
      %v2219 = vunpack.c.l.b16 0
      %v2220 = vunpack.c.h.b16 0
      %vm2221 = vcmp.ne.s32.totalorder %v2217, %v2219
      %vm2222 = vcmp.ne.s32.totalorder %v2218, %v2220
      %vm2223 = vmpackc.low %vm2222, %vm2221
      %v2224 = vunpack.c.l.b16 %v1981
      %v2225 = vunpack.c.h.b16 %v1981
      %v2226 = vunpack.c.l.b16 0
      %v2227 = vunpack.c.h.b16 0
      %vm2228 = vcmp.ne.s32.totalorder %v2224, %v2226
      %vm2229 = vcmp.ne.s32.totalorder %v2225, %v2227
      %vm2230 = vmpackc.low %vm2229, %vm2228
      %v2231 = vunpack.c.l.b16 %v1990
      %v2232 = vunpack.c.h.b16 %v1990
      %v2233 = vunpack.c.l.b16 0
      %v2234 = vunpack.c.h.b16 0
      %vm2235 = vcmp.ne.s32.totalorder %v2231, %v2233
      %vm2236 = vcmp.ne.s32.totalorder %v2232, %v2234
      %vm2237 = vmpackc.low %vm2236, %vm2235
      %v2238 = vunpack.c.l.b16 %v1999
      %v2239 = vunpack.c.h.b16 %v1999
      %v2240 = vunpack.c.l.b16 0
      %v2241 = vunpack.c.h.b16 0
      %vm2242 = vcmp.ne.s32.totalorder %v2238, %v2240
      %vm2243 = vcmp.ne.s32.totalorder %v2239, %v2241
      %vm2244 = vmpackc.low %vm2243, %vm2242
      %v2245 = vunpack.c.l.b16 %v2008
      %v2246 = vunpack.c.h.b16 %v2008
      %v2247 = vunpack.c.l.b16 0
      %v2248 = vunpack.c.h.b16 0
      %vm2249 = vcmp.ne.s32.totalorder %v2245, %v2247
      %vm2250 = vcmp.ne.s32.totalorder %v2246, %v2248
      %vm2251 = vmpackc.low %vm2250, %vm2249
      %v2252 = vunpack.c.l.b16 %v2017
      %v2253 = vunpack.c.h.b16 %v2017
      %v2254 = vunpack.c.l.b16 0
      %v2255 = vunpack.c.h.b16 0
      %vm2256 = vcmp.ne.s32.totalorder %v2252, %v2254
      %vm2257 = vcmp.ne.s32.totalorder %v2253, %v2255
      %vm2258 = vmpackc.low %vm2257, %vm2256
      %v2259 = vunpack.c.l.b16 %v2026
      %v2260 = vunpack.c.h.b16 %v2026
      %v2261 = vunpack.c.l.b16 0
      %v2262 = vunpack.c.h.b16 0
      %vm2263 = vcmp.ne.s32.totalorder %v2259, %v2261
      %vm2264 = vcmp.ne.s32.totalorder %v2260, %v2262
      %vm2265 = vmpackc.low %vm2264, %vm2263
      %v2266 = vunpack.c.l.b16 %v2035
      %v2267 = vunpack.c.h.b16 %v2035
      %v2268 = vunpack.c.l.b16 0
      %v2269 = vunpack.c.h.b16 0
      %vm2270 = vcmp.ne.s32.totalorder %v2266, %v2268
      %vm2271 = vcmp.ne.s32.totalorder %v2267, %v2269
      %vm2272 = vmpackc.low %vm2271, %vm2270
      %v2273 = vunpack.c.l.b16 %v2044
      %v2274 = vunpack.c.h.b16 %v2044
      %v2275 = vunpack.c.l.b16 0
      %v2276 = vunpack.c.h.b16 0
      %vm2277 = vcmp.ne.s32.totalorder %v2273, %v2275
      %vm2278 = vcmp.ne.s32.totalorder %v2274, %v2276
      %vm2279 = vmpackc.low %vm2278, %vm2277
      %v2280 = vunpack.c.l.b16 %v2053
      %v2281 = vunpack.c.h.b16 %v2053
      %v2282 = vunpack.c.l.b16 0
      %v2283 = vunpack.c.h.b16 0
      %vm2284 = vcmp.ne.s32.totalorder %v2280, %v2282
      %vm2285 = vcmp.ne.s32.totalorder %v2281, %v2283
      %vm2286 = vmpackc.low %vm2285, %vm2284
      %v2287 = vunpack.c.l.b16 %v2062
      %v2288 = vunpack.c.h.b16 %v2062
      %v2289 = vunpack.c.l.b16 0
      %v2290 = vunpack.c.h.b16 0
      %vm2291 = vcmp.ne.s32.totalorder %v2287, %v2289
      %vm2292 = vcmp.ne.s32.totalorder %v2288, %v2290
      %vm2293 = vmpackc.low %vm2292, %vm2291
      %v2294 = vunpack.c.l.b16 %v2071
      %v2295 = vunpack.c.h.b16 %v2071
      %v2296 = vunpack.c.l.b16 0
      %v2297 = vunpack.c.h.b16 0
      %vm2298 = vcmp.ne.s32.totalorder %v2294, %v2296
      %vm2299 = vcmp.ne.s32.totalorder %v2295, %v2297
      %vm2300 = vmpackc.low %vm2299, %vm2298
      %v2301 = vunpack.c.l.b16 %v2080
      %v2302 = vunpack.c.h.b16 %v2080
      %v2303 = vunpack.c.l.b16 0
      %v2304 = vunpack.c.h.b16 0
      %vm2305 = vcmp.ne.s32.totalorder %v2301, %v2303
      %vm2306 = vcmp.ne.s32.totalorder %v2302, %v2304
      %vm2307 = vmpackc.low %vm2306, %vm2305
      %v2308 = vunpack.c.l.b16 %v2089
      %v2309 = vunpack.c.h.b16 %v2089
      %v2310 = vunpack.c.l.b16 0
      %v2311 = vunpack.c.h.b16 0
      %vm2312 = vcmp.ne.s32.totalorder %v2308, %v2310
      %vm2313 = vcmp.ne.s32.totalorder %v2309, %v2311
      %vm2314 = vmpackc.low %vm2313, %vm2312
      %v2315 = vunpack.c.l.b16 %v2090
      %v2316 = vunpack.c.h.b16 %v2090
      %v2317 = vunpack.c.l.b16 0
      %v2318 = vunpack.c.h.b16 0
      %vm2319 = vcmp.ne.s32.totalorder %v2315, %v2317
      %vm2320 = vcmp.ne.s32.totalorder %v2316, %v2318
      %vm2321 = vmpackc.low %vm2320, %vm2319
      %v2322 = vsel %vm2097, %v894, 0
      %v2323 = vsel %vm2104, %v895, 0
      %v2324 = vsel %vm2111, %v896, 0
      %v2325 = vsel %vm2118, %v897, 0
      %v2326 = vsel %vm2125, %v898, 0
      %v2327 = vsel %vm2132, %v899, 0
      %v2328 = vsel %vm2139, %v900, 0
      %v2329 = vsel %vm2146, %v901, 0
      %v2330 = vsel %vm2153, %v902, 0
      %v2331 = vsel %vm2160, %v903, 0
      %v2332 = vsel %vm2167, %v904, 0
      %v2333 = vsel %vm2174, %v905, 0
      %v2334 = vsel %vm2181, %v906, 0
      %v2335 = vsel %vm2188, %v907, 0
      %v2336 = vsel %vm2195, %v908, 0
      %v2337 = vsel %vm2202, %v909, 0
      %v2338 = vsel %vm2209, %v910, 0
      %v2339 = vsel %vm2216, %v911, 0
      %v2340 = vsel %vm2223, %v912, 0
      %v2341 = vsel %vm2230, %v913, 0
      %v2342 = vsel %vm2237, %v914, 0
      %v2343 = vsel %vm2244, %v915, 0
      %v2344 = vsel %vm2251, %v916, 0
      %v2345 = vsel %vm2258, %v917, 0
      %v2346 = vsel %vm2265, %v918, 0
      %v2347 = vsel %vm2272, %v919, 0
      %v2348 = vsel %vm2279, %v920, 0
      %v2349 = vsel %vm2286, %v921, 0
      %v2350 = vsel %vm2293, %v922, 0
      %v2351 = vsel %vm2300, %v923, 0
      %v2352 = vsel %vm2307, %v924, 0
      %v2353 = vsel %vm2314, %v925, 0
      %v2354 = vsel %vm2321, %v1672, 0
      %vm2355 = vcmask 191488
      %2356 = vst.msk [vmem:[#allocation3] sm:$0xf] %vm2355, 0
      %2357 = vst.msk [vmem:[#allocation3 + $0x4] sm:$0xf] %vm2355, 0
      %2358 = vst.msk [vmem:[#allocation3 + $0x88] sm:$0xf] %vm2355, 0
      %2359 = vst.msk [vmem:[#allocation3 + $0x8c] sm:$0xf] %vm2355, 0
      %v2361 = vshrl.u32 %v1607, 16
      %v2363 = vrot.slane %v2361, 7
      %v2364 = vrot.slane %v2363, 4
      %v2366 = vshrl.u32 %v1608, 16
      %v2368 = vrot.slane %v2366, 7
      %v2369 = vshll.u32 %v1608, 16
      %v2371 = vor.u32 %v2368, %v2369
      %v2372 = vsel %vm1803, %v2364, %v2371
      %v2373 = vrot.slane %v2368, 4
      %v2375 = vshrl.u32 %v1609, 16
      %v2377 = vrot.slane %v2375, 7
      %v2378 = vshll.u32 %v1609, 16
      %v2380 = vor.u32 %v2377, %v2378
      %v2381 = vsel %vm1803, %v2373, %v2380
      %v2382 = vrot.slane %v2377, 4
      %v2384 = vshrl.u32 %v1610, 16
      %v2386 = vrot.slane %v2384, 7
      %v2387 = vshll.u32 %v1610, 16
      %v2389 = vor.u32 %v2386, %v2387
      %v2390 = vsel %vm1803, %v2382, %v2389
      %v2391 = vrot.slane %v2386, 4
      %v2393 = vshrl.u32 %v1611, 16
      %v2395 = vrot.slane %v2393, 7
      %v2396 = vshll.u32 %v1611, 16
      %v2398 = vor.u32 %v2395, %v2396
      %v2399 = vsel %vm1803, %v2391, %v2398
      %v2400 = vrot.slane %v2395, 4
      %v2402 = vshrl.u32 %v1612, 16
      %v2404 = vrot.slane %v2402, 7
      %v2405 = vshll.u32 %v1612, 16
      %v2407 = vor.u32 %v2404, %v2405
      %v2408 = vsel %vm1803, %v2400, %v2407
      %v2409 = vrot.slane %v2404, 4
      %v2411 = vshrl.u32 %v1613, 16
      %v2413 = vrot.slane %v2411, 7
      %v2414 = vshll.u32 %v1613, 16
      %v2416 = vor.u32 %v2413, %v2414
      %v2417 = vsel %vm1803, %v2409, %v2416
      %v2418 = vrot.slane %v2413, 4
      %v2420 = vshrl.u32 %v1614, 16
      %v2422 = vrot.slane %v2420, 7
      %v2423 = vshll.u32 %v1614, 16
      %v2425 = vor.u32 %v2422, %v2423
      %v2426 = vsel %vm1803, %v2418, %v2425
      %v2427 = vrot.slane %v2422, 4
      %v2429 = vshrl.u32 %v1615, 16
      %v2431 = vrot.slane %v2429, 7
      %v2432 = vshll.u32 %v1615, 16
      %v2434 = vor.u32 %v2431, %v2432
      %v2435 = vsel %vm1803, %v2427, %v2434
      %v2436 = vrot.slane %v2431, 4
      %v2438 = vshrl.u32 %v1616, 16
      %v2440 = vrot.slane %v2438, 7
      %v2441 = vshll.u32 %v1616, 16
      %v2443 = vor.u32 %v2440, %v2441
      %v2444 = vsel %vm1803, %v2436, %v2443
      %v2445 = vrot.slane %v2440, 4
      %v2447 = vshrl.u32 %v1617, 16
      %v2449 = vrot.slane %v2447, 7
      %v2450 = vshll.u32 %v1617, 16
      %v2452 = vor.u32 %v2449, %v2450
      %v2453 = vsel %vm1803, %v2445, %v2452
      %v2454 = vrot.slane %v2449, 4
      %v2456 = vshrl.u32 %v1618, 16
      %v2458 = vrot.slane %v2456, 7
      %v2459 = vshll.u32 %v1618, 16
      %v2461 = vor.u32 %v2458, %v2459
      %v2462 = vsel %vm1803, %v2454, %v2461
      %v2463 = vrot.slane %v2458, 4
      %v2465 = vshrl.u32 %v1619, 16
      %v2467 = vrot.slane %v2465, 7
      %v2468 = vshll.u32 %v1619, 16
      %v2470 = vor.u32 %v2467, %v2468
      %v2471 = vsel %vm1803, %v2463, %v2470
      %v2472 = vrot.slane %v2467, 4
      %v2474 = vshrl.u32 %v1620, 16
      %v2476 = vrot.slane %v2474, 7
      %v2477 = vshll.u32 %v1620, 16
      %v2479 = vor.u32 %v2476, %v2477
      %v2480 = vsel %vm1803, %v2472, %v2479
      %v2481 = vrot.slane %v2476, 4
      %v2483 = vshrl.u32 %v1621, 16
      %v2485 = vrot.slane %v2483, 7
      %v2486 = vshll.u32 %v1621, 16
      %v2488 = vor.u32 %v2485, %v2486
      %v2489 = vsel %vm1803, %v2481, %v2488
      %v2490 = vrot.slane %v2485, 4
      %v2492 = vshrl.u32 %v1622, 16
      %v2494 = vrot.slane %v2492, 7
      %v2495 = vshll.u32 %v1622, 16
      %v2497 = vor.u32 %v2494, %v2495
      %v2498 = vsel %vm1803, %v2490, %v2497
      %v2499 = vrot.slane %v2494, 4
      %v2501 = vshrl.u32 %v1623, 16
      %v2503 = vrot.slane %v2501, 7
      %v2504 = vshll.u32 %v1623, 16
      %v2506 = vor.u32 %v2503, %v2504
      %v2507 = vsel %vm1803, %v2499, %v2506
      %v2508 = vrot.slane %v2503, 4
      %v2510 = vshrl.u32 %v1624, 16
      %v2512 = vrot.slane %v2510, 7
      %v2513 = vshll.u32 %v1624, 16
      %v2515 = vor.u32 %v2512, %v2513
      %v2516 = vsel %vm1803, %v2508, %v2515
      %v2517 = vrot.slane %v2512, 4
      %v2519 = vshrl.u32 %v1625, 16
      %v2521 = vrot.slane %v2519, 7
      %v2522 = vshll.u32 %v1625, 16
      %v2524 = vor.u32 %v2521, %v2522
      %v2525 = vsel %vm1803, %v2517, %v2524
      %v2526 = vrot.slane %v2521, 4
      %v2528 = vshrl.u32 %v1626, 16
      %v2530 = vrot.slane %v2528, 7
      %v2531 = vshll.u32 %v1626, 16
      %v2533 = vor.u32 %v2530, %v2531
      %v2534 = vsel %vm1803, %v2526, %v2533
      %v2535 = vrot.slane %v2530, 4
      %v2537 = vshrl.u32 %v1627, 16
      %v2539 = vrot.slane %v2537, 7
      %v2540 = vshll.u32 %v1627, 16
      %v2542 = vor.u32 %v2539, %v2540
      %v2543 = vsel %vm1803, %v2535, %v2542
      %v2544 = vrot.slane %v2539, 4
      %v2546 = vshrl.u32 %v1628, 16
      %v2548 = vrot.slane %v2546, 7
      %v2549 = vshll.u32 %v1628, 16
      %v2551 = vor.u32 %v2548, %v2549
      %v2552 = vsel %vm1803, %v2544, %v2551
      %v2553 = vrot.slane %v2548, 4
      %v2555 = vshrl.u32 %v1629, 16
      %v2557 = vrot.slane %v2555, 7
      %v2558 = vshll.u32 %v1629, 16
      %v2560 = vor.u32 %v2557, %v2558
      %v2561 = vsel %vm1803, %v2553, %v2560
      %v2562 = vrot.slane %v2557, 4
      %v2564 = vshrl.u32 %v1630, 16
      %v2566 = vrot.slane %v2564, 7
      %v2567 = vshll.u32 %v1630, 16
      %v2569 = vor.u32 %v2566, %v2567
      %v2570 = vsel %vm1803, %v2562, %v2569
      %v2571 = vrot.slane %v2566, 4
      %v2573 = vshrl.u32 %v1631, 16
      %v2575 = vrot.slane %v2573, 7
      %v2576 = vshll.u32 %v1631, 16
      %v2578 = vor.u32 %v2575, %v2576
      %v2579 = vsel %vm1803, %v2571, %v2578
      %v2580 = vrot.slane %v2575, 4
      %v2582 = vshrl.u32 %v1632, 16
      %v2584 = vrot.slane %v2582, 7
      %v2585 = vshll.u32 %v1632, 16
      %v2587 = vor.u32 %v2584, %v2585
      %v2588 = vsel %vm1803, %v2580, %v2587
      %v2589 = vrot.slane %v2584, 4
      %v2591 = vshrl.u32 %v1633, 16
      %v2593 = vrot.slane %v2591, 7
      %v2594 = vshll.u32 %v1633, 16
      %v2596 = vor.u32 %v2593, %v2594
      %v2597 = vsel %vm1803, %v2589, %v2596
      %v2598 = vrot.slane %v2593, 4
      %v2600 = vshrl.u32 %v1634, 16
      %v2602 = vrot.slane %v2600, 7
      %v2603 = vshll.u32 %v1634, 16
      %v2605 = vor.u32 %v2602, %v2603
      %v2606 = vsel %vm1803, %v2598, %v2605
      %v2607 = vrot.slane %v2602, 4
      %v2609 = vshrl.u32 %v1635, 16
      %v2611 = vrot.slane %v2609, 7
      %v2612 = vshll.u32 %v1635, 16
      %v2614 = vor.u32 %v2611, %v2612
      %v2615 = vsel %vm1803, %v2607, %v2614
      %v2616 = vrot.slane %v2611, 4
      %v2618 = vshrl.u32 %v1636, 16
      %v2620 = vrot.slane %v2618, 7
      %v2621 = vshll.u32 %v1636, 16
      %v2623 = vor.u32 %v2620, %v2621
      %v2624 = vsel %vm1803, %v2616, %v2623
      %v2625 = vrot.slane %v2620, 4
      %v2627 = vshrl.u32 %v1637, 16
      %v2629 = vrot.slane %v2627, 7
      %v2630 = vshll.u32 %v1637, 16
      %v2632 = vor.u32 %v2629, %v2630
      %v2633 = vsel %vm1803, %v2625, %v2632
      %v2634 = vrot.slane %v2629, 4
      %v2636 = vshrl.u32 %v1638, 16
      %v2638 = vrot.slane %v2636, 7
      %v2639 = vshll.u32 %v1638, 16
      %v2641 = vor.u32 %v2638, %v2639
      %v2642 = vsel %vm1803, %v2634, %v2641
      %v2643 = vrot.slane %v2638, 4
      %v2645 = vshrl.u32 %v1639, 16
      %v2647 = vrot.slane %v2645, 7
      %v2648 = vshll.u32 %v1639, 16
      %v2650 = vor.u32 %v2647, %v2648
      %v2651 = vsel %vm1803, %v2643, %v2650
      %2684 = vst.msk [vmem:[#allocation3 + $0x8] sm:$0xf] %vm411, %v2372
      %2685 = vst.msk [vmem:[#allocation3 + $0xc] sm:$0xf] %vm411, %v2381
      %2686 = vst.msk [vmem:[#allocation3 + $0x10] sm:$0xf] %vm411, %v2390
      %2687 = vst.msk [vmem:[#allocation3 + $0x14] sm:$0xf] %vm411, %v2399
      %2688 = vst.msk [vmem:[#allocation3 + $0x18] sm:$0xf] %vm411, %v2408
      %2689 = vst.msk [vmem:[#allocation3 + $0x1c] sm:$0xf] %vm411, %v2417
      %2690 = vst.msk [vmem:[#allocation3 + $0x20] sm:$0xf] %vm411, %v2426
      %2691 = vst.msk [vmem:[#allocation3 + $0x24] sm:$0xf] %vm411, %v2435
      %2692 = vst.msk [vmem:[#allocation3 + $0x28] sm:$0xf] %vm411, %v2444
      %2693 = vst.msk [vmem:[#allocation3 + $0x2c] sm:$0xf] %vm411, %v2453
      %2694 = vst.msk [vmem:[#allocation3 + $0x30] sm:$0xf] %vm411, %v2462
      %2695 = vst.msk [vmem:[#allocation3 + $0x34] sm:$0xf] %vm411, %v2471
      %2696 = vst.msk [vmem:[#allocation3 + $0x38] sm:$0xf] %vm411, %v2480
      %2697 = vst.msk [vmem:[#allocation3 + $0x3c] sm:$0xf] %vm411, %v2489
      %2698 = vst.msk [vmem:[#allocation3 + $0x40] sm:$0xf] %vm411, %v2498
      %2699 = vst.msk [vmem:[#allocation3 + $0x44] sm:$0xf] %vm411, %v2507
      %2700 = vst.msk [vmem:[#allocation3 + $0x48] sm:$0xf] %vm411, %v2516
      %2701 = vst.msk [vmem:[#allocation3 + $0x4c] sm:$0xf] %vm411, %v2525
      %2702 = vst.msk [vmem:[#allocation3 + $0x50] sm:$0xf] %vm411, %v2534
      %2703 = vst.msk [vmem:[#allocation3 + $0x54] sm:$0xf] %vm411, %v2543
      %2704 = vst.msk [vmem:[#allocation3 + $0x58] sm:$0xf] %vm411, %v2552
      %2705 = vst.msk [vmem:[#allocation3 + $0x5c] sm:$0xf] %vm411, %v2561
      %2706 = vst.msk [vmem:[#allocation3 + $0x60] sm:$0xf] %vm411, %v2570
      %2707 = vst.msk [vmem:[#allocation3 + $0x64] sm:$0xf] %vm411, %v2579
      %2708 = vst.msk [vmem:[#allocation3 + $0x68] sm:$0xf] %vm411, %v2588
      %2709 = vst.msk [vmem:[#allocation3 + $0x6c] sm:$0xf] %vm411, %v2597
      %2710 = vst.msk [vmem:[#allocation3 + $0x70] sm:$0xf] %vm411, %v2606
      %2711 = vst.msk [vmem:[#allocation3 + $0x74] sm:$0xf] %vm411, %v2615
      %2712 = vst.msk [vmem:[#allocation3 + $0x78] sm:$0xf] %vm411, %v2624
      %2713 = vst.msk [vmem:[#allocation3 + $0x7c] sm:$0xf] %vm411, %v2633
      %2714 = vst.msk [vmem:[#allocation3 + $0x80] sm:$0xf] %vm411, %v2642
      %2715 = vst.msk [vmem:[#allocation3 + $0x84] sm:$0xf] %vm411, %v2651
      %2748 = vrot.lane.b32.xlu0 %v379, 8
      %v2749 = vpop.permute.xlu0 %2748
      %2750 = vrot.lane.b32.xlu0 %v380, 8
      %v2751 = vpop.permute.xlu0 %2750
      %2752 = vrot.lane.b32.xlu0 %v381, 8
      %v2753 = vpop.permute.xlu0 %2752
      %2754 = vrot.lane.b32.xlu0 %v382, 8
      %v2755 = vpop.permute.xlu0 %2754
      %2756 = vrot.lane.b32.xlu0 %v383, 8
      %v2757 = vpop.permute.xlu0 %2756
      %2758 = vrot.lane.b32.xlu0 %v384, 8
      %v2759 = vpop.permute.xlu0 %2758
      %2760 = vrot.lane.b32.xlu0 %v385, 8
      %v2761 = vpop.permute.xlu0 %2760
      %2762 = vrot.lane.b32.xlu0 %v386, 8
      %v2763 = vpop.permute.xlu0 %2762
      %2764 = vrot.lane.b32.xlu0 %v387, 8
      %v2765 = vpop.permute.xlu0 %2764
      %2766 = vrot.lane.b32.xlu0 %v388, 8
      %v2767 = vpop.permute.xlu0 %2766
      %2768 = vrot.lane.b32.xlu0 %v389, 8
      %v2769 = vpop.permute.xlu0 %2768
      %2770 = vrot.lane.b32.xlu0 %v390, 8
      %v2771 = vpop.permute.xlu0 %2770
      %2772 = vrot.lane.b32.xlu0 %v391, 8
      %v2773 = vpop.permute.xlu0 %2772
      %2774 = vrot.lane.b32.xlu0 %v392, 8
      %v2775 = vpop.permute.xlu0 %2774
      %2776 = vrot.lane.b32.xlu0 %v393, 8
      %v2777 = vpop.permute.xlu0 %2776
      %2778 = vrot.lane.b32.xlu0 %v394, 8
      %v2779 = vpop.permute.xlu0 %2778
      %2780 = vrot.lane.b32.xlu0 %v395, 8
      %v2781 = vpop.permute.xlu0 %2780
      %2782 = vrot.lane.b32.xlu0 %v396, 8
      %v2783 = vpop.permute.xlu0 %2782
      %2784 = vrot.lane.b32.xlu0 %v397, 8
      %v2785 = vpop.permute.xlu0 %2784
      %2786 = vrot.lane.b32.xlu0 %v398, 8
      %v2787 = vpop.permute.xlu0 %2786
      %2788 = vrot.lane.b32.xlu0 %v399, 8
      %v2789 = vpop.permute.xlu0 %2788
      %2790 = vrot.lane.b32.xlu0 %v400, 8
      %v2791 = vpop.permute.xlu0 %2790
      %2792 = vrot.lane.b32.xlu0 %v401, 8
      %v2793 = vpop.permute.xlu0 %2792
      %2794 = vrot.lane.b32.xlu0 %v402, 8
      %v2795 = vpop.permute.xlu0 %2794
      %2796 = vrot.lane.b32.xlu0 %v403, 8
      %v2797 = vpop.permute.xlu0 %2796
      %2798 = vrot.lane.b32.xlu0 %v404, 8
      %v2799 = vpop.permute.xlu0 %2798
      %2800 = vrot.lane.b32.xlu0 %v405, 8
      %v2801 = vpop.permute.xlu0 %2800
      %2802 = vrot.lane.b32.xlu0 %v406, 8
      %v2803 = vpop.permute.xlu0 %2802
      %2804 = vrot.lane.b32.xlu0 %v407, 8
      %v2805 = vpop.permute.xlu0 %2804
      %2806 = vrot.lane.b32.xlu0 %v408, 8
      %v2807 = vpop.permute.xlu0 %2806
      %2808 = vrot.lane.b32.xlu0 %v409, 8
      %v2809 = vpop.permute.xlu0 %2808
      %2810 = vrot.lane.b32.xlu0 %v410, 8
      %v2811 = vpop.permute.xlu0 %2810
      %vm2844 = vcmask 126016
      %2845 = vst.msk [vmem:[#allocation3 + $0x8] sm:$0xf] %vm2844, %v2749
      %2846 = vst.msk [vmem:[#allocation3 + $0xc] sm:$0xf] %vm2844, %v2751
      %2847 = vst.msk [vmem:[#allocation3 + $0x10] sm:$0xf] %vm2844, %v2753
      %2848 = vst.msk [vmem:[#allocation3 + $0x14] sm:$0xf] %vm2844, %v2755
      %2849 = vst.msk [vmem:[#allocation3 + $0x18] sm:$0xf] %vm2844, %v2757
      %2850 = vst.msk [vmem:[#allocation3 + $0x1c] sm:$0xf] %vm2844, %v2759
      %2851 = vst.msk [vmem:[#allocation3 + $0x20] sm:$0xf] %vm2844, %v2761
      %2852 = vst.msk [vmem:[#allocation3 + $0x24] sm:$0xf] %vm2844, %v2763
      %2853 = vst.msk [vmem:[#allocation3 + $0x28] sm:$0xf] %vm2844, %v2765
      %2854 = vst.msk [vmem:[#allocation3 + $0x2c] sm:$0xf] %vm2844, %v2767
      %2855 = vst.msk [vmem:[#allocation3 + $0x30] sm:$0xf] %vm2844, %v2769
      %2856 = vst.msk [vmem:[#allocation3 + $0x34] sm:$0xf] %vm2844, %v2771
      %2857 = vst.msk [vmem:[#allocation3 + $0x38] sm:$0xf] %vm2844, %v2773
      %2858 = vst.msk [vmem:[#allocation3 + $0x3c] sm:$0xf] %vm2844, %v2775
      %2859 = vst.msk [vmem:[#allocation3 + $0x40] sm:$0xf] %vm2844, %v2777
      %2860 = vst.msk [vmem:[#allocation3 + $0x44] sm:$0xf] %vm2844, %v2779
      %2861 = vst.msk [vmem:[#allocation3 + $0x48] sm:$0xf] %vm2844, %v2781
      %2862 = vst.msk [vmem:[#allocation3 + $0x4c] sm:$0xf] %vm2844, %v2783
      %2863 = vst.msk [vmem:[#allocation3 + $0x50] sm:$0xf] %vm2844, %v2785
      %2864 = vst.msk [vmem:[#allocation3 + $0x54] sm:$0xf] %vm2844, %v2787
      %2865 = vst.msk [vmem:[#allocation3 + $0x58] sm:$0xf] %vm2844, %v2789
      %2866 = vst.msk [vmem:[#allocation3 + $0x5c] sm:$0xf] %vm2844, %v2791
      %2867 = vst.msk [vmem:[#allocation3 + $0x60] sm:$0xf] %vm2844, %v2793
      %2868 = vst.msk [vmem:[#allocation3 + $0x64] sm:$0xf] %vm2844, %v2795
      %2869 = vst.msk [vmem:[#allocation3 + $0x68] sm:$0xf] %vm2844, %v2797
      %2870 = vst.msk [vmem:[#allocation3 + $0x6c] sm:$0xf] %vm2844, %v2799
      %2871 = vst.msk [vmem:[#allocation3 + $0x70] sm:$0xf] %vm2844, %v2801
      %2872 = vst.msk [vmem:[#allocation3 + $0x74] sm:$0xf] %vm2844, %v2803
      %2873 = vst.msk [vmem:[#allocation3 + $0x78] sm:$0xf] %vm2844, %v2805
      %2874 = vst.msk [vmem:[#allocation3 + $0x7c] sm:$0xf] %vm2844, %v2807
      %2875 = vst.msk [vmem:[#allocation3 + $0x80] sm:$0xf] %vm2844, %v2809
      %2876 = vst.msk [vmem:[#allocation3 + $0x84] sm:$0xf] %vm2844, %v2811
      %v2878 = vshrl.u32 %v2322, 16
      %v2880 = vrot.slane %v2878, 4
      %v2881 = vshll.u32 %v2322, 16
      %v2883 = vrot.slane %v2881, 5
      %v2884 = vor.u32 %v2880, %v2883
      %v2885 = vrot.slane %v2884, 4
      %v2887 = vshll.u32 %v2323, 16
      %v2889 = vrot.slane %v2887, 5
      %v2890 = vsel %vm1056, %v2885, %v2889
      %v2891 = vshrl.u32 %v2323, 16
      %v2893 = vrot.slane %v2891, 4
      %v2894 = vor.u32 %v2893, %v2889
      %v2895 = vrot.slane %v2894, 4
      %v2897 = vshll.u32 %v2324, 16
      %v2899 = vrot.slane %v2897, 5
      %v2900 = vsel %vm1056, %v2895, %v2899
      %v2901 = vshrl.u32 %v2324, 16
      %v2903 = vrot.slane %v2901, 4
      %v2904 = vor.u32 %v2903, %v2899
      %v2905 = vrot.slane %v2904, 4
      %v2907 = vshll.u32 %v2325, 16
      %v2909 = vrot.slane %v2907, 5
      %v2910 = vsel %vm1056, %v2905, %v2909
      %v2911 = vshrl.u32 %v2325, 16
      %v2913 = vrot.slane %v2911, 4
      %v2914 = vor.u32 %v2913, %v2909
      %v2915 = vrot.slane %v2914, 4
      %v2917 = vshll.u32 %v2326, 16
      %v2919 = vrot.slane %v2917, 5
      %v2920 = vsel %vm1056, %v2915, %v2919
      %v2921 = vshrl.u32 %v2326, 16
      %v2923 = vrot.slane %v2921, 4
      %v2924 = vor.u32 %v2923, %v2919
      %v2925 = vrot.slane %v2924, 4
      %v2927 = vshll.u32 %v2327, 16
      %v2929 = vrot.slane %v2927, 5
      %v2930 = vsel %vm1056, %v2925, %v2929
      %v2931 = vshrl.u32 %v2327, 16
      %v2933 = vrot.slane %v2931, 4
      %v2934 = vor.u32 %v2933, %v2929
      %v2935 = vrot.slane %v2934, 4
      %v2937 = vshll.u32 %v2328, 16
      %v2939 = vrot.slane %v2937, 5
      %v2940 = vsel %vm1056, %v2935, %v2939
      %v2941 = vshrl.u32 %v2328, 16
      %v2943 = vrot.slane %v2941, 4
      %v2944 = vor.u32 %v2943, %v2939
      %v2945 = vrot.slane %v2944, 4
      %v2947 = vshll.u32 %v2329, 16
      %v2949 = vrot.slane %v2947, 5
      %v2950 = vsel %vm1056, %v2945, %v2949
      %v2951 = vshrl.u32 %v2329, 16
      %v2953 = vrot.slane %v2951, 4
      %v2954 = vor.u32 %v2953, %v2949
      %v2955 = vrot.slane %v2954, 4
      %v2957 = vshll.u32 %v2330, 16
      %v2959 = vrot.slane %v2957, 5
      %v2960 = vsel %vm1056, %v2955, %v2959
      %v2961 = vshrl.u32 %v2330, 16
      %v2963 = vrot.slane %v2961, 4
      %v2964 = vor.u32 %v2963, %v2959
      %v2965 = vrot.slane %v2964, 4
      %v2967 = vshll.u32 %v2331, 16
      %v2969 = vrot.slane %v2967, 5
      %v2970 = vsel %vm1056, %v2965, %v2969
      %v2971 = vshrl.u32 %v2331, 16
      %v2973 = vrot.slane %v2971, 4
      %v2974 = vor.u32 %v2973, %v2969
      %v2975 = vrot.slane %v2974, 4
      %v2977 = vshll.u32 %v2332, 16
      %v2979 = vrot.slane %v2977, 5
      %v2980 = vsel %vm1056, %v2975, %v2979
      %v2981 = vshrl.u32 %v2332, 16
      %v2983 = vrot.slane %v2981, 4
      %v2984 = vor.u32 %v2983, %v2979
      %v2985 = vrot.slane %v2984, 4
      %v2987 = vshll.u32 %v2333, 16
      %v2989 = vrot.slane %v2987, 5
      %v2990 = vsel %vm1056, %v2985, %v2989
      %v2991 = vshrl.u32 %v2333, 16
      %v2993 = vrot.slane %v2991, 4
      %v2994 = vor.u32 %v2993, %v2989
      %v2995 = vrot.slane %v2994, 4
      %v2997 = vshll.u32 %v2334, 16
      %v2999 = vrot.slane %v2997, 5
      %v3000 = vsel %vm1056, %v2995, %v2999
      %v3001 = vshrl.u32 %v2334, 16
      %v3003 = vrot.slane %v3001, 4
      %v3004 = vor.u32 %v3003, %v2999
      %v3005 = vrot.slane %v3004, 4
      %v3007 = vshll.u32 %v2335, 16
      %v3009 = vrot.slane %v3007, 5
      %v3010 = vsel %vm1056, %v3005, %v3009
      %v3011 = vshrl.u32 %v2335, 16
      %v3013 = vrot.slane %v3011, 4
      %v3014 = vor.u32 %v3013, %v3009
      %v3015 = vrot.slane %v3014, 4
      %v3017 = vshll.u32 %v2336, 16
      %v3019 = vrot.slane %v3017, 5
      %v3020 = vsel %vm1056, %v3015, %v3019
      %v3021 = vshrl.u32 %v2336, 16
      %v3023 = vrot.slane %v3021, 4
      %v3024 = vor.u32 %v3023, %v3019
      %v3025 = vrot.slane %v3024, 4
      %v3027 = vshll.u32 %v2337, 16
      %v3029 = vrot.slane %v3027, 5
      %v3030 = vsel %vm1056, %v3025, %v3029
      %v3031 = vshrl.u32 %v2337, 16
      %v3033 = vrot.slane %v3031, 4
      %v3034 = vor.u32 %v3033, %v3029
      %v3035 = vrot.slane %v3034, 4
      %v3037 = vshll.u32 %v2338, 16
      %v3039 = vrot.slane %v3037, 5
      %v3040 = vsel %vm1056, %v3035, %v3039
      %v3041 = vshrl.u32 %v2338, 16
      %v3043 = vrot.slane %v3041, 4
      %v3044 = vor.u32 %v3043, %v3039
      %v3045 = vrot.slane %v3044, 4
      %v3047 = vshll.u32 %v2339, 16
      %v3049 = vrot.slane %v3047, 5
      %v3050 = vsel %vm1056, %v3045, %v3049
      %v3051 = vshrl.u32 %v2339, 16
      %v3053 = vrot.slane %v3051, 4
      %v3054 = vor.u32 %v3053, %v3049
      %v3055 = vrot.slane %v3054, 4
      %v3057 = vshll.u32 %v2340, 16
      %v3059 = vrot.slane %v3057, 5
      %v3060 = vsel %vm1056, %v3055, %v3059
      %v3061 = vshrl.u32 %v2340, 16
      %v3063 = vrot.slane %v3061, 4
      %v3064 = vor.u32 %v3063, %v3059
      %v3065 = vrot.slane %v3064, 4
      %v3067 = vshll.u32 %v2341, 16
      %v3069 = vrot.slane %v3067, 5
      %v3070 = vsel %vm1056, %v3065, %v3069
      %v3071 = vshrl.u32 %v2341, 16
      %v3073 = vrot.slane %v3071, 4
      %v3074 = vor.u32 %v3073, %v3069
      %v3075 = vrot.slane %v3074, 4
      %v3077 = vshll.u32 %v2342, 16
      %v3079 = vrot.slane %v3077, 5
      %v3080 = vsel %vm1056, %v3075, %v3079
      %v3081 = vshrl.u32 %v2342, 16
      %v3083 = vrot.slane %v3081, 4
      %v3084 = vor.u32 %v3083, %v3079
      %v3085 = vrot.slane %v3084, 4
      %v3087 = vshll.u32 %v2343, 16
      %v3089 = vrot.slane %v3087, 5
      %v3090 = vsel %vm1056, %v3085, %v3089
      %v3091 = vshrl.u32 %v2343, 16
      %v3093 = vrot.slane %v3091, 4
      %v3094 = vor.u32 %v3093, %v3089
      %v3095 = vrot.slane %v3094, 4
      %v3097 = vshll.u32 %v2344, 16
      %v3099 = vrot.slane %v3097, 5
      %v3100 = vsel %vm1056, %v3095, %v3099
      %v3101 = vshrl.u32 %v2344, 16
      %v3103 = vrot.slane %v3101, 4
      %v3104 = vor.u32 %v3103, %v3099
      %v3105 = vrot.slane %v3104, 4
      %v3107 = vshll.u32 %v2345, 16
      %v3109 = vrot.slane %v3107, 5
      %v3110 = vsel %vm1056, %v3105, %v3109
      %v3111 = vshrl.u32 %v2345, 16
      %v3113 = vrot.slane %v3111, 4
      %v3114 = vor.u32 %v3113, %v3109
      %v3115 = vrot.slane %v3114, 4
      %v3117 = vshll.u32 %v2346, 16
      %v3119 = vrot.slane %v3117, 5
      %v3120 = vsel %vm1056, %v3115, %v3119
      %v3121 = vshrl.u32 %v2346, 16
      %v3123 = vrot.slane %v3121, 4
      %v3124 = vor.u32 %v3123, %v3119
      %v3125 = vrot.slane %v3124, 4
      %v3127 = vshll.u32 %v2347, 16
      %v3129 = vrot.slane %v3127, 5
      %v3130 = vsel %vm1056, %v3125, %v3129
      %v3131 = vshrl.u32 %v2347, 16
      %v3133 = vrot.slane %v3131, 4
      %v3134 = vor.u32 %v3133, %v3129
      %v3135 = vrot.slane %v3134, 4
      %v3137 = vshll.u32 %v2348, 16
      %v3139 = vrot.slane %v3137, 5
      %v3140 = vsel %vm1056, %v3135, %v3139
      %v3141 = vshrl.u32 %v2348, 16
      %v3143 = vrot.slane %v3141, 4
      %v3144 = vor.u32 %v3143, %v3139
      %v3145 = vrot.slane %v3144, 4
      %v3147 = vshll.u32 %v2349, 16
      %v3149 = vrot.slane %v3147, 5
      %v3150 = vsel %vm1056, %v3145, %v3149
      %v3151 = vshrl.u32 %v2349, 16
      %v3153 = vrot.slane %v3151, 4
      %v3154 = vor.u32 %v3153, %v3149
      %v3155 = vrot.slane %v3154, 4
      %v3157 = vshll.u32 %v2350, 16
      %v3159 = vrot.slane %v3157, 5
      %v3160 = vsel %vm1056, %v3155, %v3159
      %v3161 = vshrl.u32 %v2350, 16
      %v3163 = vrot.slane %v3161, 4
      %v3164 = vor.u32 %v3163, %v3159
      %v3165 = vrot.slane %v3164, 4
      %v3167 = vshll.u32 %v2351, 16
      %v3169 = vrot.slane %v3167, 5
      %v3170 = vsel %vm1056, %v3165, %v3169
      %v3171 = vshrl.u32 %v2351, 16
      %v3173 = vrot.slane %v3171, 4
      %v3174 = vor.u32 %v3173, %v3169
      %v3175 = vrot.slane %v3174, 4
      %v3177 = vshll.u32 %v2352, 16
      %v3179 = vrot.slane %v3177, 5
      %v3180 = vsel %vm1056, %v3175, %v3179
      %v3181 = vshrl.u32 %v2352, 16
      %v3183 = vrot.slane %v3181, 4
      %v3184 = vor.u32 %v3183, %v3179
      %v3185 = vrot.slane %v3184, 4
      %v3187 = vshll.u32 %v2353, 16
      %v3189 = vrot.slane %v3187, 5
      %v3190 = vsel %vm1056, %v3185, %v3189
      %v3191 = vshrl.u32 %v2353, 16
      %v3193 = vrot.slane %v3191, 4
      %v3194 = vor.u32 %v3193, %v3189
      %v3195 = vrot.slane %v3194, 4
      %v3197 = vshll.u32 %v2354, 16
      %v3199 = vrot.slane %v3197, 5
      %v3200 = vsel %vm1056, %v3195, %v3199
      %3201 = vrot.lane.b32.xlu0 %v2890, 16
      %v3202 = vpop.permute.xlu0 %3201
      %3203 = vrot.lane.b32.xlu0 %v2900, 16
      %v3204 = vpop.permute.xlu0 %3203
      %3205 = vrot.lane.b32.xlu0 %v2910, 16
      %v3206 = vpop.permute.xlu0 %3205
      %3207 = vrot.lane.b32.xlu0 %v2920, 16
      %v3208 = vpop.permute.xlu0 %3207
      %3209 = vrot.lane.b32.xlu0 %v2930, 16
      %v3210 = vpop.permute.xlu0 %3209
      %3211 = vrot.lane.b32.xlu0 %v2940, 16
      %v3212 = vpop.permute.xlu0 %3211
      %3213 = vrot.lane.b32.xlu0 %v2950, 16
      %v3214 = vpop.permute.xlu0 %3213
      %3215 = vrot.lane.b32.xlu0 %v2960, 16
      %v3216 = vpop.permute.xlu0 %3215
      %3217 = vrot.lane.b32.xlu0 %v2970, 16
      %v3218 = vpop.permute.xlu0 %3217
      %3219 = vrot.lane.b32.xlu0 %v2980, 16
      %v3220 = vpop.permute.xlu0 %3219
      %3221 = vrot.lane.b32.xlu0 %v2990, 16
      %v3222 = vpop.permute.xlu0 %3221
      %3223 = vrot.lane.b32.xlu0 %v3000, 16
      %v3224 = vpop.permute.xlu0 %3223
      %3225 = vrot.lane.b32.xlu0 %v3010, 16
      %v3226 = vpop.permute.xlu0 %3225
      %3227 = vrot.lane.b32.xlu0 %v3020, 16
      %v3228 = vpop.permute.xlu0 %3227
      %3229 = vrot.lane.b32.xlu0 %v3030, 16
      %v3230 = vpop.permute.xlu0 %3229
      %3231 = vrot.lane.b32.xlu0 %v3040, 16
      %v3232 = vpop.permute.xlu0 %3231
      %3233 = vrot.lane.b32.xlu0 %v3050, 16
      %v3234 = vpop.permute.xlu0 %3233
      %3235 = vrot.lane.b32.xlu0 %v3060, 16
      %v3236 = vpop.permute.xlu0 %3235
      %3237 = vrot.lane.b32.xlu0 %v3070, 16
      %v3238 = vpop.permute.xlu0 %3237
      %3239 = vrot.lane.b32.xlu0 %v3080, 16
      %v3240 = vpop.permute.xlu0 %3239
      %3241 = vrot.lane.b32.xlu0 %v3090, 16
      %v3242 = vpop.permute.xlu0 %3241
      %3243 = vrot.lane.b32.xlu0 %v3100, 16
      %v3244 = vpop.permute.xlu0 %3243
      %3245 = vrot.lane.b32.xlu0 %v3110, 16
      %v3246 = vpop.permute.xlu0 %3245
      %3247 = vrot.lane.b32.xlu0 %v3120, 16
      %v3248 = vpop.permute.xlu0 %3247
      %3249 = vrot.lane.b32.xlu0 %v3130, 16
      %v3250 = vpop.permute.xlu0 %3249
      %3251 = vrot.lane.b32.xlu0 %v3140, 16
      %v3252 = vpop.permute.xlu0 %3251
      %3253 = vrot.lane.b32.xlu0 %v3150, 16
      %v3254 = vpop.permute.xlu0 %3253
      %3255 = vrot.lane.b32.xlu0 %v3160, 16
      %v3256 = vpop.permute.xlu0 %3255
      %3257 = vrot.lane.b32.xlu0 %v3170, 16
      %v3258 = vpop.permute.xlu0 %3257
      %3259 = vrot.lane.b32.xlu0 %v3180, 16
      %v3260 = vpop.permute.xlu0 %3259
      %3261 = vrot.lane.b32.xlu0 %v3190, 16
      %v3262 = vpop.permute.xlu0 %3261
      %3263 = vrot.lane.b32.xlu0 %v3200, 16
      %v3264 = vpop.permute.xlu0 %3263
      %vm3297 = vcmask 191616
      %3298 = vst.msk [vmem:[#allocation3 + $0x8] sm:$0xf] %vm3297, %v3202
      %3299 = vst.msk [vmem:[#allocation3 + $0xc] sm:$0xf] %vm3297, %v3204
      %3300 = vst.msk [vmem:[#allocation3 + $0x10] sm:$0xf] %vm3297, %v3206
      %3301 = vst.msk [vmem:[#allocation3 + $0x14] sm:$0xf] %vm3297, %v3208
      %3302 = vst.msk [vmem:[#allocation3 + $0x18] sm:$0xf] %vm3297, %v3210
      %3303 = vst.msk [vmem:[#allocation3 + $0x1c] sm:$0xf] %vm3297, %v3212
      %3304 = vst.msk [vmem:[#allocation3 + $0x20] sm:$0xf] %vm3297, %v3214
      %3305 = vst.msk [vmem:[#allocation3 + $0x24] sm:$0xf] %vm3297, %v3216
      %3306 = vst.msk [vmem:[#allocation3 + $0x28] sm:$0xf] %vm3297, %v3218
      %3307 = vst.msk [vmem:[#allocation3 + $0x2c] sm:$0xf] %vm3297, %v3220
      %3308 = vst.msk [vmem:[#allocation3 + $0x30] sm:$0xf] %vm3297, %v3222
      %3309 = vst.msk [vmem:[#allocation3 + $0x34] sm:$0xf] %vm3297, %v3224
      %3310 = vst.msk [vmem:[#allocation3 + $0x38] sm:$0xf] %vm3297, %v3226
      %3311 = vst.msk [vmem:[#allocation3 + $0x3c] sm:$0xf] %vm3297, %v3228
      %3312 = vst.msk [vmem:[#allocation3 + $0x40] sm:$0xf] %vm3297, %v3230
      %3313 = vst.msk [vmem:[#allocation3 + $0x44] sm:$0xf] %vm3297, %v3232
      %3314 = vst.msk [vmem:[#allocation3 + $0x48] sm:$0xf] %vm3297, %v3234
      %3315 = vst.msk [vmem:[#allocation3 + $0x4c] sm:$0xf] %vm3297, %v3236
      %3316 = vst.msk [vmem:[#allocation3 + $0x50] sm:$0xf] %vm3297, %v3238
      %3317 = vst.msk [vmem:[#allocation3 + $0x54] sm:$0xf] %vm3297, %v3240
      %3318 = vst.msk [vmem:[#allocation3 + $0x58] sm:$0xf] %vm3297, %v3242
      %3319 = vst.msk [vmem:[#allocation3 + $0x5c] sm:$0xf] %vm3297, %v3244
      %3320 = vst.msk [vmem:[#allocation3 + $0x60] sm:$0xf] %vm3297, %v3246
      %3321 = vst.msk [vmem:[#allocation3 + $0x64] sm:$0xf] %vm3297, %v3248
      %3322 = vst.msk [vmem:[#allocation3 + $0x68] sm:$0xf] %vm3297, %v3250
      %3323 = vst.msk [vmem:[#allocation3 + $0x6c] sm:$0xf] %vm3297, %v3252
      %3324 = vst.msk [vmem:[#allocation3 + $0x70] sm:$0xf] %vm3297, %v3254
      %3325 = vst.msk [vmem:[#allocation3 + $0x74] sm:$0xf] %vm3297, %v3256
      %3326 = vst.msk [vmem:[#allocation3 + $0x78] sm:$0xf] %vm3297, %v3258
      %3327 = vst.msk [vmem:[#allocation3 + $0x7c] sm:$0xf] %vm3297, %v3260
      %3328 = vst.msk [vmem:[#allocation3 + $0x80] sm:$0xf] %vm3297, %v3262
      %3329 = vst.msk [vmem:[#allocation3 + $0x84] sm:$0xf] %vm3297, %v3264
      %v3330 = vld [vmem:[#allocation3] sm:$0xf]
      %v3331 = vld [vmem:[#allocation3 + $0x4] sm:$0xf]
      %v3332 = vld [vmem:[#allocation3 + $0x8] sm:$0xf]
      %v3333 = vld [vmem:[#allocation3 + $0xc] sm:$0xf]
      %v3334 = vld [vmem:[#allocation3 + $0x10] sm:$0xf]
      %v3335 = vld [vmem:[#allocation3 + $0x14] sm:$0xf]
      %v3336 = vld [vmem:[#allocation3 + $0x18] sm:$0xf]
      %v3337 = vld [vmem:[#allocation3 + $0x1c] sm:$0xf]
      %v3338 = vld [vmem:[#allocation3 + $0x20] sm:$0xf]
      %v3339 = vld [vmem:[#allocation3 + $0x24] sm:$0xf]
      %v3340 = vld [vmem:[#allocation3 + $0x28] sm:$0xf]
      %v3341 = vld [vmem:[#allocation3 + $0x2c] sm:$0xf]
      %v3342 = vld [vmem:[#allocation3 + $0x30] sm:$0xf]
      %v3343 = vld [vmem:[#allocation3 + $0x34] sm:$0xf]
      %v3344 = vld [vmem:[#allocation3 + $0x38] sm:$0xf]
      %v3345 = vld [vmem:[#allocation3 + $0x3c] sm:$0xf]
      %v3346 = vld [vmem:[#allocation3 + $0x40] sm:$0xf]
      %v3347 = vld [vmem:[#allocation3 + $0x44] sm:$0xf]
      %v3348 = vld [vmem:[#allocation3 + $0x48] sm:$0xf]
      %v3349 = vld [vmem:[#allocation3 + $0x4c] sm:$0xf]
      %v3350 = vld [vmem:[#allocation3 + $0x50] sm:$0xf]
      %v3351 = vld [vmem:[#allocation3 + $0x54] sm:$0xf]
      %v3352 = vld [vmem:[#allocation3 + $0x58] sm:$0xf]
      %v3353 = vld [vmem:[#allocation3 + $0x5c] sm:$0xf]
      %v3354 = vld [vmem:[#allocation3 + $0x60] sm:$0xf]
      %v3355 = vld [vmem:[#allocation3 + $0x64] sm:$0xf]
      %v3356 = vld [vmem:[#allocation3 + $0x68] sm:$0xf]
      %v3357 = vld [vmem:[#allocation3 + $0x6c] sm:$0xf]
      %v3358 = vld [vmem:[#allocation3 + $0x70] sm:$0xf]
      %v3359 = vld [vmem:[#allocation3 + $0x74] sm:$0xf]
      %v3360 = vld [vmem:[#allocation3 + $0x78] sm:$0xf]
      %v3361 = vld [vmem:[#allocation3 + $0x7c] sm:$0xf]
      %v3362 = vld [vmem:[%s2] sm:$0xf]
      %v3363 = vld [vmem:[%s2 + $0x4] sm:$0xf]
      %v3364 = vld [vmem:[%s2 + $0x8] sm:$0xf]
      %v3365 = vld [vmem:[#allocation3 + $0x80] sm:$0xf]
      %v3366 = vld [vmem:[#allocation3 + $0x84] sm:$0xf]
      %v3367 = vld [vmem:[%s2 + $0xc] sm:$0xf]
      %v3368 = vld [vmem:[%s2 + $0x10] sm:$0xf]
      %v3369 = vld [vmem:[%s2 + $0x14] sm:$0xf]
      %v3402 = vunpack.c.l.b16 %v3332
      %v3403 = vunpack.c.l.b16 %v3333
      %v3404 = vunpack.c.l.b16 %v3334
      %v3405 = vunpack.c.l.b16 %v3335
      %v3406 = vunpack.c.l.b16 %v3336
      %v3407 = vunpack.c.l.b16 %v3337
      %v3408 = vunpack.c.l.b16 %v3338
      %v3409 = vunpack.c.l.b16 %v3339
      %v3410 = vunpack.c.l.b16 %v3340
      %v3411 = vunpack.c.l.b16 %v3341
      %v3412 = vunpack.c.l.b16 %v3342
      %v3413 = vunpack.c.l.b16 %v3343
      %v3414 = vunpack.c.l.b16 %v3344
      %v3415 = vunpack.c.l.b16 %v3345
      %v3416 = vunpack.c.l.b16 %v3346
      %v3417 = vunpack.c.l.b16 %v3347
      %v3418 = vunpack.c.l.b16 %v3348
      %v3419 = vunpack.c.l.b16 %v3349
      %v3420 = vunpack.c.l.b16 %v3350
      %v3421 = vunpack.c.l.b16 %v3351
      %v3422 = vunpack.c.l.b16 %v3352
      %v3423 = vunpack.c.l.b16 %v3353
      %v3424 = vunpack.c.l.b16 %v3354
      %v3425 = vunpack.c.l.b16 %v3355
      %v3426 = vunpack.c.l.b16 %v3356
      %v3427 = vunpack.c.l.b16 %v3357
      %v3428 = vunpack.c.l.b16 %v3358
      %v3429 = vunpack.c.l.b16 %v3359
      %v3430 = vunpack.c.l.b16 %v3360
      %v3431 = vunpack.c.l.b16 %v3361
      %v3432 = vunpack.c.l.b16 %v3365
      %v3433 = vunpack.c.l.b16 %v3366
      %v3434 = vpack.c.b16 %v3403, %v3402
      %v3435 = vpack.c.b16 %v3405, %v3404
      %v3436 = vpack.c.b16 %v3407, %v3406
      %v3437 = vpack.c.b16 %v3409, %v3408
      %v3438 = vpack.c.b16 %v3411, %v3410
      %v3439 = vpack.c.b16 %v3413, %v3412
      %v3440 = vpack.c.b16 %v3415, %v3414
      %v3441 = vpack.c.b16 %v3417, %v3416
      %v3442 = vpack.c.b16 %v3419, %v3418
      %v3443 = vpack.c.b16 %v3421, %v3420
      %v3444 = vpack.c.b16 %v3423, %v3422
      %v3445 = vpack.c.b16 %v3425, %v3424
      %v3446 = vpack.c.b16 %v3427, %v3426
      %v3447 = vpack.c.b16 %v3429, %v3428
      %v3448 = vpack.c.b16 %v3431, %v3430
      %v3449 = vpack.c.b16 %v3433, %v3432
      %v3453 = vunpack.c.l.b16 %v3367
      %v3454 = vunpack.c.l.b16 %v3368
      %v3455 = vunpack.c.l.b16 %v3369
      %v3456 = vpack.c.b16 %v3454, %v3453
      %v3457 = vpack.c.b16 %v3455, %v3455
      %vm3459 = vcmask 195584
      %v3461 = vsel %vm3459, %v3434, 0
      %v3464 = vsel %vm3459, %v3435, 0
      %v3467 = vsel %vm3459, %v3436, 0
      %v3470 = vsel %vm3459, %v3437, 0
      %v3473 = vsel %vm3459, %v3438, 0
      %v3476 = vsel %vm3459, %v3439, 0
      %v3479 = vsel %vm3459, %v3440, 0
      %v3482 = vsel %vm3459, %v3441, 0
      %v3485 = vsel %vm3459, %v3442, 0
      %v3488 = vsel %vm3459, %v3443, 0
      %v3491 = vsel %vm3459, %v3444, 0
      %v3494 = vsel %vm3459, %v3445, 0
      %v3497 = vsel %vm3459, %v3446, 0
      %v3500 = vsel %vm3459, %v3447, 0
      %v3503 = vsel %vm3459, %v3448, 0
      %v3506 = vsel %vm3459, %v3449, 0
      %vm3508 = vcmask 1043456
      %v3510 = vsel %vm3508, %v3457, 0
      %3512 = vmatpush.bf16.msra.mxu0 0
      %3513 = vmatpush.bf16.msra.mxu0 0
      %3514 = vmatpush.bf16.msra.mxu0 0
      %3515 = vmatpush.bf16.msra.mxu0 0
      %3516 = vmatpush.bf16.msra.mxu0 0
      %3517 = vmatpush.bf16.msra.mxu0 0
      %3518 = vmatpush.bf16.msra.mxu0 %v3510
      %3519 = vmatpush.bf16.msra.mxu0 %v3456
      %3520 = vmatmul.bf16.gmra.mxu0 %v3461
      %v3521 = vpop.f32.mrf.mxu0
      %v3522 = vadd.f32 0.0, %v3521
      %v3523 = vpop.f32.mrf.mxu0
      %v3524 = vadd.f32 0.0, %v3523
      %3525 = vmatmul.bf16.gmra.mxu0 %v3464
      %v3526 = vpop.f32.mrf.mxu0
      %v3527 = vadd.f32 0.0, %v3526
      %v3528 = vpop.f32.mrf.mxu0
      %v3529 = vadd.f32 0.0, %v3528
      %3530 = vmatmul.bf16.gmra.mxu0 %v3467
      %v3531 = vpop.f32.mrf.mxu0
      %v3532 = vadd.f32 0.0, %v3531
      %v3533 = vpop.f32.mrf.mxu0
      %v3534 = vadd.f32 0.0, %v3533
      %3535 = vmatmul.bf16.gmra.mxu0 %v3470
      %v3536 = vpop.f32.mrf.mxu0
      %v3537 = vadd.f32 0.0, %v3536
      %v3538 = vpop.f32.mrf.mxu0
      %v3539 = vadd.f32 0.0, %v3538
      %3540 = vmatmul.bf16.gmra.mxu0 %v3473
      %v3541 = vpop.f32.mrf.mxu0
      %v3542 = vadd.f32 0.0, %v3541
      %v3543 = vpop.f32.mrf.mxu0
      %v3544 = vadd.f32 0.0, %v3543
      %3545 = vmatmul.bf16.gmra.mxu0 %v3476
      %v3546 = vpop.f32.mrf.mxu0
      %v3547 = vadd.f32 0.0, %v3546
      %v3548 = vpop.f32.mrf.mxu0
      %v3549 = vadd.f32 0.0, %v3548
      %3550 = vmatmul.bf16.gmra.mxu0 %v3479
      %v3551 = vpop.f32.mrf.mxu0
      %v3552 = vadd.f32 0.0, %v3551
      %v3553 = vpop.f32.mrf.mxu0
      %v3554 = vadd.f32 0.0, %v3553
      %3555 = vmatmul.bf16.gmra.mxu0 %v3482
      %v3556 = vpop.f32.mrf.mxu0
      %v3557 = vadd.f32 0.0, %v3556
      %v3558 = vpop.f32.mrf.mxu0
      %v3559 = vadd.f32 0.0, %v3558
      %3560 = vmatmul.bf16.gmra.mxu0 %v3485
      %v3561 = vpop.f32.mrf.mxu0
      %v3562 = vadd.f32 0.0, %v3561
      %v3563 = vpop.f32.mrf.mxu0
      %v3564 = vadd.f32 0.0, %v3563
      %3565 = vmatmul.bf16.gmra.mxu0 %v3488
      %v3566 = vpop.f32.mrf.mxu0
      %v3567 = vadd.f32 0.0, %v3566
      %v3568 = vpop.f32.mrf.mxu0
      %v3569 = vadd.f32 0.0, %v3568
      %3570 = vmatmul.bf16.gmra.mxu0 %v3491
      %v3571 = vpop.f32.mrf.mxu0
      %v3572 = vadd.f32 0.0, %v3571
      %v3573 = vpop.f32.mrf.mxu0
      %v3574 = vadd.f32 0.0, %v3573
      %3575 = vmatmul.bf16.gmra.mxu0 %v3494
      %v3576 = vpop.f32.mrf.mxu0
      %v3577 = vadd.f32 0.0, %v3576
      %v3578 = vpop.f32.mrf.mxu0
      %v3579 = vadd.f32 0.0, %v3578
      %3580 = vmatmul.bf16.gmra.mxu0 %v3497
      %v3581 = vpop.f32.mrf.mxu0
      %v3582 = vadd.f32 0.0, %v3581
      %v3583 = vpop.f32.mrf.mxu0
      %v3584 = vadd.f32 0.0, %v3583
      %3585 = vmatmul.bf16.gmra.mxu0 %v3500
      %v3586 = vpop.f32.mrf.mxu0
      %v3587 = vadd.f32 0.0, %v3586
      %v3588 = vpop.f32.mrf.mxu0
      %v3589 = vadd.f32 0.0, %v3588
      %3590 = vmatmul.bf16.gmra.mxu0 %v3503
      %v3591 = vpop.f32.mrf.mxu0
      %v3592 = vadd.f32 0.0, %v3591
      %v3593 = vpop.f32.mrf.mxu0
      %v3594 = vadd.f32 0.0, %v3593
      %3595 = vmatmul.bf16.gmra.mxu0 %v3506
      %v3596 = vpop.f32.mrf.mxu0
      %v3597 = vadd.f32 0.0, %v3596
      %v3598 = vpop.f32.mrf.mxu0
      %v3599 = vadd.f32 0.0, %v3598
      %3600 = vdwg.mxu0
      %v3603 = vunpack.c.l.b16 %v3330
      %v3604 = vunpack.c.l.b16 %v3331
      %v3605 = vpack.c.b16 %v3604, %v3603
      %v3609 = vunpack.c.l.b16 %v3362
      %v3610 = vunpack.c.l.b16 %v3363
      %v3611 = vunpack.c.l.b16 %v3364
      %v3612 = vpack.c.b16 %v3610, %v3609
      %v3613 = vpack.c.b16 %v3611, %v3611
      %v3616 = vsel %vm3459, %v3605, 0
      %v3619 = vsel %vm3508, %v3613, 0
      %3621 = vmatpush.bf16.msra.mxu0 0
      %3622 = vmatpush.bf16.msra.mxu0 0
      %3623 = vmatpush.bf16.msra.mxu0 0
      %3624 = vmatpush.bf16.msra.mxu0 0
      %3625 = vmatpush.bf16.msra.mxu0 0
      %3626 = vmatpush.bf16.msra.mxu0 0
      %3627 = vmatpush.bf16.msra.mxu0 %v3619
      %3628 = vmatpush.bf16.msra.mxu0 %v3612
      %3629 = vmatmul.bf16.gmra.mxu0 %v3616
      %v3630 = vpop.f32.mrf.mxu0
      %v3631 = vadd.f32 %v3522, %v3630
      %v3632 = vpop.f32.mrf.mxu0
      %v3633 = vadd.f32 %v3524, %v3632
      %3634 = vmatmul.bf16.gmra.mxu0 %v3461
      %v3635 = vpop.f32.mrf.mxu0
      %v3636 = vadd.f32 %v3527, %v3635
      %v3637 = vpop.f32.mrf.mxu0
      %v3638 = vadd.f32 %v3529, %v3637
      %3639 = vmatmul.bf16.gmra.mxu0 %v3464
      %v3640 = vpop.f32.mrf.mxu0
      %v3641 = vadd.f32 %v3532, %v3640
      %v3642 = vpop.f32.mrf.mxu0
      %v3643 = vadd.f32 %v3534, %v3642
      %3644 = vmatmul.bf16.gmra.mxu0 %v3467
      %v3645 = vpop.f32.mrf.mxu0
      %v3646 = vadd.f32 %v3537, %v3645
      %v3647 = vpop.f32.mrf.mxu0
      %v3648 = vadd.f32 %v3539, %v3647
      %3649 = vmatmul.bf16.gmra.mxu0 %v3470
      %v3650 = vpop.f32.mrf.mxu0
      %v3651 = vadd.f32 %v3542, %v3650
      %v3652 = vpop.f32.mrf.mxu0
      %v3653 = vadd.f32 %v3544, %v3652
      %3654 = vmatmul.bf16.gmra.mxu0 %v3473
      %v3655 = vpop.f32.mrf.mxu0
      %v3656 = vadd.f32 %v3547, %v3655
      %v3657 = vpop.f32.mrf.mxu0
      %v3658 = vadd.f32 %v3549, %v3657
      %3659 = vmatmul.bf16.gmra.mxu0 %v3476
      %v3660 = vpop.f32.mrf.mxu0
      %v3661 = vadd.f32 %v3552, %v3660
      %v3662 = vpop.f32.mrf.mxu0
      %v3663 = vadd.f32 %v3554, %v3662
      %3664 = vmatmul.bf16.gmra.mxu0 %v3479
      %v3665 = vpop.f32.mrf.mxu0
      %v3666 = vadd.f32 %v3557, %v3665
      %v3667 = vpop.f32.mrf.mxu0
      %v3668 = vadd.f32 %v3559, %v3667
      %3669 = vmatmul.bf16.gmra.mxu0 %v3482
      %v3670 = vpop.f32.mrf.mxu0
      %v3671 = vadd.f32 %v3562, %v3670
      %v3672 = vpop.f32.mrf.mxu0
      %v3673 = vadd.f32 %v3564, %v3672
      %3674 = vmatmul.bf16.gmra.mxu0 %v3485
      %v3675 = vpop.f32.mrf.mxu0
      %v3676 = vadd.f32 %v3567, %v3675
      %v3677 = vpop.f32.mrf.mxu0
      %v3678 = vadd.f32 %v3569, %v3677
      %3679 = vmatmul.bf16.gmra.mxu0 %v3488
      %v3680 = vpop.f32.mrf.mxu0
      %v3681 = vadd.f32 %v3572, %v3680
      %v3682 = vpop.f32.mrf.mxu0
      %v3683 = vadd.f32 %v3574, %v3682
      %3684 = vmatmul.bf16.gmra.mxu0 %v3491
      %v3685 = vpop.f32.mrf.mxu0
      %v3686 = vadd.f32 %v3577, %v3685
      %v3687 = vpop.f32.mrf.mxu0
      %v3688 = vadd.f32 %v3579, %v3687
      %3689 = vmatmul.bf16.gmra.mxu0 %v3494
      %v3690 = vpop.f32.mrf.mxu0
      %v3691 = vadd.f32 %v3582, %v3690
      %v3692 = vpop.f32.mrf.mxu0
      %v3693 = vadd.f32 %v3584, %v3692
      %3694 = vmatmul.bf16.gmra.mxu0 %v3497
      %v3695 = vpop.f32.mrf.mxu0
      %v3696 = vadd.f32 %v3587, %v3695
      %v3697 = vpop.f32.mrf.mxu0
      %v3698 = vadd.f32 %v3589, %v3697
      %3699 = vmatmul.bf16.gmra.mxu0 %v3500
      %v3700 = vpop.f32.mrf.mxu0
      %v3701 = vadd.f32 %v3592, %v3700
      %v3702 = vpop.f32.mrf.mxu0
      %v3703 = vadd.f32 %v3594, %v3702
      %3704 = vmatmul.bf16.gmra.mxu0 %v3503
      %v3705 = vpop.f32.mrf.mxu0
      %v3706 = vadd.f32 %v3597, %v3705
      %v3707 = vpop.f32.mrf.mxu0
      %v3708 = vadd.f32 %v3599, %v3707
      %3709 = vdwg.mxu0
      %v3710 = vld [vmem:[#allocation3 + $0x10] sm:$0xf]
      %v3711 = vld [vmem:[#allocation3 + $0x14] sm:$0xf]
      %v3712 = vld [vmem:[#allocation3 + $0x18] sm:$0xf]
      %v3713 = vld [vmem:[#allocation3 + $0x1c] sm:$0xf]
      %v3714 = vld [vmem:[#allocation3 + $0x20] sm:$0xf]
      %v3715 = vld [vmem:[#allocation3 + $0x24] sm:$0xf]
      %v3716 = vld [vmem:[#allocation3 + $0x28] sm:$0xf]
      %v3717 = vld [vmem:[#allocation3 + $0x2c] sm:$0xf]
      %v3718 = vld [vmem:[#allocation3 + $0x30] sm:$0xf]
      %v3719 = vld [vmem:[#allocation3 + $0x34] sm:$0xf]
      %v3720 = vld [vmem:[#allocation3 + $0x38] sm:$0xf]
      %v3721 = vld [vmem:[#allocation3 + $0x3c] sm:$0xf]
      %v3722 = vld [vmem:[#allocation3 + $0x40] sm:$0xf]
      %v3723 = vld [vmem:[#allocation3 + $0x44] sm:$0xf]
      %v3724 = vld [vmem:[#allocation3 + $0x48] sm:$0xf]
      %v3725 = vld [vmem:[#allocation3 + $0x4c] sm:$0xf]
      %v3726 = vld [vmem:[#allocation3 + $0x50] sm:$0xf]
      %v3727 = vld [vmem:[#allocation3 + $0x54] sm:$0xf]
      %v3728 = vld [vmem:[#allocation3 + $0x58] sm:$0xf]
      %v3729 = vld [vmem:[#allocation3 + $0x5c] sm:$0xf]
      %v3730 = vld [vmem:[#allocation3 + $0x60] sm:$0xf]
      %v3731 = vld [vmem:[#allocation3 + $0x64] sm:$0xf]
      %v3732 = vld [vmem:[#allocation3 + $0x68] sm:$0xf]
      %v3733 = vld [vmem:[#allocation3 + $0x6c] sm:$0xf]
      %v3734 = vld [vmem:[#allocation3 + $0x70] sm:$0xf]
      %v3735 = vld [vmem:[#allocation3 + $0x74] sm:$0xf]
      %v3736 = vld [vmem:[#allocation3 + $0x78] sm:$0xf]
      %v3737 = vld [vmem:[#allocation3 + $0x7c] sm:$0xf]
      %v3738 = vld [vmem:[#allocation3 + $0x80] sm:$0xf]
      %v3739 = vld [vmem:[#allocation3 + $0x84] sm:$0xf]
      %v3740 = vld [vmem:[#allocation3 + $0x88] sm:$0xf]
      %v3741 = vld [vmem:[#allocation3 + $0x8c] sm:$0xf]
      %v3742 = vld [vmem:[%s2 + $0x18] sm:$0xf]
      %v3743 = vld [vmem:[%s2 + $0x1c] sm:$0xf]
      %v3744 = vld [vmem:[%s2 + $0x20] sm:$0xf]
      %v3777 = vunpack.c.l.b16 %v3710
      %v3778 = vunpack.c.l.b16 %v3711
      %v3779 = vunpack.c.l.b16 %v3712
      %v3780 = vunpack.c.l.b16 %v3713
      %v3781 = vunpack.c.l.b16 %v3714
      %v3782 = vunpack.c.l.b16 %v3715
      %v3783 = vunpack.c.l.b16 %v3716
      %v3784 = vunpack.c.l.b16 %v3717
      %v3785 = vunpack.c.l.b16 %v3718
      %v3786 = vunpack.c.l.b16 %v3719
      %v3787 = vunpack.c.l.b16 %v3720
      %v3788 = vunpack.c.l.b16 %v3721
      %v3789 = vunpack.c.l.b16 %v3722
      %v3790 = vunpack.c.l.b16 %v3723
      %v3791 = vunpack.c.l.b16 %v3724
      %v3792 = vunpack.c.l.b16 %v3725
      %v3793 = vunpack.c.l.b16 %v3726
      %v3794 = vunpack.c.l.b16 %v3727
      %v3795 = vunpack.c.l.b16 %v3728
      %v3796 = vunpack.c.l.b16 %v3729
      %v3797 = vunpack.c.l.b16 %v3730
      %v3798 = vunpack.c.l.b16 %v3731
      %v3799 = vunpack.c.l.b16 %v3732
      %v3800 = vunpack.c.l.b16 %v3733
      %v3801 = vunpack.c.l.b16 %v3734
      %v3802 = vunpack.c.l.b16 %v3735
      %v3803 = vunpack.c.l.b16 %v3736
      %v3804 = vunpack.c.l.b16 %v3737
      %v3805 = vunpack.c.l.b16 %v3738
      %v3806 = vunpack.c.l.b16 %v3739
      %v3807 = vunpack.c.l.b16 %v3740
      %v3808 = vunpack.c.l.b16 %v3741
      %v3809 = vpack.c.b16 %v3778, %v3777
      %v3810 = vpack.c.b16 %v3780, %v3779
      %v3811 = vpack.c.b16 %v3782, %v3781
      %v3812 = vpack.c.b16 %v3784, %v3783
      %v3813 = vpack.c.b16 %v3786, %v3785
      %v3814 = vpack.c.b16 %v3788, %v3787
      %v3815 = vpack.c.b16 %v3790, %v3789
      %v3816 = vpack.c.b16 %v3792, %v3791
      %v3817 = vpack.c.b16 %v3794, %v3793
      %v3818 = vpack.c.b16 %v3796, %v3795
      %v3819 = vpack.c.b16 %v3798, %v3797
      %v3820 = vpack.c.b16 %v3800, %v3799
      %v3821 = vpack.c.b16 %v3802, %v3801
      %v3822 = vpack.c.b16 %v3804, %v3803
      %v3823 = vpack.c.b16 %v3806, %v3805
      %v3824 = vpack.c.b16 %v3808, %v3807
      %v3828 = vunpack.c.l.b16 %v3742
      %v3829 = vunpack.c.l.b16 %v3743
      %v3830 = vunpack.c.l.b16 %v3744
      %v3831 = vpack.c.b16 %v3829, %v3828
      %v3832 = vpack.c.b16 %v3830, %v3830
      %v3835 = vsel %vm3459, %v3809, 0
      %v3838 = vsel %vm3459, %v3810, 0
      %v3841 = vsel %vm3459, %v3811, 0
      %v3844 = vsel %vm3459, %v3812, 0
      %v3847 = vsel %vm3459, %v3813, 0
      %v3850 = vsel %vm3459, %v3814, 0
      %v3853 = vsel %vm3459, %v3815, 0
      %v3856 = vsel %vm3459, %v3816, 0
      %v3859 = vsel %vm3459, %v3817, 0
      %v3862 = vsel %vm3459, %v3818, 0
      %v3865 = vsel %vm3459, %v3819, 0
      %v3868 = vsel %vm3459, %v3820, 0
      %v3871 = vsel %vm3459, %v3821, 0
      %v3874 = vsel %vm3459, %v3822, 0
      %v3877 = vsel %vm3459, %v3823, 0
      %v3880 = vsel %vm3459, %v3824, 0
      %v3883 = vsel %vm3508, %v3832, 0
      %3885 = vmatpush.bf16.msra.mxu0 0
      %3886 = vmatpush.bf16.msra.mxu0 0
      %3887 = vmatpush.bf16.msra.mxu0 0
      %3888 = vmatpush.bf16.msra.mxu0 0
      %3889 = vmatpush.bf16.msra.mxu0 0
      %3890 = vmatpush.bf16.msra.mxu0 0
      %3891 = vmatpush.bf16.msra.mxu0 %v3883
      %3892 = vmatpush.bf16.msra.mxu0 %v3831
      %3893 = vmatmul.bf16.gmra.mxu0 %v3835
      %v3894 = vpop.f32.mrf.mxu0
      %v3895 = vadd.f32 0.0, %v3894
      %v3896 = vpop.f32.mrf.mxu0
      %v3897 = vadd.f32 0.0, %v3896
      %3898 = vmatmul.bf16.gmra.mxu0 %v3838
      %v3899 = vpop.f32.mrf.mxu0
      %v3900 = vadd.f32 0.0, %v3899
      %v3901 = vpop.f32.mrf.mxu0
      %v3902 = vadd.f32 0.0, %v3901
      %3903 = vmatmul.bf16.gmra.mxu0 %v3841
      %v3904 = vpop.f32.mrf.mxu0
      %v3905 = vadd.f32 0.0, %v3904
      %v3906 = vpop.f32.mrf.mxu0
      %v3907 = vadd.f32 0.0, %v3906
      %3908 = vmatmul.bf16.gmra.mxu0 %v3844
      %v3909 = vpop.f32.mrf.mxu0
      %v3910 = vadd.f32 0.0, %v3909
      %v3911 = vpop.f32.mrf.mxu0
      %v3912 = vadd.f32 0.0, %v3911
      %3913 = vmatmul.bf16.gmra.mxu0 %v3847
      %v3914 = vpop.f32.mrf.mxu0
      %v3915 = vadd.f32 0.0, %v3914
      %v3916 = vpop.f32.mrf.mxu0
      %v3917 = vadd.f32 0.0, %v3916
      %3918 = vmatmul.bf16.gmra.mxu0 %v3850
      %v3919 = vpop.f32.mrf.mxu0
      %v3920 = vadd.f32 0.0, %v3919
      %v3921 = vpop.f32.mrf.mxu0
      %v3922 = vadd.f32 0.0, %v3921
      %3923 = vmatmul.bf16.gmra.mxu0 %v3853
      %v3924 = vpop.f32.mrf.mxu0
      %v3925 = vadd.f32 0.0, %v3924
      %v3926 = vpop.f32.mrf.mxu0
      %v3927 = vadd.f32 0.0, %v3926
      %3928 = vmatmul.bf16.gmra.mxu0 %v3856
      %v3929 = vpop.f32.mrf.mxu0
      %v3930 = vadd.f32 0.0, %v3929
      %v3931 = vpop.f32.mrf.mxu0
      %v3932 = vadd.f32 0.0, %v3931
      %3933 = vmatmul.bf16.gmra.mxu0 %v3859
      %v3934 = vpop.f32.mrf.mxu0
      %v3935 = vadd.f32 0.0, %v3934
      %v3936 = vpop.f32.mrf.mxu0
      %v3937 = vadd.f32 0.0, %v3936
      %3938 = vmatmul.bf16.gmra.mxu0 %v3862
      %v3939 = vpop.f32.mrf.mxu0
      %v3940 = vadd.f32 0.0, %v3939
      %v3941 = vpop.f32.mrf.mxu0
      %v3942 = vadd.f32 0.0, %v3941
      %3943 = vmatmul.bf16.gmra.mxu0 %v3865
      %v3944 = vpop.f32.mrf.mxu0
      %v3945 = vadd.f32 0.0, %v3944
      %v3946 = vpop.f32.mrf.mxu0
      %v3947 = vadd.f32 0.0, %v3946
      %3948 = vmatmul.bf16.gmra.mxu0 %v3868
      %v3949 = vpop.f32.mrf.mxu0
      %v3950 = vadd.f32 0.0, %v3949
      %v3951 = vpop.f32.mrf.mxu0
      %v3952 = vadd.f32 0.0, %v3951
      %3953 = vmatmul.bf16.gmra.mxu0 %v3871
      %v3954 = vpop.f32.mrf.mxu0
      %v3955 = vadd.f32 0.0, %v3954
      %v3956 = vpop.f32.mrf.mxu0
      %v3957 = vadd.f32 0.0, %v3956
      %3958 = vmatmul.bf16.gmra.mxu0 %v3874
      %v3959 = vpop.f32.mrf.mxu0
      %v3960 = vadd.f32 0.0, %v3959
      %v3961 = vpop.f32.mrf.mxu0
      %v3962 = vadd.f32 0.0, %v3961
      %3963 = vmatmul.bf16.gmra.mxu0 %v3877
      %v3964 = vpop.f32.mrf.mxu0
      %v3965 = vadd.f32 0.0, %v3964
      %v3966 = vpop.f32.mrf.mxu0
      %v3967 = vadd.f32 0.0, %v3966
      %3968 = vmatmul.bf16.gmra.mxu0 %v3880
      %v3969 = vpop.f32.mrf.mxu0
      %v3970 = vadd.f32 0.0, %v3969
      %v3971 = vpop.f32.mrf.mxu0
      %v3972 = vadd.f32 0.0, %v3971
      %3973 = vdwg.mxu0
      %v3974 = vadd.f32 %v3631, %v3895
      %v3975 = vadd.f32 %v3633, %v3897
      %v3976 = vadd.f32 %v3636, %v3900
      %v3977 = vadd.f32 %v3638, %v3902
      %v3978 = vadd.f32 %v3641, %v3905
      %v3979 = vadd.f32 %v3643, %v3907
      %v3980 = vadd.f32 %v3646, %v3910
      %v3981 = vadd.f32 %v3648, %v3912
      %v3982 = vadd.f32 %v3651, %v3915
      %v3983 = vadd.f32 %v3653, %v3917
      %v3984 = vadd.f32 %v3656, %v3920
      %v3985 = vadd.f32 %v3658, %v3922
      %v3986 = vadd.f32 %v3661, %v3925
      %v3987 = vadd.f32 %v3663, %v3927
      %v3988 = vadd.f32 %v3666, %v3930
      %v3989 = vadd.f32 %v3668, %v3932
      %v3990 = vadd.f32 %v3671, %v3935
      %v3991 = vadd.f32 %v3673, %v3937
      %v3992 = vadd.f32 %v3676, %v3940
      %v3993 = vadd.f32 %v3678, %v3942
      %v3994 = vadd.f32 %v3681, %v3945
      %v3995 = vadd.f32 %v3683, %v3947
      %v3996 = vadd.f32 %v3686, %v3950
      %v3997 = vadd.f32 %v3688, %v3952
      %v3998 = vadd.f32 %v3691, %v3955
      %v3999 = vadd.f32 %v3693, %v3957
      %v4000 = vadd.f32 %v3696, %v3960
      %v4001 = vadd.f32 %v3698, %v3962
      %v4002 = vadd.f32 %v3701, %v3965
      %v4003 = vadd.f32 %v3703, %v3967
      %v4004 = vadd.f32 %v3706, %v3970
      %v4005 = vadd.f32 %v3708, %v3972
      %v4006 = vpack.c.bf16 %v3974, %v3974
      %v4007 = vpack.c.bf16 %v3975, %v3975
      %v4008 = vpack.c.bf16 %v3976, %v3976
      %v4009 = vpack.c.bf16 %v3977, %v3977
      %v4010 = vpack.c.bf16 %v3978, %v3978
      %v4011 = vpack.c.bf16 %v3979, %v3979
      %v4012 = vpack.c.bf16 %v3980, %v3980
      %v4013 = vpack.c.bf16 %v3981, %v3981
      %v4014 = vpack.c.bf16 %v3982, %v3982
      %v4015 = vpack.c.bf16 %v3983, %v3983
      %v4016 = vpack.c.bf16 %v3984, %v3984
      %v4017 = vpack.c.bf16 %v3985, %v3985
      %v4018 = vpack.c.bf16 %v3986, %v3986
      %v4019 = vpack.c.bf16 %v3987, %v3987
      %v4020 = vpack.c.bf16 %v3988, %v3988
      %v4021 = vpack.c.bf16 %v3989, %v3989
      %v4022 = vpack.c.bf16 %v3990, %v3990
      %v4023 = vpack.c.bf16 %v3991, %v3991
      %v4024 = vpack.c.bf16 %v3992, %v3992
      %v4025 = vpack.c.bf16 %v3993, %v3993
      %v4026 = vpack.c.bf16 %v3994, %v3994
      %v4027 = vpack.c.bf16 %v3995, %v3995
      %v4028 = vpack.c.bf16 %v3996, %v3996
      %v4029 = vpack.c.bf16 %v3997, %v3997
      %v4030 = vpack.c.bf16 %v3998, %v3998
      %v4031 = vpack.c.bf16 %v3999, %v3999
      %v4032 = vpack.c.bf16 %v4000, %v4000
      %v4033 = vpack.c.bf16 %v4001, %v4001
      %v4034 = vpack.c.bf16 %v4002, %v4002
      %v4035 = vpack.c.bf16 %v4003, %v4003
      %v4036 = vpack.c.bf16 %v4004, %v4004
      %v4037 = vpack.c.bf16 %v4005, %v4005
      %4038 = vst.msk [vmem:[%s206] sm:$0xf] %vm411, %v4006
      %4039 = vst.msk [vmem:[%s206 + $0x4] sm:$0xf] %vm411, %v4007
      %4040 = vst.msk [vmem:[%s206 + $0x8] sm:$0xf] %vm411, %v4008
      %4041 = vst.msk [vmem:[%s206 + $0xc] sm:$0xf] %vm411, %v4009
      %4042 = vst.msk [vmem:[%s206 + $0x10] sm:$0xf] %vm411, %v4010
      %4043 = vst.msk [vmem:[%s206 + $0x14] sm:$0xf] %vm411, %v4011
      %4044 = vst.msk [vmem:[%s206 + $0x18] sm:$0xf] %vm411, %v4012
      %4045 = vst.msk [vmem:[%s206 + $0x1c] sm:$0xf] %vm411, %v4013
      %4046 = vst.msk [vmem:[%s206 + $0x20] sm:$0xf] %vm411, %v4014
      %4047 = vst.msk [vmem:[%s206 + $0x24] sm:$0xf] %vm411, %v4015
      %4048 = vst.msk [vmem:[%s206 + $0x28] sm:$0xf] %vm411, %v4016
      %4049 = vst.msk [vmem:[%s206 + $0x2c] sm:$0xf] %vm411, %v4017
      %4050 = vst.msk [vmem:[%s206 + $0x30] sm:$0xf] %vm411, %v4018
      %4051 = vst.msk [vmem:[%s206 + $0x34] sm:$0xf] %vm411, %v4019
      %4052 = vst.msk [vmem:[%s206 + $0x38] sm:$0xf] %vm411, %v4020
      %4053 = vst.msk [vmem:[%s206 + $0x3c] sm:$0xf] %vm411, %v4021
      %4054 = vst.msk [vmem:[%s206 + $0x40] sm:$0xf] %vm411, %v4022
      %4055 = vst.msk [vmem:[%s206 + $0x44] sm:$0xf] %vm411, %v4023
      %4056 = vst.msk [vmem:[%s206 + $0x48] sm:$0xf] %vm411, %v4024
      %4057 = vst.msk [vmem:[%s206 + $0x4c] sm:$0xf] %vm411, %v4025
      %4058 = vst.msk [vmem:[%s206 + $0x50] sm:$0xf] %vm411, %v4026
      %4059 = vst.msk [vmem:[%s206 + $0x54] sm:$0xf] %vm411, %v4027
      %4060 = vst.msk [vmem:[%s206 + $0x58] sm:$0xf] %vm411, %v4028
      %4061 = vst.msk [vmem:[%s206 + $0x5c] sm:$0xf] %vm411, %v4029
      %4062 = vst.msk [vmem:[%s206 + $0x60] sm:$0xf] %vm411, %v4030
      %4063 = vst.msk [vmem:[%s206 + $0x64] sm:$0xf] %vm411, %v4031
      %4064 = vst.msk [vmem:[%s206 + $0x68] sm:$0xf] %vm411, %v4032
      %4065 = vst.msk [vmem:[%s206 + $0x6c] sm:$0xf] %vm411, %v4033
      %4066 = vst.msk [vmem:[%s206 + $0x70] sm:$0xf] %vm411, %v4034
      %4067 = vst.msk [vmem:[%s206 + $0x74] sm:$0xf] %vm411, %v4035
      %4068 = vst.msk [vmem:[%s206 + $0x78] sm:$0xf] %vm411, %v4036
      %4069 = vst.msk [vmem:[%s206 + $0x7c] sm:$0xf] %vm411, %v4037
      %vm4070 = vcmask 64512
      %v4071 = vsel %vm4070, %v3974, 0.0
      %v4072 = vsel %vm4070, %v3975, 0.0
      %v4073 = vadd.f32 %v4071, %v4072
      %v4074 = vsel %vm4070, %v3976, 0.0
      %v4075 = vadd.f32 %v4073, %v4074
      %v4076 = vsel %vm4070, %v3977, 0.0
      %v4077 = vadd.f32 %v4075, %v4076
      %v4078 = vsel %vm4070, %v3978, 0.0
      %v4079 = vadd.f32 %v4077, %v4078
      %v4080 = vsel %vm4070, %v3979, 0.0
      %v4081 = vadd.f32 %v4079, %v4080
      %v4082 = vsel %vm4070, %v3980, 0.0
      %v4083 = vadd.f32 %v4081, %v4082
      %v4084 = vsel %vm4070, %v3981, 0.0
      %v4085 = vadd.f32 %v4083, %v4084
      %v4086 = vsel %vm4070, %v3982, 0.0
      %v4087 = vadd.f32 %v4085, %v4086
      %v4088 = vsel %vm4070, %v3983, 0.0
      %v4089 = vadd.f32 %v4087, %v4088
      %v4090 = vsel %vm4070, %v3984, 0.0
      %v4091 = vadd.f32 %v4089, %v4090
      %v4092 = vsel %vm4070, %v3985, 0.0
      %v4093 = vadd.f32 %v4091, %v4092
      %v4094 = vsel %vm4070, %v3986, 0.0
      %v4095 = vadd.f32 %v4093, %v4094
      %v4096 = vsel %vm4070, %v3987, 0.0
      %v4097 = vadd.f32 %v4095, %v4096
      %v4098 = vsel %vm4070, %v3988, 0.0
      %v4099 = vadd.f32 %v4097, %v4098
      %v4100 = vsel %vm4070, %v3989, 0.0
      %v4101 = vadd.f32 %v4099, %v4100
      %v4102 = vsel %vm4070, %v3990, 0.0
      %v4103 = vadd.f32 %v4101, %v4102
      %v4104 = vsel %vm4070, %v3991, 0.0
      %v4105 = vadd.f32 %v4103, %v4104
      %v4106 = vsel %vm4070, %v3992, 0.0
      %v4107 = vadd.f32 %v4105, %v4106
      %v4108 = vsel %vm4070, %v3993, 0.0
      %v4109 = vadd.f32 %v4107, %v4108
      %v4110 = vsel %vm4070, %v3994, 0.0
      %v4111 = vadd.f32 %v4109, %v4110
      %v4112 = vsel %vm4070, %v3995, 0.0
      %v4113 = vadd.f32 %v4111, %v4112
      %v4114 = vsel %vm4070, %v3996, 0.0
      %v4115 = vadd.f32 %v4113, %v4114
      %v4116 = vsel %vm4070, %v3997, 0.0
      %v4117 = vadd.f32 %v4115, %v4116
      %v4118 = vsel %vm4070, %v3998, 0.0
      %v4119 = vadd.f32 %v4117, %v4118
      %v4120 = vsel %vm4070, %v3999, 0.0
      %v4121 = vadd.f32 %v4119, %v4120
      %v4122 = vsel %vm4070, %v4000, 0.0
      %v4123 = vadd.f32 %v4121, %v4122
      %v4124 = vsel %vm4070, %v4001, 0.0
      %v4125 = vadd.f32 %v4123, %v4124
      %v4126 = vsel %vm4070, %v4002, 0.0
      %v4127 = vadd.f32 %v4125, %v4126
      %v4128 = vsel %vm4070, %v4003, 0.0
      %v4129 = vadd.f32 %v4127, %v4128
      %v4130 = vsel %vm4070, %v4004, 0.0
      %v4131 = vadd.f32 %v4129, %v4130
      %v4132 = vsel %vm4070, %v4005, 0.0
      %v4133 = vadd.f32 %v4131, %v4132
      %v4134 = vrot.slane %v4133, 4
      %v4135 = vadd.f32 %v4133, %v4134
      %v4136 = vrot.slane %v4135, 2
      %v4137 = vadd.f32 %v4135, %v4136
      %v4138 = vrot.slane %v4137, 1
      %v4139 = vadd.f32 %v4137, %v4138
      %v4140 = vmul.f32 %v3974, %v3974
      %v4141 = vmul.f32 %v3975, %v3975
      %v4142 = vmul.f32 %v3976, %v3976
      %v4143 = vmul.f32 %v3977, %v3977
      %v4144 = vmul.f32 %v3978, %v3978
      %v4145 = vmul.f32 %v3979, %v3979
      %v4146 = vmul.f32 %v3980, %v3980
      %v4147 = vmul.f32 %v3981, %v3981
      %v4148 = vmul.f32 %v3982, %v3982
      %v4149 = vmul.f32 %v3983, %v3983
      %v4150 = vmul.f32 %v3984, %v3984
      %v4151 = vmul.f32 %v3985, %v3985
      %v4152 = vmul.f32 %v3986, %v3986
      %v4153 = vmul.f32 %v3987, %v3987
      %v4154 = vmul.f32 %v3988, %v3988
      %v4155 = vmul.f32 %v3989, %v3989
      %v4156 = vmul.f32 %v3990, %v3990
      %v4157 = vmul.f32 %v3991, %v3991
      %v4158 = vmul.f32 %v3992, %v3992
      %v4159 = vmul.f32 %v3993, %v3993
      %v4160 = vmul.f32 %v3994, %v3994
      %v4161 = vmul.f32 %v3995, %v3995
      %v4162 = vmul.f32 %v3996, %v3996
      %v4163 = vmul.f32 %v3997, %v3997
      %v4164 = vmul.f32 %v3998, %v3998
      %v4165 = vmul.f32 %v3999, %v3999
      %v4166 = vmul.f32 %v4000, %v4000
      %v4167 = vmul.f32 %v4001, %v4001
      %v4168 = vmul.f32 %v4002, %v4002
      %v4169 = vmul.f32 %v4003, %v4003
      %v4170 = vmul.f32 %v4004, %v4004
      %v4171 = vmul.f32 %v4005, %v4005
      %v4172 = vsel %vm4070, %v4140, 0.0
      %v4173 = vsel %vm4070, %v4141, 0.0
      %v4174 = vadd.f32 %v4172, %v4173
      %v4175 = vsel %vm4070, %v4142, 0.0
      %v4176 = vadd.f32 %v4174, %v4175
      %v4177 = vsel %vm4070, %v4143, 0.0
      %v4178 = vadd.f32 %v4176, %v4177
      %v4179 = vsel %vm4070, %v4144, 0.0
      %v4180 = vadd.f32 %v4178, %v4179
      %v4181 = vsel %vm4070, %v4145, 0.0
      %v4182 = vadd.f32 %v4180, %v4181
      %v4183 = vsel %vm4070, %v4146, 0.0
      %v4184 = vadd.f32 %v4182, %v4183
      %v4185 = vsel %vm4070, %v4147, 0.0
      %v4186 = vadd.f32 %v4184, %v4185
      %v4187 = vsel %vm4070, %v4148, 0.0
      %v4188 = vadd.f32 %v4186, %v4187
      %v4189 = vsel %vm4070, %v4149, 0.0
      %v4190 = vadd.f32 %v4188, %v4189
      %v4191 = vsel %vm4070, %v4150, 0.0
      %v4192 = vadd.f32 %v4190, %v4191
      %v4193 = vsel %vm4070, %v4151, 0.0
      %v4194 = vadd.f32 %v4192, %v4193
      %v4195 = vsel %vm4070, %v4152, 0.0
      %v4196 = vadd.f32 %v4194, %v4195
      %v4197 = vsel %vm4070, %v4153, 0.0
      %v4198 = vadd.f32 %v4196, %v4197
      %v4199 = vsel %vm4070, %v4154, 0.0
      %v4200 = vadd.f32 %v4198, %v4199
      %v4201 = vsel %vm4070, %v4155, 0.0
      %v4202 = vadd.f32 %v4200, %v4201
      %v4203 = vsel %vm4070, %v4156, 0.0
      %v4204 = vadd.f32 %v4202, %v4203
      %v4205 = vsel %vm4070, %v4157, 0.0
      %v4206 = vadd.f32 %v4204, %v4205
      %v4207 = vsel %vm4070, %v4158, 0.0
      %v4208 = vadd.f32 %v4206, %v4207
      %v4209 = vsel %vm4070, %v4159, 0.0
      %v4210 = vadd.f32 %v4208, %v4209
      %v4211 = vsel %vm4070, %v4160, 0.0
      %v4212 = vadd.f32 %v4210, %v4211
      %v4213 = vsel %vm4070, %v4161, 0.0
      %v4214 = vadd.f32 %v4212, %v4213
      %v4215 = vsel %vm4070, %v4162, 0.0
      %v4216 = vadd.f32 %v4214, %v4215
      %v4217 = vsel %vm4070, %v4163, 0.0
      %v4218 = vadd.f32 %v4216, %v4217
      %v4219 = vsel %vm4070, %v4164, 0.0
      %v4220 = vadd.f32 %v4218, %v4219
      %v4221 = vsel %vm4070, %v4165, 0.0
      %v4222 = vadd.f32 %v4220, %v4221
      %v4223 = vsel %vm4070, %v4166, 0.0
      %v4224 = vadd.f32 %v4222, %v4223
      %v4225 = vsel %vm4070, %v4167, 0.0
      %v4226 = vadd.f32 %v4224, %v4225
      %v4227 = vsel %vm4070, %v4168, 0.0
      %v4228 = vadd.f32 %v4226, %v4227
      %v4229 = vsel %vm4070, %v4169, 0.0
      %v4230 = vadd.f32 %v4228, %v4229
      %v4231 = vsel %vm4070, %v4170, 0.0
      %v4232 = vadd.f32 %v4230, %v4231
      %v4233 = vsel %vm4070, %v4171, 0.0
      %v4234 = vadd.f32 %v4232, %v4233
      %v4235 = vrot.slane %v4234, 4
      %v4236 = vadd.f32 %v4234, %v4235
      %v4237 = vrot.slane %v4236, 2
      %v4238 = vadd.f32 %v4236, %v4237
      %v4239 = vrot.slane %v4238, 1
      %v4240 = vadd.f32 %v4238, %v4239
      %vm4241 = vcmask 1040384
      %v4242 = vsel %vm4241, %v4139, %v4240
      %vm4243 = vcmask 58368
      %4244 = vst.msk [vmem:[%s211] sm:$0x3] %vm4243, %v4242
      %s4245 = smul.u32 32, %s16
      %p4246 = scmp.lt.s32.totalorder %s4245, 63
      %s4247 = scalar_select %p4246, %s4245, 63
      %s4248 = smul.addr %s4247, 4
      %s4249 = scalar_lea.vmem %s3, %s4248
      %p4250 = scmp.lt.s32.totalorder %s16, 1
      %s4251 = scalar_select %p4250, %s16, 1
      %s4252 = smul.addr %s4251, 2
      %s4253 = scalar_lea.vmem %s4, %s4252
      // Predicated region
      $region33: #{bottleneck_forward.5} parent=31 // pred_check
        %p4254 = pneg %p102
      $region34: #{bottleneck_forward.5} parent=31 // pred_check_branch
        %4256 = sbr.rel (%p4254) target = $region36
      $region35: #{bottleneck_forward.5} parent=31 // pred_region
        %s4257 = smul.u32 32, %s16
      $region36: #{bottleneck_forward.5} parent=31 // pred_fallthru
        _
      // Predicated region
      $region37: #{bottleneck_forward.5} parent=31 // pred_check
        %p4258 = pneg %p128
      $region38: #{bottleneck_forward.5} parent=31 // pred_check_branch
        %4260 = sbr.rel (%p4258) target = $region40
      $region39: #{bottleneck_forward.5} parent=31 // pred_region
        _
      $region40: #{bottleneck_forward.5} parent=31 // pred_fallthru
        _
    $region32: #{bottleneck_forward.5} parent=5 // pred_fallthru
      _
    %p4261 = scmp.le.s32.totalorder 2, %s11
    // Predicated region
    $region41: #{bottleneck_forward.5} parent=5 // pred_check
      %p4262 = pneg %p4261
    $region42: #{bottleneck_forward.5} parent=5 // pred_check_branch
      %4264 = sbr.rel (%p4262) target = $region44
    $region43: #{bottleneck_forward.5} parent=5 // pred_region
      %s4265 = ssub.s32 %s11, 2
      // Predicated region
      $region45: #{bottleneck_forward.5} parent=43 // pred_check
        %p4266 = pneg %p108
      $region46: #{bottleneck_forward.5} parent=43 // pred_check_branch
        %4268 = sbr.rel (%p4266) target = $region48
      $region47: #{bottleneck_forward.5} parent=43 // pred_region
        %s4269 = smul.u32 32, %s17
        %p4270 = scmp.lt.s32.totalorder %s4269, 63
        %s4271 = scalar_select %p4270, %s4269, 63
        %s4272 = smul.addr %s4271, 4
        %s4273 = scalar_lea.vmem %s3, %s4272
      $region48: #{bottleneck_forward.5} parent=43 // pred_fallthru
        _
      // Predicated region
      $region49: #{bottleneck_forward.5} parent=43 // pred_check
        %p4274 = pneg %p134
      $region50: #{bottleneck_forward.5} parent=43 // pred_check_branch
        %4276 = sbr.rel (%p4274) target = $region52
      $region51: #{bottleneck_forward.5} parent=43 // pred_region
        %p4277 = scmp.lt.s32.totalorder %s17, 1
        %s4278 = scalar_select %p4277, %s17, 1
        %s4279 = smul.addr %s4278, 2
        %s4280 = scalar_lea.vmem %s4, %s4279
      $region52: #{bottleneck_forward.5} parent=43 // pred_fallthru
        _
    $region44: #{bottleneck_forward.5} parent=5 // pred_fallthru
      _
  $region6: #{bottleneck_forward.5} parent=0 // loop_footer
    %s15 = sadd.s32 1, %s11
  $region7: #{bottleneck_forward.5} parent=0 // loop_footer_branch
    %10 = sbr.rel target = $region3
  $region8: #{bottleneck_forward.5} parent=0 // loop_exit
    _

</llo_original>
